<compile_context>
chip_gen: v7x
topology: tpu7x:2x2x1
jax: 0.10.0
libtpu: 0.0.40
codegen_flags: <defaults>
</compile_context>

<pallas_src>
import jax
import jax.numpy as jnp
from jax.experimental import pallas as pl
from jax.experimental.pallas import tpu as pltpu

BN_EPS = 1e-5


def _bilinear_matrix(in_size, out_size):
    """Dense interpolation matrix for Upsample(mode='bilinear', align_corners=True)."""
    if out_size == 1:
        src = jnp.zeros((1,), jnp.float32)
    else:
        src = jnp.arange(out_size, dtype=jnp.float32) * (in_size - 1) / (out_size - 1)
    lo = jnp.clip(jnp.floor(src), 0, in_size - 1).astype(jnp.int32)
    hi = jnp.minimum(lo + 1, in_size - 1)
    frac = src - lo.astype(jnp.float32)
    rows = jnp.arange(out_size)
    m = jnp.zeros((out_size, in_size), jnp.float32)
    m = m.at[rows, lo].add(1.0 - frac)
    m = m.at[rows, hi].add(frac)
    return m


def _make_upconv_kernel(N, H, W, Cin, Cmid, Cout):
    H2, W2 = 2 * H, 2 * W

    def kernel(x_ref, uwt_ref, uh_ref,
               w1_ref, b1_ref, g1_ref, be1_ref,
               w2_ref, b2_ref, g2_ref, be2_ref,
               o_ref, pad1_ref, pad2_ref):

        # ---- bilinear x2 upsample (align_corners=True), NCHW, lane-dense ----
        x = x_ref[...]                                                  # (N, Cin, H, W)
        xw = jnp.dot(x.reshape(N * Cin * H, W), uwt_ref[...],
                     preferred_element_type=jnp.float32)                # (N*Cin*H, W2)
        xw = xw.reshape(N * Cin, H, W2)
        uh = uh_ref[...]                                                # (H2, H)
        rows = [jnp.dot(uh, xw[b], preferred_element_type=jnp.float32)
                .reshape(1, H2, W2)
                for b in range(N * Cin)]
        y = jnp.concatenate(rows, axis=0).reshape(N, Cin, H2, W2)       # (N, Cin, H2, W2)

        def conv_bn_relu(src, pad_ref, w_ref, b_ref, g_ref, be_ref, cin, cout):
            # Zero only the 1-wide halo (4 thin stores), then the interior.
            pad_ref[:, :, 0:1, :] = jnp.zeros((N, cin, 1, W2 + 2), jnp.float32)
            pad_ref[:, :, H2 + 1:H2 + 2, :] = jnp.zeros((N, cin, 1, W2 + 2), jnp.float32)
            pad_ref[:, :, :, 0:1] = jnp.zeros((N, cin, H2 + 2, 1), jnp.float32)
            pad_ref[:, :, :, W2 + 1:W2 + 2] = jnp.zeros((N, cin, H2 + 2, 1), jnp.float32)
            pad_ref[:, :, 1:H2 + 1, 1:W2 + 1] = src

            # Load the padded activation once, slice the value for the 9 taps.
            padded = pad_ref[...]                                       # (N, cin, H2+2, W2+2)
            taps = [padded[:, :, ky:ky + H2, kx:kx + W2]                # (N, cin, H2, W2)
                    for ky in range(3) for kx in range(3)]

            inv_cnt = 1.0 / float(N * H2 * W2)
            outs = []
            for co in range(cout):
                # Lane-dense per-channel accumulator; weights are SMEM scalars.
                acc = jnp.zeros((N, H2, W2), jnp.float32)
                for ci in range(cin):
                    base = (co * cin + ci) * 9
                    for t in range(9):
                        acc = acc + w_ref[base + t] * taps[t][:, ci]
                acc = acc + b_ref[co]

                # Single-pass (biased) batch statistics: E[x^2] - E[x]^2.
                s = jnp.sum(acc, axis=(0, 1, 2), keepdims=True)
                ss = jnp.sum(acc * acc, axis=(0, 1, 2), keepdims=True)
                mean = s * inv_cnt
                var = ss * inv_cnt - mean * mean
                zn = (acc - mean) * jax.lax.rsqrt(var + BN_EPS)
                zn = zn * g_ref[co] + be_ref[co]
                outs.append(jnp.maximum(zn, 0.0).reshape(N, 1, H2, W2))
            return jnp.concatenate(outs, axis=1)                        # (N, cout, H2, W2)

        z1 = conv_bn_relu(y, pad1_ref, w1_ref, b1_ref, g1_ref, be1_ref, Cin, Cmid)
        z2 = conv_bn_relu(z1, pad2_ref, w2_ref, b2_ref, g2_ref, be2_ref, Cmid, Cout)
        o_ref[...] = z2

    return kernel


def upconv_forward(x_nchw, params):
    """Pallas implementation of UpConv.forward (NCHW in, NCHW out, no transposes)."""
    N, Cin, H, W = x_nchw.shape
    Cmid = params['w1'].shape[0]
    Cout = params['w2'].shape[0]
    H2, W2 = 2 * H, 2 * W

    uh = _bilinear_matrix(H, H2)                 # (H2, H)
    uwt = _bilinear_matrix(W, W2).T              # (W, W2)

    vmem = pl.BlockSpec(memory_space=pltpu.MemorySpace.VMEM)
    smem = pl.BlockSpec(memory_space=pltpu.MemorySpace.SMEM)

    kernel = _make_upconv_kernel(N, H, W, Cin, Cmid, Cout)
    out = pl.pallas_call(
        kernel,
        out_shape=jax.ShapeDtypeStruct((N, Cout, H2, W2), jnp.float32),
        in_specs=[vmem, vmem, vmem] + [smem] * 8,
        out_specs=vmem,
        scratch_shapes=[
            pltpu.VMEM((N, Cin, H2 + 2, W2 + 2), jnp.float32),   # padded input of conv1
            pltpu.VMEM((N, Cmid, H2 + 2, W2 + 2), jnp.float32),  # padded input of conv2
        ],
        compiler_params=pltpu.CompilerParams(vmem_limit_bytes=32 * 1024 * 1024),
    )(x_nchw.astype(jnp.float32), uwt, uh,
      params['w1'].reshape(-1), params['b1'], params['g1'], params['be1'],
      params['w2'].reshape(-1), params['b2'], params['g2'], params['be2'])
    return out


def init_upconv_params(key, in_channels, out_channels):
    """Deterministic parameter init mirroring the module's __init__ shapes."""
    Cmid = in_channels // 2
    k1, k2, k3, k4 = jax.random.split(key, 4)
    bnd1 = 1.0 / (in_channels * 9) ** 0.5
    bnd2 = 1.0 / (Cmid * 9) ** 0.5
    return {
        'w1': jax.random.uniform(k1, (Cmid, in_channels, 3, 3), jnp.float32, -bnd1, bnd1),
        'b1': jax.random.uniform(k2, (Cmid,), jnp.float32, -bnd1, bnd1),
        'g1': jnp.ones((Cmid,), jnp.float32),    # BatchNorm default weight
        'be1': jnp.zeros((Cmid,), jnp.float32),  # BatchNorm default bias
        'w2': jax.random.uniform(k3, (out_channels, Cmid, 3, 3), jnp.float32, -bnd2, bnd2),
        'b2': jax.random.uniform(k4, (out_channels,), jnp.float32, -bnd2, bnd2),
        'g2': jnp.ones((out_channels,), jnp.float32),
        'be2': jnp.zeros((out_channels,), jnp.float32),
    }


def upconv_reference(x_nchw, params):
    """Pure-JAX reference with identical semantics (for a sanity check)."""
    x = x_nchw.astype(jnp.float32)
    N, Cin, H, W = x.shape
    uh = _bilinear_matrix(H, 2 * H)
    uw = _bilinear_matrix(W, 2 * W)
    y = jnp.einsum('ph,nchw->ncpw', uh, x)
    y = jnp.einsum('qw,ncpw->ncpq', uw, y)

    def block(z, w, b, g, be):
        z = jax.lax.conv_general_dilated(z, w, (1, 1), 'SAME',
                                         dimension_numbers=('NCHW', 'OIHW', 'NCHW'))
        z = z + b[None, :, None, None]
        mean = jnp.mean(z, axis=(0, 2, 3), keepdims=True)
        var = jnp.mean(jnp.square(z - mean), axis=(0, 2, 3), keepdims=True)
        z = (z - mean) / jnp.sqrt(var + BN_EPS) * g[None, :, None, None] + be[None, :, None, None]
        return jnp.maximum(z, 0.0)

    z = block(y, params['w1'], params['b1'], params['g1'], params['be1'])
    z = block(z, params['w2'], params['b2'], params['g2'], params['be2'])
    return z


if __name__ == "__main__":
    N, Cin, Cout, H, W = 2, 4, 2, 16, 16      # UpConv(in_channels=4, out_channels=2)
    key = jax.random.PRNGKey(0)
    kp, kx = jax.random.split(key)
    params = init_upconv_params(kp, Cin, Cout)
    x = jax.random.normal(kx, (N, Cin, H, W), jnp.float32)

    out = jax.block_until_ready(upconv_forward(x, params))
    assert out.shape == (N, Cout, 2 * H, 2 * W), out.shape

    ref = jax.block_until_ready(upconv_reference(x, params))
    max_err = float(jnp.max(jnp.abs(out - ref)))
    if max_err > 1e-3:
        raise AssertionError(f"mismatch vs reference: max|err|={max_err}")
    print("KERNEL_OK")
</pallas_src>

<mosaic_0001>
module attributes {stable_mosaic.version = 11 : i64} {
  func.func @kernel(%arg0: memref<2x4x16x16xf32, #tpu.memory_space<vmem>>, %arg1: memref<16x32xf32, #tpu.memory_space<vmem>>, %arg2: memref<32x16xf32, #tpu.memory_space<vmem>>, %arg3: memref<72xf32, #tpu.memory_space<smem>>, %arg4: memref<2xf32, #tpu.memory_space<smem>>, %arg5: memref<2xf32, #tpu.memory_space<smem>>, %arg6: memref<2xf32, #tpu.memory_space<smem>>, %arg7: memref<36xf32, #tpu.memory_space<smem>>, %arg8: memref<2xf32, #tpu.memory_space<smem>>, %arg9: memref<2xf32, #tpu.memory_space<smem>>, %arg10: memref<2xf32, #tpu.memory_space<smem>>, %arg11: memref<2x2x32x32xf32, #tpu.memory_space<vmem>>, %arg12: memref<2x4x34x34xf32, #tpu.memory_space<vmem>>, %arg13: memref<2x2x34x34xf32, #tpu.memory_space<vmem>>) attributes {dimension_semantics = [], scalar_prefetch = 0 : i64, scratch_operands = 2 : i64, tpu.core_type = #tpu.core_type<tc>} {
    %c0 = arith.constant 0 : index
    %c0_0 = arith.constant 0 : index
    %c0_1 = arith.constant 0 : index
    %c0_2 = arith.constant 0 : index
    %0 = vector.load %arg0[%c0, %c0_0, %c0_1, %c0_2] : memref<2x4x16x16xf32, #tpu.memory_space<vmem>>, vector<2x4x16x16xf32>
    %1 = vector.shape_cast %0 : vector<2x4x16x16xf32> to vector<128x16xf32>
    %c0_3 = arith.constant 0 : index
    %c0_4 = arith.constant 0 : index
    %2 = vector.load %arg1[%c0_3, %c0_4] : memref<16x32xf32, #tpu.memory_space<vmem>>, vector<16x32xf32>
    %cst = arith.constant dense<0.000000e+00> : vector<128x32xf32>
    %3 = tpu.matmul %1, %2, %cst {dimension_numbers = #tpu.dot_dimension_numbers<[1], [0], [0], [1], [0, 0, 1, 1], [], []>} : vector<128x16xf32>, vector<16x32xf32>, vector<128x32xf32> -> vector<128x32xf32>
    %4 = vector.shape_cast %3 : vector<128x32xf32> to vector<8x16x32xf32>
    %c0_5 = arith.constant 0 : index
    %c0_6 = arith.constant 0 : index
    %5 = vector.load %arg2[%c0_5, %c0_6] : memref<32x16xf32, #tpu.memory_space<vmem>>, vector<32x16xf32>
    %6 = vector.extract_strided_slice %4 {offsets = [0, 0, 0], sizes = [1, 16, 32], strides = [1, 1, 1]} : vector<8x16x32xf32> to vector<1x16x32xf32>
    %7 = vector.shape_cast %6 : vector<1x16x32xf32> to vector<16x32xf32>
    %cst_7 = arith.constant dense<0.000000e+00> : vector<32x32xf32>
    %8 = tpu.matmul %5, %7, %cst_7 {dimension_numbers = #tpu.dot_dimension_numbers<[1], [0], [0], [1], [0, 0, 1, 1], [], []>} : vector<32x16xf32>, vector<16x32xf32>, vector<32x32xf32> -> vector<32x32xf32>
    %9 = vector.shape_cast %8 : vector<32x32xf32> to vector<1x32x32xf32>
    %10 = vector.extract_strided_slice %4 {offsets = [1, 0, 0], sizes = [1, 16, 32], strides = [1, 1, 1]} : vector<8x16x32xf32> to vector<1x16x32xf32>
    %11 = vector.shape_cast %10 : vector<1x16x32xf32> to vector<16x32xf32>
    %cst_8 = arith.constant dense<0.000000e+00> : vector<32x32xf32>
    %12 = tpu.matmul %5, %11, %cst_8 {dimension_numbers = #tpu.dot_dimension_numbers<[1], [0], [0], [1], [0, 0, 1, 1], [], []>} : vector<32x16xf32>, vector<16x32xf32>, vector<32x32xf32> -> vector<32x32xf32>
    %13 = vector.shape_cast %12 : vector<32x32xf32> to vector<1x32x32xf32>
    %14 = vector.extract_strided_slice %4 {offsets = [2, 0, 0], sizes = [1, 16, 32], strides = [1, 1, 1]} : vector<8x16x32xf32> to vector<1x16x32xf32>
    %15 = vector.shape_cast %14 : vector<1x16x32xf32> to vector<16x32xf32>
    %cst_9 = arith.constant dense<0.000000e+00> : vector<32x32xf32>
    %16 = tpu.matmul %5, %15, %cst_9 {dimension_numbers = #tpu.dot_dimension_numbers<[1], [0], [0], [1], [0, 0, 1, 1], [], []>} : vector<32x16xf32>, vector<16x32xf32>, vector<32x32xf32> -> vector<32x32xf32>
    %17 = vector.shape_cast %16 : vector<32x32xf32> to vector<1x32x32xf32>
    %18 = vector.extract_strided_slice %4 {offsets = [3, 0, 0], sizes = [1, 16, 32], strides = [1, 1, 1]} : vector<8x16x32xf32> to vector<1x16x32xf32>
    %19 = vector.shape_cast %18 : vector<1x16x32xf32> to vector<16x32xf32>
    %cst_10 = arith.constant dense<0.000000e+00> : vector<32x32xf32>
    %20 = tpu.matmul %5, %19, %cst_10 {dimension_numbers = #tpu.dot_dimension_numbers<[1], [0], [0], [1], [0, 0, 1, 1], [], []>} : vector<32x16xf32>, vector<16x32xf32>, vector<32x32xf32> -> vector<32x32xf32>
    %21 = vector.shape_cast %20 : vector<32x32xf32> to vector<1x32x32xf32>
    %22 = vector.extract_strided_slice %4 {offsets = [4, 0, 0], sizes = [1, 16, 32], strides = [1, 1, 1]} : vector<8x16x32xf32> to vector<1x16x32xf32>
    %23 = vector.shape_cast %22 : vector<1x16x32xf32> to vector<16x32xf32>
    %cst_11 = arith.constant dense<0.000000e+00> : vector<32x32xf32>
    %24 = tpu.matmul %5, %23, %cst_11 {dimension_numbers = #tpu.dot_dimension_numbers<[1], [0], [0], [1], [0, 0, 1, 1], [], []>} : vector<32x16xf32>, vector<16x32xf32>, vector<32x32xf32> -> vector<32x32xf32>
    %25 = vector.shape_cast %24 : vector<32x32xf32> to vector<1x32x32xf32>
    %26 = vector.extract_strided_slice %4 {offsets = [5, 0, 0], sizes = [1, 16, 32], strides = [1, 1, 1]} : vector<8x16x32xf32> to vector<1x16x32xf32>
    %27 = vector.shape_cast %26 : vector<1x16x32xf32> to vector<16x32xf32>
    %cst_12 = arith.constant dense<0.000000e+00> : vector<32x32xf32>
    %28 = tpu.matmul %5, %27, %cst_12 {dimension_numbers = #tpu.dot_dimension_numbers<[1], [0], [0], [1], [0, 0, 1, 1], [], []>} : vector<32x16xf32>, vector<16x32xf32>, vector<32x32xf32> -> vector<32x32xf32>
    %29 = vector.shape_cast %28 : vector<32x32xf32> to vector<1x32x32xf32>
    %30 = vector.extract_strided_slice %4 {offsets = [6, 0, 0], sizes = [1, 16, 32], strides = [1, 1, 1]} : vector<8x16x32xf32> to vector<1x16x32xf32>
    %31 = vector.shape_cast %30 : vector<1x16x32xf32> to vector<16x32xf32>
    %cst_13 = arith.constant dense<0.000000e+00> : vector<32x32xf32>
    %32 = tpu.matmul %5, %31, %cst_13 {dimension_numbers = #tpu.dot_dimension_numbers<[1], [0], [0], [1], [0, 0, 1, 1], [], []>} : vector<32x16xf32>, vector<16x32xf32>, vector<32x32xf32> -> vector<32x32xf32>
    %33 = vector.shape_cast %32 : vector<32x32xf32> to vector<1x32x32xf32>
    %34 = vector.extract_strided_slice %4 {offsets = [7, 0, 0], sizes = [1, 16, 32], strides = [1, 1, 1]} : vector<8x16x32xf32> to vector<1x16x32xf32>
    %35 = vector.shape_cast %34 : vector<1x16x32xf32> to vector<16x32xf32>
    %cst_14 = arith.constant dense<0.000000e+00> : vector<32x32xf32>
    %36 = tpu.matmul %5, %35, %cst_14 {dimension_numbers = #tpu.dot_dimension_numbers<[1], [0], [0], [1], [0, 0, 1, 1], [], []>} : vector<32x16xf32>, vector<16x32xf32>, vector<32x32xf32> -> vector<32x32xf32>
    %37 = vector.shape_cast %36 : vector<32x32xf32> to vector<1x32x32xf32>
    %38 = tpu.concatenate %9, %13, %17, %21, %25, %29, %33, %37 in 0 : vector<1x32x32xf32>, vector<1x32x32xf32>, vector<1x32x32xf32>, vector<1x32x32xf32>, vector<1x32x32xf32>, vector<1x32x32xf32>, vector<1x32x32xf32>, vector<1x32x32xf32> -> vector<8x32x32xf32>
    %39 = vector.shape_cast %38 : vector<8x32x32xf32> to vector<2x4x32x32xf32>
    %cst_15 = arith.constant 0.000000e+00 : f32
    %40 = vector.broadcast %cst_15 : f32 to vector<2x4x1x34xf32>
    %c0_16 = arith.constant 0 : index
    %c0_17 = arith.constant 0 : index
    %c0_18 = arith.constant 0 : index
    %c0_19 = arith.constant 0 : index
    %41 = vector.load %arg12[%c0_16, %c0_17, %c0_18, %c0_19] : memref<2x4x34x34xf32, #tpu.memory_space<vmem>>, vector<2x4x1x34xf32>
    tpu.vector_store %arg12[%c0_16, %c0_17, %c0_18, %c0_19], %40 {strides = array<i32>} : memref<2x4x34x34xf32, #tpu.memory_space<vmem>>, vector<2x4x1x34xf32>,
    %cst_20 = arith.constant 0.000000e+00 : f32
    %42 = vector.broadcast %cst_20 : f32 to vector<2x4x1x34xf32>
    %c0_21 = arith.constant 0 : index
    %c0_22 = arith.constant 0 : index
    %c33 = arith.constant 33 : index
    %c0_23 = arith.constant 0 : index
    %43 = vector.load %arg12[%c0_21, %c0_22, %c33, %c0_23] : memref<2x4x34x34xf32, #tpu.memory_space<vmem>>, vector<2x4x1x34xf32>
    tpu.vector_store %arg12[%c0_21, %c0_22, %c33, %c0_23], %42 {strides = array<i32>} : memref<2x4x34x34xf32, #tpu.memory_space<vmem>>, vector<2x4x1x34xf32>,
    %cst_24 = arith.constant 0.000000e+00 : f32
    %44 = vector.broadcast %cst_24 : f32 to vector<2x4x34x1xf32>
    %c0_25 = arith.constant 0 : index
    %c0_26 = arith.constant 0 : index
    %c0_27 = arith.constant 0 : index
    %c0_28 = arith.constant 0 : index
    %45 = vector.load %arg12[%c0_25, %c0_26, %c0_27, %c0_28] : memref<2x4x34x34xf32, #tpu.memory_space<vmem>>, vector<2x4x34x1xf32>
    tpu.vector_store %arg12[%c0_25, %c0_26, %c0_27, %c0_28], %44 {strides = array<i32>} : memref<2x4x34x34xf32, #tpu.memory_space<vmem>>, vector<2x4x34x1xf32>,
    %cst_29 = arith.constant 0.000000e+00 : f32
    %46 = vector.broadcast %cst_29 : f32 to vector<2x4x34x1xf32>
    %c0_30 = arith.constant 0 : index
    %c0_31 = arith.constant 0 : index
    %c0_32 = arith.constant 0 : index
    %c33_33 = arith.constant 33 : index
    %47 = vector.load %arg12[%c0_30, %c0_31, %c0_32, %c33_33] : memref<2x4x34x34xf32, #tpu.memory_space<vmem>>, vector<2x4x34x1xf32>
    tpu.vector_store %arg12[%c0_30, %c0_31, %c0_32, %c33_33], %46 {strides = array<i32>} : memref<2x4x34x34xf32, #tpu.memory_space<vmem>>, vector<2x4x34x1xf32>,
    %c0_34 = arith.constant 0 : index
    %c0_35 = arith.constant 0 : index
    %c1 = arith.constant 1 : index
    %c1_36 = arith.constant 1 : index
    %48 = vector.load %arg12[%c0_34, %c0_35, %c1, %c1_36] : memref<2x4x34x34xf32, #tpu.memory_space<vmem>>, vector<2x4x32x32xf32>
    tpu.vector_store %arg12[%c0_34, %c0_35, %c1, %c1_36], %39 {strides = array<i32>} : memref<2x4x34x34xf32, #tpu.memory_space<vmem>>, vector<2x4x32x32xf32>,
    %c0_37 = arith.constant 0 : index
    %c0_38 = arith.constant 0 : index
    %c0_39 = arith.constant 0 : index
    %c0_40 = arith.constant 0 : index
    %49 = vector.load %arg12[%c0_37, %c0_38, %c0_39, %c0_40] : memref<2x4x34x34xf32, #tpu.memory_space<vmem>>, vector<2x4x34x34xf32>
    %50 = vector.extract_strided_slice %49 {offsets = [0, 0, 0, 0], sizes = [2, 4, 32, 32], strides = [1, 1, 1, 1]} : vector<2x4x34x34xf32> to vector<2x4x32x32xf32>
    %51 = vector.extract_strided_slice %49 {offsets = [0, 0, 0, 1], sizes = [2, 4, 32, 32], strides = [1, 1, 1, 1]} : vector<2x4x34x34xf32> to vector<2x4x32x32xf32>
    %52 = vector.extract_strided_slice %49 {offsets = [0, 0, 0, 2], sizes = [2, 4, 32, 32], strides = [1, 1, 1, 1]} : vector<2x4x34x34xf32> to vector<2x4x32x32xf32>
    %53 = vector.extract_strided_slice %49 {offsets = [0, 0, 1, 0], sizes = [2, 4, 32, 32], strides = [1, 1, 1, 1]} : vector<2x4x34x34xf32> to vector<2x4x32x32xf32>
    %54 = vector.extract_strided_slice %49 {offsets = [0, 0, 1, 1], sizes = [2, 4, 32, 32], strides = [1, 1, 1, 1]} : vector<2x4x34x34xf32> to vector<2x4x32x32xf32>
    %55 = vector.extract_strided_slice %49 {offsets = [0, 0, 1, 2], sizes = [2, 4, 32, 32], strides = [1, 1, 1, 1]} : vector<2x4x34x34xf32> to vector<2x4x32x32xf32>
    %56 = vector.extract_strided_slice %49 {offsets = [0, 0, 2, 0], sizes = [2, 4, 32, 32], strides = [1, 1, 1, 1]} : vector<2x4x34x34xf32> to vector<2x4x32x32xf32>
    %57 = vector.extract_strided_slice %49 {offsets = [0, 0, 2, 1], sizes = [2, 4, 32, 32], strides = [1, 1, 1, 1]} : vector<2x4x34x34xf32> to vector<2x4x32x32xf32>
    %58 = vector.extract_strided_slice %49 {offsets = [0, 0, 2, 2], sizes = [2, 4, 32, 32], strides = [1, 1, 1, 1]} : vector<2x4x34x34xf32> to vector<2x4x32x32xf32>
    %cst_41 = arith.constant 0.000000e+00 : f32
    %59 = vector.broadcast %cst_41 : f32 to vector<2x32x32xf32>
    %c0_42 = arith.constant 0 : index
    %60 = memref.load %arg3[%c0_42] : memref<72xf32, #tpu.memory_space<smem>>
    %61 = vector.extract_strided_slice %50 {offsets = [0, 0, 0, 0], sizes = [2, 1, 32, 32], strides = [1, 1, 1, 1]} : vector<2x4x32x32xf32> to vector<2x1x32x32xf32>
    %62 = vector.shape_cast %61 : vector<2x1x32x32xf32> to vector<2x32x32xf32>
    %63 = vector.broadcast %60 : f32 to vector<2x32x32xf32>
    %64 = arith.mulf %63, %62 : vector<2x32x32xf32>
    %65 = arith.addf %59, %64 : vector<2x32x32xf32>
    %c1_43 = arith.constant 1 : index
    %66 = memref.load %arg3[%c1_43] : memref<72xf32, #tpu.memory_space<smem>>
    %67 = vector.extract_strided_slice %51 {offsets = [0, 0, 0, 0], sizes = [2, 1, 32, 32], strides = [1, 1, 1, 1]} : vector<2x4x32x32xf32> to vector<2x1x32x32xf32>
    %68 = vector.shape_cast %67 : vector<2x1x32x32xf32> to vector<2x32x32xf32>
    %69 = vector.broadcast %66 : f32 to vector<2x32x32xf32>
    %70 = arith.mulf %69, %68 : vector<2x32x32xf32>
    %71 = arith.addf %65, %70 : vector<2x32x32xf32>
    %c2 = arith.constant 2 : index
    %72 = memref.load %arg3[%c2] : memref<72xf32, #tpu.memory_space<smem>>
    %73 = vector.extract_strided_slice %52 {offsets = [0, 0, 0, 0], sizes = [2, 1, 32, 32], strides = [1, 1, 1, 1]} : vector<2x4x32x32xf32> to vector<2x1x32x32xf32>
    %74 = vector.shape_cast %73 : vector<2x1x32x32xf32> to vector<2x32x32xf32>
    %75 = vector.broadcast %72 : f32 to vector<2x32x32xf32>
    %76 = arith.mulf %75, %74 : vector<2x32x32xf32>
    %77 = arith.addf %71, %76 : vector<2x32x32xf32>
    %c3 = arith.constant 3 : index
    %78 = memref.load %arg3[%c3] : memref<72xf32, #tpu.memory_space<smem>>
    %79 = vector.extract_strided_slice %53 {offsets = [0, 0, 0, 0], sizes = [2, 1, 32, 32], strides = [1, 1, 1, 1]} : vector<2x4x32x32xf32> to vector<2x1x32x32xf32>
    %80 = vector.shape_cast %79 : vector<2x1x32x32xf32> to vector<2x32x32xf32>
    %81 = vector.broadcast %78 : f32 to vector<2x32x32xf32>
    %82 = arith.mulf %81, %80 : vector<2x32x32xf32>
    %83 = arith.addf %77, %82 : vector<2x32x32xf32>
    %c4 = arith.constant 4 : index
    %84 = memref.load %arg3[%c4] : memref<72xf32, #tpu.memory_space<smem>>
    %85 = vector.extract_strided_slice %54 {offsets = [0, 0, 0, 0], sizes = [2, 1, 32, 32], strides = [1, 1, 1, 1]} : vector<2x4x32x32xf32> to vector<2x1x32x32xf32>
    %86 = vector.shape_cast %85 : vector<2x1x32x32xf32> to vector<2x32x32xf32>
    %87 = vector.broadcast %84 : f32 to vector<2x32x32xf32>
    %88 = arith.mulf %87, %86 : vector<2x32x32xf32>
    %89 = arith.addf %83, %88 : vector<2x32x32xf32>
    %c5 = arith.constant 5 : index
    %90 = memref.load %arg3[%c5] : memref<72xf32, #tpu.memory_space<smem>>
    %91 = vector.extract_strided_slice %55 {offsets = [0, 0, 0, 0], sizes = [2, 1, 32, 32], strides = [1, 1, 1, 1]} : vector<2x4x32x32xf32> to vector<2x1x32x32xf32>
    %92 = vector.shape_cast %91 : vector<2x1x32x32xf32> to vector<2x32x32xf32>
    %93 = vector.broadcast %90 : f32 to vector<2x32x32xf32>
    %94 = arith.mulf %93, %92 : vector<2x32x32xf32>
    %95 = arith.addf %89, %94 : vector<2x32x32xf32>
    %c6 = arith.constant 6 : index
    %96 = memref.load %arg3[%c6] : memref<72xf32, #tpu.memory_space<smem>>
    %97 = vector.extract_strided_slice %56 {offsets = [0, 0, 0, 0], sizes = [2, 1, 32, 32], strides = [1, 1, 1, 1]} : vector<2x4x32x32xf32> to vector<2x1x32x32xf32>
    %98 = vector.shape_cast %97 : vector<2x1x32x32xf32> to vector<2x32x32xf32>
    %99 = vector.broadcast %96 : f32 to vector<2x32x32xf32>
    %100 = arith.mulf %99, %98 : vector<2x32x32xf32>
    %101 = arith.addf %95, %100 : vector<2x32x32xf32>
    %c7 = arith.constant 7 : index
    %102 = memref.load %arg3[%c7] : memref<72xf32, #tpu.memory_space<smem>>
    %103 = vector.extract_strided_slice %57 {offsets = [0, 0, 0, 0], sizes = [2, 1, 32, 32], strides = [1, 1, 1, 1]} : vector<2x4x32x32xf32> to vector<2x1x32x32xf32>
    %104 = vector.shape_cast %103 : vector<2x1x32x32xf32> to vector<2x32x32xf32>
    %105 = vector.broadcast %102 : f32 to vector<2x32x32xf32>
    %106 = arith.mulf %105, %104 : vector<2x32x32xf32>
    %107 = arith.addf %101, %106 : vector<2x32x32xf32>
    %c8 = arith.constant 8 : index
    %108 = memref.load %arg3[%c8] : memref<72xf32, #tpu.memory_space<smem>>
    %109 = vector.extract_strided_slice %58 {offsets = [0, 0, 0, 0], sizes = [2, 1, 32, 32], strides = [1, 1, 1, 1]} : vector<2x4x32x32xf32> to vector<2x1x32x32xf32>
    %110 = vector.shape_cast %109 : vector<2x1x32x32xf32> to vector<2x32x32xf32>
    %111 = vector.broadcast %108 : f32 to vector<2x32x32xf32>
    %112 = arith.mulf %111, %110 : vector<2x32x32xf32>
    %113 = arith.addf %107, %112 : vector<2x32x32xf32>
    %c9 = arith.constant 9 : index
    %114 = memref.load %arg3[%c9] : memref<72xf32, #tpu.memory_space<smem>>
    %115 = vector.extract_strided_slice %50 {offsets = [0, 1, 0, 0], sizes = [2, 1, 32, 32], strides = [1, 1, 1, 1]} : vector<2x4x32x32xf32> to vector<2x1x32x32xf32>
    %116 = vector.shape_cast %115 : vector<2x1x32x32xf32> to vector<2x32x32xf32>
    %117 = vector.broadcast %114 : f32 to vector<2x32x32xf32>
    %118 = arith.mulf %117, %116 : vector<2x32x32xf32>
    %119 = arith.addf %113, %118 : vector<2x32x32xf32>
    %c10 = arith.constant 10 : index
    %120 = memref.load %arg3[%c10] : memref<72xf32, #tpu.memory_space<smem>>
    %121 = vector.extract_strided_slice %51 {offsets = [0, 1, 0, 0], sizes = [2, 1, 32, 32], strides = [1, 1, 1, 1]} : vector<2x4x32x32xf32> to vector<2x1x32x32xf32>
    %122 = vector.shape_cast %121 : vector<2x1x32x32xf32> to vector<2x32x32xf32>
    %123 = vector.broadcast %120 : f32 to vector<2x32x32xf32>
    %124 = arith.mulf %123, %122 : vector<2x32x32xf32>
    %125 = arith.addf %119, %124 : vector<2x32x32xf32>
    %c11 = arith.constant 11 : index
    %126 = memref.load %arg3[%c11] : memref<72xf32, #tpu.memory_space<smem>>
    %127 = vector.extract_strided_slice %52 {offsets = [0, 1, 0, 0], sizes = [2, 1, 32, 32], strides = [1, 1, 1, 1]} : vector<2x4x32x32xf32> to vector<2x1x32x32xf32>
    %128 = vector.shape_cast %127 : vector<2x1x32x32xf32> to vector<2x32x32xf32>
    %129 = vector.broadcast %126 : f32 to vector<2x32x32xf32>
    %130 = arith.mulf %129, %128 : vector<2x32x32xf32>
    %131 = arith.addf %125, %130 : vector<2x32x32xf32>
    %c12 = arith.constant 12 : index
    %132 = memref.load %arg3[%c12] : memref<72xf32, #tpu.memory_space<smem>>
    %133 = vector.extract_strided_slice %53 {offsets = [0, 1, 0, 0], sizes = [2, 1, 32, 32], strides = [1, 1, 1, 1]} : vector<2x4x32x32xf32> to vector<2x1x32x32xf32>
    %134 = vector.shape_cast %133 : vector<2x1x32x32xf32> to vector<2x32x32xf32>
    %135 = vector.broadcast %132 : f32 to vector<2x32x32xf32>
    %136 = arith.mulf %135, %134 : vector<2x32x32xf32>
    %137 = arith.addf %131, %136 : vector<2x32x32xf32>
    %c13 = arith.constant 13 : index
    %138 = memref.load %arg3[%c13] : memref<72xf32, #tpu.memory_space<smem>>
    %139 = vector.extract_strided_slice %54 {offsets = [0, 1, 0, 0], sizes = [2, 1, 32, 32], strides = [1, 1, 1, 1]} : vector<2x4x32x32xf32> to vector<2x1x32x32xf32>
    %140 = vector.shape_cast %139 : vector<2x1x32x32xf32> to vector<2x32x32xf32>
    %141 = vector.broadcast %138 : f32 to vector<2x32x32xf32>
    %142 = arith.mulf %141, %140 : vector<2x32x32xf32>
    %143 = arith.addf %137, %142 : vector<2x32x32xf32>
    %c14 = arith.constant 14 : index
    %144 = memref.load %arg3[%c14] : memref<72xf32, #tpu.memory_space<smem>>
    %145 = vector.extract_strided_slice %55 {offsets = [0, 1, 0, 0], sizes = [2, 1, 32, 32], strides = [1, 1, 1, 1]} : vector<2x4x32x32xf32> to vector<2x1x32x32xf32>
    %146 = vector.shape_cast %145 : vector<2x1x32x32xf32> to vector<2x32x32xf32>
    %147 = vector.broadcast %144 : f32 to vector<2x32x32xf32>
    %148 = arith.mulf %147, %146 : vector<2x32x32xf32>
    %149 = arith.addf %143, %148 : vector<2x32x32xf32>
    %c15 = arith.constant 15 : index
    %150 = memref.load %arg3[%c15] : memref<72xf32, #tpu.memory_space<smem>>
    %151 = vector.extract_strided_slice %56 {offsets = [0, 1, 0, 0], sizes = [2, 1, 32, 32], strides = [1, 1, 1, 1]} : vector<2x4x32x32xf32> to vector<2x1x32x32xf32>
    %152 = vector.shape_cast %151 : vector<2x1x32x32xf32> to vector<2x32x32xf32>
    %153 = vector.broadcast %150 : f32 to vector<2x32x32xf32>
    %154 = arith.mulf %153, %152 : vector<2x32x32xf32>
    %155 = arith.addf %149, %154 : vector<2x32x32xf32>
    %c16 = arith.constant 16 : index
    %156 = memref.load %arg3[%c16] : memref<72xf32, #tpu.memory_space<smem>>
    %157 = vector.extract_strided_slice %57 {offsets = [0, 1, 0, 0], sizes = [2, 1, 32, 32], strides = [1, 1, 1, 1]} : vector<2x4x32x32xf32> to vector<2x1x32x32xf32>
    %158 = vector.shape_cast %157 : vector<2x1x32x32xf32> to vector<2x32x32xf32>
    %159 = vector.broadcast %156 : f32 to vector<2x32x32xf32>
    %160 = arith.mulf %159, %158 : vector<2x32x32xf32>
    %161 = arith.addf %155, %160 : vector<2x32x32xf32>
    %c17 = arith.constant 17 : index
    %162 = memref.load %arg3[%c17] : memref<72xf32, #tpu.memory_space<smem>>
    %163 = vector.extract_strided_slice %58 {offsets = [0, 1, 0, 0], sizes = [2, 1, 32, 32], strides = [1, 1, 1, 1]} : vector<2x4x32x32xf32> to vector<2x1x32x32xf32>
    %164 = vector.shape_cast %163 : vector<2x1x32x32xf32> to vector<2x32x32xf32>
    %165 = vector.broadcast %162 : f32 to vector<2x32x32xf32>
    %166 = arith.mulf %165, %164 : vector<2x32x32xf32>
    %167 = arith.addf %161, %166 : vector<2x32x32xf32>
    %c18 = arith.constant 18 : index
    %168 = memref.load %arg3[%c18] : memref<72xf32, #tpu.memory_space<smem>>
    %169 = vector.extract_strided_slice %50 {offsets = [0, 2, 0, 0], sizes = [2, 1, 32, 32], strides = [1, 1, 1, 1]} : vector<2x4x32x32xf32> to vector<2x1x32x32xf32>
    %170 = vector.shape_cast %169 : vector<2x1x32x32xf32> to vector<2x32x32xf32>
    %171 = vector.broadcast %168 : f32 to vector<2x32x32xf32>
    %172 = arith.mulf %171, %170 : vector<2x32x32xf32>
    %173 = arith.addf %167, %172 : vector<2x32x32xf32>
    %c19 = arith.constant 19 : index
    %174 = memref.load %arg3[%c19] : memref<72xf32, #tpu.memory_space<smem>>
    %175 = vector.extract_strided_slice %51 {offsets = [0, 2, 0, 0], sizes = [2, 1, 32, 32], strides = [1, 1, 1, 1]} : vector<2x4x32x32xf32> to vector<2x1x32x32xf32>
    %176 = vector.shape_cast %175 : vector<2x1x32x32xf32> to vector<2x32x32xf32>
    %177 = vector.broadcast %174 : f32 to vector<2x32x32xf32>
    %178 = arith.mulf %177, %176 : vector<2x32x32xf32>
    %179 = arith.addf %173, %178 : vector<2x32x32xf32>
    %c20 = arith.constant 20 : index
    %180 = memref.load %arg3[%c20] : memref<72xf32, #tpu.memory_space<smem>>
    %181 = vector.extract_strided_slice %52 {offsets = [0, 2, 0, 0], sizes = [2, 1, 32, 32], strides = [1, 1, 1, 1]} : vector<2x4x32x32xf32> to vector<2x1x32x32xf32>
    %182 = vector.shape_cast %181 : vector<2x1x32x32xf32> to vector<2x32x32xf32>
    %183 = vector.broadcast %180 : f32 to vector<2x32x32xf32>
    %184 = arith.mulf %183, %182 : vector<2x32x32xf32>
    %185 = arith.addf %179, %184 : vector<2x32x32xf32>
    %c21 = arith.constant 21 : index
    %186 = memref.load %arg3[%c21] : memref<72xf32, #tpu.memory_space<smem>>
    %187 = vector.extract_strided_slice %53 {offsets = [0, 2, 0, 0], sizes = [2, 1, 32, 32], strides = [1, 1, 1, 1]} : vector<2x4x32x32xf32> to vector<2x1x32x32xf32>
    %188 = vector.shape_cast %187 : vector<2x1x32x32xf32> to vector<2x32x32xf32>
    %189 = vector.broadcast %186 : f32 to vector<2x32x32xf32>
    %190 = arith.mulf %189, %188 : vector<2x32x32xf32>
    %191 = arith.addf %185, %190 : vector<2x32x32xf32>
    %c22 = arith.constant 22 : index
    %192 = memref.load %arg3[%c22] : memref<72xf32, #tpu.memory_space<smem>>
    %193 = vector.extract_strided_slice %54 {offsets = [0, 2, 0, 0], sizes = [2, 1, 32, 32], strides = [1, 1, 1, 1]} : vector<2x4x32x32xf32> to vector<2x1x32x32xf32>
    %194 = vector.shape_cast %193 : vector<2x1x32x32xf32> to vector<2x32x32xf32>
    %195 = vector.broadcast %192 : f32 to vector<2x32x32xf32>
    %196 = arith.mulf %195, %194 : vector<2x32x32xf32>
    %197 = arith.addf %191, %196 : vector<2x32x32xf32>
    %c23 = arith.constant 23 : index
    %198 = memref.load %arg3[%c23] : memref<72xf32, #tpu.memory_space<smem>>
    %199 = vector.extract_strided_slice %55 {offsets = [0, 2, 0, 0], sizes = [2, 1, 32, 32], strides = [1, 1, 1, 1]} : vector<2x4x32x32xf32> to vector<2x1x32x32xf32>
    %200 = vector.shape_cast %199 : vector<2x1x32x32xf32> to vector<2x32x32xf32>
    %201 = vector.broadcast %198 : f32 to vector<2x32x32xf32>
    %202 = arith.mulf %201, %200 : vector<2x32x32xf32>
    %203 = arith.addf %197, %202 : vector<2x32x32xf32>
    %c24 = arith.constant 24 : index
    %204 = memref.load %arg3[%c24] : memref<72xf32, #tpu.memory_space<smem>>
    %205 = vector.extract_strided_slice %56 {offsets = [0, 2, 0, 0], sizes = [2, 1, 32, 32], strides = [1, 1, 1, 1]} : vector<2x4x32x32xf32> to vector<2x1x32x32xf32>
    %206 = vector.shape_cast %205 : vector<2x1x32x32xf32> to vector<2x32x32xf32>
    %207 = vector.broadcast %204 : f32 to vector<2x32x32xf32>
    %208 = arith.mulf %207, %206 : vector<2x32x32xf32>
    %209 = arith.addf %203, %208 : vector<2x32x32xf32>
    %c25 = arith.constant 25 : index
    %210 = memref.load %arg3[%c25] : memref<72xf32, #tpu.memory_space<smem>>
    %211 = vector.extract_strided_slice %57 {offsets = [0, 2, 0, 0], sizes = [2, 1, 32, 32], strides = [1, 1, 1, 1]} : vector<2x4x32x32xf32> to vector<2x1x32x32xf32>
    %212 = vector.shape_cast %211 : vector<2x1x32x32xf32> to vector<2x32x32xf32>
    %213 = vector.broadcast %210 : f32 to vector<2x32x32xf32>
    %214 = arith.mulf %213, %212 : vector<2x32x32xf32>
    %215 = arith.addf %209, %214 : vector<2x32x32xf32>
    %c26 = arith.constant 26 : index
    %216 = memref.load %arg3[%c26] : memref<72xf32, #tpu.memory_space<smem>>
    %217 = vector.extract_strided_slice %58 {offsets = [0, 2, 0, 0], sizes = [2, 1, 32, 32], strides = [1, 1, 1, 1]} : vector<2x4x32x32xf32> to vector<2x1x32x32xf32>
    %218 = vector.shape_cast %217 : vector<2x1x32x32xf32> to vector<2x32x32xf32>
    %219 = vector.broadcast %216 : f32 to vector<2x32x32xf32>
    %220 = arith.mulf %219, %218 : vector<2x32x32xf32>
    %221 = arith.addf %215, %220 : vector<2x32x32xf32>
    %c27 = arith.constant 27 : index
    %222 = memref.load %arg3[%c27] : memref<72xf32, #tpu.memory_space<smem>>
    %223 = vector.extract_strided_slice %50 {offsets = [0, 3, 0, 0], sizes = [2, 1, 32, 32], strides = [1, 1, 1, 1]} : vector<2x4x32x32xf32> to vector<2x1x32x32xf32>
    %224 = vector.shape_cast %223 : vector<2x1x32x32xf32> to vector<2x32x32xf32>
    %225 = vector.broadcast %222 : f32 to vector<2x32x32xf32>
    %226 = arith.mulf %225, %224 : vector<2x32x32xf32>
    %227 = arith.addf %221, %226 : vector<2x32x32xf32>
    %c28 = arith.constant 28 : index
    %228 = memref.load %arg3[%c28] : memref<72xf32, #tpu.memory_space<smem>>
    %229 = vector.extract_strided_slice %51 {offsets = [0, 3, 0, 0], sizes = [2, 1, 32, 32], strides = [1, 1, 1, 1]} : vector<2x4x32x32xf32> to vector<2x1x32x32xf32>
    %230 = vector.shape_cast %229 : vector<2x1x32x32xf32> to vector<2x32x32xf32>
    %231 = vector.broadcast %228 : f32 to vector<2x32x32xf32>
    %232 = arith.mulf %231, %230 : vector<2x32x32xf32>
    %233 = arith.addf %227, %232 : vector<2x32x32xf32>
    %c29 = arith.constant 29 : index
    %234 = memref.load %arg3[%c29] : memref<72xf32, #tpu.memory_space<smem>>
    %235 = vector.extract_strided_slice %52 {offsets = [0, 3, 0, 0], sizes = [2, 1, 32, 32], strides = [1, 1, 1, 1]} : vector<2x4x32x32xf32> to vector<2x1x32x32xf32>
    %236 = vector.shape_cast %235 : vector<2x1x32x32xf32> to vector<2x32x32xf32>
    %237 = vector.broadcast %234 : f32 to vector<2x32x32xf32>
    %238 = arith.mulf %237, %236 : vector<2x32x32xf32>
    %239 = arith.addf %233, %238 : vector<2x32x32xf32>
    %c30 = arith.constant 30 : index
    %240 = memref.load %arg3[%c30] : memref<72xf32, #tpu.memory_space<smem>>
    %241 = vector.extract_strided_slice %53 {offsets = [0, 3, 0, 0], sizes = [2, 1, 32, 32], strides = [1, 1, 1, 1]} : vector<2x4x32x32xf32> to vector<2x1x32x32xf32>
    %242 = vector.shape_cast %241 : vector<2x1x32x32xf32> to vector<2x32x32xf32>
    %243 = vector.broadcast %240 : f32 to vector<2x32x32xf32>
    %244 = arith.mulf %243, %242 : vector<2x32x32xf32>
    %245 = arith.addf %239, %244 : vector<2x32x32xf32>
    %c31 = arith.constant 31 : index
    %246 = memref.load %arg3[%c31] : memref<72xf32, #tpu.memory_space<smem>>
    %247 = vector.extract_strided_slice %54 {offsets = [0, 3, 0, 0], sizes = [2, 1, 32, 32], strides = [1, 1, 1, 1]} : vector<2x4x32x32xf32> to vector<2x1x32x32xf32>
    %248 = vector.shape_cast %247 : vector<2x1x32x32xf32> to vector<2x32x32xf32>
    %249 = vector.broadcast %246 : f32 to vector<2x32x32xf32>
    %250 = arith.mulf %249, %248 : vector<2x32x32xf32>
    %251 = arith.addf %245, %250 : vector<2x32x32xf32>
    %c32 = arith.constant 32 : index
    %252 = memref.load %arg3[%c32] : memref<72xf32, #tpu.memory_space<smem>>
    %253 = vector.extract_strided_slice %55 {offsets = [0, 3, 0, 0], sizes = [2, 1, 32, 32], strides = [1, 1, 1, 1]} : vector<2x4x32x32xf32> to vector<2x1x32x32xf32>
    %254 = vector.shape_cast %253 : vector<2x1x32x32xf32> to vector<2x32x32xf32>
    %255 = vector.broadcast %252 : f32 to vector<2x32x32xf32>
    %256 = arith.mulf %255, %254 : vector<2x32x32xf32>
    %257 = arith.addf %251, %256 : vector<2x32x32xf32>
    %c33_44 = arith.constant 33 : index
    %258 = memref.load %arg3[%c33_44] : memref<72xf32, #tpu.memory_space<smem>>
    %259 = vector.extract_strided_slice %56 {offsets = [0, 3, 0, 0], sizes = [2, 1, 32, 32], strides = [1, 1, 1, 1]} : vector<2x4x32x32xf32> to vector<2x1x32x32xf32>
    %260 = vector.shape_cast %259 : vector<2x1x32x32xf32> to vector<2x32x32xf32>
    %261 = vector.broadcast %258 : f32 to vector<2x32x32xf32>
    %262 = arith.mulf %261, %260 : vector<2x32x32xf32>
    %263 = arith.addf %257, %262 : vector<2x32x32xf32>
    %c34 = arith.constant 34 : index
    %264 = memref.load %arg3[%c34] : memref<72xf32, #tpu.memory_space<smem>>
    %265 = vector.extract_strided_slice %57 {offsets = [0, 3, 0, 0], sizes = [2, 1, 32, 32], strides = [1, 1, 1, 1]} : vector<2x4x32x32xf32> to vector<2x1x32x32xf32>
    %266 = vector.shape_cast %265 : vector<2x1x32x32xf32> to vector<2x32x32xf32>
    %267 = vector.broadcast %264 : f32 to vector<2x32x32xf32>
    %268 = arith.mulf %267, %266 : vector<2x32x32xf32>
    %269 = arith.addf %263, %268 : vector<2x32x32xf32>
    %c35 = arith.constant 35 : index
    %270 = memref.load %arg3[%c35] : memref<72xf32, #tpu.memory_space<smem>>
    %271 = vector.extract_strided_slice %58 {offsets = [0, 3, 0, 0], sizes = [2, 1, 32, 32], strides = [1, 1, 1, 1]} : vector<2x4x32x32xf32> to vector<2x1x32x32xf32>
    %272 = vector.shape_cast %271 : vector<2x1x32x32xf32> to vector<2x32x32xf32>
    %273 = vector.broadcast %270 : f32 to vector<2x32x32xf32>
    %274 = arith.mulf %273, %272 : vector<2x32x32xf32>
    %275 = arith.addf %269, %274 : vector<2x32x32xf32>
    %c0_45 = arith.constant 0 : index
    %276 = memref.load %arg4[%c0_45] : memref<2xf32, #tpu.memory_space<smem>>
    %277 = vector.broadcast %276 : f32 to vector<2x32x32xf32>
    %278 = arith.addf %275, %277 : vector<2x32x32xf32>
    %279 = vector.shape_cast %278 : vector<2x32x32xf32> to vector<1x2x32x32xf32>
    %cst_46 = arith.constant dense<0.000000e+00> : vector<1xf32>
    %280 = vector.multi_reduction <add>, %279, %cst_46 [1, 2, 3] : vector<1x2x32x32xf32> to vector<1xf32>
    %281 = vector.shape_cast %280 : vector<1xf32> to vector<1x1x1x1xf32>
    %282 = vector.extract %281[0, 0, 0, 0] : f32 from vector<1x1x1x1xf32>
    %283 = vector.broadcast %282 : f32 to vector<1x1x1xf32>
    %284 = arith.mulf %278, %278 : vector<2x32x32xf32>
    %285 = vector.shape_cast %284 : vector<2x32x32xf32> to vector<1x2x32x32xf32>
    %cst_47 = arith.constant dense<0.000000e+00> : vector<1xf32>
    %286 = vector.multi_reduction <add>, %285, %cst_47 [1, 2, 3] : vector<1x2x32x32xf32> to vector<1xf32>
    %287 = vector.shape_cast %286 : vector<1xf32> to vector<1x1x1x1xf32>
    %288 = vector.extract %287[0, 0, 0, 0] : f32 from vector<1x1x1x1xf32>
    %289 = vector.broadcast %288 : f32 to vector<1x1x1xf32>
    %cst_48 = arith.constant 4.8828125E-4 : f32
    %290 = vector.broadcast %cst_48 : f32 to vector<1x1x1xf32>
    %291 = arith.mulf %283, %290 : vector<1x1x1xf32>
    %cst_49 = arith.constant 4.8828125E-4 : f32
    %292 = vector.broadcast %cst_49 : f32 to vector<1x1x1xf32>
    %293 = arith.mulf %289, %292 : vector<1x1x1xf32>
    %294 = arith.mulf %291, %291 : vector<1x1x1xf32>
    %295 = arith.subf %293, %294 : vector<1x1x1xf32>
    %296 = vector.broadcast %291 : vector<1x1x1xf32> to vector<2x32x32xf32>
    %297 = arith.subf %278, %296 : vector<2x32x32xf32>
    %cst_50 = arith.constant 9.99999974E-6 : f32
    %298 = vector.broadcast %cst_50 : f32 to vector<1x1x1xf32>
    %299 = arith.addf %295, %298 : vector<1x1x1xf32>
    %300 = math.rsqrt %299 : vector<1x1x1xf32>
    %301 = vector.broadcast %300 : vector<1x1x1xf32> to vector<2x32x32xf32>
    %302 = arith.mulf %297, %301 : vector<2x32x32xf32>
    %c0_51 = arith.constant 0 : index
    %303 = memref.load %arg5[%c0_51] : memref<2xf32, #tpu.memory_space<smem>>
    %304 = vector.broadcast %303 : f32 to vector<2x32x32xf32>
    %305 = arith.mulf %302, %304 : vector<2x32x32xf32>
    %c0_52 = arith.constant 0 : index
    %306 = memref.load %arg6[%c0_52] : memref<2xf32, #tpu.memory_space<smem>>
    %307 = vector.broadcast %306 : f32 to vector<2x32x32xf32>
    %308 = arith.addf %305, %307 : vector<2x32x32xf32>
    %cst_53 = arith.constant 0.000000e+00 : f32
    %309 = vector.broadcast %cst_53 : f32 to vector<2x32x32xf32>
    %310 = arith.maximumf %308, %309 : vector<2x32x32xf32>
    %311 = vector.shape_cast %310 : vector<2x32x32xf32> to vector<2x1x32x32xf32>
    %cst_54 = arith.constant 0.000000e+00 : f32
    %312 = vector.broadcast %cst_54 : f32 to vector<2x32x32xf32>
    %c36 = arith.constant 36 : index
    %313 = memref.load %arg3[%c36] : memref<72xf32, #tpu.memory_space<smem>>
    %314 = vector.extract_strided_slice %50 {offsets = [0, 0, 0, 0], sizes = [2, 1, 32, 32], strides = [1, 1, 1, 1]} : vector<2x4x32x32xf32> to vector<2x1x32x32xf32>
    %315 = vector.shape_cast %314 : vector<2x1x32x32xf32> to vector<2x32x32xf32>
    %316 = vector.broadcast %313 : f32 to vector<2x32x32xf32>
    %317 = arith.mulf %316, %315 : vector<2x32x32xf32>
    %318 = arith.addf %312, %317 : vector<2x32x32xf32>
    %c37 = arith.constant 37 : index
    %319 = memref.load %arg3[%c37] : memref<72xf32, #tpu.memory_space<smem>>
    %320 = vector.extract_strided_slice %51 {offsets = [0, 0, 0, 0], sizes = [2, 1, 32, 32], strides = [1, 1, 1, 1]} : vector<2x4x32x32xf32> to vector<2x1x32x32xf32>
    %321 = vector.shape_cast %320 : vector<2x1x32x32xf32> to vector<2x32x32xf32>
    %322 = vector.broadcast %319 : f32 to vector<2x32x32xf32>
    %323 = arith.mulf %322, %321 : vector<2x32x32xf32>
    %324 = arith.addf %318, %323 : vector<2x32x32xf32>
    %c38 = arith.constant 38 : index
    %325 = memref.load %arg3[%c38] : memref<72xf32, #tpu.memory_space<smem>>
    %326 = vector.extract_strided_slice %52 {offsets = [0, 0, 0, 0], sizes = [2, 1, 32, 32], strides = [1, 1, 1, 1]} : vector<2x4x32x32xf32> to vector<2x1x32x32xf32>
    %327 = vector.shape_cast %326 : vector<2x1x32x32xf32> to vector<2x32x32xf32>
    %328 = vector.broadcast %325 : f32 to vector<2x32x32xf32>
    %329 = arith.mulf %328, %327 : vector<2x32x32xf32>
    %330 = arith.addf %324, %329 : vector<2x32x32xf32>
    %c39 = arith.constant 39 : index
    %331 = memref.load %arg3[%c39] : memref<72xf32, #tpu.memory_space<smem>>
    %332 = vector.extract_strided_slice %53 {offsets = [0, 0, 0, 0], sizes = [2, 1, 32, 32], strides = [1, 1, 1, 1]} : vector<2x4x32x32xf32> to vector<2x1x32x32xf32>
    %333 = vector.shape_cast %332 : vector<2x1x32x32xf32> to vector<2x32x32xf32>
    %334 = vector.broadcast %331 : f32 to vector<2x32x32xf32>
    %335 = arith.mulf %334, %333 : vector<2x32x32xf32>
    %336 = arith.addf %330, %335 : vector<2x32x32xf32>
    %c40 = arith.constant 40 : index
    %337 = memref.load %arg3[%c40] : memref<72xf32, #tpu.memory_space<smem>>
    %338 = vector.extract_strided_slice %54 {offsets = [0, 0, 0, 0], sizes = [2, 1, 32, 32], strides = [1, 1, 1, 1]} : vector<2x4x32x32xf32> to vector<2x1x32x32xf32>
    %339 = vector.shape_cast %338 : vector<2x1x32x32xf32> to vector<2x32x32xf32>
    %340 = vector.broadcast %337 : f32 to vector<2x32x32xf32>
    %341 = arith.mulf %340, %339 : vector<2x32x32xf32>
    %342 = arith.addf %336, %341 : vector<2x32x32xf32>
    %c41 = arith.constant 41 : index
    %343 = memref.load %arg3[%c41] : memref<72xf32, #tpu.memory_space<smem>>
    %344 = vector.extract_strided_slice %55 {offsets = [0, 0, 0, 0], sizes = [2, 1, 32, 32], strides = [1, 1, 1, 1]} : vector<2x4x32x32xf32> to vector<2x1x32x32xf32>
    %345 = vector.shape_cast %344 : vector<2x1x32x32xf32> to vector<2x32x32xf32>
    %346 = vector.broadcast %343 : f32 to vector<2x32x32xf32>
    %347 = arith.mulf %346, %345 : vector<2x32x32xf32>
    %348 = arith.addf %342, %347 : vector<2x32x32xf32>
    %c42 = arith.constant 42 : index
    %349 = memref.load %arg3[%c42] : memref<72xf32, #tpu.memory_space<smem>>
    %350 = vector.extract_strided_slice %56 {offsets = [0, 0, 0, 0], sizes = [2, 1, 32, 32], strides = [1, 1, 1, 1]} : vector<2x4x32x32xf32> to vector<2x1x32x32xf32>
    %351 = vector.shape_cast %350 : vector<2x1x32x32xf32> to vector<2x32x32xf32>
    %352 = vector.broadcast %349 : f32 to vector<2x32x32xf32>
    %353 = arith.mulf %352, %351 : vector<2x32x32xf32>
    %354 = arith.addf %348, %353 : vector<2x32x32xf32>
    %c43 = arith.constant 43 : index
    %355 = memref.load %arg3[%c43] : memref<72xf32, #tpu.memory_space<smem>>
    %356 = vector.extract_strided_slice %57 {offsets = [0, 0, 0, 0], sizes = [2, 1, 32, 32], strides = [1, 1, 1, 1]} : vector<2x4x32x32xf32> to vector<2x1x32x32xf32>
    %357 = vector.shape_cast %356 : vector<2x1x32x32xf32> to vector<2x32x32xf32>
    %358 = vector.broadcast %355 : f32 to vector<2x32x32xf32>
    %359 = arith.mulf %358, %357 : vector<2x32x32xf32>
    %360 = arith.addf %354, %359 : vector<2x32x32xf32>
    %c44 = arith.constant 44 : index
    %361 = memref.load %arg3[%c44] : memref<72xf32, #tpu.memory_space<smem>>
    %362 = vector.extract_strided_slice %58 {offsets = [0, 0, 0, 0], sizes = [2, 1, 32, 32], strides = [1, 1, 1, 1]} : vector<2x4x32x32xf32> to vector<2x1x32x32xf32>
    %363 = vector.shape_cast %362 : vector<2x1x32x32xf32> to vector<2x32x32xf32>
    %364 = vector.broadcast %361 : f32 to vector<2x32x32xf32>
    %365 = arith.mulf %364, %363 : vector<2x32x32xf32>
    %366 = arith.addf %360, %365 : vector<2x32x32xf32>
    %c45 = arith.constant 45 : index
    %367 = memref.load %arg3[%c45] : memref<72xf32, #tpu.memory_space<smem>>
    %368 = vector.extract_strided_slice %50 {offsets = [0, 1, 0, 0], sizes = [2, 1, 32, 32], strides = [1, 1, 1, 1]} : vector<2x4x32x32xf32> to vector<2x1x32x32xf32>
    %369 = vector.shape_cast %368 : vector<2x1x32x32xf32> to vector<2x32x32xf32>
    %370 = vector.broadcast %367 : f32 to vector<2x32x32xf32>
    %371 = arith.mulf %370, %369 : vector<2x32x32xf32>
    %372 = arith.addf %366, %371 : vector<2x32x32xf32>
    %c46 = arith.constant 46 : index
    %373 = memref.load %arg3[%c46] : memref<72xf32, #tpu.memory_space<smem>>
    %374 = vector.extract_strided_slice %51 {offsets = [0, 1, 0, 0], sizes = [2, 1, 32, 32], strides = [1, 1, 1, 1]} : vector<2x4x32x32xf32> to vector<2x1x32x32xf32>
    %375 = vector.shape_cast %374 : vector<2x1x32x32xf32> to vector<2x32x32xf32>
    %376 = vector.broadcast %373 : f32 to vector<2x32x32xf32>
    %377 = arith.mulf %376, %375 : vector<2x32x32xf32>
    %378 = arith.addf %372, %377 : vector<2x32x32xf32>
    %c47 = arith.constant 47 : index
    %379 = memref.load %arg3[%c47] : memref<72xf32, #tpu.memory_space<smem>>
    %380 = vector.extract_strided_slice %52 {offsets = [0, 1, 0, 0], sizes = [2, 1, 32, 32], strides = [1, 1, 1, 1]} : vector<2x4x32x32xf32> to vector<2x1x32x32xf32>
    %381 = vector.shape_cast %380 : vector<2x1x32x32xf32> to vector<2x32x32xf32>
    %382 = vector.broadcast %379 : f32 to vector<2x32x32xf32>
    %383 = arith.mulf %382, %381 : vector<2x32x32xf32>
    %384 = arith.addf %378, %383 : vector<2x32x32xf32>
    %c48 = arith.constant 48 : index
    %385 = memref.load %arg3[%c48] : memref<72xf32, #tpu.memory_space<smem>>
    %386 = vector.extract_strided_slice %53 {offsets = [0, 1, 0, 0], sizes = [2, 1, 32, 32], strides = [1, 1, 1, 1]} : vector<2x4x32x32xf32> to vector<2x1x32x32xf32>
    %387 = vector.shape_cast %386 : vector<2x1x32x32xf32> to vector<2x32x32xf32>
    %388 = vector.broadcast %385 : f32 to vector<2x32x32xf32>
    %389 = arith.mulf %388, %387 : vector<2x32x32xf32>
    %390 = arith.addf %384, %389 : vector<2x32x32xf32>
    %c49 = arith.constant 49 : index
    %391 = memref.load %arg3[%c49] : memref<72xf32, #tpu.memory_space<smem>>
    %392 = vector.extract_strided_slice %54 {offsets = [0, 1, 0, 0], sizes = [2, 1, 32, 32], strides = [1, 1, 1, 1]} : vector<2x4x32x32xf32> to vector<2x1x32x32xf32>
    %393 = vector.shape_cast %392 : vector<2x1x32x32xf32> to vector<2x32x32xf32>
    %394 = vector.broadcast %391 : f32 to vector<2x32x32xf32>
    %395 = arith.mulf %394, %393 : vector<2x32x32xf32>
    %396 = arith.addf %390, %395 : vector<2x32x32xf32>
    %c50 = arith.constant 50 : index
    %397 = memref.load %arg3[%c50] : memref<72xf32, #tpu.memory_space<smem>>
    %398 = vector.extract_strided_slice %55 {offsets = [0, 1, 0, 0], sizes = [2, 1, 32, 32], strides = [1, 1, 1, 1]} : vector<2x4x32x32xf32> to vector<2x1x32x32xf32>
    %399 = vector.shape_cast %398 : vector<2x1x32x32xf32> to vector<2x32x32xf32>
    %400 = vector.broadcast %397 : f32 to vector<2x32x32xf32>
    %401 = arith.mulf %400, %399 : vector<2x32x32xf32>
    %402 = arith.addf %396, %401 : vector<2x32x32xf32>
    %c51 = arith.constant 51 : index
    %403 = memref.load %arg3[%c51] : memref<72xf32, #tpu.memory_space<smem>>
    %404 = vector.extract_strided_slice %56 {offsets = [0, 1, 0, 0], sizes = [2, 1, 32, 32], strides = [1, 1, 1, 1]} : vector<2x4x32x32xf32> to vector<2x1x32x32xf32>
    %405 = vector.shape_cast %404 : vector<2x1x32x32xf32> to vector<2x32x32xf32>
    %406 = vector.broadcast %403 : f32 to vector<2x32x32xf32>
    %407 = arith.mulf %406, %405 : vector<2x32x32xf32>
    %408 = arith.addf %402, %407 : vector<2x32x32xf32>
    %c52 = arith.constant 52 : index
    %409 = memref.load %arg3[%c52] : memref<72xf32, #tpu.memory_space<smem>>
    %410 = vector.extract_strided_slice %57 {offsets = [0, 1, 0, 0], sizes = [2, 1, 32, 32], strides = [1, 1, 1, 1]} : vector<2x4x32x32xf32> to vector<2x1x32x32xf32>
    %411 = vector.shape_cast %410 : vector<2x1x32x32xf32> to vector<2x32x32xf32>
    %412 = vector.broadcast %409 : f32 to vector<2x32x32xf32>
    %413 = arith.mulf %412, %411 : vector<2x32x32xf32>
    %414 = arith.addf %408, %413 : vector<2x32x32xf32>
    %c53 = arith.constant 53 : index
    %415 = memref.load %arg3[%c53] : memref<72xf32, #tpu.memory_space<smem>>
    %416 = vector.extract_strided_slice %58 {offsets = [0, 1, 0, 0], sizes = [2, 1, 32, 32], strides = [1, 1, 1, 1]} : vector<2x4x32x32xf32> to vector<2x1x32x32xf32>
    %417 = vector.shape_cast %416 : vector<2x1x32x32xf32> to vector<2x32x32xf32>
    %418 = vector.broadcast %415 : f32 to vector<2x32x32xf32>
    %419 = arith.mulf %418, %417 : vector<2x32x32xf32>
    %420 = arith.addf %414, %419 : vector<2x32x32xf32>
    %c54 = arith.constant 54 : index
    %421 = memref.load %arg3[%c54] : memref<72xf32, #tpu.memory_space<smem>>
    %422 = vector.extract_strided_slice %50 {offsets = [0, 2, 0, 0], sizes = [2, 1, 32, 32], strides = [1, 1, 1, 1]} : vector<2x4x32x32xf32> to vector<2x1x32x32xf32>
    %423 = vector.shape_cast %422 : vector<2x1x32x32xf32> to vector<2x32x32xf32>
    %424 = vector.broadcast %421 : f32 to vector<2x32x32xf32>
    %425 = arith.mulf %424, %423 : vector<2x32x32xf32>
    %426 = arith.addf %420, %425 : vector<2x32x32xf32>
    %c55 = arith.constant 55 : index
    %427 = memref.load %arg3[%c55] : memref<72xf32, #tpu.memory_space<smem>>
    %428 = vector.extract_strided_slice %51 {offsets = [0, 2, 0, 0], sizes = [2, 1, 32, 32], strides = [1, 1, 1, 1]} : vector<2x4x32x32xf32> to vector<2x1x32x32xf32>
    %429 = vector.shape_cast %428 : vector<2x1x32x32xf32> to vector<2x32x32xf32>
    %430 = vector.broadcast %427 : f32 to vector<2x32x32xf32>
    %431 = arith.mulf %430, %429 : vector<2x32x32xf32>
    %432 = arith.addf %426, %431 : vector<2x32x32xf32>
    %c56 = arith.constant 56 : index
    %433 = memref.load %arg3[%c56] : memref<72xf32, #tpu.memory_space<smem>>
    %434 = vector.extract_strided_slice %52 {offsets = [0, 2, 0, 0], sizes = [2, 1, 32, 32], strides = [1, 1, 1, 1]} : vector<2x4x32x32xf32> to vector<2x1x32x32xf32>
    %435 = vector.shape_cast %434 : vector<2x1x32x32xf32> to vector<2x32x32xf32>
    %436 = vector.broadcast %433 : f32 to vector<2x32x32xf32>
    %437 = arith.mulf %436, %435 : vector<2x32x32xf32>
    %438 = arith.addf %432, %437 : vector<2x32x32xf32>
    %c57 = arith.constant 57 : index
    %439 = memref.load %arg3[%c57] : memref<72xf32, #tpu.memory_space<smem>>
    %440 = vector.extract_strided_slice %53 {offsets = [0, 2, 0, 0], sizes = [2, 1, 32, 32], strides = [1, 1, 1, 1]} : vector<2x4x32x32xf32> to vector<2x1x32x32xf32>
    %441 = vector.shape_cast %440 : vector<2x1x32x32xf32> to vector<2x32x32xf32>
    %442 = vector.broadcast %439 : f32 to vector<2x32x32xf32>
    %443 = arith.mulf %442, %441 : vector<2x32x32xf32>
    %444 = arith.addf %438, %443 : vector<2x32x32xf32>
    %c58 = arith.constant 58 : index
    %445 = memref.load %arg3[%c58] : memref<72xf32, #tpu.memory_space<smem>>
    %446 = vector.extract_strided_slice %54 {offsets = [0, 2, 0, 0], sizes = [2, 1, 32, 32], strides = [1, 1, 1, 1]} : vector<2x4x32x32xf32> to vector<2x1x32x32xf32>
    %447 = vector.shape_cast %446 : vector<2x1x32x32xf32> to vector<2x32x32xf32>
    %448 = vector.broadcast %445 : f32 to vector<2x32x32xf32>
    %449 = arith.mulf %448, %447 : vector<2x32x32xf32>
    %450 = arith.addf %444, %449 : vector<2x32x32xf32>
    %c59 = arith.constant 59 : index
    %451 = memref.load %arg3[%c59] : memref<72xf32, #tpu.memory_space<smem>>
    %452 = vector.extract_strided_slice %55 {offsets = [0, 2, 0, 0], sizes = [2, 1, 32, 32], strides = [1, 1, 1, 1]} : vector<2x4x32x32xf32> to vector<2x1x32x32xf32>
    %453 = vector.shape_cast %452 : vector<2x1x32x32xf32> to vector<2x32x32xf32>
    %454 = vector.broadcast %451 : f32 to vector<2x32x32xf32>
    %455 = arith.mulf %454, %453 : vector<2x32x32xf32>
    %456 = arith.addf %450, %455 : vector<2x32x32xf32>
    %c60 = arith.constant 60 : index
    %457 = memref.load %arg3[%c60] : memref<72xf32, #tpu.memory_space<smem>>
    %458 = vector.extract_strided_slice %56 {offsets = [0, 2, 0, 0], sizes = [2, 1, 32, 32], strides = [1, 1, 1, 1]} : vector<2x4x32x32xf32> to vector<2x1x32x32xf32>
    %459 = vector.shape_cast %458 : vector<2x1x32x32xf32> to vector<2x32x32xf32>
    %460 = vector.broadcast %457 : f32 to vector<2x32x32xf32>
    %461 = arith.mulf %460, %459 : vector<2x32x32xf32>
    %462 = arith.addf %456, %461 : vector<2x32x32xf32>
    %c61 = arith.constant 61 : index
    %463 = memref.load %arg3[%c61] : memref<72xf32, #tpu.memory_space<smem>>
    %464 = vector.extract_strided_slice %57 {offsets = [0, 2, 0, 0], sizes = [2, 1, 32, 32], strides = [1, 1, 1, 1]} : vector<2x4x32x32xf32> to vector<2x1x32x32xf32>
    %465 = vector.shape_cast %464 : vector<2x1x32x32xf32> to vector<2x32x32xf32>
    %466 = vector.broadcast %463 : f32 to vector<2x32x32xf32>
    %467 = arith.mulf %466, %465 : vector<2x32x32xf32>
    %468 = arith.addf %462, %467 : vector<2x32x32xf32>
    %c62 = arith.constant 62 : index
    %469 = memref.load %arg3[%c62] : memref<72xf32, #tpu.memory_space<smem>>
    %470 = vector.extract_strided_slice %58 {offsets = [0, 2, 0, 0], sizes = [2, 1, 32, 32], strides = [1, 1, 1, 1]} : vector<2x4x32x32xf32> to vector<2x1x32x32xf32>
    %471 = vector.shape_cast %470 : vector<2x1x32x32xf32> to vector<2x32x32xf32>
    %472 = vector.broadcast %469 : f32 to vector<2x32x32xf32>
    %473 = arith.mulf %472, %471 : vector<2x32x32xf32>
    %474 = arith.addf %468, %473 : vector<2x32x32xf32>
    %c63 = arith.constant 63 : index
    %475 = memref.load %arg3[%c63] : memref<72xf32, #tpu.memory_space<smem>>
    %476 = vector.extract_strided_slice %50 {offsets = [0, 3, 0, 0], sizes = [2, 1, 32, 32], strides = [1, 1, 1, 1]} : vector<2x4x32x32xf32> to vector<2x1x32x32xf32>
    %477 = vector.shape_cast %476 : vector<2x1x32x32xf32> to vector<2x32x32xf32>
    %478 = vector.broadcast %475 : f32 to vector<2x32x32xf32>
    %479 = arith.mulf %478, %477 : vector<2x32x32xf32>
    %480 = arith.addf %474, %479 : vector<2x32x32xf32>
    %c64 = arith.constant 64 : index
    %481 = memref.load %arg3[%c64] : memref<72xf32, #tpu.memory_space<smem>>
    %482 = vector.extract_strided_slice %51 {offsets = [0, 3, 0, 0], sizes = [2, 1, 32, 32], strides = [1, 1, 1, 1]} : vector<2x4x32x32xf32> to vector<2x1x32x32xf32>
    %483 = vector.shape_cast %482 : vector<2x1x32x32xf32> to vector<2x32x32xf32>
    %484 = vector.broadcast %481 : f32 to vector<2x32x32xf32>
    %485 = arith.mulf %484, %483 : vector<2x32x32xf32>
    %486 = arith.addf %480, %485 : vector<2x32x32xf32>
    %c65 = arith.constant 65 : index
    %487 = memref.load %arg3[%c65] : memref<72xf32, #tpu.memory_space<smem>>
    %488 = vector.extract_strided_slice %52 {offsets = [0, 3, 0, 0], sizes = [2, 1, 32, 32], strides = [1, 1, 1, 1]} : vector<2x4x32x32xf32> to vector<2x1x32x32xf32>
    %489 = vector.shape_cast %488 : vector<2x1x32x32xf32> to vector<2x32x32xf32>
    %490 = vector.broadcast %487 : f32 to vector<2x32x32xf32>
    %491 = arith.mulf %490, %489 : vector<2x32x32xf32>
    %492 = arith.addf %486, %491 : vector<2x32x32xf32>
    %c66 = arith.constant 66 : index
    %493 = memref.load %arg3[%c66] : memref<72xf32, #tpu.memory_space<smem>>
    %494 = vector.extract_strided_slice %53 {offsets = [0, 3, 0, 0], sizes = [2, 1, 32, 32], strides = [1, 1, 1, 1]} : vector<2x4x32x32xf32> to vector<2x1x32x32xf32>
    %495 = vector.shape_cast %494 : vector<2x1x32x32xf32> to vector<2x32x32xf32>
    %496 = vector.broadcast %493 : f32 to vector<2x32x32xf32>
    %497 = arith.mulf %496, %495 : vector<2x32x32xf32>
    %498 = arith.addf %492, %497 : vector<2x32x32xf32>
    %c67 = arith.constant 67 : index
    %499 = memref.load %arg3[%c67] : memref<72xf32, #tpu.memory_space<smem>>
    %500 = vector.extract_strided_slice %54 {offsets = [0, 3, 0, 0], sizes = [2, 1, 32, 32], strides = [1, 1, 1, 1]} : vector<2x4x32x32xf32> to vector<2x1x32x32xf32>
    %501 = vector.shape_cast %500 : vector<2x1x32x32xf32> to vector<2x32x32xf32>
    %502 = vector.broadcast %499 : f32 to vector<2x32x32xf32>
    %503 = arith.mulf %502, %501 : vector<2x32x32xf32>
    %504 = arith.addf %498, %503 : vector<2x32x32xf32>
    %c68 = arith.constant 68 : index
    %505 = memref.load %arg3[%c68] : memref<72xf32, #tpu.memory_space<smem>>
    %506 = vector.extract_strided_slice %55 {offsets = [0, 3, 0, 0], sizes = [2, 1, 32, 32], strides = [1, 1, 1, 1]} : vector<2x4x32x32xf32> to vector<2x1x32x32xf32>
    %507 = vector.shape_cast %506 : vector<2x1x32x32xf32> to vector<2x32x32xf32>
    %508 = vector.broadcast %505 : f32 to vector<2x32x32xf32>
    %509 = arith.mulf %508, %507 : vector<2x32x32xf32>
    %510 = arith.addf %504, %509 : vector<2x32x32xf32>
    %c69 = arith.constant 69 : index
    %511 = memref.load %arg3[%c69] : memref<72xf32, #tpu.memory_space<smem>>
    %512 = vector.extract_strided_slice %56 {offsets = [0, 3, 0, 0], sizes = [2, 1, 32, 32], strides = [1, 1, 1, 1]} : vector<2x4x32x32xf32> to vector<2x1x32x32xf32>
    %513 = vector.shape_cast %512 : vector<2x1x32x32xf32> to vector<2x32x32xf32>
    %514 = vector.broadcast %511 : f32 to vector<2x32x32xf32>
    %515 = arith.mulf %514, %513 : vector<2x32x32xf32>
    %516 = arith.addf %510, %515 : vector<2x32x32xf32>
    %c70 = arith.constant 70 : index
    %517 = memref.load %arg3[%c70] : memref<72xf32, #tpu.memory_space<smem>>
    %518 = vector.extract_strided_slice %57 {offsets = [0, 3, 0, 0], sizes = [2, 1, 32, 32], strides = [1, 1, 1, 1]} : vector<2x4x32x32xf32> to vector<2x1x32x32xf32>
    %519 = vector.shape_cast %518 : vector<2x1x32x32xf32> to vector<2x32x32xf32>
    %520 = vector.broadcast %517 : f32 to vector<2x32x32xf32>
    %521 = arith.mulf %520, %519 : vector<2x32x32xf32>
    %522 = arith.addf %516, %521 : vector<2x32x32xf32>
    %c71 = arith.constant 71 : index
    %523 = memref.load %arg3[%c71] : memref<72xf32, #tpu.memory_space<smem>>
    %524 = vector.extract_strided_slice %58 {offsets = [0, 3, 0, 0], sizes = [2, 1, 32, 32], strides = [1, 1, 1, 1]} : vector<2x4x32x32xf32> to vector<2x1x32x32xf32>
    %525 = vector.shape_cast %524 : vector<2x1x32x32xf32> to vector<2x32x32xf32>
    %526 = vector.broadcast %523 : f32 to vector<2x32x32xf32>
    %527 = arith.mulf %526, %525 : vector<2x32x32xf32>
    %528 = arith.addf %522, %527 : vector<2x32x32xf32>
    %c1_55 = arith.constant 1 : index
    %529 = memref.load %arg4[%c1_55] : memref<2xf32, #tpu.memory_space<smem>>
    %530 = vector.broadcast %529 : f32 to vector<2x32x32xf32>
    %531 = arith.addf %528, %530 : vector<2x32x32xf32>
    %532 = vector.shape_cast %531 : vector<2x32x32xf32> to vector<1x2x32x32xf32>
    %cst_56 = arith.constant dense<0.000000e+00> : vector<1xf32>
    %533 = vector.multi_reduction <add>, %532, %cst_56 [1, 2, 3] : vector<1x2x32x32xf32> to vector<1xf32>
    %534 = vector.shape_cast %533 : vector<1xf32> to vector<1x1x1x1xf32>
    %535 = vector.extract %534[0, 0, 0, 0] : f32 from vector<1x1x1x1xf32>
    %536 = vector.broadcast %535 : f32 to vector<1x1x1xf32>
    %537 = arith.mulf %531, %531 : vector<2x32x32xf32>
    %538 = vector.shape_cast %537 : vector<2x32x32xf32> to vector<1x2x32x32xf32>
    %cst_57 = arith.constant dense<0.000000e+00> : vector<1xf32>
    %539 = vector.multi_reduction <add>, %538, %cst_57 [1, 2, 3] : vector<1x2x32x32xf32> to vector<1xf32>
    %540 = vector.shape_cast %539 : vector<1xf32> to vector<1x1x1x1xf32>
    %541 = vector.extract %540[0, 0, 0, 0] : f32 from vector<1x1x1x1xf32>
    %542 = vector.broadcast %541 : f32 to vector<1x1x1xf32>
    %cst_58 = arith.constant 4.8828125E-4 : f32
    %543 = vector.broadcast %cst_58 : f32 to vector<1x1x1xf32>
    %544 = arith.mulf %536, %543 : vector<1x1x1xf32>
    %cst_59 = arith.constant 4.8828125E-4 : f32
    %545 = vector.broadcast %cst_59 : f32 to vector<1x1x1xf32>
    %546 = arith.mulf %542, %545 : vector<1x1x1xf32>
    %547 = arith.mulf %544, %544 : vector<1x1x1xf32>
    %548 = arith.subf %546, %547 : vector<1x1x1xf32>
    %549 = vector.broadcast %544 : vector<1x1x1xf32> to vector<2x32x32xf32>
    %550 = arith.subf %531, %549 : vector<2x32x32xf32>
    %cst_60 = arith.constant 9.99999974E-6 : f32
    %551 = vector.broadcast %cst_60 : f32 to vector<1x1x1xf32>
    %552 = arith.addf %548, %551 : vector<1x1x1xf32>
    %553 = math.rsqrt %552 : vector<1x1x1xf32>
    %554 = vector.broadcast %553 : vector<1x1x1xf32> to vector<2x32x32xf32>
    %555 = arith.mulf %550, %554 : vector<2x32x32xf32>
    %c1_61 = arith.constant 1 : index
    %556 = memref.load %arg5[%c1_61] : memref<2xf32, #tpu.memory_space<smem>>
    %557 = vector.broadcast %556 : f32 to vector<2x32x32xf32>
    %558 = arith.mulf %555, %557 : vector<2x32x32xf32>
    %c1_62 = arith.constant 1 : index
    %559 = memref.load %arg6[%c1_62] : memref<2xf32, #tpu.memory_space<smem>>
    %560 = vector.broadcast %559 : f32 to vector<2x32x32xf32>
    %561 = arith.addf %558, %560 : vector<2x32x32xf32>
    %cst_63 = arith.constant 0.000000e+00 : f32
    %562 = vector.broadcast %cst_63 : f32 to vector<2x32x32xf32>
    %563 = arith.maximumf %561, %562 : vector<2x32x32xf32>
    %564 = vector.shape_cast %563 : vector<2x32x32xf32> to vector<2x1x32x32xf32>
    %565 = tpu.concatenate %311, %564 in 1 : vector<2x1x32x32xf32>, vector<2x1x32x32xf32> -> vector<2x2x32x32xf32>
    %cst_64 = arith.constant 0.000000e+00 : f32
    %566 = vector.broadcast %cst_64 : f32 to vector<2x2x1x34xf32>
    %c0_65 = arith.constant 0 : index
    %c0_66 = arith.constant 0 : index
    %c0_67 = arith.constant 0 : index
    %c0_68 = arith.constant 0 : index
    %567 = vector.load %arg13[%c0_65, %c0_66, %c0_67, %c0_68] : memref<2x2x34x34xf32, #tpu.memory_space<vmem>>, vector<2x2x1x34xf32>
    tpu.vector_store %arg13[%c0_65, %c0_66, %c0_67, %c0_68], %566 {strides = array<i32>} : memref<2x2x34x34xf32, #tpu.memory_space<vmem>>, vector<2x2x1x34xf32>,
    %cst_69 = arith.constant 0.000000e+00 : f32
    %568 = vector.broadcast %cst_69 : f32 to vector<2x2x1x34xf32>
    %c0_70 = arith.constant 0 : index
    %c0_71 = arith.constant 0 : index
    %c33_72 = arith.constant 33 : index
    %c0_73 = arith.constant 0 : index
    %569 = vector.load %arg13[%c0_70, %c0_71, %c33_72, %c0_73] : memref<2x2x34x34xf32, #tpu.memory_space<vmem>>, vector<2x2x1x34xf32>
    tpu.vector_store %arg13[%c0_70, %c0_71, %c33_72, %c0_73], %568 {strides = array<i32>} : memref<2x2x34x34xf32, #tpu.memory_space<vmem>>, vector<2x2x1x34xf32>,
    %cst_74 = arith.constant 0.000000e+00 : f32
    %570 = vector.broadcast %cst_74 : f32 to vector<2x2x34x1xf32>
    %c0_75 = arith.constant 0 : index
    %c0_76 = arith.constant 0 : index
    %c0_77 = arith.constant 0 : index
    %c0_78 = arith.constant 0 : index
    %571 = vector.load %arg13[%c0_75, %c0_76, %c0_77, %c0_78] : memref<2x2x34x34xf32, #tpu.memory_space<vmem>>, vector<2x2x34x1xf32>
    tpu.vector_store %arg13[%c0_75, %c0_76, %c0_77, %c0_78], %570 {strides = array<i32>} : memref<2x2x34x34xf32, #tpu.memory_space<vmem>>, vector<2x2x34x1xf32>,
    %cst_79 = arith.constant 0.000000e+00 : f32
    %572 = vector.broadcast %cst_79 : f32 to vector<2x2x34x1xf32>
    %c0_80 = arith.constant 0 : index
    %c0_81 = arith.constant 0 : index
    %c0_82 = arith.constant 0 : index
    %c33_83 = arith.constant 33 : index
    %573 = vector.load %arg13[%c0_80, %c0_81, %c0_82, %c33_83] : memref<2x2x34x34xf32, #tpu.memory_space<vmem>>, vector<2x2x34x1xf32>
    tpu.vector_store %arg13[%c0_80, %c0_81, %c0_82, %c33_83], %572 {strides = array<i32>} : memref<2x2x34x34xf32, #tpu.memory_space<vmem>>, vector<2x2x34x1xf32>,
    %c0_84 = arith.constant 0 : index
    %c0_85 = arith.constant 0 : index
    %c1_86 = arith.constant 1 : index
    %c1_87 = arith.constant 1 : index
    %574 = vector.load %arg13[%c0_84, %c0_85, %c1_86, %c1_87] : memref<2x2x34x34xf32, #tpu.memory_space<vmem>>, vector<2x2x32x32xf32>
    tpu.vector_store %arg13[%c0_84, %c0_85, %c1_86, %c1_87], %565 {strides = array<i32>} : memref<2x2x34x34xf32, #tpu.memory_space<vmem>>, vector<2x2x32x32xf32>,
    %c0_88 = arith.constant 0 : index
    %c0_89 = arith.constant 0 : index
    %c0_90 = arith.constant 0 : index
    %c0_91 = arith.constant 0 : index
    %575 = vector.load %arg13[%c0_88, %c0_89, %c0_90, %c0_91] : memref<2x2x34x34xf32, #tpu.memory_space<vmem>>, vector<2x2x34x34xf32>
    %576 = vector.extract_strided_slice %575 {offsets = [0, 0, 0, 0], sizes = [2, 2, 32, 32], strides = [1, 1, 1, 1]} : vector<2x2x34x34xf32> to vector<2x2x32x32xf32>
    %577 = vector.extract_strided_slice %575 {offsets = [0, 0, 0, 1], sizes = [2, 2, 32, 32], strides = [1, 1, 1, 1]} : vector<2x2x34x34xf32> to vector<2x2x32x32xf32>
    %578 = vector.extract_strided_slice %575 {offsets = [0, 0, 0, 2], sizes = [2, 2, 32, 32], strides = [1, 1, 1, 1]} : vector<2x2x34x34xf32> to vector<2x2x32x32xf32>
    %579 = vector.extract_strided_slice %575 {offsets = [0, 0, 1, 0], sizes = [2, 2, 32, 32], strides = [1, 1, 1, 1]} : vector<2x2x34x34xf32> to vector<2x2x32x32xf32>
    %580 = vector.extract_strided_slice %575 {offsets = [0, 0, 1, 1], sizes = [2, 2, 32, 32], strides = [1, 1, 1, 1]} : vector<2x2x34x34xf32> to vector<2x2x32x32xf32>
    %581 = vector.extract_strided_slice %575 {offsets = [0, 0, 1, 2], sizes = [2, 2, 32, 32], strides = [1, 1, 1, 1]} : vector<2x2x34x34xf32> to vector<2x2x32x32xf32>
    %582 = vector.extract_strided_slice %575 {offsets = [0, 0, 2, 0], sizes = [2, 2, 32, 32], strides = [1, 1, 1, 1]} : vector<2x2x34x34xf32> to vector<2x2x32x32xf32>
    %583 = vector.extract_strided_slice %575 {offsets = [0, 0, 2, 1], sizes = [2, 2, 32, 32], strides = [1, 1, 1, 1]} : vector<2x2x34x34xf32> to vector<2x2x32x32xf32>
    %584 = vector.extract_strided_slice %575 {offsets = [0, 0, 2, 2], sizes = [2, 2, 32, 32], strides = [1, 1, 1, 1]} : vector<2x2x34x34xf32> to vector<2x2x32x32xf32>
    %cst_92 = arith.constant 0.000000e+00 : f32
    %585 = vector.broadcast %cst_92 : f32 to vector<2x32x32xf32>
    %c0_93 = arith.constant 0 : index
    %586 = memref.load %arg7[%c0_93] : memref<36xf32, #tpu.memory_space<smem>>
    %587 = vector.extract_strided_slice %576 {offsets = [0, 0, 0, 0], sizes = [2, 1, 32, 32], strides = [1, 1, 1, 1]} : vector<2x2x32x32xf32> to vector<2x1x32x32xf32>
    %588 = vector.shape_cast %587 : vector<2x1x32x32xf32> to vector<2x32x32xf32>
    %589 = vector.broadcast %586 : f32 to vector<2x32x32xf32>
    %590 = arith.mulf %589, %588 : vector<2x32x32xf32>
    %591 = arith.addf %585, %590 : vector<2x32x32xf32>
    %c1_94 = arith.constant 1 : index
    %592 = memref.load %arg7[%c1_94] : memref<36xf32, #tpu.memory_space<smem>>
    %593 = vector.extract_strided_slice %577 {offsets = [0, 0, 0, 0], sizes = [2, 1, 32, 32], strides = [1, 1, 1, 1]} : vector<2x2x32x32xf32> to vector<2x1x32x32xf32>
    %594 = vector.shape_cast %593 : vector<2x1x32x32xf32> to vector<2x32x32xf32>
    %595 = vector.broadcast %592 : f32 to vector<2x32x32xf32>
    %596 = arith.mulf %595, %594 : vector<2x32x32xf32>
    %597 = arith.addf %591, %596 : vector<2x32x32xf32>
    %c2_95 = arith.constant 2 : index
    %598 = memref.load %arg7[%c2_95] : memref<36xf32, #tpu.memory_space<smem>>
    %599 = vector.extract_strided_slice %578 {offsets = [0, 0, 0, 0], sizes = [2, 1, 32, 32], strides = [1, 1, 1, 1]} : vector<2x2x32x32xf32> to vector<2x1x32x32xf32>
    %600 = vector.shape_cast %599 : vector<2x1x32x32xf32> to vector<2x32x32xf32>
    %601 = vector.broadcast %598 : f32 to vector<2x32x32xf32>
    %602 = arith.mulf %601, %600 : vector<2x32x32xf32>
    %603 = arith.addf %597, %602 : vector<2x32x32xf32>
    %c3_96 = arith.constant 3 : index
    %604 = memref.load %arg7[%c3_96] : memref<36xf32, #tpu.memory_space<smem>>
    %605 = vector.extract_strided_slice %579 {offsets = [0, 0, 0, 0], sizes = [2, 1, 32, 32], strides = [1, 1, 1, 1]} : vector<2x2x32x32xf32> to vector<2x1x32x32xf32>
    %606 = vector.shape_cast %605 : vector<2x1x32x32xf32> to vector<2x32x32xf32>
    %607 = vector.broadcast %604 : f32 to vector<2x32x32xf32>
    %608 = arith.mulf %607, %606 : vector<2x32x32xf32>
    %609 = arith.addf %603, %608 : vector<2x32x32xf32>
    %c4_97 = arith.constant 4 : index
    %610 = memref.load %arg7[%c4_97] : memref<36xf32, #tpu.memory_space<smem>>
    %611 = vector.extract_strided_slice %580 {offsets = [0, 0, 0, 0], sizes = [2, 1, 32, 32], strides = [1, 1, 1, 1]} : vector<2x2x32x32xf32> to vector<2x1x32x32xf32>
    %612 = vector.shape_cast %611 : vector<2x1x32x32xf32> to vector<2x32x32xf32>
    %613 = vector.broadcast %610 : f32 to vector<2x32x32xf32>
    %614 = arith.mulf %613, %612 : vector<2x32x32xf32>
    %615 = arith.addf %609, %614 : vector<2x32x32xf32>
    %c5_98 = arith.constant 5 : index
    %616 = memref.load %arg7[%c5_98] : memref<36xf32, #tpu.memory_space<smem>>
    %617 = vector.extract_strided_slice %581 {offsets = [0, 0, 0, 0], sizes = [2, 1, 32, 32], strides = [1, 1, 1, 1]} : vector<2x2x32x32xf32> to vector<2x1x32x32xf32>
    %618 = vector.shape_cast %617 : vector<2x1x32x32xf32> to vector<2x32x32xf32>
    %619 = vector.broadcast %616 : f32 to vector<2x32x32xf32>
    %620 = arith.mulf %619, %618 : vector<2x32x32xf32>
    %621 = arith.addf %615, %620 : vector<2x32x32xf32>
    %c6_99 = arith.constant 6 : index
    %622 = memref.load %arg7[%c6_99] : memref<36xf32, #tpu.memory_space<smem>>
    %623 = vector.extract_strided_slice %582 {offsets = [0, 0, 0, 0], sizes = [2, 1, 32, 32], strides = [1, 1, 1, 1]} : vector<2x2x32x32xf32> to vector<2x1x32x32xf32>
    %624 = vector.shape_cast %623 : vector<2x1x32x32xf32> to vector<2x32x32xf32>
    %625 = vector.broadcast %622 : f32 to vector<2x32x32xf32>
    %626 = arith.mulf %625, %624 : vector<2x32x32xf32>
    %627 = arith.addf %621, %626 : vector<2x32x32xf32>
    %c7_100 = arith.constant 7 : index
    %628 = memref.load %arg7[%c7_100] : memref<36xf32, #tpu.memory_space<smem>>
    %629 = vector.extract_strided_slice %583 {offsets = [0, 0, 0, 0], sizes = [2, 1, 32, 32], strides = [1, 1, 1, 1]} : vector<2x2x32x32xf32> to vector<2x1x32x32xf32>
    %630 = vector.shape_cast %629 : vector<2x1x32x32xf32> to vector<2x32x32xf32>
    %631 = vector.broadcast %628 : f32 to vector<2x32x32xf32>
    %632 = arith.mulf %631, %630 : vector<2x32x32xf32>
    %633 = arith.addf %627, %632 : vector<2x32x32xf32>
    %c8_101 = arith.constant 8 : index
    %634 = memref.load %arg7[%c8_101] : memref<36xf32, #tpu.memory_space<smem>>
    %635 = vector.extract_strided_slice %584 {offsets = [0, 0, 0, 0], sizes = [2, 1, 32, 32], strides = [1, 1, 1, 1]} : vector<2x2x32x32xf32> to vector<2x1x32x32xf32>
    %636 = vector.shape_cast %635 : vector<2x1x32x32xf32> to vector<2x32x32xf32>
    %637 = vector.broadcast %634 : f32 to vector<2x32x32xf32>
    %638 = arith.mulf %637, %636 : vector<2x32x32xf32>
    %639 = arith.addf %633, %638 : vector<2x32x32xf32>
    %c9_102 = arith.constant 9 : index
    %640 = memref.load %arg7[%c9_102] : memref<36xf32, #tpu.memory_space<smem>>
    %641 = vector.extract_strided_slice %576 {offsets = [0, 1, 0, 0], sizes = [2, 1, 32, 32], strides = [1, 1, 1, 1]} : vector<2x2x32x32xf32> to vector<2x1x32x32xf32>
    %642 = vector.shape_cast %641 : vector<2x1x32x32xf32> to vector<2x32x32xf32>
    %643 = vector.broadcast %640 : f32 to vector<2x32x32xf32>
    %644 = arith.mulf %643, %642 : vector<2x32x32xf32>
    %645 = arith.addf %639, %644 : vector<2x32x32xf32>
    %c10_103 = arith.constant 10 : index
    %646 = memref.load %arg7[%c10_103] : memref<36xf32, #tpu.memory_space<smem>>
    %647 = vector.extract_strided_slice %577 {offsets = [0, 1, 0, 0], sizes = [2, 1, 32, 32], strides = [1, 1, 1, 1]} : vector<2x2x32x32xf32> to vector<2x1x32x32xf32>
    %648 = vector.shape_cast %647 : vector<2x1x32x32xf32> to vector<2x32x32xf32>
    %649 = vector.broadcast %646 : f32 to vector<2x32x32xf32>
    %650 = arith.mulf %649, %648 : vector<2x32x32xf32>
    %651 = arith.addf %645, %650 : vector<2x32x32xf32>
    %c11_104 = arith.constant 11 : index
    %652 = memref.load %arg7[%c11_104] : memref<36xf32, #tpu.memory_space<smem>>
    %653 = vector.extract_strided_slice %578 {offsets = [0, 1, 0, 0], sizes = [2, 1, 32, 32], strides = [1, 1, 1, 1]} : vector<2x2x32x32xf32> to vector<2x1x32x32xf32>
    %654 = vector.shape_cast %653 : vector<2x1x32x32xf32> to vector<2x32x32xf32>
    %655 = vector.broadcast %652 : f32 to vector<2x32x32xf32>
    %656 = arith.mulf %655, %654 : vector<2x32x32xf32>
    %657 = arith.addf %651, %656 : vector<2x32x32xf32>
    %c12_105 = arith.constant 12 : index
    %658 = memref.load %arg7[%c12_105] : memref<36xf32, #tpu.memory_space<smem>>
    %659 = vector.extract_strided_slice %579 {offsets = [0, 1, 0, 0], sizes = [2, 1, 32, 32], strides = [1, 1, 1, 1]} : vector<2x2x32x32xf32> to vector<2x1x32x32xf32>
    %660 = vector.shape_cast %659 : vector<2x1x32x32xf32> to vector<2x32x32xf32>
    %661 = vector.broadcast %658 : f32 to vector<2x32x32xf32>
    %662 = arith.mulf %661, %660 : vector<2x32x32xf32>
    %663 = arith.addf %657, %662 : vector<2x32x32xf32>
    %c13_106 = arith.constant 13 : index
    %664 = memref.load %arg7[%c13_106] : memref<36xf32, #tpu.memory_space<smem>>
    %665 = vector.extract_strided_slice %580 {offsets = [0, 1, 0, 0], sizes = [2, 1, 32, 32], strides = [1, 1, 1, 1]} : vector<2x2x32x32xf32> to vector<2x1x32x32xf32>
    %666 = vector.shape_cast %665 : vector<2x1x32x32xf32> to vector<2x32x32xf32>
    %667 = vector.broadcast %664 : f32 to vector<2x32x32xf32>
    %668 = arith.mulf %667, %666 : vector<2x32x32xf32>
    %669 = arith.addf %663, %668 : vector<2x32x32xf32>
    %c14_107 = arith.constant 14 : index
    %670 = memref.load %arg7[%c14_107] : memref<36xf32, #tpu.memory_space<smem>>
    %671 = vector.extract_strided_slice %581 {offsets = [0, 1, 0, 0], sizes = [2, 1, 32, 32], strides = [1, 1, 1, 1]} : vector<2x2x32x32xf32> to vector<2x1x32x32xf32>
    %672 = vector.shape_cast %671 : vector<2x1x32x32xf32> to vector<2x32x32xf32>
    %673 = vector.broadcast %670 : f32 to vector<2x32x32xf32>
    %674 = arith.mulf %673, %672 : vector<2x32x32xf32>
    %675 = arith.addf %669, %674 : vector<2x32x32xf32>
    %c15_108 = arith.constant 15 : index
    %676 = memref.load %arg7[%c15_108] : memref<36xf32, #tpu.memory_space<smem>>
    %677 = vector.extract_strided_slice %582 {offsets = [0, 1, 0, 0], sizes = [2, 1, 32, 32], strides = [1, 1, 1, 1]} : vector<2x2x32x32xf32> to vector<2x1x32x32xf32>
    %678 = vector.shape_cast %677 : vector<2x1x32x32xf32> to vector<2x32x32xf32>
    %679 = vector.broadcast %676 : f32 to vector<2x32x32xf32>
    %680 = arith.mulf %679, %678 : vector<2x32x32xf32>
    %681 = arith.addf %675, %680 : vector<2x32x32xf32>
    %c16_109 = arith.constant 16 : index
    %682 = memref.load %arg7[%c16_109] : memref<36xf32, #tpu.memory_space<smem>>
    %683 = vector.extract_strided_slice %583 {offsets = [0, 1, 0, 0], sizes = [2, 1, 32, 32], strides = [1, 1, 1, 1]} : vector<2x2x32x32xf32> to vector<2x1x32x32xf32>
    %684 = vector.shape_cast %683 : vector<2x1x32x32xf32> to vector<2x32x32xf32>
    %685 = vector.broadcast %682 : f32 to vector<2x32x32xf32>
    %686 = arith.mulf %685, %684 : vector<2x32x32xf32>
    %687 = arith.addf %681, %686 : vector<2x32x32xf32>
    %c17_110 = arith.constant 17 : index
    %688 = memref.load %arg7[%c17_110] : memref<36xf32, #tpu.memory_space<smem>>
    %689 = vector.extract_strided_slice %584 {offsets = [0, 1, 0, 0], sizes = [2, 1, 32, 32], strides = [1, 1, 1, 1]} : vector<2x2x32x32xf32> to vector<2x1x32x32xf32>
    %690 = vector.shape_cast %689 : vector<2x1x32x32xf32> to vector<2x32x32xf32>
    %691 = vector.broadcast %688 : f32 to vector<2x32x32xf32>
    %692 = arith.mulf %691, %690 : vector<2x32x32xf32>
    %693 = arith.addf %687, %692 : vector<2x32x32xf32>
    %c0_111 = arith.constant 0 : index
    %694 = memref.load %arg8[%c0_111] : memref<2xf32, #tpu.memory_space<smem>>
    %695 = vector.broadcast %694 : f32 to vector<2x32x32xf32>
    %696 = arith.addf %693, %695 : vector<2x32x32xf32>
    %697 = vector.shape_cast %696 : vector<2x32x32xf32> to vector<1x2x32x32xf32>
    %cst_112 = arith.constant dense<0.000000e+00> : vector<1xf32>
    %698 = vector.multi_reduction <add>, %697, %cst_112 [1, 2, 3] : vector<1x2x32x32xf32> to vector<1xf32>
    %699 = vector.shape_cast %698 : vector<1xf32> to vector<1x1x1x1xf32>
    %700 = vector.extract %699[0, 0, 0, 0] : f32 from vector<1x1x1x1xf32>
    %701 = vector.broadcast %700 : f32 to vector<1x1x1xf32>
    %702 = arith.mulf %696, %696 : vector<2x32x32xf32>
    %703 = vector.shape_cast %702 : vector<2x32x32xf32> to vector<1x2x32x32xf32>
    %cst_113 = arith.constant dense<0.000000e+00> : vector<1xf32>
    %704 = vector.multi_reduction <add>, %703, %cst_113 [1, 2, 3] : vector<1x2x32x32xf32> to vector<1xf32>
    %705 = vector.shape_cast %704 : vector<1xf32> to vector<1x1x1x1xf32>
    %706 = vector.extract %705[0, 0, 0, 0] : f32 from vector<1x1x1x1xf32>
    %707 = vector.broadcast %706 : f32 to vector<1x1x1xf32>
    %cst_114 = arith.constant 4.8828125E-4 : f32
    %708 = vector.broadcast %cst_114 : f32 to vector<1x1x1xf32>
    %709 = arith.mulf %701, %708 : vector<1x1x1xf32>
    %cst_115 = arith.constant 4.8828125E-4 : f32
    %710 = vector.broadcast %cst_115 : f32 to vector<1x1x1xf32>
    %711 = arith.mulf %707, %710 : vector<1x1x1xf32>
    %712 = arith.mulf %709, %709 : vector<1x1x1xf32>
    %713 = arith.subf %711, %712 : vector<1x1x1xf32>
    %714 = vector.broadcast %709 : vector<1x1x1xf32> to vector<2x32x32xf32>
    %715 = arith.subf %696, %714 : vector<2x32x32xf32>
    %cst_116 = arith.constant 9.99999974E-6 : f32
    %716 = vector.broadcast %cst_116 : f32 to vector<1x1x1xf32>
    %717 = arith.addf %713, %716 : vector<1x1x1xf32>
    %718 = math.rsqrt %717 : vector<1x1x1xf32>
    %719 = vector.broadcast %718 : vector<1x1x1xf32> to vector<2x32x32xf32>
    %720 = arith.mulf %715, %719 : vector<2x32x32xf32>
    %c0_117 = arith.constant 0 : index
    %721 = memref.load %arg9[%c0_117] : memref<2xf32, #tpu.memory_space<smem>>
    %722 = vector.broadcast %721 : f32 to vector<2x32x32xf32>
    %723 = arith.mulf %720, %722 : vector<2x32x32xf32>
    %c0_118 = arith.constant 0 : index
    %724 = memref.load %arg10[%c0_118] : memref<2xf32, #tpu.memory_space<smem>>
    %725 = vector.broadcast %724 : f32 to vector<2x32x32xf32>
    %726 = arith.addf %723, %725 : vector<2x32x32xf32>
    %cst_119 = arith.constant 0.000000e+00 : f32
    %727 = vector.broadcast %cst_119 : f32 to vector<2x32x32xf32>
    %728 = arith.maximumf %726, %727 : vector<2x32x32xf32>
    %729 = vector.shape_cast %728 : vector<2x32x32xf32> to vector<2x1x32x32xf32>
    %cst_120 = arith.constant 0.000000e+00 : f32
    %730 = vector.broadcast %cst_120 : f32 to vector<2x32x32xf32>
    %c18_121 = arith.constant 18 : index
    %731 = memref.load %arg7[%c18_121] : memref<36xf32, #tpu.memory_space<smem>>
    %732 = vector.extract_strided_slice %576 {offsets = [0, 0, 0, 0], sizes = [2, 1, 32, 32], strides = [1, 1, 1, 1]} : vector<2x2x32x32xf32> to vector<2x1x32x32xf32>
    %733 = vector.shape_cast %732 : vector<2x1x32x32xf32> to vector<2x32x32xf32>
    %734 = vector.broadcast %731 : f32 to vector<2x32x32xf32>
    %735 = arith.mulf %734, %733 : vector<2x32x32xf32>
    %736 = arith.addf %730, %735 : vector<2x32x32xf32>
    %c19_122 = arith.constant 19 : index
    %737 = memref.load %arg7[%c19_122] : memref<36xf32, #tpu.memory_space<smem>>
    %738 = vector.extract_strided_slice %577 {offsets = [0, 0, 0, 0], sizes = [2, 1, 32, 32], strides = [1, 1, 1, 1]} : vector<2x2x32x32xf32> to vector<2x1x32x32xf32>
    %739 = vector.shape_cast %738 : vector<2x1x32x32xf32> to vector<2x32x32xf32>
    %740 = vector.broadcast %737 : f32 to vector<2x32x32xf32>
    %741 = arith.mulf %740, %739 : vector<2x32x32xf32>
    %742 = arith.addf %736, %741 : vector<2x32x32xf32>
    %c20_123 = arith.constant 20 : index
    %743 = memref.load %arg7[%c20_123] : memref<36xf32, #tpu.memory_space<smem>>
    %744 = vector.extract_strided_slice %578 {offsets = [0, 0, 0, 0], sizes = [2, 1, 32, 32], strides = [1, 1, 1, 1]} : vector<2x2x32x32xf32> to vector<2x1x32x32xf32>
    %745 = vector.shape_cast %744 : vector<2x1x32x32xf32> to vector<2x32x32xf32>
    %746 = vector.broadcast %743 : f32 to vector<2x32x32xf32>
    %747 = arith.mulf %746, %745 : vector<2x32x32xf32>
    %748 = arith.addf %742, %747 : vector<2x32x32xf32>
    %c21_124 = arith.constant 21 : index
    %749 = memref.load %arg7[%c21_124] : memref<36xf32, #tpu.memory_space<smem>>
    %750 = vector.extract_strided_slice %579 {offsets = [0, 0, 0, 0], sizes = [2, 1, 32, 32], strides = [1, 1, 1, 1]} : vector<2x2x32x32xf32> to vector<2x1x32x32xf32>
    %751 = vector.shape_cast %750 : vector<2x1x32x32xf32> to vector<2x32x32xf32>
    %752 = vector.broadcast %749 : f32 to vector<2x32x32xf32>
    %753 = arith.mulf %752, %751 : vector<2x32x32xf32>
    %754 = arith.addf %748, %753 : vector<2x32x32xf32>
    %c22_125 = arith.constant 22 : index
    %755 = memref.load %arg7[%c22_125] : memref<36xf32, #tpu.memory_space<smem>>
    %756 = vector.extract_strided_slice %580 {offsets = [0, 0, 0, 0], sizes = [2, 1, 32, 32], strides = [1, 1, 1, 1]} : vector<2x2x32x32xf32> to vector<2x1x32x32xf32>
    %757 = vector.shape_cast %756 : vector<2x1x32x32xf32> to vector<2x32x32xf32>
    %758 = vector.broadcast %755 : f32 to vector<2x32x32xf32>
    %759 = arith.mulf %758, %757 : vector<2x32x32xf32>
    %760 = arith.addf %754, %759 : vector<2x32x32xf32>
    %c23_126 = arith.constant 23 : index
    %761 = memref.load %arg7[%c23_126] : memref<36xf32, #tpu.memory_space<smem>>
    %762 = vector.extract_strided_slice %581 {offsets = [0, 0, 0, 0], sizes = [2, 1, 32, 32], strides = [1, 1, 1, 1]} : vector<2x2x32x32xf32> to vector<2x1x32x32xf32>
    %763 = vector.shape_cast %762 : vector<2x1x32x32xf32> to vector<2x32x32xf32>
    %764 = vector.broadcast %761 : f32 to vector<2x32x32xf32>
    %765 = arith.mulf %764, %763 : vector<2x32x32xf32>
    %766 = arith.addf %760, %765 : vector<2x32x32xf32>
    %c24_127 = arith.constant 24 : index
    %767 = memref.load %arg7[%c24_127] : memref<36xf32, #tpu.memory_space<smem>>
    %768 = vector.extract_strided_slice %582 {offsets = [0, 0, 0, 0], sizes = [2, 1, 32, 32], strides = [1, 1, 1, 1]} : vector<2x2x32x32xf32> to vector<2x1x32x32xf32>
    %769 = vector.shape_cast %768 : vector<2x1x32x32xf32> to vector<2x32x32xf32>
    %770 = vector.broadcast %767 : f32 to vector<2x32x32xf32>
    %771 = arith.mulf %770, %769 : vector<2x32x32xf32>
    %772 = arith.addf %766, %771 : vector<2x32x32xf32>
    %c25_128 = arith.constant 25 : index
    %773 = memref.load %arg7[%c25_128] : memref<36xf32, #tpu.memory_space<smem>>
    %774 = vector.extract_strided_slice %583 {offsets = [0, 0, 0, 0], sizes = [2, 1, 32, 32], strides = [1, 1, 1, 1]} : vector<2x2x32x32xf32> to vector<2x1x32x32xf32>
    %775 = vector.shape_cast %774 : vector<2x1x32x32xf32> to vector<2x32x32xf32>
    %776 = vector.broadcast %773 : f32 to vector<2x32x32xf32>
    %777 = arith.mulf %776, %775 : vector<2x32x32xf32>
    %778 = arith.addf %772, %777 : vector<2x32x32xf32>
    %c26_129 = arith.constant 26 : index
    %779 = memref.load %arg7[%c26_129] : memref<36xf32, #tpu.memory_space<smem>>
    %780 = vector.extract_strided_slice %584 {offsets = [0, 0, 0, 0], sizes = [2, 1, 32, 32], strides = [1, 1, 1, 1]} : vector<2x2x32x32xf32> to vector<2x1x32x32xf32>
    %781 = vector.shape_cast %780 : vector<2x1x32x32xf32> to vector<2x32x32xf32>
    %782 = vector.broadcast %779 : f32 to vector<2x32x32xf32>
    %783 = arith.mulf %782, %781 : vector<2x32x32xf32>
    %784 = arith.addf %778, %783 : vector<2x32x32xf32>
    %c27_130 = arith.constant 27 : index
    %785 = memref.load %arg7[%c27_130] : memref<36xf32, #tpu.memory_space<smem>>
    %786 = vector.extract_strided_slice %576 {offsets = [0, 1, 0, 0], sizes = [2, 1, 32, 32], strides = [1, 1, 1, 1]} : vector<2x2x32x32xf32> to vector<2x1x32x32xf32>
    %787 = vector.shape_cast %786 : vector<2x1x32x32xf32> to vector<2x32x32xf32>
    %788 = vector.broadcast %785 : f32 to vector<2x32x32xf32>
    %789 = arith.mulf %788, %787 : vector<2x32x32xf32>
    %790 = arith.addf %784, %789 : vector<2x32x32xf32>
    %c28_131 = arith.constant 28 : index
    %791 = memref.load %arg7[%c28_131] : memref<36xf32, #tpu.memory_space<smem>>
    %792 = vector.extract_strided_slice %577 {offsets = [0, 1, 0, 0], sizes = [2, 1, 32, 32], strides = [1, 1, 1, 1]} : vector<2x2x32x32xf32> to vector<2x1x32x32xf32>
    %793 = vector.shape_cast %792 : vector<2x1x32x32xf32> to vector<2x32x32xf32>
    %794 = vector.broadcast %791 : f32 to vector<2x32x32xf32>
    %795 = arith.mulf %794, %793 : vector<2x32x32xf32>
    %796 = arith.addf %790, %795 : vector<2x32x32xf32>
    %c29_132 = arith.constant 29 : index
    %797 = memref.load %arg7[%c29_132] : memref<36xf32, #tpu.memory_space<smem>>
    %798 = vector.extract_strided_slice %578 {offsets = [0, 1, 0, 0], sizes = [2, 1, 32, 32], strides = [1, 1, 1, 1]} : vector<2x2x32x32xf32> to vector<2x1x32x32xf32>
    %799 = vector.shape_cast %798 : vector<2x1x32x32xf32> to vector<2x32x32xf32>
    %800 = vector.broadcast %797 : f32 to vector<2x32x32xf32>
    %801 = arith.mulf %800, %799 : vector<2x32x32xf32>
    %802 = arith.addf %796, %801 : vector<2x32x32xf32>
    %c30_133 = arith.constant 30 : index
    %803 = memref.load %arg7[%c30_133] : memref<36xf32, #tpu.memory_space<smem>>
    %804 = vector.extract_strided_slice %579 {offsets = [0, 1, 0, 0], sizes = [2, 1, 32, 32], strides = [1, 1, 1, 1]} : vector<2x2x32x32xf32> to vector<2x1x32x32xf32>
    %805 = vector.shape_cast %804 : vector<2x1x32x32xf32> to vector<2x32x32xf32>
    %806 = vector.broadcast %803 : f32 to vector<2x32x32xf32>
    %807 = arith.mulf %806, %805 : vector<2x32x32xf32>
    %808 = arith.addf %802, %807 : vector<2x32x32xf32>
    %c31_134 = arith.constant 31 : index
    %809 = memref.load %arg7[%c31_134] : memref<36xf32, #tpu.memory_space<smem>>
    %810 = vector.extract_strided_slice %580 {offsets = [0, 1, 0, 0], sizes = [2, 1, 32, 32], strides = [1, 1, 1, 1]} : vector<2x2x32x32xf32> to vector<2x1x32x32xf32>
    %811 = vector.shape_cast %810 : vector<2x1x32x32xf32> to vector<2x32x32xf32>
    %812 = vector.broadcast %809 : f32 to vector<2x32x32xf32>
    %813 = arith.mulf %812, %811 : vector<2x32x32xf32>
    %814 = arith.addf %808, %813 : vector<2x32x32xf32>
    %c32_135 = arith.constant 32 : index
    %815 = memref.load %arg7[%c32_135] : memref<36xf32, #tpu.memory_space<smem>>
    %816 = vector.extract_strided_slice %581 {offsets = [0, 1, 0, 0], sizes = [2, 1, 32, 32], strides = [1, 1, 1, 1]} : vector<2x2x32x32xf32> to vector<2x1x32x32xf32>
    %817 = vector.shape_cast %816 : vector<2x1x32x32xf32> to vector<2x32x32xf32>
    %818 = vector.broadcast %815 : f32 to vector<2x32x32xf32>
    %819 = arith.mulf %818, %817 : vector<2x32x32xf32>
    %820 = arith.addf %814, %819 : vector<2x32x32xf32>
    %c33_136 = arith.constant 33 : index
    %821 = memref.load %arg7[%c33_136] : memref<36xf32, #tpu.memory_space<smem>>
    %822 = vector.extract_strided_slice %582 {offsets = [0, 1, 0, 0], sizes = [2, 1, 32, 32], strides = [1, 1, 1, 1]} : vector<2x2x32x32xf32> to vector<2x1x32x32xf32>
    %823 = vector.shape_cast %822 : vector<2x1x32x32xf32> to vector<2x32x32xf32>
    %824 = vector.broadcast %821 : f32 to vector<2x32x32xf32>
    %825 = arith.mulf %824, %823 : vector<2x32x32xf32>
    %826 = arith.addf %820, %825 : vector<2x32x32xf32>
    %c34_137 = arith.constant 34 : index
    %827 = memref.load %arg7[%c34_137] : memref<36xf32, #tpu.memory_space<smem>>
    %828 = vector.extract_strided_slice %583 {offsets = [0, 1, 0, 0], sizes = [2, 1, 32, 32], strides = [1, 1, 1, 1]} : vector<2x2x32x32xf32> to vector<2x1x32x32xf32>
    %829 = vector.shape_cast %828 : vector<2x1x32x32xf32> to vector<2x32x32xf32>
    %830 = vector.broadcast %827 : f32 to vector<2x32x32xf32>
    %831 = arith.mulf %830, %829 : vector<2x32x32xf32>
    %832 = arith.addf %826, %831 : vector<2x32x32xf32>
    %c35_138 = arith.constant 35 : index
    %833 = memref.load %arg7[%c35_138] : memref<36xf32, #tpu.memory_space<smem>>
    %834 = vector.extract_strided_slice %584 {offsets = [0, 1, 0, 0], sizes = [2, 1, 32, 32], strides = [1, 1, 1, 1]} : vector<2x2x32x32xf32> to vector<2x1x32x32xf32>
    %835 = vector.shape_cast %834 : vector<2x1x32x32xf32> to vector<2x32x32xf32>
    %836 = vector.broadcast %833 : f32 to vector<2x32x32xf32>
    %837 = arith.mulf %836, %835 : vector<2x32x32xf32>
    %838 = arith.addf %832, %837 : vector<2x32x32xf32>
    %c1_139 = arith.constant 1 : index
    %839 = memref.load %arg8[%c1_139] : memref<2xf32, #tpu.memory_space<smem>>
    %840 = vector.broadcast %839 : f32 to vector<2x32x32xf32>
    %841 = arith.addf %838, %840 : vector<2x32x32xf32>
    %842 = vector.shape_cast %841 : vector<2x32x32xf32> to vector<1x2x32x32xf32>
    %cst_140 = arith.constant dense<0.000000e+00> : vector<1xf32>
    %843 = vector.multi_reduction <add>, %842, %cst_140 [1, 2, 3] : vector<1x2x32x32xf32> to vector<1xf32>
    %844 = vector.shape_cast %843 : vector<1xf32> to vector<1x1x1x1xf32>
    %845 = vector.extract %844[0, 0, 0, 0] : f32 from vector<1x1x1x1xf32>
    %846 = vector.broadcast %845 : f32 to vector<1x1x1xf32>
    %847 = arith.mulf %841, %841 : vector<2x32x32xf32>
    %848 = vector.shape_cast %847 : vector<2x32x32xf32> to vector<1x2x32x32xf32>
    %cst_141 = arith.constant dense<0.000000e+00> : vector<1xf32>
    %849 = vector.multi_reduction <add>, %848, %cst_141 [1, 2, 3] : vector<1x2x32x32xf32> to vector<1xf32>
    %850 = vector.shape_cast %849 : vector<1xf32> to vector<1x1x1x1xf32>
    %851 = vector.extract %850[0, 0, 0, 0] : f32 from vector<1x1x1x1xf32>
    %852 = vector.broadcast %851 : f32 to vector<1x1x1xf32>
    %cst_142 = arith.constant 4.8828125E-4 : f32
    %853 = vector.broadcast %cst_142 : f32 to vector<1x1x1xf32>
    %854 = arith.mulf %846, %853 : vector<1x1x1xf32>
    %cst_143 = arith.constant 4.8828125E-4 : f32
    %855 = vector.broadcast %cst_143 : f32 to vector<1x1x1xf32>
    %856 = arith.mulf %852, %855 : vector<1x1x1xf32>
    %857 = arith.mulf %854, %854 : vector<1x1x1xf32>
    %858 = arith.subf %856, %857 : vector<1x1x1xf32>
    %859 = vector.broadcast %854 : vector<1x1x1xf32> to vector<2x32x32xf32>
    %860 = arith.subf %841, %859 : vector<2x32x32xf32>
    %cst_144 = arith.constant 9.99999974E-6 : f32
    %861 = vector.broadcast %cst_144 : f32 to vector<1x1x1xf32>
    %862 = arith.addf %858, %861 : vector<1x1x1xf32>
    %863 = math.rsqrt %862 : vector<1x1x1xf32>
    %864 = vector.broadcast %863 : vector<1x1x1xf32> to vector<2x32x32xf32>
    %865 = arith.mulf %860, %864 : vector<2x32x32xf32>
    %c1_145 = arith.constant 1 : index
    %866 = memref.load %arg9[%c1_145] : memref<2xf32, #tpu.memory_space<smem>>
    %867 = vector.broadcast %866 : f32 to vector<2x32x32xf32>
    %868 = arith.mulf %865, %867 : vector<2x32x32xf32>
    %c1_146 = arith.constant 1 : index
    %869 = memref.load %arg10[%c1_146] : memref<2xf32, #tpu.memory_space<smem>>
    %870 = vector.broadcast %869 : f32 to vector<2x32x32xf32>
    %871 = arith.addf %868, %870 : vector<2x32x32xf32>
    %cst_147 = arith.constant 0.000000e+00 : f32
    %872 = vector.broadcast %cst_147 : f32 to vector<2x32x32xf32>
    %873 = arith.maximumf %871, %872 : vector<2x32x32xf32>
    %874 = vector.shape_cast %873 : vector<2x32x32xf32> to vector<2x1x32x32xf32>
    %875 = tpu.concatenate %729, %874 in 1 : vector<2x1x32x32xf32>, vector<2x1x32x32xf32> -> vector<2x2x32x32xf32>
    %c0_148 = arith.constant 0 : index
    %c0_149 = arith.constant 0 : index
    %c0_150 = arith.constant 0 : index
    %c0_151 = arith.constant 0 : index
    %876 = vector.load %arg11[%c0_148, %c0_149, %c0_150, %c0_151] : memref<2x2x32x32xf32, #tpu.memory_space<vmem>>, vector<2x2x32x32xf32>
    tpu.vector_store %arg11[%c0_148, %c0_149, %c0_150, %c0_151], %875 {strides = array<i32>} : memref<2x2x32x32xf32, #tpu.memory_space<vmem>>, vector<2x2x32x32xf32>,
    return
  }
}

</mosaic_0001>

<llo_original>
// kernel: tpu_custom_call.1
$region0: #{tpu_custom_call.1}
  #allocation0 [shape = 'u32[]', space=smem, size = 0x4, offset = 0x4, fixed_abs, tag = 'smem constant byte address 0x4 - core index']
  #allocation1 [shape = 'u32[144,128]{1,0:T(1,128)}', space=vmem, size = 0x12000, scoped, tag = 'internal scratch']
  #allocation2 [shape = 'f32[2,4,34,34]{3,2,1,0:T(8,128)}', space=vmem, size = 0x28000, scoped, tag = 'scratch operand']
  #allocation3 [shape = 'f32[2,2,34,34]{3,2,1,0:T(8,128)}', space=vmem, size = 0x14000, scoped, tag = 'scratch operand']
  %s0 = inlined_call_operand.hbm [shape: f32[2,4,16,16], index: 0, kind: input, shape index: {}]
  %s1 = inlined_call_operand.vmem [shape: f32[16,32], index: 1, kind: input, shape index: {}]
  %s2 = inlined_call_operand.vmem [shape: f32[32,16], index: 2, kind: input, shape index: {}]
  %s3 = inlined_call_operand.vmem [shape: f32[72], index: 3, kind: input, shape index: {}]
  %s4 = inlined_call_operand.vmem [shape: f32[2], index: 4, kind: input, shape index: {}]
  %s5 = inlined_call_operand.vmem [shape: f32[2], index: 5, kind: input, shape index: {}]
  %s6 = inlined_call_operand.vmem [shape: f32[2], index: 6, kind: input, shape index: {}]
  %s7 = inlined_call_operand.vmem [shape: f32[36], index: 7, kind: input, shape index: {}]
  %s8 = inlined_call_operand.vmem [shape: f32[2], index: 8, kind: input, shape index: {}]
  %s9 = inlined_call_operand.vmem [shape: f32[2], index: 9, kind: input, shape index: {}]
  %s10 = inlined_call_operand.vmem [shape: f32[2], index: 10, kind: input, shape index: {}]
  %s11 = inlined_call_operand.hbm [shape: f32[2,2,32,32], index: 11, kind: output, shape index: {}]
  %s12 = sld [smem:[#allocation0]]
  $region90: #{tpu_custom_call.1} parent=0
    _
  %s14 = ssub.s32 1, %s12
  %s15 = scalar_select 0, %s14, %s12
  $region1: #{tpu_custom_call.1} parent=0
    #allocation4 [shape = 'u8[65536]{0}', space=vmem, size = 0x10000, scoped, tag = 'input window, operand 0, single buffered']
    #allocation5 [shape = 's32[1]{0}', space=sflag, size = 0x4, scoped, tag = 'scoped memory for tpu_custom_call.1']
    #allocation6 [shape = 's32[1]{0}', space=sflag, size = 0x4, scoped, tag = 'scoped memory for tpu_custom_call.1']
    #allocation7 [shape = 's32[1]{0}', space=sflag, size = 0x4, scoped, tag = 'scoped memory for tpu_custom_call.1']
    #allocation8 [shape = 'u8[512]{0}', space=smem, size = 0x200, scoped, tag = 'input window, operand 3, single buffered']
    #allocation9 [shape = 'u8[512]{0}', space=smem, size = 0x200, scoped, tag = 'input window, operand 4, single buffered']
    #allocation10 [shape = 's32[1]{0}', space=sflag, size = 0x4, scoped, tag = 'scoped memory for tpu_custom_call.1']
    #allocation11 [shape = 'u8[512]{0}', space=smem, size = 0x200, scoped, tag = 'input window, operand 5, single buffered']
    #allocation12 [shape = 'u8[512]{0}', space=smem, size = 0x200, scoped, tag = 'input window, operand 6, single buffered']
    #allocation13 [shape = 's32[1]{0}', space=sflag, size = 0x4, scoped, tag = 'scoped memory for tpu_custom_call.1']
    #allocation14 [shape = 'u8[512]{0}', space=smem, size = 0x200, scoped, tag = 'input window, operand 7, single buffered']
    #allocation15 [shape = 'u8[512]{0}', space=smem, size = 0x200, scoped, tag = 'input window, operand 8, single buffered']
    #allocation16 [shape = 's32[1]{0}', space=sflag, size = 0x4, scoped, tag = 'scoped memory for tpu_custom_call.1']
    #allocation17 [shape = 'u8[512]{0}', space=smem, size = 0x200, scoped, tag = 'input window, operand 9, single buffered']
    #allocation18 [shape = 'u8[512]{0}', space=smem, size = 0x200, scoped, tag = 'input window, operand 10, single buffered']
    #allocation19 [shape = 's32[1]{0}', space=sflag, size = 0x4, scoped, tag = 'scoped memory for tpu_custom_call.1']
    #allocation20 [shape = 'u8[65536]{0}', space=vmem, size = 0x10000, scoped, tag = 'output window, operand 0, single buffered']
    %16 = vsyncpa [#allocation5], 0
    %17 = vsyncpa [#allocation7], 0
    %18 = vsyncpa [#allocation10], 0
    %19 = vsyncpa [#allocation13], 0
    %20 = vsyncpa [#allocation16], 0
    %21 = vsyncpa [#allocation19], 0
    %22 = vsyncpa [#allocation6], 0
    // Predicated region
    $region2: #{tpu_custom_call.1} parent=1 // pred_check
      _
    $region3: #{tpu_custom_call.1} parent=1 // pred_check_branch
      %24 = sbr.rel (0) target = $region5
    $region4: #{tpu_custom_call.1} parent=1 // pred_region
      %s26 = ssub.s32 2048, 2048
      %27 = vsyncadd [#allocation5], %s26
      %s28 = sshll.u32 [#allocation4], 4
      %s29 = int_to_ptr.vmem [resolvable:$true] %s28
      %34 = dma.hbm_to_vmem [thread:$0]  %s0, 2048, %s29, [#allocation5], 128, 128, 8
    $region5: #{tpu_custom_call.1} parent=1 // pred_fallthru
      _
    // Predicated region
    $region6: #{tpu_custom_call.1} parent=1 // pred_check
      _
    $region7: #{tpu_custom_call.1} parent=1 // pred_check_branch
      %36 = sbr.rel (0) target = $region9
    $region8: #{tpu_custom_call.1} parent=1 // pred_region
      _
    $region9: #{tpu_custom_call.1} parent=1 // pred_fallthru
      _
    // Predicated region
    $region10: #{tpu_custom_call.1} parent=1 // pred_check
      _
    $region11: #{tpu_custom_call.1} parent=1 // pred_check_branch
      %38 = sbr.rel (0) target = $region13
    $region12: #{tpu_custom_call.1} parent=1 // pred_region
      _
    $region13: #{tpu_custom_call.1} parent=1 // pred_fallthru
      _
    // Predicated region
    $region14: #{tpu_custom_call.1} parent=1 // pred_check
      _
    $region15: #{tpu_custom_call.1} parent=1 // pred_check_branch
      %40 = sbr.rel (0) target = $region17
    $region16: #{tpu_custom_call.1} parent=1 // pred_region
      %s42 = ssub.s32 16, 16
      %43 = vsyncadd [#allocation7], %s42
      %s45 = sshll.u32 %s3, 4
      %s46 = int_to_ptr.vmem [resolvable:$true] %s45
      %48 = dma.vmem_to_smem %s46, 16, [#allocation8], [#allocation7]
    $region17: #{tpu_custom_call.1} parent=1 // pred_fallthru
      _
    // Predicated region
    $region18: #{tpu_custom_call.1} parent=1 // pred_check
      _
    $region19: #{tpu_custom_call.1} parent=1 // pred_check_branch
      %50 = sbr.rel (0) target = $region21
    $region20: #{tpu_custom_call.1} parent=1 // pred_region
      %s52 = ssub.s32 16, 16
      %53 = vsyncadd [#allocation10], %s52
      %s55 = sshll.u32 %s4, 4
      %s56 = int_to_ptr.vmem [resolvable:$true] %s55
      %58 = dma.vmem_to_smem %s56, 16, [#allocation9], [#allocation10]
    $region21: #{tpu_custom_call.1} parent=1 // pred_fallthru
      _
    // Predicated region
    $region22: #{tpu_custom_call.1} parent=1 // pred_check
      _
    $region23: #{tpu_custom_call.1} parent=1 // pred_check_branch
      %60 = sbr.rel (0) target = $region25
    $region24: #{tpu_custom_call.1} parent=1 // pred_region
      %s62 = ssub.s32 16, 16
      %63 = vsyncadd [#allocation10], %s62
      %s65 = sshll.u32 %s5, 4
      %s66 = int_to_ptr.vmem [resolvable:$true] %s65
      %68 = dma.vmem_to_smem %s66, 16, [#allocation11], [#allocation10]
    $region25: #{tpu_custom_call.1} parent=1 // pred_fallthru
      _
    // Predicated region
    $region26: #{tpu_custom_call.1} parent=1 // pred_check
      _
    $region27: #{tpu_custom_call.1} parent=1 // pred_check_branch
      %70 = sbr.rel (0) target = $region29
    $region28: #{tpu_custom_call.1} parent=1 // pred_region
      %s72 = ssub.s32 16, 16
      %73 = vsyncadd [#allocation13], %s72
      %s75 = sshll.u32 %s6, 4
      %s76 = int_to_ptr.vmem [resolvable:$true] %s75
      %78 = dma.vmem_to_smem %s76, 16, [#allocation12], [#allocation13]
    $region29: #{tpu_custom_call.1} parent=1 // pred_fallthru
      _
    // Predicated region
    $region30: #{tpu_custom_call.1} parent=1 // pred_check
      _
    $region31: #{tpu_custom_call.1} parent=1 // pred_check_branch
      %80 = sbr.rel (0) target = $region33
    $region32: #{tpu_custom_call.1} parent=1 // pred_region
      %s82 = ssub.s32 16, 16
      %83 = vsyncadd [#allocation13], %s82
      %s85 = sshll.u32 %s7, 4
      %s86 = int_to_ptr.vmem [resolvable:$true] %s85
      %88 = dma.vmem_to_smem %s86, 16, [#allocation14], [#allocation13]
    $region33: #{tpu_custom_call.1} parent=1 // pred_fallthru
      _
    // Predicated region
    $region34: #{tpu_custom_call.1} parent=1 // pred_check
      _
    $region35: #{tpu_custom_call.1} parent=1 // pred_check_branch
      %90 = sbr.rel (0) target = $region37
    $region36: #{tpu_custom_call.1} parent=1 // pred_region
      %s92 = ssub.s32 16, 16
      %93 = vsyncadd [#allocation16], %s92
      %s95 = sshll.u32 %s8, 4
      %s96 = int_to_ptr.vmem [resolvable:$true] %s95
      %98 = dma.vmem_to_smem %s96, 16, [#allocation15], [#allocation16]
    $region37: #{tpu_custom_call.1} parent=1 // pred_fallthru
      _
    // Predicated region
    $region38: #{tpu_custom_call.1} parent=1 // pred_check
      _
    $region39: #{tpu_custom_call.1} parent=1 // pred_check_branch
      %100 = sbr.rel (0) target = $region41
    $region40: #{tpu_custom_call.1} parent=1 // pred_region
      %s102 = ssub.s32 16, 16
      %103 = vsyncadd [#allocation16], %s102
      %s105 = sshll.u32 %s9, 4
      %s106 = int_to_ptr.vmem [resolvable:$true] %s105
      %108 = dma.vmem_to_smem %s106, 16, [#allocation17], [#allocation16]
    $region41: #{tpu_custom_call.1} parent=1 // pred_fallthru
      _
    // Predicated region
    $region42: #{tpu_custom_call.1} parent=1 // pred_check
      _
    $region43: #{tpu_custom_call.1} parent=1 // pred_check_branch
      %110 = sbr.rel (0) target = $region45
    $region44: #{tpu_custom_call.1} parent=1 // pred_region
      %s112 = ssub.s32 16, 16
      %113 = vsyncadd [#allocation19], %s112
      %s115 = sshll.u32 %s10, 4
      %s116 = int_to_ptr.vmem [resolvable:$true] %s115
      %118 = dma.vmem_to_smem %s116, 16, [#allocation18], [#allocation19]
    $region45: #{tpu_custom_call.1} parent=1 // pred_fallthru
      _
    // Predicated region
    $region46: #{tpu_custom_call.1} parent=1 // pred_check
      _
    $region47: #{tpu_custom_call.1} parent=1 // pred_check_branch
      %120 = sbr.rel (0) target = $region49
    $region48: #{tpu_custom_call.1} parent=1 // pred_region
      %121 = dma.done [#allocation5], 2048
    $region49: #{tpu_custom_call.1} parent=1 // pred_fallthru
      _
    // Predicated region
    $region50: #{tpu_custom_call.1} parent=1 // pred_check
      _
    $region51: #{tpu_custom_call.1} parent=1 // pred_check_branch
      %123 = sbr.rel (0) target = $region53
    $region52: #{tpu_custom_call.1} parent=1 // pred_region
      %124 = dma.done [#allocation7], 16
    $region53: #{tpu_custom_call.1} parent=1 // pred_fallthru
      _
    // Predicated region
    $region54: #{tpu_custom_call.1} parent=1 // pred_check
      _
    $region55: #{tpu_custom_call.1} parent=1 // pred_check_branch
      %126 = sbr.rel (0) target = $region57
    $region56: #{tpu_custom_call.1} parent=1 // pred_region
      %127 = dma.done [#allocation10], 16
    $region57: #{tpu_custom_call.1} parent=1 // pred_fallthru
      _
    // Predicated region
    $region58: #{tpu_custom_call.1} parent=1 // pred_check
      _
    $region59: #{tpu_custom_call.1} parent=1 // pred_check_branch
      %129 = sbr.rel (0) target = $region61
    $region60: #{tpu_custom_call.1} parent=1 // pred_region
      %130 = dma.done [#allocation10], 16
    $region61: #{tpu_custom_call.1} parent=1 // pred_fallthru
      _
    // Predicated region
    $region62: #{tpu_custom_call.1} parent=1 // pred_check
      _
    $region63: #{tpu_custom_call.1} parent=1 // pred_check_branch
      %132 = sbr.rel (0) target = $region65
    $region64: #{tpu_custom_call.1} parent=1 // pred_region
      %133 = dma.done [#allocation13], 16
    $region65: #{tpu_custom_call.1} parent=1 // pred_fallthru
      _
    // Predicated region
    $region66: #{tpu_custom_call.1} parent=1 // pred_check
      _
    $region67: #{tpu_custom_call.1} parent=1 // pred_check_branch
      %135 = sbr.rel (0) target = $region69
    $region68: #{tpu_custom_call.1} parent=1 // pred_region
      %136 = dma.done [#allocation13], 16
    $region69: #{tpu_custom_call.1} parent=1 // pred_fallthru
      _
    // Predicated region
    $region70: #{tpu_custom_call.1} parent=1 // pred_check
      _
    $region71: #{tpu_custom_call.1} parent=1 // pred_check_branch
      %138 = sbr.rel (0) target = $region73
    $region72: #{tpu_custom_call.1} parent=1 // pred_region
      %139 = dma.done [#allocation16], 16
    $region73: #{tpu_custom_call.1} parent=1 // pred_fallthru
      _
    // Predicated region
    $region74: #{tpu_custom_call.1} parent=1 // pred_check
      _
    $region75: #{tpu_custom_call.1} parent=1 // pred_check_branch
      %141 = sbr.rel (0) target = $region77
    $region76: #{tpu_custom_call.1} parent=1 // pred_region
      %142 = dma.done [#allocation16], 16
    $region77: #{tpu_custom_call.1} parent=1 // pred_fallthru
      _
    // Predicated region
    $region78: #{tpu_custom_call.1} parent=1 // pred_check
      _
    $region79: #{tpu_custom_call.1} parent=1 // pred_check_branch
      %144 = sbr.rel (0) target = $region81
    $region80: #{tpu_custom_call.1} parent=1 // pred_region
      %145 = dma.done [#allocation19], 16
    $region81: #{tpu_custom_call.1} parent=1 // pred_fallthru
      _
    %146 = sfence
    %v147 = vld [vmem:[#allocation4] sm:$0xff]
    %v148 = vld [vmem:[#allocation4 + $0x8] sm:$0xff]
    %v149 = vld [vmem:[#allocation4 + $0x10] sm:$0xff]
    %v150 = vld [vmem:[#allocation4 + $0x18] sm:$0xff]
    %v151 = vld [vmem:[#allocation4 + $0x20] sm:$0xff]
    %v152 = vld [vmem:[#allocation4 + $0x28] sm:$0xff]
    %v153 = vld [vmem:[#allocation4 + $0x30] sm:$0xff]
    %v154 = vld [vmem:[#allocation4 + $0x38] sm:$0xff]
    %v155 = vld [vmem:[#allocation4 + $0x40] sm:$0xff]
    %v156 = vld [vmem:[#allocation4 + $0x48] sm:$0xff]
    %v157 = vld [vmem:[#allocation4 + $0x50] sm:$0xff]
    %v158 = vld [vmem:[#allocation4 + $0x58] sm:$0xff]
    %v159 = vld [vmem:[#allocation4 + $0x60] sm:$0xff]
    %v160 = vld [vmem:[#allocation4 + $0x68] sm:$0xff]
    %v161 = vld [vmem:[#allocation4 + $0x70] sm:$0xff]
    %v162 = vld [vmem:[#allocation4 + $0x78] sm:$0xff]
    %v163 = vld [vmem:[%s1] sm:$0xff]
    %v164 = vld [vmem:[%s1 + $0x8] sm:$0xff]
    %vm165 = vcmask 130048
    %v167 = vsel %vm165, %v147, 0
    %v170 = vsel %vm165, %v148, 0
    %v173 = vsel %vm165, %v149, 0
    %v176 = vsel %vm165, %v150, 0
    %v179 = vsel %vm165, %v151, 0
    %v182 = vsel %vm165, %v152, 0
    %v185 = vsel %vm165, %v153, 0
    %v188 = vsel %vm165, %v154, 0
    %v191 = vsel %vm165, %v155, 0
    %v194 = vsel %vm165, %v156, 0
    %v197 = vsel %vm165, %v157, 0
    %v200 = vsel %vm165, %v158, 0
    %v203 = vsel %vm165, %v159, 0
    %v206 = vsel %vm165, %v160, 0
    %v209 = vsel %vm165, %v161, 0
    %v212 = vsel %vm165, %v162, 0
    %214 = vmatprep.subr.mxu0 0.0
    %215 = vmatpush1.msra.mxu0 %v163
    %216 = vmatprep.subr.mxu0 0.0
    %217 = vmatpush1.msra.mxu0 %v164
    %218 = vmatprep.subr.mxu0 0.0
    %219 = vmatpush1.msra.mxu0 0.0
    %220 = vmatprep.subr.mxu0 0.0
    %221 = vmatpush1.msra.mxu0 0.0
    %222 = vmatprep.subr.mxu0 0.0
    %223 = vmatpush1.msra.mxu0 0.0
    %224 = vmatprep.subr.mxu0 0.0
    %225 = vmatpush1.msra.mxu0 0.0
    %226 = vmatprep.subr.mxu0 0.0
    %227 = vmatpush1.msra.mxu0 0.0
    %228 = vmatprep.subr.mxu0 0.0
    %229 = vmatpush1.msra.mxu0 0.0
    %230 = vmatprep.subr.mxu0 0.0
    %231 = vmatpush1.msra.mxu0 0.0
    %232 = vmatprep.subr.mxu0 0.0
    %233 = vmatpush1.msra.mxu0 0.0
    %234 = vmatprep.subr.mxu0 0.0
    %235 = vmatpush1.msra.mxu0 0.0
    %236 = vmatprep.subr.mxu0 0.0
    %237 = vmatpush1.msra.mxu0 0.0
    %238 = vmatprep.subr.mxu0 0.0
    %239 = vmatpush1.msra.mxu0 0.0
    %240 = vmatprep.subr.mxu0 0.0
    %241 = vmatpush1.msra.mxu0 0.0
    %242 = vmatprep.subr.mxu0 0.0
    %243 = vmatpush1.msra.mxu0 0.0
    %244 = vmatprep.subr.mxu0 0.0
    %245 = vmatpush1.msra.mxu0 0.0
    %246 = vmatprep.subr.mxu0 0.0
    %247 = vmatpush1.msra.mxu0 0.0
    %248 = vmatprep.subr.mxu0 0.0
    %249 = vmatpush1.msra.mxu0 0.0
    %250 = vmatprep.subr.mxu0 0.0
    %251 = vmatpush1.msra.mxu0 0.0
    %252 = vmatprep.subr.mxu0 0.0
    %253 = vmatpush1.msra.mxu0 0.0
    %254 = vmatprep.subr.mxu0 0.0
    %255 = vmatpush1.msra.mxu0 0.0
    %256 = vmatprep.subr.mxu0 0.0
    %257 = vmatpush1.msra.mxu0 0.0
    %258 = vmatprep.subr.mxu0 0.0
    %259 = vmatpush1.msra.mxu0 0.0
    %260 = vmatprep.subr.mxu0 0.0
    %261 = vmatpush1.msra.mxu0 0.0
    %262 = vmatprep.subr.mxu0 0.0
    %263 = vmatpush1.msra.mxu0 0.0
    %264 = vmatprep.subr.mxu0 0.0
    %265 = vmatpush1.msra.mxu0 0.0
    %266 = vmatprep.subr.mxu0 0.0
    %267 = vmatpush1.msra.mxu0 0.0
    %268 = vmatprep.subr.mxu0 0.0
    %269 = vmatpush1.msra.mxu0 0.0
    %270 = vmatprep.subr.mxu0 0.0
    %271 = vmatpush1.msra.mxu0 0.0
    %272 = vmatprep.subr.mxu0 0.0
    %273 = vmatpush1.msra.mxu0 0.0
    %274 = vmatprep.subr.mxu0 0.0
    %275 = vmatpush1.msra.mxu0 0.0
    %276 = vmatprep.subr.mxu0 0.0
    %277 = vmatpush1.msra.mxu0 0.0
    %278 = vmatprep.mubr.f32.mxu0 0.0
    %279 = vmatmul.mubr.f32.gmra.mrb[0].mxu0 %v167
    %v280 = vpop.f32.mrb[0].mxu0
    %v281 = vadd.f32 0.0, %v280
    %v282 = vpop.f32.mrb[0].mxu0
    %283 = vmatprep.mubr.f32.mxu0 0.0
    %284 = vmatmul.mubr.f32.gmra.mrb[0].mxu0 %v170
    %v285 = vpop.f32.mrb[0].mxu0
    %v286 = vadd.f32 0.0, %v285
    %v287 = vpop.f32.mrb[0].mxu0
    %288 = vmatprep.mubr.f32.mxu0 0.0
    %289 = vmatmul.mubr.f32.gmra.mrb[0].mxu0 %v173
    %v290 = vpop.f32.mrb[0].mxu0
    %v291 = vadd.f32 0.0, %v290
    %v292 = vpop.f32.mrb[0].mxu0
    %293 = vmatprep.mubr.f32.mxu0 0.0
    %294 = vmatmul.mubr.f32.gmra.mrb[0].mxu0 %v176
    %v295 = vpop.f32.mrb[0].mxu0
    %v296 = vadd.f32 0.0, %v295
    %v297 = vpop.f32.mrb[0].mxu0
    %298 = vmatprep.mubr.f32.mxu0 0.0
    %299 = vmatmul.mubr.f32.gmra.mrb[0].mxu0 %v179
    %v300 = vpop.f32.mrb[0].mxu0
    %v301 = vadd.f32 0.0, %v300
    %v302 = vpop.f32.mrb[0].mxu0
    %303 = vmatprep.mubr.f32.mxu0 0.0
    %304 = vmatmul.mubr.f32.gmra.mrb[0].mxu0 %v182
    %v305 = vpop.f32.mrb[0].mxu0
    %v306 = vadd.f32 0.0, %v305
    %v307 = vpop.f32.mrb[0].mxu0
    %308 = vmatprep.mubr.f32.mxu0 0.0
    %309 = vmatmul.mubr.f32.gmra.mrb[0].mxu0 %v185
    %v310 = vpop.f32.mrb[0].mxu0
    %v311 = vadd.f32 0.0, %v310
    %v312 = vpop.f32.mrb[0].mxu0
    %313 = vmatprep.mubr.f32.mxu0 0.0
    %314 = vmatmul.mubr.f32.gmra.mrb[0].mxu0 %v188
    %v315 = vpop.f32.mrb[0].mxu0
    %v316 = vadd.f32 0.0, %v315
    %v317 = vpop.f32.mrb[0].mxu0
    %318 = vmatprep.mubr.f32.mxu0 0.0
    %319 = vmatmul.mubr.f32.gmra.mrb[0].mxu0 %v191
    %v320 = vpop.f32.mrb[0].mxu0
    %v321 = vadd.f32 0.0, %v320
    %v322 = vpop.f32.mrb[0].mxu0
    %323 = vmatprep.mubr.f32.mxu0 0.0
    %324 = vmatmul.mubr.f32.gmra.mrb[0].mxu0 %v194
    %v325 = vpop.f32.mrb[0].mxu0
    %v326 = vadd.f32 0.0, %v325
    %v327 = vpop.f32.mrb[0].mxu0
    %328 = vmatprep.mubr.f32.mxu0 0.0
    %329 = vmatmul.mubr.f32.gmra.mrb[0].mxu0 %v197
    %v330 = vpop.f32.mrb[0].mxu0
    %v331 = vadd.f32 0.0, %v330
    %v332 = vpop.f32.mrb[0].mxu0
    %333 = vmatprep.mubr.f32.mxu0 0.0
    %334 = vmatmul.mubr.f32.gmra.mrb[0].mxu0 %v200
    %v335 = vpop.f32.mrb[0].mxu0
    %v336 = vadd.f32 0.0, %v335
    %v337 = vpop.f32.mrb[0].mxu0
    %338 = vmatprep.mubr.f32.mxu0 0.0
    %339 = vmatmul.mubr.f32.gmra.mrb[0].mxu0 %v203
    %v340 = vpop.f32.mrb[0].mxu0
    %v341 = vadd.f32 0.0, %v340
    %v342 = vpop.f32.mrb[0].mxu0
    %343 = vmatprep.mubr.f32.mxu0 0.0
    %344 = vmatmul.mubr.f32.gmra.mrb[0].mxu0 %v206
    %v345 = vpop.f32.mrb[0].mxu0
    %v346 = vadd.f32 0.0, %v345
    %v347 = vpop.f32.mrb[0].mxu0
    %348 = vmatprep.mubr.f32.mxu0 0.0
    %349 = vmatmul.mubr.f32.gmra.mrb[0].mxu0 %v209
    %v350 = vpop.f32.mrb[0].mxu0
    %v351 = vadd.f32 0.0, %v350
    %v352 = vpop.f32.mrb[0].mxu0
    %353 = vmatprep.mubr.f32.mxu0 0.0
    %354 = vmatmul.mubr.f32.gmra.mrb[0].mxu0 %v212
    %v355 = vpop.f32.mrb[0].mxu0
    %v356 = vadd.f32 0.0, %v355
    %v357 = vpop.f32.mrb[0].mxu0
    %358 = vdwg.mxu0
    %v359 = vld [vmem:[%s2] sm:$0xff]
    %v360 = vld [vmem:[%s2 + $0x8] sm:$0xff]
    %v361 = vld [vmem:[%s2 + $0x10] sm:$0xff]
    %v362 = vld [vmem:[%s2 + $0x18] sm:$0xff]
    %v364 = vsel %vm165, %v359, 0
    %v367 = vsel %vm165, %v360, 0
    %v370 = vsel %vm165, %v361, 0
    %v373 = vsel %vm165, %v362, 0
    %375 = vmatprep.subr.mxu0 0.0
    %376 = vmatpush1.msra.mxu0 %v281
    %377 = vmatprep.subr.mxu0 0.0
    %378 = vmatpush1.msra.mxu0 %v286
    %379 = vmatprep.subr.mxu0 0.0
    %380 = vmatpush1.msra.mxu0 0.0
    %381 = vmatprep.subr.mxu0 0.0
    %382 = vmatpush1.msra.mxu0 0.0
    %383 = vmatprep.subr.mxu0 0.0
    %384 = vmatpush1.msra.mxu0 0.0
    %385 = vmatprep.subr.mxu0 0.0
    %386 = vmatpush1.msra.mxu0 0.0
    %387 = vmatprep.subr.mxu0 0.0
    %388 = vmatpush1.msra.mxu0 0.0
    %389 = vmatprep.subr.mxu0 0.0
    %390 = vmatpush1.msra.mxu0 0.0
    %391 = vmatprep.subr.mxu0 0.0
    %392 = vmatpush1.msra.mxu0 0.0
    %393 = vmatprep.subr.mxu0 0.0
    %394 = vmatpush1.msra.mxu0 0.0
    %395 = vmatprep.subr.mxu0 0.0
    %396 = vmatpush1.msra.mxu0 0.0
    %397 = vmatprep.subr.mxu0 0.0
    %398 = vmatpush1.msra.mxu0 0.0
    %399 = vmatprep.subr.mxu0 0.0
    %400 = vmatpush1.msra.mxu0 0.0
    %401 = vmatprep.subr.mxu0 0.0
    %402 = vmatpush1.msra.mxu0 0.0
    %403 = vmatprep.subr.mxu0 0.0
    %404 = vmatpush1.msra.mxu0 0.0
    %405 = vmatprep.subr.mxu0 0.0
    %406 = vmatpush1.msra.mxu0 0.0
    %407 = vmatprep.subr.mxu0 0.0
    %408 = vmatpush1.msra.mxu0 0.0
    %409 = vmatprep.subr.mxu0 0.0
    %410 = vmatpush1.msra.mxu0 0.0
    %411 = vmatprep.subr.mxu0 0.0
    %412 = vmatpush1.msra.mxu0 0.0
    %413 = vmatprep.subr.mxu0 0.0
    %414 = vmatpush1.msra.mxu0 0.0
    %415 = vmatprep.subr.mxu0 0.0
    %416 = vmatpush1.msra.mxu0 0.0
    %417 = vmatprep.subr.mxu0 0.0
    %418 = vmatpush1.msra.mxu0 0.0
    %419 = vmatprep.subr.mxu0 0.0
    %420 = vmatpush1.msra.mxu0 0.0
    %421 = vmatprep.subr.mxu0 0.0
    %422 = vmatpush1.msra.mxu0 0.0
    %423 = vmatprep.subr.mxu0 0.0
    %424 = vmatpush1.msra.mxu0 0.0
    %425 = vmatprep.subr.mxu0 0.0
    %426 = vmatpush1.msra.mxu0 0.0
    %427 = vmatprep.subr.mxu0 0.0
    %428 = vmatpush1.msra.mxu0 0.0
    %429 = vmatprep.subr.mxu0 0.0
    %430 = vmatpush1.msra.mxu0 0.0
    %431 = vmatprep.subr.mxu0 0.0
    %432 = vmatpush1.msra.mxu0 0.0
    %433 = vmatprep.subr.mxu0 0.0
    %434 = vmatpush1.msra.mxu0 0.0
    %435 = vmatprep.subr.mxu0 0.0
    %436 = vmatpush1.msra.mxu0 0.0
    %437 = vmatprep.subr.mxu0 0.0
    %438 = vmatpush1.msra.mxu0 0.0
    %439 = vmatprep.mubr.f32.mxu0 0.0
    %440 = vmatmul.mubr.f32.gmra.mrb[0].mxu0 %v364
    %v441 = vpop.f32.mrb[0].mxu0
    %v442 = vadd.f32 0.0, %v441
    %v443 = vpop.f32.mrb[0].mxu0
    %444 = vmatprep.mubr.f32.mxu0 0.0
    %445 = vmatmul.mubr.f32.gmra.mrb[0].mxu0 %v367
    %v446 = vpop.f32.mrb[0].mxu0
    %v447 = vadd.f32 0.0, %v446
    %v448 = vpop.f32.mrb[0].mxu0
    %449 = vmatprep.mubr.f32.mxu0 0.0
    %450 = vmatmul.mubr.f32.gmra.mrb[0].mxu0 %v370
    %v451 = vpop.f32.mrb[0].mxu0
    %v452 = vadd.f32 0.0, %v451
    %v453 = vpop.f32.mrb[0].mxu0
    %454 = vmatprep.mubr.f32.mxu0 0.0
    %455 = vmatmul.mubr.f32.gmra.mrb[0].mxu0 %v373
    %v456 = vpop.f32.mrb[0].mxu0
    %v457 = vadd.f32 0.0, %v456
    %v458 = vpop.f32.mrb[0].mxu0
    %459 = vdwg.mxu0
    %460 = vmatprep.subr.mxu0 0.0
    %461 = vmatpush1.msra.mxu0 %v291
    %462 = vmatprep.subr.mxu0 0.0
    %463 = vmatpush1.msra.mxu0 %v296
    %464 = vmatprep.subr.mxu0 0.0
    %465 = vmatpush1.msra.mxu0 0.0
    %466 = vmatprep.subr.mxu0 0.0
    %467 = vmatpush1.msra.mxu0 0.0
    %468 = vmatprep.subr.mxu0 0.0
    %469 = vmatpush1.msra.mxu0 0.0
    %470 = vmatprep.subr.mxu0 0.0
    %471 = vmatpush1.msra.mxu0 0.0
    %472 = vmatprep.subr.mxu0 0.0
    %473 = vmatpush1.msra.mxu0 0.0
    %474 = vmatprep.subr.mxu0 0.0
    %475 = vmatpush1.msra.mxu0 0.0
    %476 = vmatprep.subr.mxu0 0.0
    %477 = vmatpush1.msra.mxu0 0.0
    %478 = vmatprep.subr.mxu0 0.0
    %479 = vmatpush1.msra.mxu0 0.0
    %480 = vmatprep.subr.mxu0 0.0
    %481 = vmatpush1.msra.mxu0 0.0
    %482 = vmatprep.subr.mxu0 0.0
    %483 = vmatpush1.msra.mxu0 0.0
    %484 = vmatprep.subr.mxu0 0.0
    %485 = vmatpush1.msra.mxu0 0.0
    %486 = vmatprep.subr.mxu0 0.0
    %487 = vmatpush1.msra.mxu0 0.0
    %488 = vmatprep.subr.mxu0 0.0
    %489 = vmatpush1.msra.mxu0 0.0
    %490 = vmatprep.subr.mxu0 0.0
    %491 = vmatpush1.msra.mxu0 0.0
    %492 = vmatprep.subr.mxu0 0.0
    %493 = vmatpush1.msra.mxu0 0.0
    %494 = vmatprep.subr.mxu0 0.0
    %495 = vmatpush1.msra.mxu0 0.0
    %496 = vmatprep.subr.mxu0 0.0
    %497 = vmatpush1.msra.mxu0 0.0
    %498 = vmatprep.subr.mxu0 0.0
    %499 = vmatpush1.msra.mxu0 0.0
    %500 = vmatprep.subr.mxu0 0.0
    %501 = vmatpush1.msra.mxu0 0.0
    %502 = vmatprep.subr.mxu0 0.0
    %503 = vmatpush1.msra.mxu0 0.0
    %504 = vmatprep.subr.mxu0 0.0
    %505 = vmatpush1.msra.mxu0 0.0
    %506 = vmatprep.subr.mxu0 0.0
    %507 = vmatpush1.msra.mxu0 0.0
    %508 = vmatprep.subr.mxu0 0.0
    %509 = vmatpush1.msra.mxu0 0.0
    %510 = vmatprep.subr.mxu0 0.0
    %511 = vmatpush1.msra.mxu0 0.0
    %512 = vmatprep.subr.mxu0 0.0
    %513 = vmatpush1.msra.mxu0 0.0
    %514 = vmatprep.subr.mxu0 0.0
    %515 = vmatpush1.msra.mxu0 0.0
    %516 = vmatprep.subr.mxu0 0.0
    %517 = vmatpush1.msra.mxu0 0.0
    %518 = vmatprep.subr.mxu0 0.0
    %519 = vmatpush1.msra.mxu0 0.0
    %520 = vmatprep.subr.mxu0 0.0
    %521 = vmatpush1.msra.mxu0 0.0
    %522 = vmatprep.subr.mxu0 0.0
    %523 = vmatpush1.msra.mxu0 0.0
    %524 = vmatprep.mubr.f32.mxu0 0.0
    %525 = vmatmul.mubr.f32.gmra.mrb[0].mxu0 %v364
    %v526 = vpop.f32.mrb[0].mxu0
    %v527 = vadd.f32 0.0, %v526
    %v528 = vpop.f32.mrb[0].mxu0
    %529 = vmatprep.mubr.f32.mxu0 0.0
    %530 = vmatmul.mubr.f32.gmra.mrb[0].mxu0 %v367
    %v531 = vpop.f32.mrb[0].mxu0
    %v532 = vadd.f32 0.0, %v531
    %v533 = vpop.f32.mrb[0].mxu0
    %534 = vmatprep.mubr.f32.mxu0 0.0
    %535 = vmatmul.mubr.f32.gmra.mrb[0].mxu0 %v370
    %v536 = vpop.f32.mrb[0].mxu0
    %v537 = vadd.f32 0.0, %v536
    %v538 = vpop.f32.mrb[0].mxu0
    %539 = vmatprep.mubr.f32.mxu0 0.0
    %540 = vmatmul.mubr.f32.gmra.mrb[0].mxu0 %v373
    %v541 = vpop.f32.mrb[0].mxu0
    %v542 = vadd.f32 0.0, %v541
    %v543 = vpop.f32.mrb[0].mxu0
    %544 = vdwg.mxu0
    %545 = vmatprep.subr.mxu0 0.0
    %546 = vmatpush1.msra.mxu0 %v301
    %547 = vmatprep.subr.mxu0 0.0
    %548 = vmatpush1.msra.mxu0 %v306
    %549 = vmatprep.subr.mxu0 0.0
    %550 = vmatpush1.msra.mxu0 0.0
    %551 = vmatprep.subr.mxu0 0.0
    %552 = vmatpush1.msra.mxu0 0.0
    %553 = vmatprep.subr.mxu0 0.0
    %554 = vmatpush1.msra.mxu0 0.0
    %555 = vmatprep.subr.mxu0 0.0
    %556 = vmatpush1.msra.mxu0 0.0
    %557 = vmatprep.subr.mxu0 0.0
    %558 = vmatpush1.msra.mxu0 0.0
    %559 = vmatprep.subr.mxu0 0.0
    %560 = vmatpush1.msra.mxu0 0.0
    %561 = vmatprep.subr.mxu0 0.0
    %562 = vmatpush1.msra.mxu0 0.0
    %563 = vmatprep.subr.mxu0 0.0
    %564 = vmatpush1.msra.mxu0 0.0
    %565 = vmatprep.subr.mxu0 0.0
    %566 = vmatpush1.msra.mxu0 0.0
    %567 = vmatprep.subr.mxu0 0.0
    %568 = vmatpush1.msra.mxu0 0.0
    %569 = vmatprep.subr.mxu0 0.0
    %570 = vmatpush1.msra.mxu0 0.0
    %571 = vmatprep.subr.mxu0 0.0
    %572 = vmatpush1.msra.mxu0 0.0
    %573 = vmatprep.subr.mxu0 0.0
    %574 = vmatpush1.msra.mxu0 0.0
    %575 = vmatprep.subr.mxu0 0.0
    %576 = vmatpush1.msra.mxu0 0.0
    %577 = vmatprep.subr.mxu0 0.0
    %578 = vmatpush1.msra.mxu0 0.0
    %579 = vmatprep.subr.mxu0 0.0
    %580 = vmatpush1.msra.mxu0 0.0
    %581 = vmatprep.subr.mxu0 0.0
    %582 = vmatpush1.msra.mxu0 0.0
    %583 = vmatprep.subr.mxu0 0.0
    %584 = vmatpush1.msra.mxu0 0.0
    %585 = vmatprep.subr.mxu0 0.0
    %586 = vmatpush1.msra.mxu0 0.0
    %587 = vmatprep.subr.mxu0 0.0
    %588 = vmatpush1.msra.mxu0 0.0
    %589 = vmatprep.subr.mxu0 0.0
    %590 = vmatpush1.msra.mxu0 0.0
    %591 = vmatprep.subr.mxu0 0.0
    %592 = vmatpush1.msra.mxu0 0.0
    %593 = vmatprep.subr.mxu0 0.0
    %594 = vmatpush1.msra.mxu0 0.0
    %595 = vmatprep.subr.mxu0 0.0
    %596 = vmatpush1.msra.mxu0 0.0
    %597 = vmatprep.subr.mxu0 0.0
    %598 = vmatpush1.msra.mxu0 0.0
    %599 = vmatprep.subr.mxu0 0.0
    %600 = vmatpush1.msra.mxu0 0.0
    %601 = vmatprep.subr.mxu0 0.0
    %602 = vmatpush1.msra.mxu0 0.0
    %603 = vmatprep.subr.mxu0 0.0
    %604 = vmatpush1.msra.mxu0 0.0
    %605 = vmatprep.subr.mxu0 0.0
    %606 = vmatpush1.msra.mxu0 0.0
    %607 = vmatprep.subr.mxu0 0.0
    %608 = vmatpush1.msra.mxu0 0.0
    %609 = vmatprep.mubr.f32.mxu0 0.0
    %610 = vmatmul.mubr.f32.gmra.mrb[0].mxu0 %v364
    %v611 = vpop.f32.mrb[0].mxu0
    %v612 = vadd.f32 0.0, %v611
    %v613 = vpop.f32.mrb[0].mxu0
    %614 = vmatprep.mubr.f32.mxu0 0.0
    %615 = vmatmul.mubr.f32.gmra.mrb[0].mxu0 %v367
    %v616 = vpop.f32.mrb[0].mxu0
    %v617 = vadd.f32 0.0, %v616
    %v618 = vpop.f32.mrb[0].mxu0
    %619 = vmatprep.mubr.f32.mxu0 0.0
    %620 = vmatmul.mubr.f32.gmra.mrb[0].mxu0 %v370
    %v621 = vpop.f32.mrb[0].mxu0
    %v622 = vadd.f32 0.0, %v621
    %v623 = vpop.f32.mrb[0].mxu0
    %624 = vmatprep.mubr.f32.mxu0 0.0
    %625 = vmatmul.mubr.f32.gmra.mrb[0].mxu0 %v373
    %v626 = vpop.f32.mrb[0].mxu0
    %v627 = vadd.f32 0.0, %v626
    %v628 = vpop.f32.mrb[0].mxu0
    %629 = vdwg.mxu0
    %630 = vmatprep.subr.mxu0 0.0
    %631 = vmatpush1.msra.mxu0 %v311
    %632 = vmatprep.subr.mxu0 0.0
    %633 = vmatpush1.msra.mxu0 %v316
    %634 = vmatprep.subr.mxu0 0.0
    %635 = vmatpush1.msra.mxu0 0.0
    %636 = vmatprep.subr.mxu0 0.0
    %637 = vmatpush1.msra.mxu0 0.0
    %638 = vmatprep.subr.mxu0 0.0
    %639 = vmatpush1.msra.mxu0 0.0
    %640 = vmatprep.subr.mxu0 0.0
    %641 = vmatpush1.msra.mxu0 0.0
    %642 = vmatprep.subr.mxu0 0.0
    %643 = vmatpush1.msra.mxu0 0.0
    %644 = vmatprep.subr.mxu0 0.0
    %645 = vmatpush1.msra.mxu0 0.0
    %646 = vmatprep.subr.mxu0 0.0
    %647 = vmatpush1.msra.mxu0 0.0
    %648 = vmatprep.subr.mxu0 0.0
    %649 = vmatpush1.msra.mxu0 0.0
    %650 = vmatprep.subr.mxu0 0.0
    %651 = vmatpush1.msra.mxu0 0.0
    %652 = vmatprep.subr.mxu0 0.0
    %653 = vmatpush1.msra.mxu0 0.0
    %654 = vmatprep.subr.mxu0 0.0
    %655 = vmatpush1.msra.mxu0 0.0
    %656 = vmatprep.subr.mxu0 0.0
    %657 = vmatpush1.msra.mxu0 0.0
    %658 = vmatprep.subr.mxu0 0.0
    %659 = vmatpush1.msra.mxu0 0.0
    %660 = vmatprep.subr.mxu0 0.0
    %661 = vmatpush1.msra.mxu0 0.0
    %662 = vmatprep.subr.mxu0 0.0
    %663 = vmatpush1.msra.mxu0 0.0
    %664 = vmatprep.subr.mxu0 0.0
    %665 = vmatpush1.msra.mxu0 0.0
    %666 = vmatprep.subr.mxu0 0.0
    %667 = vmatpush1.msra.mxu0 0.0
    %668 = vmatprep.subr.mxu0 0.0
    %669 = vmatpush1.msra.mxu0 0.0
    %670 = vmatprep.subr.mxu0 0.0
    %671 = vmatpush1.msra.mxu0 0.0
    %672 = vmatprep.subr.mxu0 0.0
    %673 = vmatpush1.msra.mxu0 0.0
    %674 = vmatprep.subr.mxu0 0.0
    %675 = vmatpush1.msra.mxu0 0.0
    %676 = vmatprep.subr.mxu0 0.0
    %677 = vmatpush1.msra.mxu0 0.0
    %678 = vmatprep.subr.mxu0 0.0
    %679 = vmatpush1.msra.mxu0 0.0
    %680 = vmatprep.subr.mxu0 0.0
    %681 = vmatpush1.msra.mxu0 0.0
    %682 = vmatprep.subr.mxu0 0.0
    %683 = vmatpush1.msra.mxu0 0.0
    %684 = vmatprep.subr.mxu0 0.0
    %685 = vmatpush1.msra.mxu0 0.0
    %686 = vmatprep.subr.mxu0 0.0
    %687 = vmatpush1.msra.mxu0 0.0
    %688 = vmatprep.subr.mxu0 0.0
    %689 = vmatpush1.msra.mxu0 0.0
    %690 = vmatprep.subr.mxu0 0.0
    %691 = vmatpush1.msra.mxu0 0.0
    %692 = vmatprep.subr.mxu0 0.0
    %693 = vmatpush1.msra.mxu0 0.0
    %694 = vmatprep.mubr.f32.mxu0 0.0
    %695 = vmatmul.mubr.f32.gmra.mrb[0].mxu0 %v364
    %v696 = vpop.f32.mrb[0].mxu0
    %v697 = vadd.f32 0.0, %v696
    %v698 = vpop.f32.mrb[0].mxu0
    %699 = vmatprep.mubr.f32.mxu0 0.0
    %700 = vmatmul.mubr.f32.gmra.mrb[0].mxu0 %v367
    %v701 = vpop.f32.mrb[0].mxu0
    %v702 = vadd.f32 0.0, %v701
    %v703 = vpop.f32.mrb[0].mxu0
    %704 = vmatprep.mubr.f32.mxu0 0.0
    %705 = vmatmul.mubr.f32.gmra.mrb[0].mxu0 %v370
    %v706 = vpop.f32.mrb[0].mxu0
    %v707 = vadd.f32 0.0, %v706
    %v708 = vpop.f32.mrb[0].mxu0
    %709 = vmatprep.mubr.f32.mxu0 0.0
    %710 = vmatmul.mubr.f32.gmra.mrb[0].mxu0 %v373
    %v711 = vpop.f32.mrb[0].mxu0
    %v712 = vadd.f32 0.0, %v711
    %v713 = vpop.f32.mrb[0].mxu0
    %714 = vdwg.mxu0
    %715 = vmatprep.subr.mxu0 0.0
    %716 = vmatpush1.msra.mxu0 %v321
    %717 = vmatprep.subr.mxu0 0.0
    %718 = vmatpush1.msra.mxu0 %v326
    %719 = vmatprep.subr.mxu0 0.0
    %720 = vmatpush1.msra.mxu0 0.0
    %721 = vmatprep.subr.mxu0 0.0
    %722 = vmatpush1.msra.mxu0 0.0
    %723 = vmatprep.subr.mxu0 0.0
    %724 = vmatpush1.msra.mxu0 0.0
    %725 = vmatprep.subr.mxu0 0.0
    %726 = vmatpush1.msra.mxu0 0.0
    %727 = vmatprep.subr.mxu0 0.0
    %728 = vmatpush1.msra.mxu0 0.0
    %729 = vmatprep.subr.mxu0 0.0
    %730 = vmatpush1.msra.mxu0 0.0
    %731 = vmatprep.subr.mxu0 0.0
    %732 = vmatpush1.msra.mxu0 0.0
    %733 = vmatprep.subr.mxu0 0.0
    %734 = vmatpush1.msra.mxu0 0.0
    %735 = vmatprep.subr.mxu0 0.0
    %736 = vmatpush1.msra.mxu0 0.0
    %737 = vmatprep.subr.mxu0 0.0
    %738 = vmatpush1.msra.mxu0 0.0
    %739 = vmatprep.subr.mxu0 0.0
    %740 = vmatpush1.msra.mxu0 0.0
    %741 = vmatprep.subr.mxu0 0.0
    %742 = vmatpush1.msra.mxu0 0.0
    %743 = vmatprep.subr.mxu0 0.0
    %744 = vmatpush1.msra.mxu0 0.0
    %745 = vmatprep.subr.mxu0 0.0
    %746 = vmatpush1.msra.mxu0 0.0
    %747 = vmatprep.subr.mxu0 0.0
    %748 = vmatpush1.msra.mxu0 0.0
    %749 = vmatprep.subr.mxu0 0.0
    %750 = vmatpush1.msra.mxu0 0.0
    %751 = vmatprep.subr.mxu0 0.0
    %752 = vmatpush1.msra.mxu0 0.0
    %753 = vmatprep.subr.mxu0 0.0
    %754 = vmatpush1.msra.mxu0 0.0
    %755 = vmatprep.subr.mxu0 0.0
    %756 = vmatpush1.msra.mxu0 0.0
    %757 = vmatprep.subr.mxu0 0.0
    %758 = vmatpush1.msra.mxu0 0.0
    %759 = vmatprep.subr.mxu0 0.0
    %760 = vmatpush1.msra.mxu0 0.0
    %761 = vmatprep.subr.mxu0 0.0
    %762 = vmatpush1.msra.mxu0 0.0
    %763 = vmatprep.subr.mxu0 0.0
    %764 = vmatpush1.msra.mxu0 0.0
    %765 = vmatprep.subr.mxu0 0.0
    %766 = vmatpush1.msra.mxu0 0.0
    %767 = vmatprep.subr.mxu0 0.0
    %768 = vmatpush1.msra.mxu0 0.0
    %769 = vmatprep.subr.mxu0 0.0
    %770 = vmatpush1.msra.mxu0 0.0
    %771 = vmatprep.subr.mxu0 0.0
    %772 = vmatpush1.msra.mxu0 0.0
    %773 = vmatprep.subr.mxu0 0.0
    %774 = vmatpush1.msra.mxu0 0.0
    %775 = vmatprep.subr.mxu0 0.0
    %776 = vmatpush1.msra.mxu0 0.0
    %777 = vmatprep.subr.mxu0 0.0
    %778 = vmatpush1.msra.mxu0 0.0
    %779 = vmatprep.mubr.f32.mxu0 0.0
    %780 = vmatmul.mubr.f32.gmra.mrb[0].mxu0 %v364
    %v781 = vpop.f32.mrb[0].mxu0
    %v782 = vadd.f32 0.0, %v781
    %v783 = vpop.f32.mrb[0].mxu0
    %784 = vmatprep.mubr.f32.mxu0 0.0
    %785 = vmatmul.mubr.f32.gmra.mrb[0].mxu0 %v367
    %v786 = vpop.f32.mrb[0].mxu0
    %v787 = vadd.f32 0.0, %v786
    %v788 = vpop.f32.mrb[0].mxu0
    %789 = vmatprep.mubr.f32.mxu0 0.0
    %790 = vmatmul.mubr.f32.gmra.mrb[0].mxu0 %v370
    %v791 = vpop.f32.mrb[0].mxu0
    %v792 = vadd.f32 0.0, %v791
    %v793 = vpop.f32.mrb[0].mxu0
    %794 = vmatprep.mubr.f32.mxu0 0.0
    %795 = vmatmul.mubr.f32.gmra.mrb[0].mxu0 %v373
    %v796 = vpop.f32.mrb[0].mxu0
    %v797 = vadd.f32 0.0, %v796
    %v798 = vpop.f32.mrb[0].mxu0
    %799 = vdwg.mxu0
    %800 = vmatprep.subr.mxu0 0.0
    %801 = vmatpush1.msra.mxu0 %v331
    %802 = vmatprep.subr.mxu0 0.0
    %803 = vmatpush1.msra.mxu0 %v336
    %804 = vmatprep.subr.mxu0 0.0
    %805 = vmatpush1.msra.mxu0 0.0
    %806 = vmatprep.subr.mxu0 0.0
    %807 = vmatpush1.msra.mxu0 0.0
    %808 = vmatprep.subr.mxu0 0.0
    %809 = vmatpush1.msra.mxu0 0.0
    %810 = vmatprep.subr.mxu0 0.0
    %811 = vmatpush1.msra.mxu0 0.0
    %812 = vmatprep.subr.mxu0 0.0
    %813 = vmatpush1.msra.mxu0 0.0
    %814 = vmatprep.subr.mxu0 0.0
    %815 = vmatpush1.msra.mxu0 0.0
    %816 = vmatprep.subr.mxu0 0.0
    %817 = vmatpush1.msra.mxu0 0.0
    %818 = vmatprep.subr.mxu0 0.0
    %819 = vmatpush1.msra.mxu0 0.0
    %820 = vmatprep.subr.mxu0 0.0
    %821 = vmatpush1.msra.mxu0 0.0
    %822 = vmatprep.subr.mxu0 0.0
    %823 = vmatpush1.msra.mxu0 0.0
    %824 = vmatprep.subr.mxu0 0.0
    %825 = vmatpush1.msra.mxu0 0.0
    %826 = vmatprep.subr.mxu0 0.0
    %827 = vmatpush1.msra.mxu0 0.0
    %828 = vmatprep.subr.mxu0 0.0
    %829 = vmatpush1.msra.mxu0 0.0
    %830 = vmatprep.subr.mxu0 0.0
    %831 = vmatpush1.msra.mxu0 0.0
    %832 = vmatprep.subr.mxu0 0.0
    %833 = vmatpush1.msra.mxu0 0.0
    %834 = vmatprep.subr.mxu0 0.0
    %835 = vmatpush1.msra.mxu0 0.0
    %836 = vmatprep.subr.mxu0 0.0
    %837 = vmatpush1.msra.mxu0 0.0
    %838 = vmatprep.subr.mxu0 0.0
    %839 = vmatpush1.msra.mxu0 0.0
    %840 = vmatprep.subr.mxu0 0.0
    %841 = vmatpush1.msra.mxu0 0.0
    %842 = vmatprep.subr.mxu0 0.0
    %843 = vmatpush1.msra.mxu0 0.0
    %844 = vmatprep.subr.mxu0 0.0
    %845 = vmatpush1.msra.mxu0 0.0
    %846 = vmatprep.subr.mxu0 0.0
    %847 = vmatpush1.msra.mxu0 0.0
    %848 = vmatprep.subr.mxu0 0.0
    %849 = vmatpush1.msra.mxu0 0.0
    %850 = vmatprep.subr.mxu0 0.0
    %851 = vmatpush1.msra.mxu0 0.0
    %852 = vmatprep.subr.mxu0 0.0
    %853 = vmatpush1.msra.mxu0 0.0
    %854 = vmatprep.subr.mxu0 0.0
    %855 = vmatpush1.msra.mxu0 0.0
    %856 = vmatprep.subr.mxu0 0.0
    %857 = vmatpush1.msra.mxu0 0.0
    %858 = vmatprep.subr.mxu0 0.0
    %859 = vmatpush1.msra.mxu0 0.0
    %860 = vmatprep.subr.mxu0 0.0
    %861 = vmatpush1.msra.mxu0 0.0
    %862 = vmatprep.subr.mxu0 0.0
    %863 = vmatpush1.msra.mxu0 0.0
    %864 = vmatprep.mubr.f32.mxu0 0.0
    %865 = vmatmul.mubr.f32.gmra.mrb[0].mxu0 %v364
    %v866 = vpop.f32.mrb[0].mxu0
    %v867 = vadd.f32 0.0, %v866
    %v868 = vpop.f32.mrb[0].mxu0
    %869 = vmatprep.mubr.f32.mxu0 0.0
    %870 = vmatmul.mubr.f32.gmra.mrb[0].mxu0 %v367
    %v871 = vpop.f32.mrb[0].mxu0
    %v872 = vadd.f32 0.0, %v871
    %v873 = vpop.f32.mrb[0].mxu0
    %874 = vmatprep.mubr.f32.mxu0 0.0
    %875 = vmatmul.mubr.f32.gmra.mrb[0].mxu0 %v370
    %v876 = vpop.f32.mrb[0].mxu0
    %v877 = vadd.f32 0.0, %v876
    %v878 = vpop.f32.mrb[0].mxu0
    %879 = vmatprep.mubr.f32.mxu0 0.0
    %880 = vmatmul.mubr.f32.gmra.mrb[0].mxu0 %v373
    %v881 = vpop.f32.mrb[0].mxu0
    %v882 = vadd.f32 0.0, %v881
    %v883 = vpop.f32.mrb[0].mxu0
    %884 = vdwg.mxu0
    %885 = vmatprep.subr.mxu0 0.0
    %886 = vmatpush1.msra.mxu0 %v341
    %887 = vmatprep.subr.mxu0 0.0
    %888 = vmatpush1.msra.mxu0 %v346
    %889 = vmatprep.subr.mxu0 0.0
    %890 = vmatpush1.msra.mxu0 0.0
    %891 = vmatprep.subr.mxu0 0.0
    %892 = vmatpush1.msra.mxu0 0.0
    %893 = vmatprep.subr.mxu0 0.0
    %894 = vmatpush1.msra.mxu0 0.0
    %895 = vmatprep.subr.mxu0 0.0
    %896 = vmatpush1.msra.mxu0 0.0
    %897 = vmatprep.subr.mxu0 0.0
    %898 = vmatpush1.msra.mxu0 0.0
    %899 = vmatprep.subr.mxu0 0.0
    %900 = vmatpush1.msra.mxu0 0.0
    %901 = vmatprep.subr.mxu0 0.0
    %902 = vmatpush1.msra.mxu0 0.0
    %903 = vmatprep.subr.mxu0 0.0
    %904 = vmatpush1.msra.mxu0 0.0
    %905 = vmatprep.subr.mxu0 0.0
    %906 = vmatpush1.msra.mxu0 0.0
    %907 = vmatprep.subr.mxu0 0.0
    %908 = vmatpush1.msra.mxu0 0.0
    %909 = vmatprep.subr.mxu0 0.0
    %910 = vmatpush1.msra.mxu0 0.0
    %911 = vmatprep.subr.mxu0 0.0
    %912 = vmatpush1.msra.mxu0 0.0
    %913 = vmatprep.subr.mxu0 0.0
    %914 = vmatpush1.msra.mxu0 0.0
    %915 = vmatprep.subr.mxu0 0.0
    %916 = vmatpush1.msra.mxu0 0.0
    %917 = vmatprep.subr.mxu0 0.0
    %918 = vmatpush1.msra.mxu0 0.0
    %919 = vmatprep.subr.mxu0 0.0
    %920 = vmatpush1.msra.mxu0 0.0
    %921 = vmatprep.subr.mxu0 0.0
    %922 = vmatpush1.msra.mxu0 0.0
    %923 = vmatprep.subr.mxu0 0.0
    %924 = vmatpush1.msra.mxu0 0.0
    %925 = vmatprep.subr.mxu0 0.0
    %926 = vmatpush1.msra.mxu0 0.0
    %927 = vmatprep.subr.mxu0 0.0
    %928 = vmatpush1.msra.mxu0 0.0
    %929 = vmatprep.subr.mxu0 0.0
    %930 = vmatpush1.msra.mxu0 0.0
    %931 = vmatprep.subr.mxu0 0.0
    %932 = vmatpush1.msra.mxu0 0.0
    %933 = vmatprep.subr.mxu0 0.0
    %934 = vmatpush1.msra.mxu0 0.0
    %935 = vmatprep.subr.mxu0 0.0
    %936 = vmatpush1.msra.mxu0 0.0
    %937 = vmatprep.subr.mxu0 0.0
    %938 = vmatpush1.msra.mxu0 0.0
    %939 = vmatprep.subr.mxu0 0.0
    %940 = vmatpush1.msra.mxu0 0.0
    %941 = vmatprep.subr.mxu0 0.0
    %942 = vmatpush1.msra.mxu0 0.0
    %943 = vmatprep.subr.mxu0 0.0
    %944 = vmatpush1.msra.mxu0 0.0
    %945 = vmatprep.subr.mxu0 0.0
    %946 = vmatpush1.msra.mxu0 0.0
    %947 = vmatprep.subr.mxu0 0.0
    %948 = vmatpush1.msra.mxu0 0.0
    %949 = vmatprep.mubr.f32.mxu0 0.0
    %950 = vmatmul.mubr.f32.gmra.mrb[0].mxu0 %v364
    %v951 = vpop.f32.mrb[0].mxu0
    %v952 = vadd.f32 0.0, %v951
    %v953 = vpop.f32.mrb[0].mxu0
    %954 = vmatprep.mubr.f32.mxu0 0.0
    %955 = vmatmul.mubr.f32.gmra.mrb[0].mxu0 %v367
    %v956 = vpop.f32.mrb[0].mxu0
    %v957 = vadd.f32 0.0, %v956
    %v958 = vpop.f32.mrb[0].mxu0
    %959 = vmatprep.mubr.f32.mxu0 0.0
    %960 = vmatmul.mubr.f32.gmra.mrb[0].mxu0 %v370
    %v961 = vpop.f32.mrb[0].mxu0
    %v962 = vadd.f32 0.0, %v961
    %v963 = vpop.f32.mrb[0].mxu0
    %964 = vmatprep.mubr.f32.mxu0 0.0
    %965 = vmatmul.mubr.f32.gmra.mrb[0].mxu0 %v373
    %v966 = vpop.f32.mrb[0].mxu0
    %v967 = vadd.f32 0.0, %v966
    %v968 = vpop.f32.mrb[0].mxu0
    %969 = vdwg.mxu0
    %970 = vmatprep.subr.mxu0 0.0
    %971 = vmatpush1.msra.mxu0 %v351
    %972 = vmatprep.subr.mxu0 0.0
    %973 = vmatpush1.msra.mxu0 %v356
    %974 = vmatprep.subr.mxu0 0.0
    %975 = vmatpush1.msra.mxu0 0.0
    %976 = vmatprep.subr.mxu0 0.0
    %977 = vmatpush1.msra.mxu0 0.0
    %978 = vmatprep.subr.mxu0 0.0
    %979 = vmatpush1.msra.mxu0 0.0
    %980 = vmatprep.subr.mxu0 0.0
    %981 = vmatpush1.msra.mxu0 0.0
    %982 = vmatprep.subr.mxu0 0.0
    %983 = vmatpush1.msra.mxu0 0.0
    %984 = vmatprep.subr.mxu0 0.0
    %985 = vmatpush1.msra.mxu0 0.0
    %986 = vmatprep.subr.mxu0 0.0
    %987 = vmatpush1.msra.mxu0 0.0
    %988 = vmatprep.subr.mxu0 0.0
    %989 = vmatpush1.msra.mxu0 0.0
    %990 = vmatprep.subr.mxu0 0.0
    %991 = vmatpush1.msra.mxu0 0.0
    %992 = vmatprep.subr.mxu0 0.0
    %993 = vmatpush1.msra.mxu0 0.0
    %994 = vmatprep.subr.mxu0 0.0
    %995 = vmatpush1.msra.mxu0 0.0
    %996 = vmatprep.subr.mxu0 0.0
    %997 = vmatpush1.msra.mxu0 0.0
    %998 = vmatprep.subr.mxu0 0.0
    %999 = vmatpush1.msra.mxu0 0.0
    %1000 = vmatprep.subr.mxu0 0.0
    %1001 = vmatpush1.msra.mxu0 0.0
    %1002 = vmatprep.subr.mxu0 0.0
    %1003 = vmatpush1.msra.mxu0 0.0
    %1004 = vmatprep.subr.mxu0 0.0
    %1005 = vmatpush1.msra.mxu0 0.0
    %1006 = vmatprep.subr.mxu0 0.0
    %1007 = vmatpush1.msra.mxu0 0.0
    %1008 = vmatprep.subr.mxu0 0.0
    %1009 = vmatpush1.msra.mxu0 0.0
    %1010 = vmatprep.subr.mxu0 0.0
    %1011 = vmatpush1.msra.mxu0 0.0
    %1012 = vmatprep.subr.mxu0 0.0
    %1013 = vmatpush1.msra.mxu0 0.0
    %1014 = vmatprep.subr.mxu0 0.0
    %1015 = vmatpush1.msra.mxu0 0.0
    %1016 = vmatprep.subr.mxu0 0.0
    %1017 = vmatpush1.msra.mxu0 0.0
    %1018 = vmatprep.subr.mxu0 0.0
    %1019 = vmatpush1.msra.mxu0 0.0
    %1020 = vmatprep.subr.mxu0 0.0
    %1021 = vmatpush1.msra.mxu0 0.0
    %1022 = vmatprep.subr.mxu0 0.0
    %1023 = vmatpush1.msra.mxu0 0.0
    %1024 = vmatprep.subr.mxu0 0.0
    %1025 = vmatpush1.msra.mxu0 0.0
    %1026 = vmatprep.subr.mxu0 0.0
    %1027 = vmatpush1.msra.mxu0 0.0
    %1028 = vmatprep.subr.mxu0 0.0
    %1029 = vmatpush1.msra.mxu0 0.0
    %1030 = vmatprep.subr.mxu0 0.0
    %1031 = vmatpush1.msra.mxu0 0.0
    %1032 = vmatprep.subr.mxu0 0.0
    %1033 = vmatpush1.msra.mxu0 0.0
    %1034 = vmatprep.mubr.f32.mxu0 0.0
    %1035 = vmatmul.mubr.f32.gmra.mrb[0].mxu0 %v364
    %v1036 = vpop.f32.mrb[0].mxu0
    %v1037 = vadd.f32 0.0, %v1036
    %v1038 = vpop.f32.mrb[0].mxu0
    %1039 = vmatprep.mubr.f32.mxu0 0.0
    %1040 = vmatmul.mubr.f32.gmra.mrb[0].mxu0 %v367
    %v1041 = vpop.f32.mrb[0].mxu0
    %v1042 = vadd.f32 0.0, %v1041
    %v1043 = vpop.f32.mrb[0].mxu0
    %1044 = vmatprep.mubr.f32.mxu0 0.0
    %1045 = vmatmul.mubr.f32.gmra.mrb[0].mxu0 %v370
    %v1046 = vpop.f32.mrb[0].mxu0
    %v1047 = vadd.f32 0.0, %v1046
    %v1048 = vpop.f32.mrb[0].mxu0
    %1049 = vmatprep.mubr.f32.mxu0 0.0
    %1050 = vmatmul.mubr.f32.gmra.mrb[0].mxu0 %v373
    %v1051 = vpop.f32.mrb[0].mxu0
    %v1052 = vadd.f32 0.0, %v1051
    %v1053 = vpop.f32.mrb[0].mxu0
    %1054 = vdwg.mxu0
    %vm1055 = vcmask 270336
    %1056 = vst.msk [vmem:[#allocation2] sm:$0x1] %vm1055, 0.0
    %1057 = vst.msk [vmem:[#allocation2 + $0x28] sm:$0x1] %vm1055, 0.0
    %1058 = vst.msk [vmem:[#allocation2 + $0x50] sm:$0x1] %vm1055, 0.0
    %1059 = vst.msk [vmem:[#allocation2 + $0x78] sm:$0x1] %vm1055, 0.0
    %1060 = vst.msk [vmem:[#allocation2 + $0xa0] sm:$0x1] %vm1055, 0.0
    %1061 = vst.msk [vmem:[#allocation2 + $0xc8] sm:$0x1] %vm1055, 0.0
    %1062 = vst.msk [vmem:[#allocation2 + $0xf0] sm:$0x1] %vm1055, 0.0
    %1063 = vst.msk [vmem:[#allocation2 + $0x118] sm:$0x1] %vm1055, 0.0
    %1064 = vst.msk [vmem:[#allocation2 + $0x21] sm:$0x1] %vm1055, 0.0
    %1065 = vst.msk [vmem:[#allocation2 + $0x49] sm:$0x1] %vm1055, 0.0
    %1066 = vst.msk [vmem:[#allocation2 + $0x71] sm:$0x1] %vm1055, 0.0
    %1067 = vst.msk [vmem:[#allocation2 + $0x99] sm:$0x1] %vm1055, 0.0
    %1068 = vst.msk [vmem:[#allocation2 + $0xc1] sm:$0x1] %vm1055, 0.0
    %1069 = vst.msk [vmem:[#allocation2 + $0xe9] sm:$0x1] %vm1055, 0.0
    %1070 = vst.msk [vmem:[#allocation2 + $0x111] sm:$0x1] %vm1055, 0.0
    %1071 = vst.msk [vmem:[#allocation2 + $0x139] sm:$0x1] %vm1055, 0.0
    %vm1072 = vcmask 7168
    %1073 = vst.msk [vmem:[#allocation2] sm:$0xff] %vm1072, 0.0
    %1074 = vst.msk [vmem:[#allocation2 + $0x8] sm:$0xff] %vm1072, 0.0
    %1075 = vst.msk [vmem:[#allocation2 + $0x10] sm:$0xff] %vm1072, 0.0
    %1076 = vst.msk [vmem:[#allocation2 + $0x18] sm:$0xff] %vm1072, 0.0
    %vm1077 = vcmask 1024
    %1078 = vst.msk [vmem:[#allocation2 + $0x20] sm:$0x3] %vm1077, 0.0
    %1079 = vst.msk [vmem:[#allocation2 + $0x28] sm:$0xff] %vm1072, 0.0
    %1080 = vst.msk [vmem:[#allocation2 + $0x30] sm:$0xff] %vm1072, 0.0
    %1081 = vst.msk [vmem:[#allocation2 + $0x38] sm:$0xff] %vm1072, 0.0
    %1082 = vst.msk [vmem:[#allocation2 + $0x40] sm:$0xff] %vm1072, 0.0
    %1083 = vst.msk [vmem:[#allocation2 + $0x48] sm:$0x3] %vm1077, 0.0
    %1084 = vst.msk [vmem:[#allocation2 + $0x50] sm:$0xff] %vm1072, 0.0
    %1085 = vst.msk [vmem:[#allocation2 + $0x58] sm:$0xff] %vm1072, 0.0
    %1086 = vst.msk [vmem:[#allocation2 + $0x60] sm:$0xff] %vm1072, 0.0
    %1087 = vst.msk [vmem:[#allocation2 + $0x68] sm:$0xff] %vm1072, 0.0
    %1088 = vst.msk [vmem:[#allocation2 + $0x70] sm:$0x3] %vm1077, 0.0
    %1089 = vst.msk [vmem:[#allocation2 + $0x78] sm:$0xff] %vm1072, 0.0
    %1090 = vst.msk [vmem:[#allocation2 + $0x80] sm:$0xff] %vm1072, 0.0
    %1091 = vst.msk [vmem:[#allocation2 + $0x88] sm:$0xff] %vm1072, 0.0
    %1092 = vst.msk [vmem:[#allocation2 + $0x90] sm:$0xff] %vm1072, 0.0
    %1093 = vst.msk [vmem:[#allocation2 + $0x98] sm:$0x3] %vm1077, 0.0
    %1094 = vst.msk [vmem:[#allocation2 + $0xa0] sm:$0xff] %vm1072, 0.0
    %1095 = vst.msk [vmem:[#allocation2 + $0xa8] sm:$0xff] %vm1072, 0.0
    %1096 = vst.msk [vmem:[#allocation2 + $0xb0] sm:$0xff] %vm1072, 0.0
    %1097 = vst.msk [vmem:[#allocation2 + $0xb8] sm:$0xff] %vm1072, 0.0
    %1098 = vst.msk [vmem:[#allocation2 + $0xc0] sm:$0x3] %vm1077, 0.0
    %1099 = vst.msk [vmem:[#allocation2 + $0xc8] sm:$0xff] %vm1072, 0.0
    %1100 = vst.msk [vmem:[#allocation2 + $0xd0] sm:$0xff] %vm1072, 0.0
    %1101 = vst.msk [vmem:[#allocation2 + $0xd8] sm:$0xff] %vm1072, 0.0
    %1102 = vst.msk [vmem:[#allocation2 + $0xe0] sm:$0xff] %vm1072, 0.0
    %1103 = vst.msk [vmem:[#allocation2 + $0xe8] sm:$0x3] %vm1077, 0.0
    %1104 = vst.msk [vmem:[#allocation2 + $0xf0] sm:$0xff] %vm1072, 0.0
    %1105 = vst.msk [vmem:[#allocation2 + $0xf8] sm:$0xff] %vm1072, 0.0
    %1106 = vst.msk [vmem:[#allocation2 + $0x100] sm:$0xff] %vm1072, 0.0
    %1107 = vst.msk [vmem:[#allocation2 + $0x108] sm:$0xff] %vm1072, 0.0
    %1108 = vst.msk [vmem:[#allocation2 + $0x110] sm:$0x3] %vm1077, 0.0
    %1109 = vst.msk [vmem:[#allocation2 + $0x118] sm:$0xff] %vm1072, 0.0
    %1110 = vst.msk [vmem:[#allocation2 + $0x120] sm:$0xff] %vm1072, 0.0
    %1111 = vst.msk [vmem:[#allocation2 + $0x128] sm:$0xff] %vm1072, 0.0
    %1112 = vst.msk [vmem:[#allocation2 + $0x130] sm:$0xff] %vm1072, 0.0
    %1113 = vst.msk [vmem:[#allocation2 + $0x138] sm:$0x3] %vm1077, 0.0
    %vm1114 = vcmask 277768
    %1115 = vst.msk [vmem:[#allocation2] sm:$0xff] %vm1114, 0.0
    %1116 = vst.msk [vmem:[#allocation2 + $0x8] sm:$0xff] %vm1114, 0.0
    %1117 = vst.msk [vmem:[#allocation2 + $0x10] sm:$0xff] %vm1114, 0.0
    %1118 = vst.msk [vmem:[#allocation2 + $0x18] sm:$0xff] %vm1114, 0.0
    %vm1119 = vcmask 271624
    %1120 = vst.msk [vmem:[#allocation2 + $0x20] sm:$0x3] %vm1119, 0.0
    %1121 = vst.msk [vmem:[#allocation2 + $0x28] sm:$0xff] %vm1114, 0.0
    %1122 = vst.msk [vmem:[#allocation2 + $0x30] sm:$0xff] %vm1114, 0.0
    %1123 = vst.msk [vmem:[#allocation2 + $0x38] sm:$0xff] %vm1114, 0.0
    %1124 = vst.msk [vmem:[#allocation2 + $0x40] sm:$0xff] %vm1114, 0.0
    %1125 = vst.msk [vmem:[#allocation2 + $0x48] sm:$0x3] %vm1119, 0.0
    %1126 = vst.msk [vmem:[#allocation2 + $0x50] sm:$0xff] %vm1114, 0.0
    %1127 = vst.msk [vmem:[#allocation2 + $0x58] sm:$0xff] %vm1114, 0.0
    %1128 = vst.msk [vmem:[#allocation2 + $0x60] sm:$0xff] %vm1114, 0.0
    %1129 = vst.msk [vmem:[#allocation2 + $0x68] sm:$0xff] %vm1114, 0.0
    %1130 = vst.msk [vmem:[#allocation2 + $0x70] sm:$0x3] %vm1119, 0.0
    %1131 = vst.msk [vmem:[#allocation2 + $0x78] sm:$0xff] %vm1114, 0.0
    %1132 = vst.msk [vmem:[#allocation2 + $0x80] sm:$0xff] %vm1114, 0.0
    %1133 = vst.msk [vmem:[#allocation2 + $0x88] sm:$0xff] %vm1114, 0.0
    %1134 = vst.msk [vmem:[#allocation2 + $0x90] sm:$0xff] %vm1114, 0.0
    %1135 = vst.msk [vmem:[#allocation2 + $0x98] sm:$0x3] %vm1119, 0.0
    %1136 = vst.msk [vmem:[#allocation2 + $0xa0] sm:$0xff] %vm1114, 0.0
    %1137 = vst.msk [vmem:[#allocation2 + $0xa8] sm:$0xff] %vm1114, 0.0
    %1138 = vst.msk [vmem:[#allocation2 + $0xb0] sm:$0xff] %vm1114, 0.0
    %1139 = vst.msk [vmem:[#allocation2 + $0xb8] sm:$0xff] %vm1114, 0.0
    %1140 = vst.msk [vmem:[#allocation2 + $0xc0] sm:$0x3] %vm1119, 0.0
    %1141 = vst.msk [vmem:[#allocation2 + $0xc8] sm:$0xff] %vm1114, 0.0
    %1142 = vst.msk [vmem:[#allocation2 + $0xd0] sm:$0xff] %vm1114, 0.0
    %1143 = vst.msk [vmem:[#allocation2 + $0xd8] sm:$0xff] %vm1114, 0.0
    %1144 = vst.msk [vmem:[#allocation2 + $0xe0] sm:$0xff] %vm1114, 0.0
    %1145 = vst.msk [vmem:[#allocation2 + $0xe8] sm:$0x3] %vm1119, 0.0
    %1146 = vst.msk [vmem:[#allocation2 + $0xf0] sm:$0xff] %vm1114, 0.0
    %1147 = vst.msk [vmem:[#allocation2 + $0xf8] sm:$0xff] %vm1114, 0.0
    %1148 = vst.msk [vmem:[#allocation2 + $0x100] sm:$0xff] %vm1114, 0.0
    %1149 = vst.msk [vmem:[#allocation2 + $0x108] sm:$0xff] %vm1114, 0.0
    %1150 = vst.msk [vmem:[#allocation2 + $0x110] sm:$0x3] %vm1119, 0.0
    %1151 = vst.msk [vmem:[#allocation2 + $0x118] sm:$0xff] %vm1114, 0.0
    %1152 = vst.msk [vmem:[#allocation2 + $0x120] sm:$0xff] %vm1114, 0.0
    %1153 = vst.msk [vmem:[#allocation2 + $0x128] sm:$0xff] %vm1114, 0.0
    %1154 = vst.msk [vmem:[#allocation2 + $0x130] sm:$0xff] %vm1114, 0.0
    %1155 = vst.msk [vmem:[#allocation2 + $0x138] sm:$0x3] %vm1119, 0.0
    %1188 = vrot.lane.b32.xlu0 %v442, 1
    %v1189 = vpop.permute.xlu0 %1188
    %1190 = vrot.lane.b32.xlu0 %v447, 1
    %v1191 = vpop.permute.xlu0 %1190
    %1192 = vrot.lane.b32.xlu0 %v452, 1
    %v1193 = vpop.permute.xlu0 %1192
    %1194 = vrot.lane.b32.xlu0 %v457, 1
    %v1195 = vpop.permute.xlu0 %1194
    %1196 = vrot.lane.b32.xlu0 %v527, 1
    %v1197 = vpop.permute.xlu0 %1196
    %1198 = vrot.lane.b32.xlu0 %v532, 1
    %v1199 = vpop.permute.xlu0 %1198
    %1200 = vrot.lane.b32.xlu0 %v537, 1
    %v1201 = vpop.permute.xlu0 %1200
    %1202 = vrot.lane.b32.xlu0 %v542, 1
    %v1203 = vpop.permute.xlu0 %1202
    %1204 = vrot.lane.b32.xlu0 %v612, 1
    %v1205 = vpop.permute.xlu0 %1204
    %1206 = vrot.lane.b32.xlu0 %v617, 1
    %v1207 = vpop.permute.xlu0 %1206
    %1208 = vrot.lane.b32.xlu0 %v622, 1
    %v1209 = vpop.permute.xlu0 %1208
    %1210 = vrot.lane.b32.xlu0 %v627, 1
    %v1211 = vpop.permute.xlu0 %1210
    %1212 = vrot.lane.b32.xlu0 %v697, 1
    %v1213 = vpop.permute.xlu0 %1212
    %1214 = vrot.lane.b32.xlu0 %v702, 1
    %v1215 = vpop.permute.xlu0 %1214
    %1216 = vrot.lane.b32.xlu0 %v707, 1
    %v1217 = vpop.permute.xlu0 %1216
    %1218 = vrot.lane.b32.xlu0 %v712, 1
    %v1219 = vpop.permute.xlu0 %1218
    %1220 = vrot.lane.b32.xlu0 %v782, 1
    %v1221 = vpop.permute.xlu0 %1220
    %1222 = vrot.lane.b32.xlu0 %v787, 1
    %v1223 = vpop.permute.xlu0 %1222
    %1224 = vrot.lane.b32.xlu0 %v792, 1
    %v1225 = vpop.permute.xlu0 %1224
    %1226 = vrot.lane.b32.xlu0 %v797, 1
    %v1227 = vpop.permute.xlu0 %1226
    %1228 = vrot.lane.b32.xlu0 %v867, 1
    %v1229 = vpop.permute.xlu0 %1228
    %1230 = vrot.lane.b32.xlu0 %v872, 1
    %v1231 = vpop.permute.xlu0 %1230
    %1232 = vrot.lane.b32.xlu0 %v877, 1
    %v1233 = vpop.permute.xlu0 %1232
    %1234 = vrot.lane.b32.xlu0 %v882, 1
    %v1235 = vpop.permute.xlu0 %1234
    %1236 = vrot.lane.b32.xlu0 %v952, 1
    %v1237 = vpop.permute.xlu0 %1236
    %1238 = vrot.lane.b32.xlu0 %v957, 1
    %v1239 = vpop.permute.xlu0 %1238
    %1240 = vrot.lane.b32.xlu0 %v962, 1
    %v1241 = vpop.permute.xlu0 %1240
    %1242 = vrot.lane.b32.xlu0 %v967, 1
    %v1243 = vpop.permute.xlu0 %1242
    %1244 = vrot.lane.b32.xlu0 %v1037, 1
    %v1245 = vpop.permute.xlu0 %1244
    %1246 = vrot.lane.b32.xlu0 %v1042, 1
    %v1247 = vpop.permute.xlu0 %1246
    %1248 = vrot.lane.b32.xlu0 %v1047, 1
    %v1249 = vpop.permute.xlu0 %1248
    %1250 = vrot.lane.b32.xlu0 %v1052, 1
    %v1251 = vpop.permute.xlu0 %1250
    %vm1284 = vcmask 269320
    %1285 = vst.msk [vmem:[#allocation2 + $0x1] sm:$0xff] %vm1284, %v1189
    %1286 = vst.msk [vmem:[#allocation2 + $0x9] sm:$0xff] %vm1284, %v1191
    %1287 = vst.msk [vmem:[#allocation2 + $0x11] sm:$0xff] %vm1284, %v1193
    %1288 = vst.msk [vmem:[#allocation2 + $0x19] sm:$0xff] %vm1284, %v1195
    %1289 = vst.msk [vmem:[#allocation2 + $0x29] sm:$0xff] %vm1284, %v1197
    %1290 = vst.msk [vmem:[#allocation2 + $0x31] sm:$0xff] %vm1284, %v1199
    %1291 = vst.msk [vmem:[#allocation2 + $0x39] sm:$0xff] %vm1284, %v1201
    %1292 = vst.msk [vmem:[#allocation2 + $0x41] sm:$0xff] %vm1284, %v1203
    %1293 = vst.msk [vmem:[#allocation2 + $0x51] sm:$0xff] %vm1284, %v1205
    %1294 = vst.msk [vmem:[#allocation2 + $0x59] sm:$0xff] %vm1284, %v1207
    %1295 = vst.msk [vmem:[#allocation2 + $0x61] sm:$0xff] %vm1284, %v1209
    %1296 = vst.msk [vmem:[#allocation2 + $0x69] sm:$0xff] %vm1284, %v1211
    %1297 = vst.msk [vmem:[#allocation2 + $0x79] sm:$0xff] %vm1284, %v1213
    %1298 = vst.msk [vmem:[#allocation2 + $0x81] sm:$0xff] %vm1284, %v1215
    %1299 = vst.msk [vmem:[#allocation2 + $0x89] sm:$0xff] %vm1284, %v1217
    %1300 = vst.msk [vmem:[#allocation2 + $0x91] sm:$0xff] %vm1284, %v1219
    %1301 = vst.msk [vmem:[#allocation2 + $0xa1] sm:$0xff] %vm1284, %v1221
    %1302 = vst.msk [vmem:[#allocation2 + $0xa9] sm:$0xff] %vm1284, %v1223
    %1303 = vst.msk [vmem:[#allocation2 + $0xb1] sm:$0xff] %vm1284, %v1225
    %1304 = vst.msk [vmem:[#allocation2 + $0xb9] sm:$0xff] %vm1284, %v1227
    %1305 = vst.msk [vmem:[#allocation2 + $0xc9] sm:$0xff] %vm1284, %v1229
    %1306 = vst.msk [vmem:[#allocation2 + $0xd1] sm:$0xff] %vm1284, %v1231
    %1307 = vst.msk [vmem:[#allocation2 + $0xd9] sm:$0xff] %vm1284, %v1233
    %1308 = vst.msk [vmem:[#allocation2 + $0xe1] sm:$0xff] %vm1284, %v1235
    %1309 = vst.msk [vmem:[#allocation2 + $0xf1] sm:$0xff] %vm1284, %v1237
    %1310 = vst.msk [vmem:[#allocation2 + $0xf9] sm:$0xff] %vm1284, %v1239
    %1311 = vst.msk [vmem:[#allocation2 + $0x101] sm:$0xff] %vm1284, %v1241
    %1312 = vst.msk [vmem:[#allocation2 + $0x109] sm:$0xff] %vm1284, %v1243
    %1313 = vst.msk [vmem:[#allocation2 + $0x119] sm:$0xff] %vm1284, %v1245
    %1314 = vst.msk [vmem:[#allocation2 + $0x121] sm:$0xff] %vm1284, %v1247
    %1315 = vst.msk [vmem:[#allocation2 + $0x129] sm:$0xff] %vm1284, %v1249
    %1316 = vst.msk [vmem:[#allocation2 + $0x131] sm:$0xff] %vm1284, %v1251
    %v1317 = vld [vmem:[#allocation2] sm:$0xff]
    %v1318 = vld [vmem:[#allocation2 + $0x8] sm:$0xff]
    %v1319 = vld [vmem:[#allocation2 + $0x10] sm:$0xff]
    %v1320 = vld [vmem:[#allocation2 + $0x18] sm:$0xff]
    %v1321 = vld [vmem:[#allocation2 + $0x20] sm:$0x3]
    %v1322 = vld [vmem:[#allocation2 + $0x28] sm:$0xff]
    %v1323 = vld [vmem:[#allocation2 + $0x30] sm:$0xff]
    %v1324 = vld [vmem:[#allocation2 + $0x38] sm:$0xff]
    %v1325 = vld [vmem:[#allocation2 + $0x40] sm:$0xff]
    %v1326 = vld [vmem:[#allocation2 + $0x48] sm:$0x3]
    %v1327 = vld [vmem:[#allocation2 + $0x50] sm:$0xff]
    %v1328 = vld [vmem:[#allocation2 + $0x58] sm:$0xff]
    %v1329 = vld [vmem:[#allocation2 + $0x60] sm:$0xff]
    %v1330 = vld [vmem:[#allocation2 + $0x68] sm:$0xff]
    %v1331 = vld [vmem:[#allocation2 + $0x70] sm:$0x3]
    %v1332 = vld [vmem:[#allocation2 + $0x78] sm:$0xff]
    %v1333 = vld [vmem:[#allocation2 + $0x80] sm:$0xff]
    %v1334 = vld [vmem:[#allocation2 + $0x88] sm:$0xff]
    %v1335 = vld [vmem:[#allocation2 + $0x90] sm:$0xff]
    %v1336 = vld [vmem:[#allocation2 + $0x98] sm:$0x3]
    %v1337 = vld [vmem:[#allocation2 + $0xa0] sm:$0xff]
    %v1338 = vld [vmem:[#allocation2 + $0xa8] sm:$0xff]
    %v1339 = vld [vmem:[#allocation2 + $0xb0] sm:$0xff]
    %v1340 = vld [vmem:[#allocation2 + $0xb8] sm:$0xff]
    %v1341 = vld [vmem:[#allocation2 + $0xc0] sm:$0x3]
    %v1342 = vld [vmem:[#allocation2 + $0xc8] sm:$0xff]
    %v1343 = vld [vmem:[#allocation2 + $0xd0] sm:$0xff]
    %v1344 = vld [vmem:[#allocation2 + $0xd8] sm:$0xff]
    %v1345 = vld [vmem:[#allocation2 + $0xe0] sm:$0xff]
    %v1346 = vld [vmem:[#allocation2 + $0xe8] sm:$0x3]
    %v1347 = vld [vmem:[#allocation2 + $0xf0] sm:$0xff]
    %v1348 = vld [vmem:[#allocation2 + $0xf8] sm:$0xff]
    %v1349 = vld [vmem:[#allocation2 + $0x100] sm:$0xff]
    %v1350 = vld [vmem:[#allocation2 + $0x108] sm:$0xff]
    %v1351 = vld [vmem:[#allocation2 + $0x110] sm:$0x3]
    %v1352 = vld [vmem:[#allocation2 + $0x118] sm:$0xff]
    %v1353 = vld [vmem:[#allocation2 + $0x120] sm:$0xff]
    %v1354 = vld [vmem:[#allocation2 + $0x128] sm:$0xff]
    %v1355 = vld [vmem:[#allocation2 + $0x130] sm:$0xff]
    %v1356 = vld [vmem:[#allocation2 + $0x138] sm:$0x3]
    %s1357 = sld [smem:[#allocation8]]
    %v1358 = vstv %s1357
    %v1359 = vmul.f32 %v1358, %v1317
    %v1360 = vmul.f32 %v1358, %v1318
    %v1361 = vmul.f32 %v1358, %v1319
    %v1362 = vmul.f32 %v1358, %v1320
    %v1363 = vmul.f32 %v1358, %v1337
    %v1364 = vmul.f32 %v1358, %v1338
    %v1365 = vmul.f32 %v1358, %v1339
    %v1366 = vmul.f32 %v1358, %v1340
    %v1367 = vadd.f32 %v1359, 0.0
    %v1368 = vadd.f32 %v1360, 0.0
    %v1369 = vadd.f32 %v1361, 0.0
    %v1370 = vadd.f32 %v1362, 0.0
    %v1371 = vadd.f32 %v1363, 0.0
    %v1372 = vadd.f32 %v1364, 0.0
    %v1373 = vadd.f32 %v1365, 0.0
    %v1374 = vadd.f32 %v1366, 0.0
    %s1375 = sld [smem:[#allocation8 + $0x1]]
    %v1376 = vstv %s1375
    %v1377 = vmul.f32 %v1376, %v1317
    %v1378 = vmul.f32 %v1376, %v1318
    %v1379 = vmul.f32 %v1376, %v1319
    %v1380 = vmul.f32 %v1376, %v1320
    %v1381 = vmul.f32 %v1376, %v1337
    %v1382 = vmul.f32 %v1376, %v1338
    %v1383 = vmul.f32 %v1376, %v1339
    %v1384 = vmul.f32 %v1376, %v1340
    %1393 = vrot.lane.b32.xlu0 %v1377, 127
    %v1394 = vpop.permute.xlu0 %1393
    %1395 = vrot.lane.b32.xlu0 %v1378, 127
    %v1396 = vpop.permute.xlu0 %1395
    %1397 = vrot.lane.b32.xlu0 %v1379, 127
    %v1398 = vpop.permute.xlu0 %1397
    %1399 = vrot.lane.b32.xlu0 %v1380, 127
    %v1400 = vpop.permute.xlu0 %1399
    %1401 = vrot.lane.b32.xlu0 %v1381, 127
    %v1402 = vpop.permute.xlu0 %1401
    %1403 = vrot.lane.b32.xlu0 %v1382, 127
    %v1404 = vpop.permute.xlu0 %1403
    %1405 = vrot.lane.b32.xlu0 %v1383, 127
    %v1406 = vpop.permute.xlu0 %1405
    %1407 = vrot.lane.b32.xlu0 %v1384, 127
    %v1408 = vpop.permute.xlu0 %1407
    %v1417 = vadd.f32 %v1367, %v1394
    %v1418 = vadd.f32 %v1368, %v1396
    %v1419 = vadd.f32 %v1369, %v1398
    %v1420 = vadd.f32 %v1370, %v1400
    %v1421 = vadd.f32 %v1371, %v1402
    %v1422 = vadd.f32 %v1372, %v1404
    %v1423 = vadd.f32 %v1373, %v1406
    %v1424 = vadd.f32 %v1374, %v1408
    %s1425 = sld [smem:[#allocation8 + $0x2]]
    %v1426 = vstv %s1425
    %v1427 = vmul.f32 %v1426, %v1317
    %v1428 = vmul.f32 %v1426, %v1318
    %v1429 = vmul.f32 %v1426, %v1319
    %v1430 = vmul.f32 %v1426, %v1320
    %v1431 = vmul.f32 %v1426, %v1337
    %v1432 = vmul.f32 %v1426, %v1338
    %v1433 = vmul.f32 %v1426, %v1339
    %v1434 = vmul.f32 %v1426, %v1340
    %1443 = vrot.lane.b32.xlu0 %v1427, 126
    %v1444 = vpop.permute.xlu0 %1443
    %1445 = vrot.lane.b32.xlu0 %v1428, 126
    %v1446 = vpop.permute.xlu0 %1445
    %1447 = vrot.lane.b32.xlu0 %v1429, 126
    %v1448 = vpop.permute.xlu0 %1447
    %1449 = vrot.lane.b32.xlu0 %v1430, 126
    %v1450 = vpop.permute.xlu0 %1449
    %1451 = vrot.lane.b32.xlu0 %v1431, 126
    %v1452 = vpop.permute.xlu0 %1451
    %1453 = vrot.lane.b32.xlu0 %v1432, 126
    %v1454 = vpop.permute.xlu0 %1453
    %1455 = vrot.lane.b32.xlu0 %v1433, 126
    %v1456 = vpop.permute.xlu0 %1455
    %1457 = vrot.lane.b32.xlu0 %v1434, 126
    %v1458 = vpop.permute.xlu0 %1457
    %v1467 = vadd.f32 %v1417, %v1444
    %v1468 = vadd.f32 %v1418, %v1446
    %v1469 = vadd.f32 %v1419, %v1448
    %v1470 = vadd.f32 %v1420, %v1450
    %v1471 = vadd.f32 %v1421, %v1452
    %v1472 = vadd.f32 %v1422, %v1454
    %v1473 = vadd.f32 %v1423, %v1456
    %v1474 = vadd.f32 %v1424, %v1458
    %s1475 = sld [smem:[#allocation8 + $0x3]]
    %v1476 = vstv %s1475
    %v1477 = vmul.f32 %v1476, %v1317
    %v1478 = vmul.f32 %v1476, %v1318
    %v1479 = vmul.f32 %v1476, %v1319
    %v1480 = vmul.f32 %v1476, %v1320
    %v1481 = vmul.f32 %v1476, %v1321
    %v1482 = vmul.f32 %v1476, %v1337
    %v1483 = vmul.f32 %v1476, %v1338
    %v1484 = vmul.f32 %v1476, %v1339
    %v1485 = vmul.f32 %v1476, %v1340
    %v1486 = vmul.f32 %v1476, %v1341
    %vm1497 = vcmask 1046528
    %v1498 = vrot.slane %v1477, 1
    %v1499 = vrot.slane %v1478, 1
    %v1500 = vsel %vm1497, %v1498, %v1499
    %v1501 = vrot.slane %v1479, 1
    %v1502 = vsel %vm1497, %v1499, %v1501
    %v1503 = vrot.slane %v1480, 1
    %v1504 = vsel %vm1497, %v1501, %v1503
    %v1505 = vrot.slane %v1481, 1
    %v1506 = vsel %vm1497, %v1503, %v1505
    %v1507 = vrot.slane %v1482, 1
    %v1508 = vrot.slane %v1483, 1
    %v1509 = vsel %vm1497, %v1507, %v1508
    %v1510 = vrot.slane %v1484, 1
    %v1511 = vsel %vm1497, %v1508, %v1510
    %v1512 = vrot.slane %v1485, 1
    %v1513 = vsel %vm1497, %v1510, %v1512
    %v1514 = vrot.slane %v1486, 1
    %v1515 = vsel %vm1497, %v1512, %v1514
    %v1524 = vadd.f32 %v1467, %v1500
    %v1525 = vadd.f32 %v1468, %v1502
    %v1526 = vadd.f32 %v1469, %v1504
    %v1527 = vadd.f32 %v1470, %v1506
    %v1528 = vadd.f32 %v1471, %v1509
    %v1529 = vadd.f32 %v1472, %v1511
    %v1530 = vadd.f32 %v1473, %v1513
    %v1531 = vadd.f32 %v1474, %v1515
    %s1532 = sld [smem:[#allocation8 + $0x4]]
    %v1533 = vstv %s1532
    %v1534 = vmul.f32 %v1533, %v1317
    %v1535 = vmul.f32 %v1533, %v1318
    %v1536 = vmul.f32 %v1533, %v1319
    %v1537 = vmul.f32 %v1533, %v1320
    %v1538 = vmul.f32 %v1533, %v1321
    %v1539 = vmul.f32 %v1533, %v1337
    %v1540 = vmul.f32 %v1533, %v1338
    %v1541 = vmul.f32 %v1533, %v1339
    %v1542 = vmul.f32 %v1533, %v1340
    %v1543 = vmul.f32 %v1533, %v1341
    %v1554 = vrot.slane %v1534, 1
    %v1555 = vrot.slane %v1535, 1
    %v1556 = vsel %vm1497, %v1554, %v1555
    %v1557 = vrot.slane %v1536, 1
    %v1558 = vsel %vm1497, %v1555, %v1557
    %v1559 = vrot.slane %v1537, 1
    %v1560 = vsel %vm1497, %v1557, %v1559
    %v1561 = vrot.slane %v1538, 1
    %v1562 = vsel %vm1497, %v1559, %v1561
    %v1563 = vrot.slane %v1539, 1
    %v1564 = vrot.slane %v1540, 1
    %v1565 = vsel %vm1497, %v1563, %v1564
    %v1566 = vrot.slane %v1541, 1
    %v1567 = vsel %vm1497, %v1564, %v1566
    %v1568 = vrot.slane %v1542, 1
    %v1569 = vsel %vm1497, %v1566, %v1568
    %v1570 = vrot.slane %v1543, 1
    %v1571 = vsel %vm1497, %v1568, %v1570
    %1572 = vrot.lane.b32.xlu0 %v1556, 127
    %v1573 = vpop.permute.xlu0 %1572
    %1574 = vrot.lane.b32.xlu0 %v1558, 127
    %v1575 = vpop.permute.xlu0 %1574
    %1576 = vrot.lane.b32.xlu0 %v1560, 127
    %v1577 = vpop.permute.xlu0 %1576
    %1578 = vrot.lane.b32.xlu0 %v1562, 127
    %v1579 = vpop.permute.xlu0 %1578
    %1580 = vrot.lane.b32.xlu0 %v1565, 127
    %v1581 = vpop.permute.xlu0 %1580
    %1582 = vrot.lane.b32.xlu0 %v1567, 127
    %v1583 = vpop.permute.xlu0 %1582
    %1584 = vrot.lane.b32.xlu0 %v1569, 127
    %v1585 = vpop.permute.xlu0 %1584
    %1586 = vrot.lane.b32.xlu0 %v1571, 127
    %v1587 = vpop.permute.xlu0 %1586
    %v1596 = vadd.f32 %v1524, %v1573
    %v1597 = vadd.f32 %v1525, %v1575
    %v1598 = vadd.f32 %v1526, %v1577
    %v1599 = vadd.f32 %v1527, %v1579
    %v1600 = vadd.f32 %v1528, %v1581
    %v1601 = vadd.f32 %v1529, %v1583
    %v1602 = vadd.f32 %v1530, %v1585
    %v1603 = vadd.f32 %v1531, %v1587
    %s1604 = sld [smem:[#allocation8 + $0x5]]
    %v1605 = vstv %s1604
    %v1606 = vmul.f32 %v1605, %v1317
    %v1607 = vmul.f32 %v1605, %v1318
    %v1608 = vmul.f32 %v1605, %v1319
    %v1609 = vmul.f32 %v1605, %v1320
    %v1610 = vmul.f32 %v1605, %v1321
    %v1611 = vmul.f32 %v1605, %v1337
    %v1612 = vmul.f32 %v1605, %v1338
    %v1613 = vmul.f32 %v1605, %v1339
    %v1614 = vmul.f32 %v1605, %v1340
    %v1615 = vmul.f32 %v1605, %v1341
    %v1626 = vrot.slane %v1606, 1
    %v1627 = vrot.slane %v1607, 1
    %v1628 = vsel %vm1497, %v1626, %v1627
    %v1629 = vrot.slane %v1608, 1
    %v1630 = vsel %vm1497, %v1627, %v1629
    %v1631 = vrot.slane %v1609, 1
    %v1632 = vsel %vm1497, %v1629, %v1631
    %v1633 = vrot.slane %v1610, 1
    %v1634 = vsel %vm1497, %v1631, %v1633
    %v1635 = vrot.slane %v1611, 1
    %v1636 = vrot.slane %v1612, 1
    %v1637 = vsel %vm1497, %v1635, %v1636
    %v1638 = vrot.slane %v1613, 1
    %v1639 = vsel %vm1497, %v1636, %v1638
    %v1640 = vrot.slane %v1614, 1
    %v1641 = vsel %vm1497, %v1638, %v1640
    %v1642 = vrot.slane %v1615, 1
    %v1643 = vsel %vm1497, %v1640, %v1642
    %1644 = vrot.lane.b32.xlu0 %v1628, 126
    %v1645 = vpop.permute.xlu0 %1644
    %1646 = vrot.lane.b32.xlu0 %v1630, 126
    %v1647 = vpop.permute.xlu0 %1646
    %1648 = vrot.lane.b32.xlu0 %v1632, 126
    %v1649 = vpop.permute.xlu0 %1648
    %1650 = vrot.lane.b32.xlu0 %v1634, 126
    %v1651 = vpop.permute.xlu0 %1650
    %1652 = vrot.lane.b32.xlu0 %v1637, 126
    %v1653 = vpop.permute.xlu0 %1652
    %1654 = vrot.lane.b32.xlu0 %v1639, 126
    %v1655 = vpop.permute.xlu0 %1654
    %1656 = vrot.lane.b32.xlu0 %v1641, 126
    %v1657 = vpop.permute.xlu0 %1656
    %1658 = vrot.lane.b32.xlu0 %v1643, 126
    %v1659 = vpop.permute.xlu0 %1658
    %v1668 = vadd.f32 %v1596, %v1645
    %v1669 = vadd.f32 %v1597, %v1647
    %v1670 = vadd.f32 %v1598, %v1649
    %v1671 = vadd.f32 %v1599, %v1651
    %v1672 = vadd.f32 %v1600, %v1653
    %v1673 = vadd.f32 %v1601, %v1655
    %v1674 = vadd.f32 %v1602, %v1657
    %v1675 = vadd.f32 %v1603, %v1659
    %s1676 = sld [smem:[#allocation8 + $0x6]]
    %v1677 = vstv %s1676
    %v1678 = vmul.f32 %v1677, %v1317
    %v1679 = vmul.f32 %v1677, %v1318
    %v1680 = vmul.f32 %v1677, %v1319
    %v1681 = vmul.f32 %v1677, %v1320
    %v1682 = vmul.f32 %v1677, %v1321
    %v1683 = vmul.f32 %v1677, %v1337
    %v1684 = vmul.f32 %v1677, %v1338
    %v1685 = vmul.f32 %v1677, %v1339
    %v1686 = vmul.f32 %v1677, %v1340
    %v1687 = vmul.f32 %v1677, %v1341
    %vm1698 = vcmask 1045504
    %v1699 = vrot.slane %v1678, 2
    %v1700 = vrot.slane %v1679, 2
    %v1701 = vsel %vm1698, %v1699, %v1700
    %v1702 = vrot.slane %v1680, 2
    %v1703 = vsel %vm1698, %v1700, %v1702
    %v1704 = vrot.slane %v1681, 2
    %v1705 = vsel %vm1698, %v1702, %v1704
    %v1706 = vrot.slane %v1682, 2
    %v1707 = vsel %vm1698, %v1704, %v1706
    %v1708 = vrot.slane %v1683, 2
    %v1709 = vrot.slane %v1684, 2
    %v1710 = vsel %vm1698, %v1708, %v1709
    %v1711 = vrot.slane %v1685, 2
    %v1712 = vsel %vm1698, %v1709, %v1711
    %v1713 = vrot.slane %v1686, 2
    %v1714 = vsel %vm1698, %v1711, %v1713
    %v1715 = vrot.slane %v1687, 2
    %v1716 = vsel %vm1698, %v1713, %v1715
    %v1725 = vadd.f32 %v1668, %v1701
    %v1726 = vadd.f32 %v1669, %v1703
    %v1727 = vadd.f32 %v1670, %v1705
    %v1728 = vadd.f32 %v1671, %v1707
    %v1729 = vadd.f32 %v1672, %v1710
    %v1730 = vadd.f32 %v1673, %v1712
    %v1731 = vadd.f32 %v1674, %v1714
    %v1732 = vadd.f32 %v1675, %v1716
    %s1733 = sld [smem:[#allocation8 + $0x7]]
    %v1734 = vstv %s1733
    %v1735 = vmul.f32 %v1734, %v1317
    %v1736 = vmul.f32 %v1734, %v1318
    %v1737 = vmul.f32 %v1734, %v1319
    %v1738 = vmul.f32 %v1734, %v1320
    %v1739 = vmul.f32 %v1734, %v1321
    %v1740 = vmul.f32 %v1734, %v1337
    %v1741 = vmul.f32 %v1734, %v1338
    %v1742 = vmul.f32 %v1734, %v1339
    %v1743 = vmul.f32 %v1734, %v1340
    %v1744 = vmul.f32 %v1734, %v1341
    %v1755 = vrot.slane %v1735, 2
    %v1756 = vrot.slane %v1736, 2
    %v1757 = vsel %vm1698, %v1755, %v1756
    %v1758 = vrot.slane %v1737, 2
    %v1759 = vsel %vm1698, %v1756, %v1758
    %v1760 = vrot.slane %v1738, 2
    %v1761 = vsel %vm1698, %v1758, %v1760
    %v1762 = vrot.slane %v1739, 2
    %v1763 = vsel %vm1698, %v1760, %v1762
    %v1764 = vrot.slane %v1740, 2
    %v1765 = vrot.slane %v1741, 2
    %v1766 = vsel %vm1698, %v1764, %v1765
    %v1767 = vrot.slane %v1742, 2
    %v1768 = vsel %vm1698, %v1765, %v1767
    %v1769 = vrot.slane %v1743, 2
    %v1770 = vsel %vm1698, %v1767, %v1769
    %v1771 = vrot.slane %v1744, 2
    %v1772 = vsel %vm1698, %v1769, %v1771
    %1773 = vrot.lane.b32.xlu0 %v1757, 127
    %v1774 = vpop.permute.xlu0 %1773
    %1775 = vrot.lane.b32.xlu0 %v1759, 127
    %v1776 = vpop.permute.xlu0 %1775
    %1777 = vrot.lane.b32.xlu0 %v1761, 127
    %v1778 = vpop.permute.xlu0 %1777
    %1779 = vrot.lane.b32.xlu0 %v1763, 127
    %v1780 = vpop.permute.xlu0 %1779
    %1781 = vrot.lane.b32.xlu0 %v1766, 127
    %v1782 = vpop.permute.xlu0 %1781
    %1783 = vrot.lane.b32.xlu0 %v1768, 127
    %v1784 = vpop.permute.xlu0 %1783
    %1785 = vrot.lane.b32.xlu0 %v1770, 127
    %v1786 = vpop.permute.xlu0 %1785
    %1787 = vrot.lane.b32.xlu0 %v1772, 127
    %v1788 = vpop.permute.xlu0 %1787
    %v1797 = vadd.f32 %v1725, %v1774
    %v1798 = vadd.f32 %v1726, %v1776
    %v1799 = vadd.f32 %v1727, %v1778
    %v1800 = vadd.f32 %v1728, %v1780
    %v1801 = vadd.f32 %v1729, %v1782
    %v1802 = vadd.f32 %v1730, %v1784
    %v1803 = vadd.f32 %v1731, %v1786
    %v1804 = vadd.f32 %v1732, %v1788
    %s1805 = sld [smem:[#allocation8 + $0x8]]
    %v1806 = vstv %s1805
    %v1807 = vmul.f32 %v1806, %v1317
    %v1808 = vmul.f32 %v1806, %v1318
    %v1809 = vmul.f32 %v1806, %v1319
    %v1810 = vmul.f32 %v1806, %v1320
    %v1811 = vmul.f32 %v1806, %v1321
    %v1812 = vmul.f32 %v1806, %v1337
    %v1813 = vmul.f32 %v1806, %v1338
    %v1814 = vmul.f32 %v1806, %v1339
    %v1815 = vmul.f32 %v1806, %v1340
    %v1816 = vmul.f32 %v1806, %v1341
    %v1827 = vrot.slane %v1807, 2
    %v1828 = vrot.slane %v1808, 2
    %v1829 = vsel %vm1698, %v1827, %v1828
    %v1830 = vrot.slane %v1809, 2
    %v1831 = vsel %vm1698, %v1828, %v1830
    %v1832 = vrot.slane %v1810, 2
    %v1833 = vsel %vm1698, %v1830, %v1832
    %v1834 = vrot.slane %v1811, 2
    %v1835 = vsel %vm1698, %v1832, %v1834
    %v1836 = vrot.slane %v1812, 2
    %v1837 = vrot.slane %v1813, 2
    %v1838 = vsel %vm1698, %v1836, %v1837
    %v1839 = vrot.slane %v1814, 2
    %v1840 = vsel %vm1698, %v1837, %v1839
    %v1841 = vrot.slane %v1815, 2
    %v1842 = vsel %vm1698, %v1839, %v1841
    %v1843 = vrot.slane %v1816, 2
    %v1844 = vsel %vm1698, %v1841, %v1843
    %1845 = vrot.lane.b32.xlu0 %v1829, 126
    %v1846 = vpop.permute.xlu0 %1845
    %1847 = vrot.lane.b32.xlu0 %v1831, 126
    %v1848 = vpop.permute.xlu0 %1847
    %1849 = vrot.lane.b32.xlu0 %v1833, 126
    %v1850 = vpop.permute.xlu0 %1849
    %1851 = vrot.lane.b32.xlu0 %v1835, 126
    %v1852 = vpop.permute.xlu0 %1851
    %1853 = vrot.lane.b32.xlu0 %v1838, 126
    %v1854 = vpop.permute.xlu0 %1853
    %1855 = vrot.lane.b32.xlu0 %v1840, 126
    %v1856 = vpop.permute.xlu0 %1855
    %1857 = vrot.lane.b32.xlu0 %v1842, 126
    %v1858 = vpop.permute.xlu0 %1857
    %1859 = vrot.lane.b32.xlu0 %v1844, 126
    %v1860 = vpop.permute.xlu0 %1859
    %v1869 = vadd.f32 %v1797, %v1846
    %v1870 = vadd.f32 %v1798, %v1848
    %v1871 = vadd.f32 %v1799, %v1850
    %v1872 = vadd.f32 %v1800, %v1852
    %v1873 = vadd.f32 %v1801, %v1854
    %v1874 = vadd.f32 %v1802, %v1856
    %v1875 = vadd.f32 %v1803, %v1858
    %v1876 = vadd.f32 %v1804, %v1860
    %s1877 = sld [smem:[#allocation8 + $0x9]]
    %v1878 = vstv %s1877
    %v1879 = vmul.f32 %v1878, %v1322
    %v1880 = vmul.f32 %v1878, %v1323
    %v1881 = vmul.f32 %v1878, %v1324
    %v1882 = vmul.f32 %v1878, %v1325
    %v1883 = vmul.f32 %v1878, %v1342
    %v1884 = vmul.f32 %v1878, %v1343
    %v1885 = vmul.f32 %v1878, %v1344
    %v1886 = vmul.f32 %v1878, %v1345
    %v1887 = vadd.f32 %v1869, %v1879
    %v1888 = vadd.f32 %v1870, %v1880
    %v1889 = vadd.f32 %v1871, %v1881
    %v1890 = vadd.f32 %v1872, %v1882
    %v1891 = vadd.f32 %v1873, %v1883
    %v1892 = vadd.f32 %v1874, %v1884
    %v1893 = vadd.f32 %v1875, %v1885
    %v1894 = vadd.f32 %v1876, %v1886
    %s1895 = sld [smem:[#allocation8 + $0xa]]
    %v1896 = vstv %s1895
    %v1897 = vmul.f32 %v1896, %v1322
    %v1898 = vmul.f32 %v1896, %v1323
    %v1899 = vmul.f32 %v1896, %v1324
    %v1900 = vmul.f32 %v1896, %v1325
    %v1901 = vmul.f32 %v1896, %v1342
    %v1902 = vmul.f32 %v1896, %v1343
    %v1903 = vmul.f32 %v1896, %v1344
    %v1904 = vmul.f32 %v1896, %v1345
    %1913 = vrot.lane.b32.xlu0 %v1897, 127
    %v1914 = vpop.permute.xlu0 %1913
    %1915 = vrot.lane.b32.xlu0 %v1898, 127
    %v1916 = vpop.permute.xlu0 %1915
    %1917 = vrot.lane.b32.xlu0 %v1899, 127
    %v1918 = vpop.permute.xlu0 %1917
    %1919 = vrot.lane.b32.xlu0 %v1900, 127
    %v1920 = vpop.permute.xlu0 %1919
    %1921 = vrot.lane.b32.xlu0 %v1901, 127
    %v1922 = vpop.permute.xlu0 %1921
    %1923 = vrot.lane.b32.xlu0 %v1902, 127
    %v1924 = vpop.permute.xlu0 %1923
    %1925 = vrot.lane.b32.xlu0 %v1903, 127
    %v1926 = vpop.permute.xlu0 %1925
    %1927 = vrot.lane.b32.xlu0 %v1904, 127
    %v1928 = vpop.permute.xlu0 %1927
    %v1937 = vadd.f32 %v1887, %v1914
    %v1938 = vadd.f32 %v1888, %v1916
    %v1939 = vadd.f32 %v1889, %v1918
    %v1940 = vadd.f32 %v1890, %v1920
    %v1941 = vadd.f32 %v1891, %v1922
    %v1942 = vadd.f32 %v1892, %v1924
    %v1943 = vadd.f32 %v1893, %v1926
    %v1944 = vadd.f32 %v1894, %v1928
    %s1945 = sld [smem:[#allocation8 + $0xb]]
    %v1946 = vstv %s1945
    %v1947 = vmul.f32 %v1946, %v1322
    %v1948 = vmul.f32 %v1946, %v1323
    %v1949 = vmul.f32 %v1946, %v1324
    %v1950 = vmul.f32 %v1946, %v1325
    %v1951 = vmul.f32 %v1946, %v1342
    %v1952 = vmul.f32 %v1946, %v1343
    %v1953 = vmul.f32 %v1946, %v1344
    %v1954 = vmul.f32 %v1946, %v1345
    %1963 = vrot.lane.b32.xlu0 %v1947, 126
    %v1964 = vpop.permute.xlu0 %1963
    %1965 = vrot.lane.b32.xlu0 %v1948, 126
    %v1966 = vpop.permute.xlu0 %1965
    %1967 = vrot.lane.b32.xlu0 %v1949, 126
    %v1968 = vpop.permute.xlu0 %1967
    %1969 = vrot.lane.b32.xlu0 %v1950, 126
    %v1970 = vpop.permute.xlu0 %1969
    %1971 = vrot.lane.b32.xlu0 %v1951, 126
    %v1972 = vpop.permute.xlu0 %1971
    %1973 = vrot.lane.b32.xlu0 %v1952, 126
    %v1974 = vpop.permute.xlu0 %1973
    %1975 = vrot.lane.b32.xlu0 %v1953, 126
    %v1976 = vpop.permute.xlu0 %1975
    %1977 = vrot.lane.b32.xlu0 %v1954, 126
    %v1978 = vpop.permute.xlu0 %1977
    %v1987 = vadd.f32 %v1937, %v1964
    %v1988 = vadd.f32 %v1938, %v1966
    %v1989 = vadd.f32 %v1939, %v1968
    %v1990 = vadd.f32 %v1940, %v1970
    %v1991 = vadd.f32 %v1941, %v1972
    %v1992 = vadd.f32 %v1942, %v1974
    %v1993 = vadd.f32 %v1943, %v1976
    %v1994 = vadd.f32 %v1944, %v1978
    %s1995 = sld [smem:[#allocation8 + $0xc]]
    %v1996 = vstv %s1995
    %v1997 = vmul.f32 %v1996, %v1322
    %v1998 = vmul.f32 %v1996, %v1323
    %v1999 = vmul.f32 %v1996, %v1324
    %v2000 = vmul.f32 %v1996, %v1325
    %v2001 = vmul.f32 %v1996, %v1326
    %v2002 = vmul.f32 %v1996, %v1342
    %v2003 = vmul.f32 %v1996, %v1343
    %v2004 = vmul.f32 %v1996, %v1344
    %v2005 = vmul.f32 %v1996, %v1345
    %v2006 = vmul.f32 %v1996, %v1346
    %v2017 = vrot.slane %v1997, 1
    %v2018 = vrot.slane %v1998, 1
    %v2019 = vsel %vm1497, %v2017, %v2018
    %v2020 = vrot.slane %v1999, 1
    %v2021 = vsel %vm1497, %v2018, %v2020
    %v2022 = vrot.slane %v2000, 1
    %v2023 = vsel %vm1497, %v2020, %v2022
    %v2024 = vrot.slane %v2001, 1
    %v2025 = vsel %vm1497, %v2022, %v2024
    %v2026 = vrot.slane %v2002, 1
    %v2027 = vrot.slane %v2003, 1
    %v2028 = vsel %vm1497, %v2026, %v2027
    %v2029 = vrot.slane %v2004, 1
    %v2030 = vsel %vm1497, %v2027, %v2029
    %v2031 = vrot.slane %v2005, 1
    %v2032 = vsel %vm1497, %v2029, %v2031
    %v2033 = vrot.slane %v2006, 1
    %v2034 = vsel %vm1497, %v2031, %v2033
    %v2043 = vadd.f32 %v1987, %v2019
    %v2044 = vadd.f32 %v1988, %v2021
    %v2045 = vadd.f32 %v1989, %v2023
    %v2046 = vadd.f32 %v1990, %v2025
    %v2047 = vadd.f32 %v1991, %v2028
    %v2048 = vadd.f32 %v1992, %v2030
    %v2049 = vadd.f32 %v1993, %v2032
    %v2050 = vadd.f32 %v1994, %v2034
    %s2051 = sld [smem:[#allocation8 + $0xd]]
    %v2052 = vstv %s2051
    %v2053 = vmul.f32 %v2052, %v1322
    %v2054 = vmul.f32 %v2052, %v1323
    %v2055 = vmul.f32 %v2052, %v1324
    %v2056 = vmul.f32 %v2052, %v1325
    %v2057 = vmul.f32 %v2052, %v1326
    %v2058 = vmul.f32 %v2052, %v1342
    %v2059 = vmul.f32 %v2052, %v1343
    %v2060 = vmul.f32 %v2052, %v1344
    %v2061 = vmul.f32 %v2052, %v1345
    %v2062 = vmul.f32 %v2052, %v1346
    %v2073 = vrot.slane %v2053, 1
    %v2074 = vrot.slane %v2054, 1
    %v2075 = vsel %vm1497, %v2073, %v2074
    %v2076 = vrot.slane %v2055, 1
    %v2077 = vsel %vm1497, %v2074, %v2076
    %v2078 = vrot.slane %v2056, 1
    %v2079 = vsel %vm1497, %v2076, %v2078
    %v2080 = vrot.slane %v2057, 1
    %v2081 = vsel %vm1497, %v2078, %v2080
    %v2082 = vrot.slane %v2058, 1
    %v2083 = vrot.slane %v2059, 1
    %v2084 = vsel %vm1497, %v2082, %v2083
    %v2085 = vrot.slane %v2060, 1
    %v2086 = vsel %vm1497, %v2083, %v2085
    %v2087 = vrot.slane %v2061, 1
    %v2088 = vsel %vm1497, %v2085, %v2087
    %v2089 = vrot.slane %v2062, 1
    %v2090 = vsel %vm1497, %v2087, %v2089
    %2091 = vrot.lane.b32.xlu0 %v2075, 127
    %v2092 = vpop.permute.xlu0 %2091
    %2093 = vrot.lane.b32.xlu0 %v2077, 127
    %v2094 = vpop.permute.xlu0 %2093
    %2095 = vrot.lane.b32.xlu0 %v2079, 127
    %v2096 = vpop.permute.xlu0 %2095
    %2097 = vrot.lane.b32.xlu0 %v2081, 127
    %v2098 = vpop.permute.xlu0 %2097
    %2099 = vrot.lane.b32.xlu0 %v2084, 127
    %v2100 = vpop.permute.xlu0 %2099
    %2101 = vrot.lane.b32.xlu0 %v2086, 127
    %v2102 = vpop.permute.xlu0 %2101
    %2103 = vrot.lane.b32.xlu0 %v2088, 127
    %v2104 = vpop.permute.xlu0 %2103
    %2105 = vrot.lane.b32.xlu0 %v2090, 127
    %v2106 = vpop.permute.xlu0 %2105
    %v2115 = vadd.f32 %v2043, %v2092
    %v2116 = vadd.f32 %v2044, %v2094
    %v2117 = vadd.f32 %v2045, %v2096
    %v2118 = vadd.f32 %v2046, %v2098
    %v2119 = vadd.f32 %v2047, %v2100
    %v2120 = vadd.f32 %v2048, %v2102
    %v2121 = vadd.f32 %v2049, %v2104
    %v2122 = vadd.f32 %v2050, %v2106
    %s2123 = sld [smem:[#allocation8 + $0xe]]
    %v2124 = vstv %s2123
    %v2125 = vmul.f32 %v2124, %v1322
    %v2126 = vmul.f32 %v2124, %v1323
    %v2127 = vmul.f32 %v2124, %v1324
    %v2128 = vmul.f32 %v2124, %v1325
    %v2129 = vmul.f32 %v2124, %v1326
    %v2130 = vmul.f32 %v2124, %v1342
    %v2131 = vmul.f32 %v2124, %v1343
    %v2132 = vmul.f32 %v2124, %v1344
    %v2133 = vmul.f32 %v2124, %v1345
    %v2134 = vmul.f32 %v2124, %v1346
    %v2145 = vrot.slane %v2125, 1
    %v2146 = vrot.slane %v2126, 1
    %v2147 = vsel %vm1497, %v2145, %v2146
    %v2148 = vrot.slane %v2127, 1
    %v2149 = vsel %vm1497, %v2146, %v2148
    %v2150 = vrot.slane %v2128, 1
    %v2151 = vsel %vm1497, %v2148, %v2150
    %v2152 = vrot.slane %v2129, 1
    %v2153 = vsel %vm1497, %v2150, %v2152
    %v2154 = vrot.slane %v2130, 1
    %v2155 = vrot.slane %v2131, 1
    %v2156 = vsel %vm1497, %v2154, %v2155
    %v2157 = vrot.slane %v2132, 1
    %v2158 = vsel %vm1497, %v2155, %v2157
    %v2159 = vrot.slane %v2133, 1
    %v2160 = vsel %vm1497, %v2157, %v2159
    %v2161 = vrot.slane %v2134, 1
    %v2162 = vsel %vm1497, %v2159, %v2161
    %2163 = vrot.lane.b32.xlu0 %v2147, 126
    %v2164 = vpop.permute.xlu0 %2163
    %2165 = vrot.lane.b32.xlu0 %v2149, 126
    %v2166 = vpop.permute.xlu0 %2165
    %2167 = vrot.lane.b32.xlu0 %v2151, 126
    %v2168 = vpop.permute.xlu0 %2167
    %2169 = vrot.lane.b32.xlu0 %v2153, 126
    %v2170 = vpop.permute.xlu0 %2169
    %2171 = vrot.lane.b32.xlu0 %v2156, 126
    %v2172 = vpop.permute.xlu0 %2171
    %2173 = vrot.lane.b32.xlu0 %v2158, 126
    %v2174 = vpop.permute.xlu0 %2173
    %2175 = vrot.lane.b32.xlu0 %v2160, 126
    %v2176 = vpop.permute.xlu0 %2175
    %2177 = vrot.lane.b32.xlu0 %v2162, 126
    %v2178 = vpop.permute.xlu0 %2177
    %v2187 = vadd.f32 %v2115, %v2164
    %v2188 = vadd.f32 %v2116, %v2166
    %v2189 = vadd.f32 %v2117, %v2168
    %v2190 = vadd.f32 %v2118, %v2170
    %v2191 = vadd.f32 %v2119, %v2172
    %v2192 = vadd.f32 %v2120, %v2174
    %v2193 = vadd.f32 %v2121, %v2176
    %v2194 = vadd.f32 %v2122, %v2178
    %s2195 = sld [smem:[#allocation8 + $0xf]]
    %v2196 = vstv %s2195
    %v2197 = vmul.f32 %v2196, %v1322
    %v2198 = vmul.f32 %v2196, %v1323
    %v2199 = vmul.f32 %v2196, %v1324
    %v2200 = vmul.f32 %v2196, %v1325
    %v2201 = vmul.f32 %v2196, %v1326
    %v2202 = vmul.f32 %v2196, %v1342
    %v2203 = vmul.f32 %v2196, %v1343
    %v2204 = vmul.f32 %v2196, %v1344
    %v2205 = vmul.f32 %v2196, %v1345
    %v2206 = vmul.f32 %v2196, %v1346
    %v2217 = vrot.slane %v2197, 2
    %v2218 = vrot.slane %v2198, 2
    %v2219 = vsel %vm1698, %v2217, %v2218
    %v2220 = vrot.slane %v2199, 2
    %v2221 = vsel %vm1698, %v2218, %v2220
    %v2222 = vrot.slane %v2200, 2
    %v2223 = vsel %vm1698, %v2220, %v2222
    %v2224 = vrot.slane %v2201, 2
    %v2225 = vsel %vm1698, %v2222, %v2224
    %v2226 = vrot.slane %v2202, 2
    %v2227 = vrot.slane %v2203, 2
    %v2228 = vsel %vm1698, %v2226, %v2227
    %v2229 = vrot.slane %v2204, 2
    %v2230 = vsel %vm1698, %v2227, %v2229
    %v2231 = vrot.slane %v2205, 2
    %v2232 = vsel %vm1698, %v2229, %v2231
    %v2233 = vrot.slane %v2206, 2
    %v2234 = vsel %vm1698, %v2231, %v2233
    %v2243 = vadd.f32 %v2187, %v2219
    %v2244 = vadd.f32 %v2188, %v2221
    %v2245 = vadd.f32 %v2189, %v2223
    %v2246 = vadd.f32 %v2190, %v2225
    %v2247 = vadd.f32 %v2191, %v2228
    %v2248 = vadd.f32 %v2192, %v2230
    %v2249 = vadd.f32 %v2193, %v2232
    %v2250 = vadd.f32 %v2194, %v2234
    %s2251 = sld [smem:[#allocation8 + $0x10]]
    %v2252 = vstv %s2251
    %v2253 = vmul.f32 %v2252, %v1322
    %v2254 = vmul.f32 %v2252, %v1323
    %v2255 = vmul.f32 %v2252, %v1324
    %v2256 = vmul.f32 %v2252, %v1325
    %v2257 = vmul.f32 %v2252, %v1326
    %v2258 = vmul.f32 %v2252, %v1342
    %v2259 = vmul.f32 %v2252, %v1343
    %v2260 = vmul.f32 %v2252, %v1344
    %v2261 = vmul.f32 %v2252, %v1345
    %v2262 = vmul.f32 %v2252, %v1346
    %v2273 = vrot.slane %v2253, 2
    %v2274 = vrot.slane %v2254, 2
    %v2275 = vsel %vm1698, %v2273, %v2274
    %v2276 = vrot.slane %v2255, 2
    %v2277 = vsel %vm1698, %v2274, %v2276
    %v2278 = vrot.slane %v2256, 2
    %v2279 = vsel %vm1698, %v2276, %v2278
    %v2280 = vrot.slane %v2257, 2
    %v2281 = vsel %vm1698, %v2278, %v2280
    %v2282 = vrot.slane %v2258, 2
    %v2283 = vrot.slane %v2259, 2
    %v2284 = vsel %vm1698, %v2282, %v2283
    %v2285 = vrot.slane %v2260, 2
    %v2286 = vsel %vm1698, %v2283, %v2285
    %v2287 = vrot.slane %v2261, 2
    %v2288 = vsel %vm1698, %v2285, %v2287
    %v2289 = vrot.slane %v2262, 2
    %v2290 = vsel %vm1698, %v2287, %v2289
    %2291 = vrot.lane.b32.xlu0 %v2275, 127
    %v2292 = vpop.permute.xlu0 %2291
    %2293 = vrot.lane.b32.xlu0 %v2277, 127
    %v2294 = vpop.permute.xlu0 %2293
    %2295 = vrot.lane.b32.xlu0 %v2279, 127
    %v2296 = vpop.permute.xlu0 %2295
    %2297 = vrot.lane.b32.xlu0 %v2281, 127
    %v2298 = vpop.permute.xlu0 %2297
    %2299 = vrot.lane.b32.xlu0 %v2284, 127
    %v2300 = vpop.permute.xlu0 %2299
    %2301 = vrot.lane.b32.xlu0 %v2286, 127
    %v2302 = vpop.permute.xlu0 %2301
    %2303 = vrot.lane.b32.xlu0 %v2288, 127
    %v2304 = vpop.permute.xlu0 %2303
    %2305 = vrot.lane.b32.xlu0 %v2290, 127
    %v2306 = vpop.permute.xlu0 %2305
    %v2315 = vadd.f32 %v2243, %v2292
    %v2316 = vadd.f32 %v2244, %v2294
    %v2317 = vadd.f32 %v2245, %v2296
    %v2318 = vadd.f32 %v2246, %v2298
    %v2319 = vadd.f32 %v2247, %v2300
    %v2320 = vadd.f32 %v2248, %v2302
    %v2321 = vadd.f32 %v2249, %v2304
    %v2322 = vadd.f32 %v2250, %v2306
    %s2323 = sld [smem:[#allocation8 + $0x11]]
    %v2324 = vstv %s2323
    %v2325 = vmul.f32 %v2324, %v1322
    %v2326 = vmul.f32 %v2324, %v1323
    %v2327 = vmul.f32 %v2324, %v1324
    %v2328 = vmul.f32 %v2324, %v1325
    %v2329 = vmul.f32 %v2324, %v1326
    %v2330 = vmul.f32 %v2324, %v1342
    %v2331 = vmul.f32 %v2324, %v1343
    %v2332 = vmul.f32 %v2324, %v1344
    %v2333 = vmul.f32 %v2324, %v1345
    %v2334 = vmul.f32 %v2324, %v1346
    %v2345 = vrot.slane %v2325, 2
    %v2346 = vrot.slane %v2326, 2
    %v2347 = vsel %vm1698, %v2345, %v2346
    %v2348 = vrot.slane %v2327, 2
    %v2349 = vsel %vm1698, %v2346, %v2348
    %v2350 = vrot.slane %v2328, 2
    %v2351 = vsel %vm1698, %v2348, %v2350
    %v2352 = vrot.slane %v2329, 2
    %v2353 = vsel %vm1698, %v2350, %v2352
    %v2354 = vrot.slane %v2330, 2
    %v2355 = vrot.slane %v2331, 2
    %v2356 = vsel %vm1698, %v2354, %v2355
    %v2357 = vrot.slane %v2332, 2
    %v2358 = vsel %vm1698, %v2355, %v2357
    %v2359 = vrot.slane %v2333, 2
    %v2360 = vsel %vm1698, %v2357, %v2359
    %v2361 = vrot.slane %v2334, 2
    %v2362 = vsel %vm1698, %v2359, %v2361
    %2363 = vrot.lane.b32.xlu0 %v2347, 126
    %v2364 = vpop.permute.xlu0 %2363
    %2365 = vrot.lane.b32.xlu0 %v2349, 126
    %v2366 = vpop.permute.xlu0 %2365
    %2367 = vrot.lane.b32.xlu0 %v2351, 126
    %v2368 = vpop.permute.xlu0 %2367
    %2369 = vrot.lane.b32.xlu0 %v2353, 126
    %v2370 = vpop.permute.xlu0 %2369
    %2371 = vrot.lane.b32.xlu0 %v2356, 126
    %v2372 = vpop.permute.xlu0 %2371
    %2373 = vrot.lane.b32.xlu0 %v2358, 126
    %v2374 = vpop.permute.xlu0 %2373
    %2375 = vrot.lane.b32.xlu0 %v2360, 126
    %v2376 = vpop.permute.xlu0 %2375
    %2377 = vrot.lane.b32.xlu0 %v2362, 126
    %v2378 = vpop.permute.xlu0 %2377
    %v2387 = vadd.f32 %v2315, %v2364
    %v2388 = vadd.f32 %v2316, %v2366
    %v2389 = vadd.f32 %v2317, %v2368
    %v2390 = vadd.f32 %v2318, %v2370
    %v2391 = vadd.f32 %v2319, %v2372
    %v2392 = vadd.f32 %v2320, %v2374
    %v2393 = vadd.f32 %v2321, %v2376
    %v2394 = vadd.f32 %v2322, %v2378
    %s2395 = sld [smem:[#allocation8 + $0x12]]
    %v2396 = vstv %s2395
    %v2397 = vmul.f32 %v2396, %v1327
    %v2398 = vmul.f32 %v2396, %v1328
    %v2399 = vmul.f32 %v2396, %v1329
    %v2400 = vmul.f32 %v2396, %v1330
    %v2401 = vmul.f32 %v2396, %v1347
    %v2402 = vmul.f32 %v2396, %v1348
    %v2403 = vmul.f32 %v2396, %v1349
    %v2404 = vmul.f32 %v2396, %v1350
    %v2405 = vadd.f32 %v2387, %v2397
    %v2406 = vadd.f32 %v2388, %v2398
    %v2407 = vadd.f32 %v2389, %v2399
    %v2408 = vadd.f32 %v2390, %v2400
    %v2409 = vadd.f32 %v2391, %v2401
    %v2410 = vadd.f32 %v2392, %v2402
    %v2411 = vadd.f32 %v2393, %v2403
    %v2412 = vadd.f32 %v2394, %v2404
    %s2413 = sld [smem:[#allocation8 + $0x13]]
    %v2414 = vstv %s2413
    %v2415 = vmul.f32 %v2414, %v1327
    %v2416 = vmul.f32 %v2414, %v1328
    %v2417 = vmul.f32 %v2414, %v1329
    %v2418 = vmul.f32 %v2414, %v1330
    %v2419 = vmul.f32 %v2414, %v1347
    %v2420 = vmul.f32 %v2414, %v1348
    %v2421 = vmul.f32 %v2414, %v1349
    %v2422 = vmul.f32 %v2414, %v1350
    %2431 = vrot.lane.b32.xlu0 %v2415, 127
    %v2432 = vpop.permute.xlu0 %2431
    %2433 = vrot.lane.b32.xlu0 %v2416, 127
    %v2434 = vpop.permute.xlu0 %2433
    %2435 = vrot.lane.b32.xlu0 %v2417, 127
    %v2436 = vpop.permute.xlu0 %2435
    %2437 = vrot.lane.b32.xlu0 %v2418, 127
    %v2438 = vpop.permute.xlu0 %2437
    %2439 = vrot.lane.b32.xlu0 %v2419, 127
    %v2440 = vpop.permute.xlu0 %2439
    %2441 = vrot.lane.b32.xlu0 %v2420, 127
    %v2442 = vpop.permute.xlu0 %2441
    %2443 = vrot.lane.b32.xlu0 %v2421, 127
    %v2444 = vpop.permute.xlu0 %2443
    %2445 = vrot.lane.b32.xlu0 %v2422, 127
    %v2446 = vpop.permute.xlu0 %2445
    %v2455 = vadd.f32 %v2405, %v2432
    %v2456 = vadd.f32 %v2406, %v2434
    %v2457 = vadd.f32 %v2407, %v2436
    %v2458 = vadd.f32 %v2408, %v2438
    %v2459 = vadd.f32 %v2409, %v2440
    %v2460 = vadd.f32 %v2410, %v2442
    %v2461 = vadd.f32 %v2411, %v2444
    %v2462 = vadd.f32 %v2412, %v2446
    %s2463 = sld [smem:[#allocation8 + $0x14]]
    %v2464 = vstv %s2463
    %v2465 = vmul.f32 %v2464, %v1327
    %v2466 = vmul.f32 %v2464, %v1328
    %v2467 = vmul.f32 %v2464, %v1329
    %v2468 = vmul.f32 %v2464, %v1330
    %v2469 = vmul.f32 %v2464, %v1347
    %v2470 = vmul.f32 %v2464, %v1348
    %v2471 = vmul.f32 %v2464, %v1349
    %v2472 = vmul.f32 %v2464, %v1350
    %2481 = vrot.lane.b32.xlu0 %v2465, 126
    %v2482 = vpop.permute.xlu0 %2481
    %2483 = vrot.lane.b32.xlu0 %v2466, 126
    %v2484 = vpop.permute.xlu0 %2483
    %2485 = vrot.lane.b32.xlu0 %v2467, 126
    %v2486 = vpop.permute.xlu0 %2485
    %2487 = vrot.lane.b32.xlu0 %v2468, 126
    %v2488 = vpop.permute.xlu0 %2487
    %2489 = vrot.lane.b32.xlu0 %v2469, 126
    %v2490 = vpop.permute.xlu0 %2489
    %2491 = vrot.lane.b32.xlu0 %v2470, 126
    %v2492 = vpop.permute.xlu0 %2491
    %2493 = vrot.lane.b32.xlu0 %v2471, 126
    %v2494 = vpop.permute.xlu0 %2493
    %2495 = vrot.lane.b32.xlu0 %v2472, 126
    %v2496 = vpop.permute.xlu0 %2495
    %v2505 = vadd.f32 %v2455, %v2482
    %v2506 = vadd.f32 %v2456, %v2484
    %v2507 = vadd.f32 %v2457, %v2486
    %v2508 = vadd.f32 %v2458, %v2488
    %v2509 = vadd.f32 %v2459, %v2490
    %v2510 = vadd.f32 %v2460, %v2492
    %v2511 = vadd.f32 %v2461, %v2494
    %v2512 = vadd.f32 %v2462, %v2496
    %s2513 = sld [smem:[#allocation8 + $0x15]]
    %v2514 = vstv %s2513
    %v2515 = vmul.f32 %v2514, %v1327
    %v2516 = vmul.f32 %v2514, %v1328
    %v2517 = vmul.f32 %v2514, %v1329
    %v2518 = vmul.f32 %v2514, %v1330
    %v2519 = vmul.f32 %v2514, %v1331
    %v2520 = vmul.f32 %v2514, %v1347
    %v2521 = vmul.f32 %v2514, %v1348
    %v2522 = vmul.f32 %v2514, %v1349
    %v2523 = vmul.f32 %v2514, %v1350
    %v2524 = vmul.f32 %v2514, %v1351
    %v2535 = vrot.slane %v2515, 1
    %v2536 = vrot.slane %v2516, 1
    %v2537 = vsel %vm1497, %v2535, %v2536
    %v2538 = vrot.slane %v2517, 1
    %v2539 = vsel %vm1497, %v2536, %v2538
    %v2540 = vrot.slane %v2518, 1
    %v2541 = vsel %vm1497, %v2538, %v2540
    %v2542 = vrot.slane %v2519, 1
    %v2543 = vsel %vm1497, %v2540, %v2542
    %v2544 = vrot.slane %v2520, 1
    %v2545 = vrot.slane %v2521, 1
    %v2546 = vsel %vm1497, %v2544, %v2545
    %v2547 = vrot.slane %v2522, 1
    %v2548 = vsel %vm1497, %v2545, %v2547
    %v2549 = vrot.slane %v2523, 1
    %v2550 = vsel %vm1497, %v2547, %v2549
    %v2551 = vrot.slane %v2524, 1
    %v2552 = vsel %vm1497, %v2549, %v2551
    %v2561 = vadd.f32 %v2505, %v2537
    %v2562 = vadd.f32 %v2506, %v2539
    %v2563 = vadd.f32 %v2507, %v2541
    %v2564 = vadd.f32 %v2508, %v2543
    %v2565 = vadd.f32 %v2509, %v2546
    %v2566 = vadd.f32 %v2510, %v2548
    %v2567 = vadd.f32 %v2511, %v2550
    %v2568 = vadd.f32 %v2512, %v2552
    %s2569 = sld [smem:[#allocation8 + $0x16]]
    %v2570 = vstv %s2569
    %v2571 = vmul.f32 %v2570, %v1327
    %v2572 = vmul.f32 %v2570, %v1328
    %v2573 = vmul.f32 %v2570, %v1329
    %v2574 = vmul.f32 %v2570, %v1330
    %v2575 = vmul.f32 %v2570, %v1331
    %v2576 = vmul.f32 %v2570, %v1347
    %v2577 = vmul.f32 %v2570, %v1348
    %v2578 = vmul.f32 %v2570, %v1349
    %v2579 = vmul.f32 %v2570, %v1350
    %v2580 = vmul.f32 %v2570, %v1351
    %v2591 = vrot.slane %v2571, 1
    %v2592 = vrot.slane %v2572, 1
    %v2593 = vsel %vm1497, %v2591, %v2592
    %v2594 = vrot.slane %v2573, 1
    %v2595 = vsel %vm1497, %v2592, %v2594
    %v2596 = vrot.slane %v2574, 1
    %v2597 = vsel %vm1497, %v2594, %v2596
    %v2598 = vrot.slane %v2575, 1
    %v2599 = vsel %vm1497, %v2596, %v2598
    %v2600 = vrot.slane %v2576, 1
    %v2601 = vrot.slane %v2577, 1
    %v2602 = vsel %vm1497, %v2600, %v2601
    %v2603 = vrot.slane %v2578, 1
    %v2604 = vsel %vm1497, %v2601, %v2603
    %v2605 = vrot.slane %v2579, 1
    %v2606 = vsel %vm1497, %v2603, %v2605
    %v2607 = vrot.slane %v2580, 1
    %v2608 = vsel %vm1497, %v2605, %v2607
    %2609 = vrot.lane.b32.xlu0 %v2593, 127
    %v2610 = vpop.permute.xlu0 %2609
    %2611 = vrot.lane.b32.xlu0 %v2595, 127
    %v2612 = vpop.permute.xlu0 %2611
    %2613 = vrot.lane.b32.xlu0 %v2597, 127
    %v2614 = vpop.permute.xlu0 %2613
    %2615 = vrot.lane.b32.xlu0 %v2599, 127
    %v2616 = vpop.permute.xlu0 %2615
    %2617 = vrot.lane.b32.xlu0 %v2602, 127
    %v2618 = vpop.permute.xlu0 %2617
    %2619 = vrot.lane.b32.xlu0 %v2604, 127
    %v2620 = vpop.permute.xlu0 %2619
    %2621 = vrot.lane.b32.xlu0 %v2606, 127
    %v2622 = vpop.permute.xlu0 %2621
    %2623 = vrot.lane.b32.xlu0 %v2608, 127
    %v2624 = vpop.permute.xlu0 %2623
    %v2633 = vadd.f32 %v2561, %v2610
    %v2634 = vadd.f32 %v2562, %v2612
    %v2635 = vadd.f32 %v2563, %v2614
    %v2636 = vadd.f32 %v2564, %v2616
    %v2637 = vadd.f32 %v2565, %v2618
    %v2638 = vadd.f32 %v2566, %v2620
    %v2639 = vadd.f32 %v2567, %v2622
    %v2640 = vadd.f32 %v2568, %v2624
    %s2641 = sld [smem:[#allocation8 + $0x17]]
    %v2642 = vstv %s2641
    %v2643 = vmul.f32 %v2642, %v1327
    %v2644 = vmul.f32 %v2642, %v1328
    %v2645 = vmul.f32 %v2642, %v1329
    %v2646 = vmul.f32 %v2642, %v1330
    %v2647 = vmul.f32 %v2642, %v1331
    %v2648 = vmul.f32 %v2642, %v1347
    %v2649 = vmul.f32 %v2642, %v1348
    %v2650 = vmul.f32 %v2642, %v1349
    %v2651 = vmul.f32 %v2642, %v1350
    %v2652 = vmul.f32 %v2642, %v1351
    %v2663 = vrot.slane %v2643, 1
    %v2664 = vrot.slane %v2644, 1
    %v2665 = vsel %vm1497, %v2663, %v2664
    %v2666 = vrot.slane %v2645, 1
    %v2667 = vsel %vm1497, %v2664, %v2666
    %v2668 = vrot.slane %v2646, 1
    %v2669 = vsel %vm1497, %v2666, %v2668
    %v2670 = vrot.slane %v2647, 1
    %v2671 = vsel %vm1497, %v2668, %v2670
    %v2672 = vrot.slane %v2648, 1
    %v2673 = vrot.slane %v2649, 1
    %v2674 = vsel %vm1497, %v2672, %v2673
    %v2675 = vrot.slane %v2650, 1
    %v2676 = vsel %vm1497, %v2673, %v2675
    %v2677 = vrot.slane %v2651, 1
    %v2678 = vsel %vm1497, %v2675, %v2677
    %v2679 = vrot.slane %v2652, 1
    %v2680 = vsel %vm1497, %v2677, %v2679
    %2681 = vrot.lane.b32.xlu0 %v2665, 126
    %v2682 = vpop.permute.xlu0 %2681
    %2683 = vrot.lane.b32.xlu0 %v2667, 126
    %v2684 = vpop.permute.xlu0 %2683
    %2685 = vrot.lane.b32.xlu0 %v2669, 126
    %v2686 = vpop.permute.xlu0 %2685
    %2687 = vrot.lane.b32.xlu0 %v2671, 126
    %v2688 = vpop.permute.xlu0 %2687
    %2689 = vrot.lane.b32.xlu0 %v2674, 126
    %v2690 = vpop.permute.xlu0 %2689
    %2691 = vrot.lane.b32.xlu0 %v2676, 126
    %v2692 = vpop.permute.xlu0 %2691
    %2693 = vrot.lane.b32.xlu0 %v2678, 126
    %v2694 = vpop.permute.xlu0 %2693
    %2695 = vrot.lane.b32.xlu0 %v2680, 126
    %v2696 = vpop.permute.xlu0 %2695
    %v2705 = vadd.f32 %v2633, %v2682
    %v2706 = vadd.f32 %v2634, %v2684
    %v2707 = vadd.f32 %v2635, %v2686
    %v2708 = vadd.f32 %v2636, %v2688
    %v2709 = vadd.f32 %v2637, %v2690
    %v2710 = vadd.f32 %v2638, %v2692
    %v2711 = vadd.f32 %v2639, %v2694
    %v2712 = vadd.f32 %v2640, %v2696
    %s2713 = sld [smem:[#allocation8 + $0x18]]
    %v2714 = vstv %s2713
    %v2715 = vmul.f32 %v2714, %v1327
    %v2716 = vmul.f32 %v2714, %v1328
    %v2717 = vmul.f32 %v2714, %v1329
    %v2718 = vmul.f32 %v2714, %v1330
    %v2719 = vmul.f32 %v2714, %v1331
    %v2720 = vmul.f32 %v2714, %v1347
    %v2721 = vmul.f32 %v2714, %v1348
    %v2722 = vmul.f32 %v2714, %v1349
    %v2723 = vmul.f32 %v2714, %v1350
    %v2724 = vmul.f32 %v2714, %v1351
    %v2735 = vrot.slane %v2715, 2
    %v2736 = vrot.slane %v2716, 2
    %v2737 = vsel %vm1698, %v2735, %v2736
    %v2738 = vrot.slane %v2717, 2
    %v2739 = vsel %vm1698, %v2736, %v2738
    %v2740 = vrot.slane %v2718, 2
    %v2741 = vsel %vm1698, %v2738, %v2740
    %v2742 = vrot.slane %v2719, 2
    %v2743 = vsel %vm1698, %v2740, %v2742
    %v2744 = vrot.slane %v2720, 2
    %v2745 = vrot.slane %v2721, 2
    %v2746 = vsel %vm1698, %v2744, %v2745
    %v2747 = vrot.slane %v2722, 2
    %v2748 = vsel %vm1698, %v2745, %v2747
    %v2749 = vrot.slane %v2723, 2
    %v2750 = vsel %vm1698, %v2747, %v2749
    %v2751 = vrot.slane %v2724, 2
    %v2752 = vsel %vm1698, %v2749, %v2751
    %v2761 = vadd.f32 %v2705, %v2737
    %v2762 = vadd.f32 %v2706, %v2739
    %v2763 = vadd.f32 %v2707, %v2741
    %v2764 = vadd.f32 %v2708, %v2743
    %v2765 = vadd.f32 %v2709, %v2746
    %v2766 = vadd.f32 %v2710, %v2748
    %v2767 = vadd.f32 %v2711, %v2750
    %v2768 = vadd.f32 %v2712, %v2752
    %s2769 = sld [smem:[#allocation8 + $0x19]]
    %v2770 = vstv %s2769
    %v2771 = vmul.f32 %v2770, %v1327
    %v2772 = vmul.f32 %v2770, %v1328
    %v2773 = vmul.f32 %v2770, %v1329
    %v2774 = vmul.f32 %v2770, %v1330
    %v2775 = vmul.f32 %v2770, %v1331
    %v2776 = vmul.f32 %v2770, %v1347
    %v2777 = vmul.f32 %v2770, %v1348
    %v2778 = vmul.f32 %v2770, %v1349
    %v2779 = vmul.f32 %v2770, %v1350
    %v2780 = vmul.f32 %v2770, %v1351
    %v2791 = vrot.slane %v2771, 2
    %v2792 = vrot.slane %v2772, 2
    %v2793 = vsel %vm1698, %v2791, %v2792
    %v2794 = vrot.slane %v2773, 2
    %v2795 = vsel %vm1698, %v2792, %v2794
    %v2796 = vrot.slane %v2774, 2
    %v2797 = vsel %vm1698, %v2794, %v2796
    %v2798 = vrot.slane %v2775, 2
    %v2799 = vsel %vm1698, %v2796, %v2798
    %v2800 = vrot.slane %v2776, 2
    %v2801 = vrot.slane %v2777, 2
    %v2802 = vsel %vm1698, %v2800, %v2801
    %v2803 = vrot.slane %v2778, 2
    %v2804 = vsel %vm1698, %v2801, %v2803
    %v2805 = vrot.slane %v2779, 2
    %v2806 = vsel %vm1698, %v2803, %v2805
    %v2807 = vrot.slane %v2780, 2
    %v2808 = vsel %vm1698, %v2805, %v2807
    %2809 = vrot.lane.b32.xlu0 %v2793, 127
    %v2810 = vpop.permute.xlu0 %2809
    %2811 = vrot.lane.b32.xlu0 %v2795, 127
    %v2812 = vpop.permute.xlu0 %2811
    %2813 = vrot.lane.b32.xlu0 %v2797, 127
    %v2814 = vpop.permute.xlu0 %2813
    %2815 = vrot.lane.b32.xlu0 %v2799, 127
    %v2816 = vpop.permute.xlu0 %2815
    %2817 = vrot.lane.b32.xlu0 %v2802, 127
    %v2818 = vpop.permute.xlu0 %2817
    %2819 = vrot.lane.b32.xlu0 %v2804, 127
    %v2820 = vpop.permute.xlu0 %2819
    %2821 = vrot.lane.b32.xlu0 %v2806, 127
    %v2822 = vpop.permute.xlu0 %2821
    %2823 = vrot.lane.b32.xlu0 %v2808, 127
    %v2824 = vpop.permute.xlu0 %2823
    %v2833 = vadd.f32 %v2761, %v2810
    %v2834 = vadd.f32 %v2762, %v2812
    %v2835 = vadd.f32 %v2763, %v2814
    %v2836 = vadd.f32 %v2764, %v2816
    %v2837 = vadd.f32 %v2765, %v2818
    %v2838 = vadd.f32 %v2766, %v2820
    %v2839 = vadd.f32 %v2767, %v2822
    %v2840 = vadd.f32 %v2768, %v2824
    %s2841 = sld [smem:[#allocation8 + $0x1a]]
    %v2842 = vstv %s2841
    %v2843 = vmul.f32 %v2842, %v1327
    %v2844 = vmul.f32 %v2842, %v1328
    %v2845 = vmul.f32 %v2842, %v1329
    %v2846 = vmul.f32 %v2842, %v1330
    %v2847 = vmul.f32 %v2842, %v1331
    %v2848 = vmul.f32 %v2842, %v1347
    %v2849 = vmul.f32 %v2842, %v1348
    %v2850 = vmul.f32 %v2842, %v1349
    %v2851 = vmul.f32 %v2842, %v1350
    %v2852 = vmul.f32 %v2842, %v1351
    %v2863 = vrot.slane %v2843, 2
    %v2864 = vrot.slane %v2844, 2
    %v2865 = vsel %vm1698, %v2863, %v2864
    %v2866 = vrot.slane %v2845, 2
    %v2867 = vsel %vm1698, %v2864, %v2866
    %v2868 = vrot.slane %v2846, 2
    %v2869 = vsel %vm1698, %v2866, %v2868
    %v2870 = vrot.slane %v2847, 2
    %v2871 = vsel %vm1698, %v2868, %v2870
    %v2872 = vrot.slane %v2848, 2
    %v2873 = vrot.slane %v2849, 2
    %v2874 = vsel %vm1698, %v2872, %v2873
    %v2875 = vrot.slane %v2850, 2
    %v2876 = vsel %vm1698, %v2873, %v2875
    %v2877 = vrot.slane %v2851, 2
    %v2878 = vsel %vm1698, %v2875, %v2877
    %v2879 = vrot.slane %v2852, 2
    %v2880 = vsel %vm1698, %v2877, %v2879
    %2881 = vrot.lane.b32.xlu0 %v2865, 126
    %v2882 = vpop.permute.xlu0 %2881
    %2883 = vrot.lane.b32.xlu0 %v2867, 126
    %v2884 = vpop.permute.xlu0 %2883
    %2885 = vrot.lane.b32.xlu0 %v2869, 126
    %v2886 = vpop.permute.xlu0 %2885
    %2887 = vrot.lane.b32.xlu0 %v2871, 126
    %v2888 = vpop.permute.xlu0 %2887
    %2889 = vrot.lane.b32.xlu0 %v2874, 126
    %v2890 = vpop.permute.xlu0 %2889
    %2891 = vrot.lane.b32.xlu0 %v2876, 126
    %v2892 = vpop.permute.xlu0 %2891
    %2893 = vrot.lane.b32.xlu0 %v2878, 126
    %v2894 = vpop.permute.xlu0 %2893
    %2895 = vrot.lane.b32.xlu0 %v2880, 126
    %v2896 = vpop.permute.xlu0 %2895
    %v2905 = vadd.f32 %v2833, %v2882
    %v2906 = vadd.f32 %v2834, %v2884
    %v2907 = vadd.f32 %v2835, %v2886
    %v2908 = vadd.f32 %v2836, %v2888
    %v2909 = vadd.f32 %v2837, %v2890
    %v2910 = vadd.f32 %v2838, %v2892
    %v2911 = vadd.f32 %v2839, %v2894
    %v2912 = vadd.f32 %v2840, %v2896
    %s2913 = sld [smem:[#allocation8 + $0x1b]]
    %v2914 = vstv %s2913
    %v2915 = vmul.f32 %v2914, %v1332
    %v2916 = vmul.f32 %v2914, %v1333
    %v2917 = vmul.f32 %v2914, %v1334
    %v2918 = vmul.f32 %v2914, %v1335
    %v2919 = vmul.f32 %v2914, %v1352
    %v2920 = vmul.f32 %v2914, %v1353
    %v2921 = vmul.f32 %v2914, %v1354
    %v2922 = vmul.f32 %v2914, %v1355
    %v2923 = vadd.f32 %v2905, %v2915
    %v2924 = vadd.f32 %v2906, %v2916
    %v2925 = vadd.f32 %v2907, %v2917
    %v2926 = vadd.f32 %v2908, %v2918
    %v2927 = vadd.f32 %v2909, %v2919
    %v2928 = vadd.f32 %v2910, %v2920
    %v2929 = vadd.f32 %v2911, %v2921
    %v2930 = vadd.f32 %v2912, %v2922
    %s2931 = sld [smem:[#allocation8 + $0x1c]]
    %v2932 = vstv %s2931
    %v2933 = vmul.f32 %v2932, %v1332
    %v2934 = vmul.f32 %v2932, %v1333
    %v2935 = vmul.f32 %v2932, %v1334
    %v2936 = vmul.f32 %v2932, %v1335
    %v2937 = vmul.f32 %v2932, %v1352
    %v2938 = vmul.f32 %v2932, %v1353
    %v2939 = vmul.f32 %v2932, %v1354
    %v2940 = vmul.f32 %v2932, %v1355
    %2949 = vrot.lane.b32.xlu0 %v2933, 127
    %v2950 = vpop.permute.xlu0 %2949
    %2951 = vrot.lane.b32.xlu0 %v2934, 127
    %v2952 = vpop.permute.xlu0 %2951
    %2953 = vrot.lane.b32.xlu0 %v2935, 127
    %v2954 = vpop.permute.xlu0 %2953
    %2955 = vrot.lane.b32.xlu0 %v2936, 127
    %v2956 = vpop.permute.xlu0 %2955
    %2957 = vrot.lane.b32.xlu0 %v2937, 127
    %v2958 = vpop.permute.xlu0 %2957
    %2959 = vrot.lane.b32.xlu0 %v2938, 127
    %v2960 = vpop.permute.xlu0 %2959
    %2961 = vrot.lane.b32.xlu0 %v2939, 127
    %v2962 = vpop.permute.xlu0 %2961
    %2963 = vrot.lane.b32.xlu0 %v2940, 127
    %v2964 = vpop.permute.xlu0 %2963
    %v2973 = vadd.f32 %v2923, %v2950
    %v2974 = vadd.f32 %v2924, %v2952
    %v2975 = vadd.f32 %v2925, %v2954
    %v2976 = vadd.f32 %v2926, %v2956
    %v2977 = vadd.f32 %v2927, %v2958
    %v2978 = vadd.f32 %v2928, %v2960
    %v2979 = vadd.f32 %v2929, %v2962
    %v2980 = vadd.f32 %v2930, %v2964
    %s2981 = sld [smem:[#allocation8 + $0x1d]]
    %v2982 = vstv %s2981
    %v2983 = vmul.f32 %v2982, %v1332
    %v2984 = vmul.f32 %v2982, %v1333
    %v2985 = vmul.f32 %v2982, %v1334
    %v2986 = vmul.f32 %v2982, %v1335
    %v2987 = vmul.f32 %v2982, %v1352
    %v2988 = vmul.f32 %v2982, %v1353
    %v2989 = vmul.f32 %v2982, %v1354
    %v2990 = vmul.f32 %v2982, %v1355
    %2999 = vrot.lane.b32.xlu0 %v2983, 126
    %v3000 = vpop.permute.xlu0 %2999
    %3001 = vrot.lane.b32.xlu0 %v2984, 126
    %v3002 = vpop.permute.xlu0 %3001
    %3003 = vrot.lane.b32.xlu0 %v2985, 126
    %v3004 = vpop.permute.xlu0 %3003
    %3005 = vrot.lane.b32.xlu0 %v2986, 126
    %v3006 = vpop.permute.xlu0 %3005
    %3007 = vrot.lane.b32.xlu0 %v2987, 126
    %v3008 = vpop.permute.xlu0 %3007
    %3009 = vrot.lane.b32.xlu0 %v2988, 126
    %v3010 = vpop.permute.xlu0 %3009
    %3011 = vrot.lane.b32.xlu0 %v2989, 126
    %v3012 = vpop.permute.xlu0 %3011
    %3013 = vrot.lane.b32.xlu0 %v2990, 126
    %v3014 = vpop.permute.xlu0 %3013
    %v3023 = vadd.f32 %v2973, %v3000
    %v3024 = vadd.f32 %v2974, %v3002
    %v3025 = vadd.f32 %v2975, %v3004
    %v3026 = vadd.f32 %v2976, %v3006
    %v3027 = vadd.f32 %v2977, %v3008
    %v3028 = vadd.f32 %v2978, %v3010
    %v3029 = vadd.f32 %v2979, %v3012
    %v3030 = vadd.f32 %v2980, %v3014
    %s3031 = sld [smem:[#allocation8 + $0x1e]]
    %v3032 = vstv %s3031
    %v3033 = vmul.f32 %v3032, %v1332
    %v3034 = vmul.f32 %v3032, %v1333
    %v3035 = vmul.f32 %v3032, %v1334
    %v3036 = vmul.f32 %v3032, %v1335
    %v3037 = vmul.f32 %v3032, %v1336
    %v3038 = vmul.f32 %v3032, %v1352
    %v3039 = vmul.f32 %v3032, %v1353
    %v3040 = vmul.f32 %v3032, %v1354
    %v3041 = vmul.f32 %v3032, %v1355
    %v3042 = vmul.f32 %v3032, %v1356
    %v3053 = vrot.slane %v3033, 1
    %v3054 = vrot.slane %v3034, 1
    %v3055 = vsel %vm1497, %v3053, %v3054
    %v3056 = vrot.slane %v3035, 1
    %v3057 = vsel %vm1497, %v3054, %v3056
    %v3058 = vrot.slane %v3036, 1
    %v3059 = vsel %vm1497, %v3056, %v3058
    %v3060 = vrot.slane %v3037, 1
    %v3061 = vsel %vm1497, %v3058, %v3060
    %v3062 = vrot.slane %v3038, 1
    %v3063 = vrot.slane %v3039, 1
    %v3064 = vsel %vm1497, %v3062, %v3063
    %v3065 = vrot.slane %v3040, 1
    %v3066 = vsel %vm1497, %v3063, %v3065
    %v3067 = vrot.slane %v3041, 1
    %v3068 = vsel %vm1497, %v3065, %v3067
    %v3069 = vrot.slane %v3042, 1
    %v3070 = vsel %vm1497, %v3067, %v3069
    %v3079 = vadd.f32 %v3023, %v3055
    %v3080 = vadd.f32 %v3024, %v3057
    %v3081 = vadd.f32 %v3025, %v3059
    %v3082 = vadd.f32 %v3026, %v3061
    %v3083 = vadd.f32 %v3027, %v3064
    %v3084 = vadd.f32 %v3028, %v3066
    %v3085 = vadd.f32 %v3029, %v3068
    %v3086 = vadd.f32 %v3030, %v3070
    %s3087 = sld [smem:[#allocation8 + $0x1f]]
    %v3088 = vstv %s3087
    %v3089 = vmul.f32 %v3088, %v1332
    %v3090 = vmul.f32 %v3088, %v1333
    %v3091 = vmul.f32 %v3088, %v1334
    %v3092 = vmul.f32 %v3088, %v1335
    %v3093 = vmul.f32 %v3088, %v1336
    %v3094 = vmul.f32 %v3088, %v1352
    %v3095 = vmul.f32 %v3088, %v1353
    %v3096 = vmul.f32 %v3088, %v1354
    %v3097 = vmul.f32 %v3088, %v1355
    %v3098 = vmul.f32 %v3088, %v1356
    %v3109 = vrot.slane %v3089, 1
    %v3110 = vrot.slane %v3090, 1
    %v3111 = vsel %vm1497, %v3109, %v3110
    %v3112 = vrot.slane %v3091, 1
    %v3113 = vsel %vm1497, %v3110, %v3112
    %v3114 = vrot.slane %v3092, 1
    %v3115 = vsel %vm1497, %v3112, %v3114
    %v3116 = vrot.slane %v3093, 1
    %v3117 = vsel %vm1497, %v3114, %v3116
    %v3118 = vrot.slane %v3094, 1
    %v3119 = vrot.slane %v3095, 1
    %v3120 = vsel %vm1497, %v3118, %v3119
    %v3121 = vrot.slane %v3096, 1
    %v3122 = vsel %vm1497, %v3119, %v3121
    %v3123 = vrot.slane %v3097, 1
    %v3124 = vsel %vm1497, %v3121, %v3123
    %v3125 = vrot.slane %v3098, 1
    %v3126 = vsel %vm1497, %v3123, %v3125
    %3127 = vrot.lane.b32.xlu0 %v3111, 127
    %v3128 = vpop.permute.xlu0 %3127
    %3129 = vrot.lane.b32.xlu0 %v3113, 127
    %v3130 = vpop.permute.xlu0 %3129
    %3131 = vrot.lane.b32.xlu0 %v3115, 127
    %v3132 = vpop.permute.xlu0 %3131
    %3133 = vrot.lane.b32.xlu0 %v3117, 127
    %v3134 = vpop.permute.xlu0 %3133
    %3135 = vrot.lane.b32.xlu0 %v3120, 127
    %v3136 = vpop.permute.xlu0 %3135
    %3137 = vrot.lane.b32.xlu0 %v3122, 127
    %v3138 = vpop.permute.xlu0 %3137
    %3139 = vrot.lane.b32.xlu0 %v3124, 127
    %v3140 = vpop.permute.xlu0 %3139
    %3141 = vrot.lane.b32.xlu0 %v3126, 127
    %v3142 = vpop.permute.xlu0 %3141
    %v3151 = vadd.f32 %v3079, %v3128
    %v3152 = vadd.f32 %v3080, %v3130
    %v3153 = vadd.f32 %v3081, %v3132
    %v3154 = vadd.f32 %v3082, %v3134
    %v3155 = vadd.f32 %v3083, %v3136
    %v3156 = vadd.f32 %v3084, %v3138
    %v3157 = vadd.f32 %v3085, %v3140
    %v3158 = vadd.f32 %v3086, %v3142
    %s3159 = sld [smem:[#allocation8 + $0x20]]
    %v3160 = vstv %s3159
    %v3161 = vmul.f32 %v3160, %v1332
    %v3162 = vmul.f32 %v3160, %v1333
    %v3163 = vmul.f32 %v3160, %v1334
    %v3164 = vmul.f32 %v3160, %v1335
    %v3165 = vmul.f32 %v3160, %v1336
    %v3166 = vmul.f32 %v3160, %v1352
    %v3167 = vmul.f32 %v3160, %v1353
    %v3168 = vmul.f32 %v3160, %v1354
    %v3169 = vmul.f32 %v3160, %v1355
    %v3170 = vmul.f32 %v3160, %v1356
    %v3181 = vrot.slane %v3161, 1
    %v3182 = vrot.slane %v3162, 1
    %v3183 = vsel %vm1497, %v3181, %v3182
    %v3184 = vrot.slane %v3163, 1
    %v3185 = vsel %vm1497, %v3182, %v3184
    %v3186 = vrot.slane %v3164, 1
    %v3187 = vsel %vm1497, %v3184, %v3186
    %v3188 = vrot.slane %v3165, 1
    %v3189 = vsel %vm1497, %v3186, %v3188
    %v3190 = vrot.slane %v3166, 1
    %v3191 = vrot.slane %v3167, 1
    %v3192 = vsel %vm1497, %v3190, %v3191
    %v3193 = vrot.slane %v3168, 1
    %v3194 = vsel %vm1497, %v3191, %v3193
    %v3195 = vrot.slane %v3169, 1
    %v3196 = vsel %vm1497, %v3193, %v3195
    %v3197 = vrot.slane %v3170, 1
    %v3198 = vsel %vm1497, %v3195, %v3197
    %3199 = vrot.lane.b32.xlu0 %v3183, 126
    %v3200 = vpop.permute.xlu0 %3199
    %3201 = vrot.lane.b32.xlu0 %v3185, 126
    %v3202 = vpop.permute.xlu0 %3201
    %3203 = vrot.lane.b32.xlu0 %v3187, 126
    %v3204 = vpop.permute.xlu0 %3203
    %3205 = vrot.lane.b32.xlu0 %v3189, 126
    %v3206 = vpop.permute.xlu0 %3205
    %3207 = vrot.lane.b32.xlu0 %v3192, 126
    %v3208 = vpop.permute.xlu0 %3207
    %3209 = vrot.lane.b32.xlu0 %v3194, 126
    %v3210 = vpop.permute.xlu0 %3209
    %3211 = vrot.lane.b32.xlu0 %v3196, 126
    %v3212 = vpop.permute.xlu0 %3211
    %3213 = vrot.lane.b32.xlu0 %v3198, 126
    %v3214 = vpop.permute.xlu0 %3213
    %v3223 = vadd.f32 %v3151, %v3200
    %v3224 = vadd.f32 %v3152, %v3202
    %v3225 = vadd.f32 %v3153, %v3204
    %v3226 = vadd.f32 %v3154, %v3206
    %v3227 = vadd.f32 %v3155, %v3208
    %v3228 = vadd.f32 %v3156, %v3210
    %v3229 = vadd.f32 %v3157, %v3212
    %v3230 = vadd.f32 %v3158, %v3214
    %s3231 = sld [smem:[#allocation8 + $0x21]]
    %v3232 = vstv %s3231
    %v3233 = vmul.f32 %v3232, %v1332
    %v3234 = vmul.f32 %v3232, %v1333
    %v3235 = vmul.f32 %v3232, %v1334
    %v3236 = vmul.f32 %v3232, %v1335
    %v3237 = vmul.f32 %v3232, %v1336
    %v3238 = vmul.f32 %v3232, %v1352
    %v3239 = vmul.f32 %v3232, %v1353
    %v3240 = vmul.f32 %v3232, %v1354
    %v3241 = vmul.f32 %v3232, %v1355
    %v3242 = vmul.f32 %v3232, %v1356
    %v3253 = vrot.slane %v3233, 2
    %v3254 = vrot.slane %v3234, 2
    %v3255 = vsel %vm1698, %v3253, %v3254
    %v3256 = vrot.slane %v3235, 2
    %v3257 = vsel %vm1698, %v3254, %v3256
    %v3258 = vrot.slane %v3236, 2
    %v3259 = vsel %vm1698, %v3256, %v3258
    %v3260 = vrot.slane %v3237, 2
    %v3261 = vsel %vm1698, %v3258, %v3260
    %v3262 = vrot.slane %v3238, 2
    %v3263 = vrot.slane %v3239, 2
    %v3264 = vsel %vm1698, %v3262, %v3263
    %v3265 = vrot.slane %v3240, 2
    %v3266 = vsel %vm1698, %v3263, %v3265
    %v3267 = vrot.slane %v3241, 2
    %v3268 = vsel %vm1698, %v3265, %v3267
    %v3269 = vrot.slane %v3242, 2
    %v3270 = vsel %vm1698, %v3267, %v3269
    %v3279 = vadd.f32 %v3223, %v3255
    %v3280 = vadd.f32 %v3224, %v3257
    %v3281 = vadd.f32 %v3225, %v3259
    %v3282 = vadd.f32 %v3226, %v3261
    %v3283 = vadd.f32 %v3227, %v3264
    %v3284 = vadd.f32 %v3228, %v3266
    %v3285 = vadd.f32 %v3229, %v3268
    %v3286 = vadd.f32 %v3230, %v3270
    %s3287 = sld [smem:[#allocation8 + $0x22]]
    %v3288 = vstv %s3287
    %v3289 = vmul.f32 %v3288, %v1332
    %v3290 = vmul.f32 %v3288, %v1333
    %v3291 = vmul.f32 %v3288, %v1334
    %v3292 = vmul.f32 %v3288, %v1335
    %v3293 = vmul.f32 %v3288, %v1336
    %v3294 = vmul.f32 %v3288, %v1352
    %v3295 = vmul.f32 %v3288, %v1353
    %v3296 = vmul.f32 %v3288, %v1354
    %v3297 = vmul.f32 %v3288, %v1355
    %v3298 = vmul.f32 %v3288, %v1356
    %v3309 = vrot.slane %v3289, 2
    %v3310 = vrot.slane %v3290, 2
    %v3311 = vsel %vm1698, %v3309, %v3310
    %v3312 = vrot.slane %v3291, 2
    %v3313 = vsel %vm1698, %v3310, %v3312
    %v3314 = vrot.slane %v3292, 2
    %v3315 = vsel %vm1698, %v3312, %v3314
    %v3316 = vrot.slane %v3293, 2
    %v3317 = vsel %vm1698, %v3314, %v3316
    %v3318 = vrot.slane %v3294, 2
    %v3319 = vrot.slane %v3295, 2
    %v3320 = vsel %vm1698, %v3318, %v3319
    %v3321 = vrot.slane %v3296, 2
    %v3322 = vsel %vm1698, %v3319, %v3321
    %v3323 = vrot.slane %v3297, 2
    %v3324 = vsel %vm1698, %v3321, %v3323
    %v3325 = vrot.slane %v3298, 2
    %v3326 = vsel %vm1698, %v3323, %v3325
    %3327 = vrot.lane.b32.xlu0 %v3311, 127
    %v3328 = vpop.permute.xlu0 %3327
    %3329 = vrot.lane.b32.xlu0 %v3313, 127
    %v3330 = vpop.permute.xlu0 %3329
    %3331 = vrot.lane.b32.xlu0 %v3315, 127
    %v3332 = vpop.permute.xlu0 %3331
    %3333 = vrot.lane.b32.xlu0 %v3317, 127
    %v3334 = vpop.permute.xlu0 %3333
    %3335 = vrot.lane.b32.xlu0 %v3320, 127
    %v3336 = vpop.permute.xlu0 %3335
    %3337 = vrot.lane.b32.xlu0 %v3322, 127
    %v3338 = vpop.permute.xlu0 %3337
    %3339 = vrot.lane.b32.xlu0 %v3324, 127
    %v3340 = vpop.permute.xlu0 %3339
    %3341 = vrot.lane.b32.xlu0 %v3326, 127
    %v3342 = vpop.permute.xlu0 %3341
    %v3351 = vadd.f32 %v3279, %v3328
    %v3352 = vadd.f32 %v3280, %v3330
    %v3353 = vadd.f32 %v3281, %v3332
    %v3354 = vadd.f32 %v3282, %v3334
    %v3355 = vadd.f32 %v3283, %v3336
    %v3356 = vadd.f32 %v3284, %v3338
    %v3357 = vadd.f32 %v3285, %v3340
    %v3358 = vadd.f32 %v3286, %v3342
    %s3359 = sld [smem:[#allocation8 + $0x23]]
    %v3360 = vstv %s3359
    %v3361 = vmul.f32 %v3360, %v1332
    %v3362 = vmul.f32 %v3360, %v1333
    %v3363 = vmul.f32 %v3360, %v1334
    %v3364 = vmul.f32 %v3360, %v1335
    %v3365 = vmul.f32 %v3360, %v1336
    %v3366 = vmul.f32 %v3360, %v1352
    %v3367 = vmul.f32 %v3360, %v1353
    %v3368 = vmul.f32 %v3360, %v1354
    %v3369 = vmul.f32 %v3360, %v1355
    %v3370 = vmul.f32 %v3360, %v1356
    %v3381 = vrot.slane %v3361, 2
    %v3382 = vrot.slane %v3362, 2
    %v3383 = vsel %vm1698, %v3381, %v3382
    %v3384 = vrot.slane %v3363, 2
    %v3385 = vsel %vm1698, %v3382, %v3384
    %v3386 = vrot.slane %v3364, 2
    %v3387 = vsel %vm1698, %v3384, %v3386
    %v3388 = vrot.slane %v3365, 2
    %v3389 = vsel %vm1698, %v3386, %v3388
    %v3390 = vrot.slane %v3366, 2
    %v3391 = vrot.slane %v3367, 2
    %v3392 = vsel %vm1698, %v3390, %v3391
    %v3393 = vrot.slane %v3368, 2
    %v3394 = vsel %vm1698, %v3391, %v3393
    %v3395 = vrot.slane %v3369, 2
    %v3396 = vsel %vm1698, %v3393, %v3395
    %v3397 = vrot.slane %v3370, 2
    %v3398 = vsel %vm1698, %v3395, %v3397
    %3399 = vrot.lane.b32.xlu0 %v3383, 126
    %v3400 = vpop.permute.xlu0 %3399
    %3401 = vrot.lane.b32.xlu0 %v3385, 126
    %v3402 = vpop.permute.xlu0 %3401
    %3403 = vrot.lane.b32.xlu0 %v3387, 126
    %v3404 = vpop.permute.xlu0 %3403
    %3405 = vrot.lane.b32.xlu0 %v3389, 126
    %v3406 = vpop.permute.xlu0 %3405
    %3407 = vrot.lane.b32.xlu0 %v3392, 126
    %v3408 = vpop.permute.xlu0 %3407
    %3409 = vrot.lane.b32.xlu0 %v3394, 126
    %v3410 = vpop.permute.xlu0 %3409
    %3411 = vrot.lane.b32.xlu0 %v3396, 126
    %v3412 = vpop.permute.xlu0 %3411
    %3413 = vrot.lane.b32.xlu0 %v3398, 126
    %v3414 = vpop.permute.xlu0 %3413
    %v3423 = vadd.f32 %v3351, %v3400
    %v3424 = vadd.f32 %v3352, %v3402
    %v3425 = vadd.f32 %v3353, %v3404
    %v3426 = vadd.f32 %v3354, %v3406
    %v3427 = vadd.f32 %v3355, %v3408
    %v3428 = vadd.f32 %v3356, %v3410
    %v3429 = vadd.f32 %v3357, %v3412
    %v3430 = vadd.f32 %v3358, %v3414
    %s3431 = sld [smem:[#allocation9]]
    %v3432 = vstv %s3431
    %v3433 = vadd.f32 %v3423, %v3432
    %v3434 = vadd.f32 %v3424, %v3432
    %v3435 = vadd.f32 %v3425, %v3432
    %v3436 = vadd.f32 %v3426, %v3432
    %v3437 = vadd.f32 %v3427, %v3432
    %v3438 = vadd.f32 %v3428, %v3432
    %v3439 = vadd.f32 %v3429, %v3432
    %v3440 = vadd.f32 %v3430, %v3432
    %vm3441 = vcmask 261120
    %v3442 = vsel %vm3441, %v3433, 0.0
    %v3443 = vsel %vm3441, %v3434, 0.0
    %v3444 = vadd.f32 %v3442, %v3443
    %v3445 = vsel %vm3441, %v3435, 0.0
    %v3446 = vadd.f32 %v3444, %v3445
    %v3447 = vsel %vm3441, %v3436, 0.0
    %v3448 = vadd.f32 %v3446, %v3447
    %v3449 = vsel %vm3441, %v3437, 0.0
    %v3450 = vadd.f32 %v3448, %v3449
    %v3451 = vsel %vm3441, %v3438, 0.0
    %v3452 = vadd.f32 %v3450, %v3451
    %v3453 = vsel %vm3441, %v3439, 0.0
    %v3454 = vadd.f32 %v3452, %v3453
    %v3455 = vsel %vm3441, %v3440, 0.0
    %v3456 = vadd.f32 %v3454, %v3455
    %3457 = vadd.xlane.f32.xlu0 %v3456
    %v3458 = vpop.xlane.xlu0 %3457
    %v3459 = vrot.slane %v3458, 4
    %v3460 = vadd.f32 %v3458, %v3459
    %v3461 = vrot.slane %v3460, 2
    %v3462 = vadd.f32 %v3460, %v3461
    %v3463 = vrot.slane %v3462, 1
    %v3464 = vadd.f32 %v3462, %v3463
    %s3465 = vtos %v3464
    %v3466 = vstv %s3465
    %v3467 = vmul.f32 %v3433, %v3433
    %v3468 = vmul.f32 %v3434, %v3434
    %v3469 = vmul.f32 %v3435, %v3435
    %v3470 = vmul.f32 %v3436, %v3436
    %v3471 = vmul.f32 %v3437, %v3437
    %v3472 = vmul.f32 %v3438, %v3438
    %v3473 = vmul.f32 %v3439, %v3439
    %v3474 = vmul.f32 %v3440, %v3440
    %v3475 = vsel %vm3441, %v3467, 0.0
    %v3476 = vsel %vm3441, %v3468, 0.0
    %v3477 = vadd.f32 %v3475, %v3476
    %v3478 = vsel %vm3441, %v3469, 0.0
    %v3479 = vadd.f32 %v3477, %v3478
    %v3480 = vsel %vm3441, %v3470, 0.0
    %v3481 = vadd.f32 %v3479, %v3480
    %v3482 = vsel %vm3441, %v3471, 0.0
    %v3483 = vadd.f32 %v3481, %v3482
    %v3484 = vsel %vm3441, %v3472, 0.0
    %v3485 = vadd.f32 %v3483, %v3484
    %v3486 = vsel %vm3441, %v3473, 0.0
    %v3487 = vadd.f32 %v3485, %v3486
    %v3488 = vsel %vm3441, %v3474, 0.0
    %v3489 = vadd.f32 %v3487, %v3488
    %3490 = vadd.xlane.f32.xlu0 %v3489
    %v3491 = vpop.xlane.xlu0 %3490
    %v3492 = vrot.slane %v3491, 4
    %v3493 = vadd.f32 %v3491, %v3492
    %v3494 = vrot.slane %v3493, 2
    %v3495 = vadd.f32 %v3493, %v3494
    %v3496 = vrot.slane %v3495, 1
    %v3497 = vadd.f32 %v3495, %v3496
    %s3498 = vtos %v3497
    %v3499 = vstv %s3498
    %v3500 = vmul.f32 %v3466, 0.00048828125
    %v3501 = vmul.f32 %v3499, 0.00048828125
    %v3502 = vmul.f32 %v3500, %v3500
    %v3503 = vsub.f32 %v3501, %v3502
    %v3504 = vsub.f32 %v3433, %v3500
    %v3505 = vsub.f32 %v3434, %v3500
    %v3506 = vsub.f32 %v3435, %v3500
    %v3507 = vsub.f32 %v3436, %v3500
    %v3508 = vsub.f32 %v3437, %v3500
    %v3509 = vsub.f32 %v3438, %v3500
    %v3510 = vsub.f32 %v3439, %v3500
    %v3511 = vsub.f32 %v3440, %v3500
    %v3512 = vadd.f32 %v3503, 1e-05
    %v3513 = vrsqrt.pop %v3512
    %v3514 = vmul.f32 %v3504, %v3513
    %v3515 = vmul.f32 %v3505, %v3513
    %v3516 = vmul.f32 %v3506, %v3513
    %v3517 = vmul.f32 %v3507, %v3513
    %v3518 = vmul.f32 %v3508, %v3513
    %v3519 = vmul.f32 %v3509, %v3513
    %v3520 = vmul.f32 %v3510, %v3513
    %v3521 = vmul.f32 %v3511, %v3513
    %s3522 = sld [smem:[#allocation11]]
    %v3523 = vstv %s3522
    %v3524 = vmul.f32 %v3514, %v3523
    %v3525 = vmul.f32 %v3515, %v3523
    %v3526 = vmul.f32 %v3516, %v3523
    %v3527 = vmul.f32 %v3517, %v3523
    %v3528 = vmul.f32 %v3518, %v3523
    %v3529 = vmul.f32 %v3519, %v3523
    %v3530 = vmul.f32 %v3520, %v3523
    %v3531 = vmul.f32 %v3521, %v3523
    %s3532 = sld [smem:[#allocation12]]
    %v3533 = vstv %s3532
    %v3534 = vadd.f32 %v3524, %v3533
    %v3535 = vadd.f32 %v3525, %v3533
    %v3536 = vadd.f32 %v3526, %v3533
    %v3537 = vadd.f32 %v3527, %v3533
    %v3538 = vadd.f32 %v3528, %v3533
    %v3539 = vadd.f32 %v3529, %v3533
    %v3540 = vadd.f32 %v3530, %v3533
    %v3541 = vadd.f32 %v3531, %v3533
    %v3542 = vmax.f32 %v3534, 0.0
    %v3543 = vmax.f32 %v3535, 0.0
    %v3544 = vmax.f32 %v3536, 0.0
    %v3545 = vmax.f32 %v3537, 0.0
    %v3546 = vmax.f32 %v3538, 0.0
    %v3547 = vmax.f32 %v3539, 0.0
    %v3548 = vmax.f32 %v3540, 0.0
    %v3549 = vmax.f32 %v3541, 0.0
    %s3550 = sld [smem:[#allocation8 + $0x24]]
    %v3551 = vstv %s3550
    %v3552 = vmul.f32 %v3551, %v1317
    %v3553 = vmul.f32 %v3551, %v1318
    %v3554 = vmul.f32 %v3551, %v1319
    %v3555 = vmul.f32 %v3551, %v1320
    %v3556 = vmul.f32 %v3551, %v1337
    %v3557 = vmul.f32 %v3551, %v1338
    %v3558 = vmul.f32 %v3551, %v1339
    %v3559 = vmul.f32 %v3551, %v1340
    %v3560 = vadd.f32 %v3552, 0.0
    %v3561 = vadd.f32 %v3553, 0.0
    %v3562 = vadd.f32 %v3554, 0.0
    %v3563 = vadd.f32 %v3555, 0.0
    %v3564 = vadd.f32 %v3556, 0.0
    %v3565 = vadd.f32 %v3557, 0.0
    %v3566 = vadd.f32 %v3558, 0.0
    %v3567 = vadd.f32 %v3559, 0.0
    %s3568 = sld [smem:[#allocation8 + $0x25]]
    %v3569 = vstv %s3568
    %v3570 = vmul.f32 %v3569, %v1317
    %v3571 = vmul.f32 %v3569, %v1318
    %v3572 = vmul.f32 %v3569, %v1319
    %v3573 = vmul.f32 %v3569, %v1320
    %v3574 = vmul.f32 %v3569, %v1337
    %v3575 = vmul.f32 %v3569, %v1338
    %v3576 = vmul.f32 %v3569, %v1339
    %v3577 = vmul.f32 %v3569, %v1340
    %3586 = vrot.lane.b32.xlu0 %v3570, 127
    %v3587 = vpop.permute.xlu0 %3586
    %3588 = vrot.lane.b32.xlu0 %v3571, 127
    %v3589 = vpop.permute.xlu0 %3588
    %3590 = vrot.lane.b32.xlu0 %v3572, 127
    %v3591 = vpop.permute.xlu0 %3590
    %3592 = vrot.lane.b32.xlu0 %v3573, 127
    %v3593 = vpop.permute.xlu0 %3592
    %3594 = vrot.lane.b32.xlu0 %v3574, 127
    %v3595 = vpop.permute.xlu0 %3594
    %3596 = vrot.lane.b32.xlu0 %v3575, 127
    %v3597 = vpop.permute.xlu0 %3596
    %3598 = vrot.lane.b32.xlu0 %v3576, 127
    %v3599 = vpop.permute.xlu0 %3598
    %3600 = vrot.lane.b32.xlu0 %v3577, 127
    %v3601 = vpop.permute.xlu0 %3600
    %v3610 = vadd.f32 %v3560, %v3587
    %v3611 = vadd.f32 %v3561, %v3589
    %v3612 = vadd.f32 %v3562, %v3591
    %v3613 = vadd.f32 %v3563, %v3593
    %v3614 = vadd.f32 %v3564, %v3595
    %v3615 = vadd.f32 %v3565, %v3597
    %v3616 = vadd.f32 %v3566, %v3599
    %v3617 = vadd.f32 %v3567, %v3601
    %s3618 = sld [smem:[#allocation8 + $0x26]]
    %v3619 = vstv %s3618
    %v3620 = vmul.f32 %v3619, %v1317
    %v3621 = vmul.f32 %v3619, %v1318
    %v3622 = vmul.f32 %v3619, %v1319
    %v3623 = vmul.f32 %v3619, %v1320
    %v3624 = vmul.f32 %v3619, %v1337
    %v3625 = vmul.f32 %v3619, %v1338
    %v3626 = vmul.f32 %v3619, %v1339
    %v3627 = vmul.f32 %v3619, %v1340
    %3636 = vrot.lane.b32.xlu0 %v3620, 126
    %v3637 = vpop.permute.xlu0 %3636
    %3638 = vrot.lane.b32.xlu0 %v3621, 126
    %v3639 = vpop.permute.xlu0 %3638
    %3640 = vrot.lane.b32.xlu0 %v3622, 126
    %v3641 = vpop.permute.xlu0 %3640
    %3642 = vrot.lane.b32.xlu0 %v3623, 126
    %v3643 = vpop.permute.xlu0 %3642
    %3644 = vrot.lane.b32.xlu0 %v3624, 126
    %v3645 = vpop.permute.xlu0 %3644
    %3646 = vrot.lane.b32.xlu0 %v3625, 126
    %v3647 = vpop.permute.xlu0 %3646
    %3648 = vrot.lane.b32.xlu0 %v3626, 126
    %v3649 = vpop.permute.xlu0 %3648
    %3650 = vrot.lane.b32.xlu0 %v3627, 126
    %v3651 = vpop.permute.xlu0 %3650
    %v3660 = vadd.f32 %v3610, %v3637
    %v3661 = vadd.f32 %v3611, %v3639
    %v3662 = vadd.f32 %v3612, %v3641
    %v3663 = vadd.f32 %v3613, %v3643
    %v3664 = vadd.f32 %v3614, %v3645
    %v3665 = vadd.f32 %v3615, %v3647
    %v3666 = vadd.f32 %v3616, %v3649
    %v3667 = vadd.f32 %v3617, %v3651
    %s3668 = sld [smem:[#allocation8 + $0x27]]
    %v3669 = vstv %s3668
    %v3670 = vmul.f32 %v3669, %v1317
    %v3671 = vmul.f32 %v3669, %v1318
    %v3672 = vmul.f32 %v3669, %v1319
    %v3673 = vmul.f32 %v3669, %v1320
    %v3674 = vmul.f32 %v3669, %v1321
    %v3675 = vmul.f32 %v3669, %v1337
    %v3676 = vmul.f32 %v3669, %v1338
    %v3677 = vmul.f32 %v3669, %v1339
    %v3678 = vmul.f32 %v3669, %v1340
    %v3679 = vmul.f32 %v3669, %v1341
    %v3690 = vrot.slane %v3670, 1
    %v3691 = vrot.slane %v3671, 1
    %v3692 = vsel %vm1497, %v3690, %v3691
    %v3693 = vrot.slane %v3672, 1
    %v3694 = vsel %vm1497, %v3691, %v3693
    %v3695 = vrot.slane %v3673, 1
    %v3696 = vsel %vm1497, %v3693, %v3695
    %v3697 = vrot.slane %v3674, 1
    %v3698 = vsel %vm1497, %v3695, %v3697
    %v3699 = vrot.slane %v3675, 1
    %v3700 = vrot.slane %v3676, 1
    %v3701 = vsel %vm1497, %v3699, %v3700
    %v3702 = vrot.slane %v3677, 1
    %v3703 = vsel %vm1497, %v3700, %v3702
    %v3704 = vrot.slane %v3678, 1
    %v3705 = vsel %vm1497, %v3702, %v3704
    %v3706 = vrot.slane %v3679, 1
    %v3707 = vsel %vm1497, %v3704, %v3706
    %v3716 = vadd.f32 %v3660, %v3692
    %v3717 = vadd.f32 %v3661, %v3694
    %v3718 = vadd.f32 %v3662, %v3696
    %v3719 = vadd.f32 %v3663, %v3698
    %v3720 = vadd.f32 %v3664, %v3701
    %v3721 = vadd.f32 %v3665, %v3703
    %v3722 = vadd.f32 %v3666, %v3705
    %v3723 = vadd.f32 %v3667, %v3707
    %s3724 = sld [smem:[#allocation8 + $0x28]]
    %v3725 = vstv %s3724
    %v3726 = vmul.f32 %v3725, %v1317
    %v3727 = vmul.f32 %v3725, %v1318
    %v3728 = vmul.f32 %v3725, %v1319
    %v3729 = vmul.f32 %v3725, %v1320
    %v3730 = vmul.f32 %v3725, %v1321
    %v3731 = vmul.f32 %v3725, %v1337
    %v3732 = vmul.f32 %v3725, %v1338
    %v3733 = vmul.f32 %v3725, %v1339
    %v3734 = vmul.f32 %v3725, %v1340
    %v3735 = vmul.f32 %v3725, %v1341
    %v3746 = vrot.slane %v3726, 1
    %v3747 = vrot.slane %v3727, 1
    %v3748 = vsel %vm1497, %v3746, %v3747
    %v3749 = vrot.slane %v3728, 1
    %v3750 = vsel %vm1497, %v3747, %v3749
    %v3751 = vrot.slane %v3729, 1
    %v3752 = vsel %vm1497, %v3749, %v3751
    %v3753 = vrot.slane %v3730, 1
    %v3754 = vsel %vm1497, %v3751, %v3753
    %v3755 = vrot.slane %v3731, 1
    %v3756 = vrot.slane %v3732, 1
    %v3757 = vsel %vm1497, %v3755, %v3756
    %v3758 = vrot.slane %v3733, 1
    %v3759 = vsel %vm1497, %v3756, %v3758
    %v3760 = vrot.slane %v3734, 1
    %v3761 = vsel %vm1497, %v3758, %v3760
    %v3762 = vrot.slane %v3735, 1
    %v3763 = vsel %vm1497, %v3760, %v3762
    %3764 = vrot.lane.b32.xlu0 %v3748, 127
    %v3765 = vpop.permute.xlu0 %3764
    %3766 = vrot.lane.b32.xlu0 %v3750, 127
    %v3767 = vpop.permute.xlu0 %3766
    %3768 = vrot.lane.b32.xlu0 %v3752, 127
    %v3769 = vpop.permute.xlu0 %3768
    %3770 = vrot.lane.b32.xlu0 %v3754, 127
    %v3771 = vpop.permute.xlu0 %3770
    %3772 = vrot.lane.b32.xlu0 %v3757, 127
    %v3773 = vpop.permute.xlu0 %3772
    %3774 = vrot.lane.b32.xlu0 %v3759, 127
    %v3775 = vpop.permute.xlu0 %3774
    %3776 = vrot.lane.b32.xlu0 %v3761, 127
    %v3777 = vpop.permute.xlu0 %3776
    %3778 = vrot.lane.b32.xlu0 %v3763, 127
    %v3779 = vpop.permute.xlu0 %3778
    %v3788 = vadd.f32 %v3716, %v3765
    %v3789 = vadd.f32 %v3717, %v3767
    %v3790 = vadd.f32 %v3718, %v3769
    %v3791 = vadd.f32 %v3719, %v3771
    %v3792 = vadd.f32 %v3720, %v3773
    %v3793 = vadd.f32 %v3721, %v3775
    %v3794 = vadd.f32 %v3722, %v3777
    %v3795 = vadd.f32 %v3723, %v3779
    %s3796 = sld [smem:[#allocation8 + $0x29]]
    %v3797 = vstv %s3796
    %v3798 = vmul.f32 %v3797, %v1317
    %v3799 = vmul.f32 %v3797, %v1318
    %v3800 = vmul.f32 %v3797, %v1319
    %v3801 = vmul.f32 %v3797, %v1320
    %v3802 = vmul.f32 %v3797, %v1321
    %v3803 = vmul.f32 %v3797, %v1337
    %v3804 = vmul.f32 %v3797, %v1338
    %v3805 = vmul.f32 %v3797, %v1339
    %v3806 = vmul.f32 %v3797, %v1340
    %v3807 = vmul.f32 %v3797, %v1341
    %v3818 = vrot.slane %v3798, 1
    %v3819 = vrot.slane %v3799, 1
    %v3820 = vsel %vm1497, %v3818, %v3819
    %v3821 = vrot.slane %v3800, 1
    %v3822 = vsel %vm1497, %v3819, %v3821
    %v3823 = vrot.slane %v3801, 1
    %v3824 = vsel %vm1497, %v3821, %v3823
    %v3825 = vrot.slane %v3802, 1
    %v3826 = vsel %vm1497, %v3823, %v3825
    %v3827 = vrot.slane %v3803, 1
    %v3828 = vrot.slane %v3804, 1
    %v3829 = vsel %vm1497, %v3827, %v3828
    %v3830 = vrot.slane %v3805, 1
    %v3831 = vsel %vm1497, %v3828, %v3830
    %v3832 = vrot.slane %v3806, 1
    %v3833 = vsel %vm1497, %v3830, %v3832
    %v3834 = vrot.slane %v3807, 1
    %v3835 = vsel %vm1497, %v3832, %v3834
    %3836 = vrot.lane.b32.xlu0 %v3820, 126
    %v3837 = vpop.permute.xlu0 %3836
    %3838 = vrot.lane.b32.xlu0 %v3822, 126
    %v3839 = vpop.permute.xlu0 %3838
    %3840 = vrot.lane.b32.xlu0 %v3824, 126
    %v3841 = vpop.permute.xlu0 %3840
    %3842 = vrot.lane.b32.xlu0 %v3826, 126
    %v3843 = vpop.permute.xlu0 %3842
    %3844 = vrot.lane.b32.xlu0 %v3829, 126
    %v3845 = vpop.permute.xlu0 %3844
    %3846 = vrot.lane.b32.xlu0 %v3831, 126
    %v3847 = vpop.permute.xlu0 %3846
    %3848 = vrot.lane.b32.xlu0 %v3833, 126
    %v3849 = vpop.permute.xlu0 %3848
    %3850 = vrot.lane.b32.xlu0 %v3835, 126
    %v3851 = vpop.permute.xlu0 %3850
    %v3860 = vadd.f32 %v3788, %v3837
    %v3861 = vadd.f32 %v3789, %v3839
    %v3862 = vadd.f32 %v3790, %v3841
    %v3863 = vadd.f32 %v3791, %v3843
    %v3864 = vadd.f32 %v3792, %v3845
    %v3865 = vadd.f32 %v3793, %v3847
    %v3866 = vadd.f32 %v3794, %v3849
    %v3867 = vadd.f32 %v3795, %v3851
    %s3868 = sld [smem:[#allocation8 + $0x2a]]
    %v3869 = vstv %s3868
    %v3870 = vmul.f32 %v3869, %v1317
    %v3871 = vmul.f32 %v3869, %v1318
    %v3872 = vmul.f32 %v3869, %v1319
    %v3873 = vmul.f32 %v3869, %v1320
    %v3874 = vmul.f32 %v3869, %v1321
    %v3875 = vmul.f32 %v3869, %v1337
    %v3876 = vmul.f32 %v3869, %v1338
    %v3877 = vmul.f32 %v3869, %v1339
    %v3878 = vmul.f32 %v3869, %v1340
    %v3879 = vmul.f32 %v3869, %v1341
    %v3890 = vrot.slane %v3870, 2
    %v3891 = vrot.slane %v3871, 2
    %v3892 = vsel %vm1698, %v3890, %v3891
    %v3893 = vrot.slane %v3872, 2
    %v3894 = vsel %vm1698, %v3891, %v3893
    %v3895 = vrot.slane %v3873, 2
    %v3896 = vsel %vm1698, %v3893, %v3895
    %v3897 = vrot.slane %v3874, 2
    %v3898 = vsel %vm1698, %v3895, %v3897
    %v3899 = vrot.slane %v3875, 2
    %v3900 = vrot.slane %v3876, 2
    %v3901 = vsel %vm1698, %v3899, %v3900
    %v3902 = vrot.slane %v3877, 2
    %v3903 = vsel %vm1698, %v3900, %v3902
    %v3904 = vrot.slane %v3878, 2
    %v3905 = vsel %vm1698, %v3902, %v3904
    %v3906 = vrot.slane %v3879, 2
    %v3907 = vsel %vm1698, %v3904, %v3906
    %v3916 = vadd.f32 %v3860, %v3892
    %v3917 = vadd.f32 %v3861, %v3894
    %v3918 = vadd.f32 %v3862, %v3896
    %v3919 = vadd.f32 %v3863, %v3898
    %v3920 = vadd.f32 %v3864, %v3901
    %v3921 = vadd.f32 %v3865, %v3903
    %v3922 = vadd.f32 %v3866, %v3905
    %v3923 = vadd.f32 %v3867, %v3907
    %s3924 = sld [smem:[#allocation8 + $0x2b]]
    %v3925 = vstv %s3924
    %v3926 = vmul.f32 %v3925, %v1317
    %v3927 = vmul.f32 %v3925, %v1318
    %v3928 = vmul.f32 %v3925, %v1319
    %v3929 = vmul.f32 %v3925, %v1320
    %v3930 = vmul.f32 %v3925, %v1321
    %v3931 = vmul.f32 %v3925, %v1337
    %v3932 = vmul.f32 %v3925, %v1338
    %v3933 = vmul.f32 %v3925, %v1339
    %v3934 = vmul.f32 %v3925, %v1340
    %v3935 = vmul.f32 %v3925, %v1341
    %v3946 = vrot.slane %v3926, 2
    %v3947 = vrot.slane %v3927, 2
    %v3948 = vsel %vm1698, %v3946, %v3947
    %v3949 = vrot.slane %v3928, 2
    %v3950 = vsel %vm1698, %v3947, %v3949
    %v3951 = vrot.slane %v3929, 2
    %v3952 = vsel %vm1698, %v3949, %v3951
    %v3953 = vrot.slane %v3930, 2
    %v3954 = vsel %vm1698, %v3951, %v3953
    %v3955 = vrot.slane %v3931, 2
    %v3956 = vrot.slane %v3932, 2
    %v3957 = vsel %vm1698, %v3955, %v3956
    %v3958 = vrot.slane %v3933, 2
    %v3959 = vsel %vm1698, %v3956, %v3958
    %v3960 = vrot.slane %v3934, 2
    %v3961 = vsel %vm1698, %v3958, %v3960
    %v3962 = vrot.slane %v3935, 2
    %v3963 = vsel %vm1698, %v3960, %v3962
    %3964 = vrot.lane.b32.xlu0 %v3948, 127
    %v3965 = vpop.permute.xlu0 %3964
    %3966 = vrot.lane.b32.xlu0 %v3950, 127
    %v3967 = vpop.permute.xlu0 %3966
    %3968 = vrot.lane.b32.xlu0 %v3952, 127
    %v3969 = vpop.permute.xlu0 %3968
    %3970 = vrot.lane.b32.xlu0 %v3954, 127
    %v3971 = vpop.permute.xlu0 %3970
    %3972 = vrot.lane.b32.xlu0 %v3957, 127
    %v3973 = vpop.permute.xlu0 %3972
    %3974 = vrot.lane.b32.xlu0 %v3959, 127
    %v3975 = vpop.permute.xlu0 %3974
    %3976 = vrot.lane.b32.xlu0 %v3961, 127
    %v3977 = vpop.permute.xlu0 %3976
    %3978 = vrot.lane.b32.xlu0 %v3963, 127
    %v3979 = vpop.permute.xlu0 %3978
    %v3988 = vadd.f32 %v3916, %v3965
    %v3989 = vadd.f32 %v3917, %v3967
    %v3990 = vadd.f32 %v3918, %v3969
    %v3991 = vadd.f32 %v3919, %v3971
    %v3992 = vadd.f32 %v3920, %v3973
    %v3993 = vadd.f32 %v3921, %v3975
    %v3994 = vadd.f32 %v3922, %v3977
    %v3995 = vadd.f32 %v3923, %v3979
    %s3996 = sld [smem:[#allocation8 + $0x2c]]
    %v3997 = vstv %s3996
    %v3998 = vmul.f32 %v3997, %v1317
    %v3999 = vmul.f32 %v3997, %v1318
    %v4000 = vmul.f32 %v3997, %v1319
    %v4001 = vmul.f32 %v3997, %v1320
    %v4002 = vmul.f32 %v3997, %v1321
    %v4003 = vmul.f32 %v3997, %v1337
    %v4004 = vmul.f32 %v3997, %v1338
    %v4005 = vmul.f32 %v3997, %v1339
    %v4006 = vmul.f32 %v3997, %v1340
    %v4007 = vmul.f32 %v3997, %v1341
    %v4018 = vrot.slane %v3998, 2
    %v4019 = vrot.slane %v3999, 2
    %v4020 = vsel %vm1698, %v4018, %v4019
    %v4021 = vrot.slane %v4000, 2
    %v4022 = vsel %vm1698, %v4019, %v4021
    %v4023 = vrot.slane %v4001, 2
    %v4024 = vsel %vm1698, %v4021, %v4023
    %v4025 = vrot.slane %v4002, 2
    %v4026 = vsel %vm1698, %v4023, %v4025
    %v4027 = vrot.slane %v4003, 2
    %v4028 = vrot.slane %v4004, 2
    %v4029 = vsel %vm1698, %v4027, %v4028
    %v4030 = vrot.slane %v4005, 2
    %v4031 = vsel %vm1698, %v4028, %v4030
    %v4032 = vrot.slane %v4006, 2
    %v4033 = vsel %vm1698, %v4030, %v4032
    %v4034 = vrot.slane %v4007, 2
    %v4035 = vsel %vm1698, %v4032, %v4034
    %4036 = vrot.lane.b32.xlu0 %v4020, 126
    %v4037 = vpop.permute.xlu0 %4036
    %4038 = vrot.lane.b32.xlu0 %v4022, 126
    %v4039 = vpop.permute.xlu0 %4038
    %4040 = vrot.lane.b32.xlu0 %v4024, 126
    %v4041 = vpop.permute.xlu0 %4040
    %4042 = vrot.lane.b32.xlu0 %v4026, 126
    %v4043 = vpop.permute.xlu0 %4042
    %4044 = vrot.lane.b32.xlu0 %v4029, 126
    %v4045 = vpop.permute.xlu0 %4044
    %4046 = vrot.lane.b32.xlu0 %v4031, 126
    %v4047 = vpop.permute.xlu0 %4046
    %4048 = vrot.lane.b32.xlu0 %v4033, 126
    %v4049 = vpop.permute.xlu0 %4048
    %4050 = vrot.lane.b32.xlu0 %v4035, 126
    %v4051 = vpop.permute.xlu0 %4050
    %v4060 = vadd.f32 %v3988, %v4037
    %v4061 = vadd.f32 %v3989, %v4039
    %v4062 = vadd.f32 %v3990, %v4041
    %v4063 = vadd.f32 %v3991, %v4043
    %v4064 = vadd.f32 %v3992, %v4045
    %v4065 = vadd.f32 %v3993, %v4047
    %v4066 = vadd.f32 %v3994, %v4049
    %v4067 = vadd.f32 %v3995, %v4051
    %s4068 = sld [smem:[#allocation8 + $0x2d]]
    %v4069 = vstv %s4068
    %v4070 = vmul.f32 %v4069, %v1322
    %v4071 = vmul.f32 %v4069, %v1323
    %v4072 = vmul.f32 %v4069, %v1324
    %v4073 = vmul.f32 %v4069, %v1325
    %v4074 = vmul.f32 %v4069, %v1342
    %v4075 = vmul.f32 %v4069, %v1343
    %v4076 = vmul.f32 %v4069, %v1344
    %v4077 = vmul.f32 %v4069, %v1345
    %v4078 = vadd.f32 %v4060, %v4070
    %v4079 = vadd.f32 %v4061, %v4071
    %v4080 = vadd.f32 %v4062, %v4072
    %v4081 = vadd.f32 %v4063, %v4073
    %v4082 = vadd.f32 %v4064, %v4074
    %v4083 = vadd.f32 %v4065, %v4075
    %v4084 = vadd.f32 %v4066, %v4076
    %v4085 = vadd.f32 %v4067, %v4077
    %s4086 = sld [smem:[#allocation8 + $0x2e]]
    %v4087 = vstv %s4086
    %v4088 = vmul.f32 %v4087, %v1322
    %v4089 = vmul.f32 %v4087, %v1323
    %v4090 = vmul.f32 %v4087, %v1324
    %v4091 = vmul.f32 %v4087, %v1325
    %v4092 = vmul.f32 %v4087, %v1342
    %v4093 = vmul.f32 %v4087, %v1343
    %v4094 = vmul.f32 %v4087, %v1344
    %v4095 = vmul.f32 %v4087, %v1345
    %4104 = vrot.lane.b32.xlu0 %v4088, 127
    %v4105 = vpop.permute.xlu0 %4104
    %4106 = vrot.lane.b32.xlu0 %v4089, 127
    %v4107 = vpop.permute.xlu0 %4106
    %4108 = vrot.lane.b32.xlu0 %v4090, 127
    %v4109 = vpop.permute.xlu0 %4108
    %4110 = vrot.lane.b32.xlu0 %v4091, 127
    %v4111 = vpop.permute.xlu0 %4110
    %4112 = vrot.lane.b32.xlu0 %v4092, 127
    %v4113 = vpop.permute.xlu0 %4112
    %4114 = vrot.lane.b32.xlu0 %v4093, 127
    %v4115 = vpop.permute.xlu0 %4114
    %4116 = vrot.lane.b32.xlu0 %v4094, 127
    %v4117 = vpop.permute.xlu0 %4116
    %4118 = vrot.lane.b32.xlu0 %v4095, 127
    %v4119 = vpop.permute.xlu0 %4118
    %v4128 = vadd.f32 %v4078, %v4105
    %v4129 = vadd.f32 %v4079, %v4107
    %v4130 = vadd.f32 %v4080, %v4109
    %v4131 = vadd.f32 %v4081, %v4111
    %v4132 = vadd.f32 %v4082, %v4113
    %v4133 = vadd.f32 %v4083, %v4115
    %v4134 = vadd.f32 %v4084, %v4117
    %v4135 = vadd.f32 %v4085, %v4119
    %s4136 = sld [smem:[#allocation8 + $0x2f]]
    %v4137 = vstv %s4136
    %v4138 = vmul.f32 %v4137, %v1322
    %v4139 = vmul.f32 %v4137, %v1323
    %v4140 = vmul.f32 %v4137, %v1324
    %v4141 = vmul.f32 %v4137, %v1325
    %v4142 = vmul.f32 %v4137, %v1342
    %v4143 = vmul.f32 %v4137, %v1343
    %v4144 = vmul.f32 %v4137, %v1344
    %v4145 = vmul.f32 %v4137, %v1345
    %4154 = vrot.lane.b32.xlu0 %v4138, 126
    %v4155 = vpop.permute.xlu0 %4154
    %4156 = vrot.lane.b32.xlu0 %v4139, 126
    %v4157 = vpop.permute.xlu0 %4156
    %4158 = vrot.lane.b32.xlu0 %v4140, 126
    %v4159 = vpop.permute.xlu0 %4158
    %4160 = vrot.lane.b32.xlu0 %v4141, 126
    %v4161 = vpop.permute.xlu0 %4160
    %4162 = vrot.lane.b32.xlu0 %v4142, 126
    %v4163 = vpop.permute.xlu0 %4162
    %4164 = vrot.lane.b32.xlu0 %v4143, 126
    %v4165 = vpop.permute.xlu0 %4164
    %4166 = vrot.lane.b32.xlu0 %v4144, 126
    %v4167 = vpop.permute.xlu0 %4166
    %4168 = vrot.lane.b32.xlu0 %v4145, 126
    %v4169 = vpop.permute.xlu0 %4168
    %v4178 = vadd.f32 %v4128, %v4155
    %v4179 = vadd.f32 %v4129, %v4157
    %v4180 = vadd.f32 %v4130, %v4159
    %v4181 = vadd.f32 %v4131, %v4161
    %v4182 = vadd.f32 %v4132, %v4163
    %v4183 = vadd.f32 %v4133, %v4165
    %v4184 = vadd.f32 %v4134, %v4167
    %v4185 = vadd.f32 %v4135, %v4169
    %s4186 = sld [smem:[#allocation8 + $0x30]]
    %v4187 = vstv %s4186
    %v4188 = vmul.f32 %v4187, %v1322
    %v4189 = vmul.f32 %v4187, %v1323
    %v4190 = vmul.f32 %v4187, %v1324
    %v4191 = vmul.f32 %v4187, %v1325
    %v4192 = vmul.f32 %v4187, %v1326
    %v4193 = vmul.f32 %v4187, %v1342
    %v4194 = vmul.f32 %v4187, %v1343
    %v4195 = vmul.f32 %v4187, %v1344
    %v4196 = vmul.f32 %v4187, %v1345
    %v4197 = vmul.f32 %v4187, %v1346
    %v4208 = vrot.slane %v4188, 1
    %v4209 = vrot.slane %v4189, 1
    %v4210 = vsel %vm1497, %v4208, %v4209
    %v4211 = vrot.slane %v4190, 1
    %v4212 = vsel %vm1497, %v4209, %v4211
    %v4213 = vrot.slane %v4191, 1
    %v4214 = vsel %vm1497, %v4211, %v4213
    %v4215 = vrot.slane %v4192, 1
    %v4216 = vsel %vm1497, %v4213, %v4215
    %v4217 = vrot.slane %v4193, 1
    %v4218 = vrot.slane %v4194, 1
    %v4219 = vsel %vm1497, %v4217, %v4218
    %v4220 = vrot.slane %v4195, 1
    %v4221 = vsel %vm1497, %v4218, %v4220
    %v4222 = vrot.slane %v4196, 1
    %v4223 = vsel %vm1497, %v4220, %v4222
    %v4224 = vrot.slane %v4197, 1
    %v4225 = vsel %vm1497, %v4222, %v4224
    %v4234 = vadd.f32 %v4178, %v4210
    %v4235 = vadd.f32 %v4179, %v4212
    %v4236 = vadd.f32 %v4180, %v4214
    %v4237 = vadd.f32 %v4181, %v4216
    %v4238 = vadd.f32 %v4182, %v4219
    %v4239 = vadd.f32 %v4183, %v4221
    %v4240 = vadd.f32 %v4184, %v4223
    %v4241 = vadd.f32 %v4185, %v4225
    %s4242 = sld [smem:[#allocation8 + $0x31]]
    %v4243 = vstv %s4242
    %v4244 = vmul.f32 %v4243, %v1322
    %v4245 = vmul.f32 %v4243, %v1323
    %v4246 = vmul.f32 %v4243, %v1324
    %v4247 = vmul.f32 %v4243, %v1325
    %v4248 = vmul.f32 %v4243, %v1326
    %v4249 = vmul.f32 %v4243, %v1342
    %v4250 = vmul.f32 %v4243, %v1343
    %v4251 = vmul.f32 %v4243, %v1344
    %v4252 = vmul.f32 %v4243, %v1345
    %v4253 = vmul.f32 %v4243, %v1346
    %v4264 = vrot.slane %v4244, 1
    %v4265 = vrot.slane %v4245, 1
    %v4266 = vsel %vm1497, %v4264, %v4265
    %v4267 = vrot.slane %v4246, 1
    %v4268 = vsel %vm1497, %v4265, %v4267
    %v4269 = vrot.slane %v4247, 1
    %v4270 = vsel %vm1497, %v4267, %v4269
    %v4271 = vrot.slane %v4248, 1
    %v4272 = vsel %vm1497, %v4269, %v4271
    %v4273 = vrot.slane %v4249, 1
    %v4274 = vrot.slane %v4250, 1
    %v4275 = vsel %vm1497, %v4273, %v4274
    %v4276 = vrot.slane %v4251, 1
    %v4277 = vsel %vm1497, %v4274, %v4276
    %v4278 = vrot.slane %v4252, 1
    %v4279 = vsel %vm1497, %v4276, %v4278
    %v4280 = vrot.slane %v4253, 1
    %v4281 = vsel %vm1497, %v4278, %v4280
    %4282 = vrot.lane.b32.xlu0 %v4266, 127
    %v4283 = vpop.permute.xlu0 %4282
    %4284 = vrot.lane.b32.xlu0 %v4268, 127
    %v4285 = vpop.permute.xlu0 %4284
    %4286 = vrot.lane.b32.xlu0 %v4270, 127
    %v4287 = vpop.permute.xlu0 %4286
    %4288 = vrot.lane.b32.xlu0 %v4272, 127
    %v4289 = vpop.permute.xlu0 %4288
    %4290 = vrot.lane.b32.xlu0 %v4275, 127
    %v4291 = vpop.permute.xlu0 %4290
    %4292 = vrot.lane.b32.xlu0 %v4277, 127
    %v4293 = vpop.permute.xlu0 %4292
    %4294 = vrot.lane.b32.xlu0 %v4279, 127
    %v4295 = vpop.permute.xlu0 %4294
    %4296 = vrot.lane.b32.xlu0 %v4281, 127
    %v4297 = vpop.permute.xlu0 %4296
    %v4306 = vadd.f32 %v4234, %v4283
    %v4307 = vadd.f32 %v4235, %v4285
    %v4308 = vadd.f32 %v4236, %v4287
    %v4309 = vadd.f32 %v4237, %v4289
    %v4310 = vadd.f32 %v4238, %v4291
    %v4311 = vadd.f32 %v4239, %v4293
    %v4312 = vadd.f32 %v4240, %v4295
    %v4313 = vadd.f32 %v4241, %v4297
    %s4314 = sld [smem:[#allocation8 + $0x32]]
    %v4315 = vstv %s4314
    %v4316 = vmul.f32 %v4315, %v1322
    %v4317 = vmul.f32 %v4315, %v1323
    %v4318 = vmul.f32 %v4315, %v1324
    %v4319 = vmul.f32 %v4315, %v1325
    %v4320 = vmul.f32 %v4315, %v1326
    %v4321 = vmul.f32 %v4315, %v1342
    %v4322 = vmul.f32 %v4315, %v1343
    %v4323 = vmul.f32 %v4315, %v1344
    %v4324 = vmul.f32 %v4315, %v1345
    %v4325 = vmul.f32 %v4315, %v1346
    %v4336 = vrot.slane %v4316, 1
    %v4337 = vrot.slane %v4317, 1
    %v4338 = vsel %vm1497, %v4336, %v4337
    %v4339 = vrot.slane %v4318, 1
    %v4340 = vsel %vm1497, %v4337, %v4339
    %v4341 = vrot.slane %v4319, 1
    %v4342 = vsel %vm1497, %v4339, %v4341
    %v4343 = vrot.slane %v4320, 1
    %v4344 = vsel %vm1497, %v4341, %v4343
    %v4345 = vrot.slane %v4321, 1
    %v4346 = vrot.slane %v4322, 1
    %v4347 = vsel %vm1497, %v4345, %v4346
    %v4348 = vrot.slane %v4323, 1
    %v4349 = vsel %vm1497, %v4346, %v4348
    %v4350 = vrot.slane %v4324, 1
    %v4351 = vsel %vm1497, %v4348, %v4350
    %v4352 = vrot.slane %v4325, 1
    %v4353 = vsel %vm1497, %v4350, %v4352
    %4354 = vrot.lane.b32.xlu0 %v4338, 126
    %v4355 = vpop.permute.xlu0 %4354
    %4356 = vrot.lane.b32.xlu0 %v4340, 126
    %v4357 = vpop.permute.xlu0 %4356
    %4358 = vrot.lane.b32.xlu0 %v4342, 126
    %v4359 = vpop.permute.xlu0 %4358
    %4360 = vrot.lane.b32.xlu0 %v4344, 126
    %v4361 = vpop.permute.xlu0 %4360
    %4362 = vrot.lane.b32.xlu0 %v4347, 126
    %v4363 = vpop.permute.xlu0 %4362
    %4364 = vrot.lane.b32.xlu0 %v4349, 126
    %v4365 = vpop.permute.xlu0 %4364
    %4366 = vrot.lane.b32.xlu0 %v4351, 126
    %v4367 = vpop.permute.xlu0 %4366
    %4368 = vrot.lane.b32.xlu0 %v4353, 126
    %v4369 = vpop.permute.xlu0 %4368
    %v4378 = vadd.f32 %v4306, %v4355
    %v4379 = vadd.f32 %v4307, %v4357
    %v4380 = vadd.f32 %v4308, %v4359
    %v4381 = vadd.f32 %v4309, %v4361
    %v4382 = vadd.f32 %v4310, %v4363
    %v4383 = vadd.f32 %v4311, %v4365
    %v4384 = vadd.f32 %v4312, %v4367
    %v4385 = vadd.f32 %v4313, %v4369
    %s4386 = sld [smem:[#allocation8 + $0x33]]
    %v4387 = vstv %s4386
    %v4388 = vmul.f32 %v4387, %v1322
    %v4389 = vmul.f32 %v4387, %v1323
    %v4390 = vmul.f32 %v4387, %v1324
    %v4391 = vmul.f32 %v4387, %v1325
    %v4392 = vmul.f32 %v4387, %v1326
    %v4393 = vmul.f32 %v4387, %v1342
    %v4394 = vmul.f32 %v4387, %v1343
    %v4395 = vmul.f32 %v4387, %v1344
    %v4396 = vmul.f32 %v4387, %v1345
    %v4397 = vmul.f32 %v4387, %v1346
    %v4408 = vrot.slane %v4388, 2
    %v4409 = vrot.slane %v4389, 2
    %v4410 = vsel %vm1698, %v4408, %v4409
    %v4411 = vrot.slane %v4390, 2
    %v4412 = vsel %vm1698, %v4409, %v4411
    %v4413 = vrot.slane %v4391, 2
    %v4414 = vsel %vm1698, %v4411, %v4413
    %v4415 = vrot.slane %v4392, 2
    %v4416 = vsel %vm1698, %v4413, %v4415
    %v4417 = vrot.slane %v4393, 2
    %v4418 = vrot.slane %v4394, 2
    %v4419 = vsel %vm1698, %v4417, %v4418
    %v4420 = vrot.slane %v4395, 2
    %v4421 = vsel %vm1698, %v4418, %v4420
    %v4422 = vrot.slane %v4396, 2
    %v4423 = vsel %vm1698, %v4420, %v4422
    %v4424 = vrot.slane %v4397, 2
    %v4425 = vsel %vm1698, %v4422, %v4424
    %v4434 = vadd.f32 %v4378, %v4410
    %v4435 = vadd.f32 %v4379, %v4412
    %v4436 = vadd.f32 %v4380, %v4414
    %v4437 = vadd.f32 %v4381, %v4416
    %v4438 = vadd.f32 %v4382, %v4419
    %v4439 = vadd.f32 %v4383, %v4421
    %v4440 = vadd.f32 %v4384, %v4423
    %v4441 = vadd.f32 %v4385, %v4425
    %s4442 = sld [smem:[#allocation8 + $0x34]]
    %v4443 = vstv %s4442
    %v4444 = vmul.f32 %v4443, %v1322
    %v4445 = vmul.f32 %v4443, %v1323
    %v4446 = vmul.f32 %v4443, %v1324
    %v4447 = vmul.f32 %v4443, %v1325
    %v4448 = vmul.f32 %v4443, %v1326
    %v4449 = vmul.f32 %v4443, %v1342
    %v4450 = vmul.f32 %v4443, %v1343
    %v4451 = vmul.f32 %v4443, %v1344
    %v4452 = vmul.f32 %v4443, %v1345
    %v4453 = vmul.f32 %v4443, %v1346
    %v4464 = vrot.slane %v4444, 2
    %v4465 = vrot.slane %v4445, 2
    %v4466 = vsel %vm1698, %v4464, %v4465
    %v4467 = vrot.slane %v4446, 2
    %v4468 = vsel %vm1698, %v4465, %v4467
    %v4469 = vrot.slane %v4447, 2
    %v4470 = vsel %vm1698, %v4467, %v4469
    %v4471 = vrot.slane %v4448, 2
    %v4472 = vsel %vm1698, %v4469, %v4471
    %v4473 = vrot.slane %v4449, 2
    %v4474 = vrot.slane %v4450, 2
    %v4475 = vsel %vm1698, %v4473, %v4474
    %v4476 = vrot.slane %v4451, 2
    %v4477 = vsel %vm1698, %v4474, %v4476
    %v4478 = vrot.slane %v4452, 2
    %v4479 = vsel %vm1698, %v4476, %v4478
    %v4480 = vrot.slane %v4453, 2
    %v4481 = vsel %vm1698, %v4478, %v4480
    %4482 = vrot.lane.b32.xlu0 %v4466, 127
    %v4483 = vpop.permute.xlu0 %4482
    %4484 = vrot.lane.b32.xlu0 %v4468, 127
    %v4485 = vpop.permute.xlu0 %4484
    %4486 = vrot.lane.b32.xlu0 %v4470, 127
    %v4487 = vpop.permute.xlu0 %4486
    %4488 = vrot.lane.b32.xlu0 %v4472, 127
    %v4489 = vpop.permute.xlu0 %4488
    %4490 = vrot.lane.b32.xlu0 %v4475, 127
    %v4491 = vpop.permute.xlu0 %4490
    %4492 = vrot.lane.b32.xlu0 %v4477, 127
    %v4493 = vpop.permute.xlu0 %4492
    %4494 = vrot.lane.b32.xlu0 %v4479, 127
    %v4495 = vpop.permute.xlu0 %4494
    %4496 = vrot.lane.b32.xlu0 %v4481, 127
    %v4497 = vpop.permute.xlu0 %4496
    %v4506 = vadd.f32 %v4434, %v4483
    %v4507 = vadd.f32 %v4435, %v4485
    %v4508 = vadd.f32 %v4436, %v4487
    %v4509 = vadd.f32 %v4437, %v4489
    %v4510 = vadd.f32 %v4438, %v4491
    %v4511 = vadd.f32 %v4439, %v4493
    %v4512 = vadd.f32 %v4440, %v4495
    %v4513 = vadd.f32 %v4441, %v4497
    %s4514 = sld [smem:[#allocation8 + $0x35]]
    %v4515 = vstv %s4514
    %v4516 = vmul.f32 %v4515, %v1322
    %v4517 = vmul.f32 %v4515, %v1323
    %v4518 = vmul.f32 %v4515, %v1324
    %v4519 = vmul.f32 %v4515, %v1325
    %v4520 = vmul.f32 %v4515, %v1326
    %v4521 = vmul.f32 %v4515, %v1342
    %v4522 = vmul.f32 %v4515, %v1343
    %v4523 = vmul.f32 %v4515, %v1344
    %v4524 = vmul.f32 %v4515, %v1345
    %v4525 = vmul.f32 %v4515, %v1346
    %v4536 = vrot.slane %v4516, 2
    %v4537 = vrot.slane %v4517, 2
    %v4538 = vsel %vm1698, %v4536, %v4537
    %v4539 = vrot.slane %v4518, 2
    %v4540 = vsel %vm1698, %v4537, %v4539
    %v4541 = vrot.slane %v4519, 2
    %v4542 = vsel %vm1698, %v4539, %v4541
    %v4543 = vrot.slane %v4520, 2
    %v4544 = vsel %vm1698, %v4541, %v4543
    %v4545 = vrot.slane %v4521, 2
    %v4546 = vrot.slane %v4522, 2
    %v4547 = vsel %vm1698, %v4545, %v4546
    %v4548 = vrot.slane %v4523, 2
    %v4549 = vsel %vm1698, %v4546, %v4548
    %v4550 = vrot.slane %v4524, 2
    %v4551 = vsel %vm1698, %v4548, %v4550
    %v4552 = vrot.slane %v4525, 2
    %v4553 = vsel %vm1698, %v4550, %v4552
    %4554 = vrot.lane.b32.xlu0 %v4538, 126
    %v4555 = vpop.permute.xlu0 %4554
    %4556 = vrot.lane.b32.xlu0 %v4540, 126
    %v4557 = vpop.permute.xlu0 %4556
    %4558 = vrot.lane.b32.xlu0 %v4542, 126
    %v4559 = vpop.permute.xlu0 %4558
    %4560 = vrot.lane.b32.xlu0 %v4544, 126
    %v4561 = vpop.permute.xlu0 %4560
    %4562 = vrot.lane.b32.xlu0 %v4547, 126
    %v4563 = vpop.permute.xlu0 %4562
    %4564 = vrot.lane.b32.xlu0 %v4549, 126
    %v4565 = vpop.permute.xlu0 %4564
    %4566 = vrot.lane.b32.xlu0 %v4551, 126
    %v4567 = vpop.permute.xlu0 %4566
    %4568 = vrot.lane.b32.xlu0 %v4553, 126
    %v4569 = vpop.permute.xlu0 %4568
    %v4578 = vadd.f32 %v4506, %v4555
    %v4579 = vadd.f32 %v4507, %v4557
    %v4580 = vadd.f32 %v4508, %v4559
    %v4581 = vadd.f32 %v4509, %v4561
    %v4582 = vadd.f32 %v4510, %v4563
    %v4583 = vadd.f32 %v4511, %v4565
    %v4584 = vadd.f32 %v4512, %v4567
    %v4585 = vadd.f32 %v4513, %v4569
    %s4586 = sld [smem:[#allocation8 + $0x36]]
    %v4587 = vstv %s4586
    %v4588 = vmul.f32 %v4587, %v1327
    %v4589 = vmul.f32 %v4587, %v1328
    %v4590 = vmul.f32 %v4587, %v1329
    %v4591 = vmul.f32 %v4587, %v1330
    %v4592 = vmul.f32 %v4587, %v1347
    %v4593 = vmul.f32 %v4587, %v1348
    %v4594 = vmul.f32 %v4587, %v1349
    %v4595 = vmul.f32 %v4587, %v1350
    %v4596 = vadd.f32 %v4578, %v4588
    %v4597 = vadd.f32 %v4579, %v4589
    %v4598 = vadd.f32 %v4580, %v4590
    %v4599 = vadd.f32 %v4581, %v4591
    %v4600 = vadd.f32 %v4582, %v4592
    %v4601 = vadd.f32 %v4583, %v4593
    %v4602 = vadd.f32 %v4584, %v4594
    %v4603 = vadd.f32 %v4585, %v4595
    %s4604 = sld [smem:[#allocation8 + $0x37]]
    %v4605 = vstv %s4604
    %v4606 = vmul.f32 %v4605, %v1327
    %v4607 = vmul.f32 %v4605, %v1328
    %v4608 = vmul.f32 %v4605, %v1329
    %v4609 = vmul.f32 %v4605, %v1330
    %v4610 = vmul.f32 %v4605, %v1347
    %v4611 = vmul.f32 %v4605, %v1348
    %v4612 = vmul.f32 %v4605, %v1349
    %v4613 = vmul.f32 %v4605, %v1350
    %4622 = vrot.lane.b32.xlu0 %v4606, 127
    %v4623 = vpop.permute.xlu0 %4622
    %4624 = vrot.lane.b32.xlu0 %v4607, 127
    %v4625 = vpop.permute.xlu0 %4624
    %4626 = vrot.lane.b32.xlu0 %v4608, 127
    %v4627 = vpop.permute.xlu0 %4626
    %4628 = vrot.lane.b32.xlu0 %v4609, 127
    %v4629 = vpop.permute.xlu0 %4628
    %4630 = vrot.lane.b32.xlu0 %v4610, 127
    %v4631 = vpop.permute.xlu0 %4630
    %4632 = vrot.lane.b32.xlu0 %v4611, 127
    %v4633 = vpop.permute.xlu0 %4632
    %4634 = vrot.lane.b32.xlu0 %v4612, 127
    %v4635 = vpop.permute.xlu0 %4634
    %4636 = vrot.lane.b32.xlu0 %v4613, 127
    %v4637 = vpop.permute.xlu0 %4636
    %v4646 = vadd.f32 %v4596, %v4623
    %v4647 = vadd.f32 %v4597, %v4625
    %v4648 = vadd.f32 %v4598, %v4627
    %v4649 = vadd.f32 %v4599, %v4629
    %v4650 = vadd.f32 %v4600, %v4631
    %v4651 = vadd.f32 %v4601, %v4633
    %v4652 = vadd.f32 %v4602, %v4635
    %v4653 = vadd.f32 %v4603, %v4637
    %s4654 = sld [smem:[#allocation8 + $0x38]]
    %v4655 = vstv %s4654
    %v4656 = vmul.f32 %v4655, %v1327
    %v4657 = vmul.f32 %v4655, %v1328
    %v4658 = vmul.f32 %v4655, %v1329
    %v4659 = vmul.f32 %v4655, %v1330
    %v4660 = vmul.f32 %v4655, %v1347
    %v4661 = vmul.f32 %v4655, %v1348
    %v4662 = vmul.f32 %v4655, %v1349
    %v4663 = vmul.f32 %v4655, %v1350
    %4672 = vrot.lane.b32.xlu0 %v4656, 126
    %v4673 = vpop.permute.xlu0 %4672
    %4674 = vrot.lane.b32.xlu0 %v4657, 126
    %v4675 = vpop.permute.xlu0 %4674
    %4676 = vrot.lane.b32.xlu0 %v4658, 126
    %v4677 = vpop.permute.xlu0 %4676
    %4678 = vrot.lane.b32.xlu0 %v4659, 126
    %v4679 = vpop.permute.xlu0 %4678
    %4680 = vrot.lane.b32.xlu0 %v4660, 126
    %v4681 = vpop.permute.xlu0 %4680
    %4682 = vrot.lane.b32.xlu0 %v4661, 126
    %v4683 = vpop.permute.xlu0 %4682
    %4684 = vrot.lane.b32.xlu0 %v4662, 126
    %v4685 = vpop.permute.xlu0 %4684
    %4686 = vrot.lane.b32.xlu0 %v4663, 126
    %v4687 = vpop.permute.xlu0 %4686
    %v4696 = vadd.f32 %v4646, %v4673
    %v4697 = vadd.f32 %v4647, %v4675
    %v4698 = vadd.f32 %v4648, %v4677
    %v4699 = vadd.f32 %v4649, %v4679
    %v4700 = vadd.f32 %v4650, %v4681
    %v4701 = vadd.f32 %v4651, %v4683
    %v4702 = vadd.f32 %v4652, %v4685
    %v4703 = vadd.f32 %v4653, %v4687
    %s4704 = sld [smem:[#allocation8 + $0x39]]
    %v4705 = vstv %s4704
    %v4706 = vmul.f32 %v4705, %v1327
    %v4707 = vmul.f32 %v4705, %v1328
    %v4708 = vmul.f32 %v4705, %v1329
    %v4709 = vmul.f32 %v4705, %v1330
    %v4710 = vmul.f32 %v4705, %v1331
    %v4711 = vmul.f32 %v4705, %v1347
    %v4712 = vmul.f32 %v4705, %v1348
    %v4713 = vmul.f32 %v4705, %v1349
    %v4714 = vmul.f32 %v4705, %v1350
    %v4715 = vmul.f32 %v4705, %v1351
    %v4726 = vrot.slane %v4706, 1
    %v4727 = vrot.slane %v4707, 1
    %v4728 = vsel %vm1497, %v4726, %v4727
    %v4729 = vrot.slane %v4708, 1
    %v4730 = vsel %vm1497, %v4727, %v4729
    %v4731 = vrot.slane %v4709, 1
    %v4732 = vsel %vm1497, %v4729, %v4731
    %v4733 = vrot.slane %v4710, 1
    %v4734 = vsel %vm1497, %v4731, %v4733
    %v4735 = vrot.slane %v4711, 1
    %v4736 = vrot.slane %v4712, 1
    %v4737 = vsel %vm1497, %v4735, %v4736
    %v4738 = vrot.slane %v4713, 1
    %v4739 = vsel %vm1497, %v4736, %v4738
    %v4740 = vrot.slane %v4714, 1
    %v4741 = vsel %vm1497, %v4738, %v4740
    %v4742 = vrot.slane %v4715, 1
    %v4743 = vsel %vm1497, %v4740, %v4742
    %v4752 = vadd.f32 %v4696, %v4728
    %v4753 = vadd.f32 %v4697, %v4730
    %v4754 = vadd.f32 %v4698, %v4732
    %v4755 = vadd.f32 %v4699, %v4734
    %v4756 = vadd.f32 %v4700, %v4737
    %v4757 = vadd.f32 %v4701, %v4739
    %v4758 = vadd.f32 %v4702, %v4741
    %v4759 = vadd.f32 %v4703, %v4743
    %s4760 = sld [smem:[#allocation8 + $0x3a]]
    %v4761 = vstv %s4760
    %v4762 = vmul.f32 %v4761, %v1327
    %v4763 = vmul.f32 %v4761, %v1328
    %v4764 = vmul.f32 %v4761, %v1329
    %v4765 = vmul.f32 %v4761, %v1330
    %v4766 = vmul.f32 %v4761, %v1331
    %v4767 = vmul.f32 %v4761, %v1347
    %v4768 = vmul.f32 %v4761, %v1348
    %v4769 = vmul.f32 %v4761, %v1349
    %v4770 = vmul.f32 %v4761, %v1350
    %v4771 = vmul.f32 %v4761, %v1351
    %v4782 = vrot.slane %v4762, 1
    %v4783 = vrot.slane %v4763, 1
    %v4784 = vsel %vm1497, %v4782, %v4783
    %v4785 = vrot.slane %v4764, 1
    %v4786 = vsel %vm1497, %v4783, %v4785
    %v4787 = vrot.slane %v4765, 1
    %v4788 = vsel %vm1497, %v4785, %v4787
    %v4789 = vrot.slane %v4766, 1
    %v4790 = vsel %vm1497, %v4787, %v4789
    %v4791 = vrot.slane %v4767, 1
    %v4792 = vrot.slane %v4768, 1
    %v4793 = vsel %vm1497, %v4791, %v4792
    %v4794 = vrot.slane %v4769, 1
    %v4795 = vsel %vm1497, %v4792, %v4794
    %v4796 = vrot.slane %v4770, 1
    %v4797 = vsel %vm1497, %v4794, %v4796
    %v4798 = vrot.slane %v4771, 1
    %v4799 = vsel %vm1497, %v4796, %v4798
    %4800 = vrot.lane.b32.xlu0 %v4784, 127
    %v4801 = vpop.permute.xlu0 %4800
    %4802 = vrot.lane.b32.xlu0 %v4786, 127
    %v4803 = vpop.permute.xlu0 %4802
    %4804 = vrot.lane.b32.xlu0 %v4788, 127
    %v4805 = vpop.permute.xlu0 %4804
    %4806 = vrot.lane.b32.xlu0 %v4790, 127
    %v4807 = vpop.permute.xlu0 %4806
    %4808 = vrot.lane.b32.xlu0 %v4793, 127
    %v4809 = vpop.permute.xlu0 %4808
    %4810 = vrot.lane.b32.xlu0 %v4795, 127
    %v4811 = vpop.permute.xlu0 %4810
    %4812 = vrot.lane.b32.xlu0 %v4797, 127
    %v4813 = vpop.permute.xlu0 %4812
    %4814 = vrot.lane.b32.xlu0 %v4799, 127
    %v4815 = vpop.permute.xlu0 %4814
    %v4824 = vadd.f32 %v4752, %v4801
    %v4825 = vadd.f32 %v4753, %v4803
    %v4826 = vadd.f32 %v4754, %v4805
    %v4827 = vadd.f32 %v4755, %v4807
    %v4828 = vadd.f32 %v4756, %v4809
    %v4829 = vadd.f32 %v4757, %v4811
    %v4830 = vadd.f32 %v4758, %v4813
    %v4831 = vadd.f32 %v4759, %v4815
    %s4832 = sld [smem:[#allocation8 + $0x3b]]
    %v4833 = vstv %s4832
    %v4834 = vmul.f32 %v4833, %v1327
    %v4835 = vmul.f32 %v4833, %v1328
    %v4836 = vmul.f32 %v4833, %v1329
    %v4837 = vmul.f32 %v4833, %v1330
    %v4838 = vmul.f32 %v4833, %v1331
    %v4839 = vmul.f32 %v4833, %v1347
    %v4840 = vmul.f32 %v4833, %v1348
    %v4841 = vmul.f32 %v4833, %v1349
    %v4842 = vmul.f32 %v4833, %v1350
    %v4843 = vmul.f32 %v4833, %v1351
    %v4854 = vrot.slane %v4834, 1
    %v4855 = vrot.slane %v4835, 1
    %v4856 = vsel %vm1497, %v4854, %v4855
    %v4857 = vrot.slane %v4836, 1
    %v4858 = vsel %vm1497, %v4855, %v4857
    %v4859 = vrot.slane %v4837, 1
    %v4860 = vsel %vm1497, %v4857, %v4859
    %v4861 = vrot.slane %v4838, 1
    %v4862 = vsel %vm1497, %v4859, %v4861
    %v4863 = vrot.slane %v4839, 1
    %v4864 = vrot.slane %v4840, 1
    %v4865 = vsel %vm1497, %v4863, %v4864
    %v4866 = vrot.slane %v4841, 1
    %v4867 = vsel %vm1497, %v4864, %v4866
    %v4868 = vrot.slane %v4842, 1
    %v4869 = vsel %vm1497, %v4866, %v4868
    %v4870 = vrot.slane %v4843, 1
    %v4871 = vsel %vm1497, %v4868, %v4870
    %4872 = vrot.lane.b32.xlu0 %v4856, 126
    %v4873 = vpop.permute.xlu0 %4872
    %4874 = vrot.lane.b32.xlu0 %v4858, 126
    %v4875 = vpop.permute.xlu0 %4874
    %4876 = vrot.lane.b32.xlu0 %v4860, 126
    %v4877 = vpop.permute.xlu0 %4876
    %4878 = vrot.lane.b32.xlu0 %v4862, 126
    %v4879 = vpop.permute.xlu0 %4878
    %4880 = vrot.lane.b32.xlu0 %v4865, 126
    %v4881 = vpop.permute.xlu0 %4880
    %4882 = vrot.lane.b32.xlu0 %v4867, 126
    %v4883 = vpop.permute.xlu0 %4882
    %4884 = vrot.lane.b32.xlu0 %v4869, 126
    %v4885 = vpop.permute.xlu0 %4884
    %4886 = vrot.lane.b32.xlu0 %v4871, 126
    %v4887 = vpop.permute.xlu0 %4886
    %v4896 = vadd.f32 %v4824, %v4873
    %v4897 = vadd.f32 %v4825, %v4875
    %v4898 = vadd.f32 %v4826, %v4877
    %v4899 = vadd.f32 %v4827, %v4879
    %v4900 = vadd.f32 %v4828, %v4881
    %v4901 = vadd.f32 %v4829, %v4883
    %v4902 = vadd.f32 %v4830, %v4885
    %v4903 = vadd.f32 %v4831, %v4887
    %s4904 = sld [smem:[#allocation8 + $0x3c]]
    %v4905 = vstv %s4904
    %v4906 = vmul.f32 %v4905, %v1327
    %v4907 = vmul.f32 %v4905, %v1328
    %v4908 = vmul.f32 %v4905, %v1329
    %v4909 = vmul.f32 %v4905, %v1330
    %v4910 = vmul.f32 %v4905, %v1331
    %v4911 = vmul.f32 %v4905, %v1347
    %v4912 = vmul.f32 %v4905, %v1348
    %v4913 = vmul.f32 %v4905, %v1349
    %v4914 = vmul.f32 %v4905, %v1350
    %v4915 = vmul.f32 %v4905, %v1351
    %v4926 = vrot.slane %v4906, 2
    %v4927 = vrot.slane %v4907, 2
    %v4928 = vsel %vm1698, %v4926, %v4927
    %v4929 = vrot.slane %v4908, 2
    %v4930 = vsel %vm1698, %v4927, %v4929
    %v4931 = vrot.slane %v4909, 2
    %v4932 = vsel %vm1698, %v4929, %v4931
    %v4933 = vrot.slane %v4910, 2
    %v4934 = vsel %vm1698, %v4931, %v4933
    %v4935 = vrot.slane %v4911, 2
    %v4936 = vrot.slane %v4912, 2
    %v4937 = vsel %vm1698, %v4935, %v4936
    %v4938 = vrot.slane %v4913, 2
    %v4939 = vsel %vm1698, %v4936, %v4938
    %v4940 = vrot.slane %v4914, 2
    %v4941 = vsel %vm1698, %v4938, %v4940
    %v4942 = vrot.slane %v4915, 2
    %v4943 = vsel %vm1698, %v4940, %v4942
    %v4952 = vadd.f32 %v4896, %v4928
    %v4953 = vadd.f32 %v4897, %v4930
    %v4954 = vadd.f32 %v4898, %v4932
    %v4955 = vadd.f32 %v4899, %v4934
    %v4956 = vadd.f32 %v4900, %v4937
    %v4957 = vadd.f32 %v4901, %v4939
    %v4958 = vadd.f32 %v4902, %v4941
    %v4959 = vadd.f32 %v4903, %v4943
    %s4960 = sld [smem:[#allocation8 + $0x3d]]
    %v4961 = vstv %s4960
    %v4962 = vmul.f32 %v4961, %v1327
    %v4963 = vmul.f32 %v4961, %v1328
    %v4964 = vmul.f32 %v4961, %v1329
    %v4965 = vmul.f32 %v4961, %v1330
    %v4966 = vmul.f32 %v4961, %v1331
    %v4967 = vmul.f32 %v4961, %v1347
    %v4968 = vmul.f32 %v4961, %v1348
    %v4969 = vmul.f32 %v4961, %v1349
    %v4970 = vmul.f32 %v4961, %v1350
    %v4971 = vmul.f32 %v4961, %v1351
    %v4982 = vrot.slane %v4962, 2
    %v4983 = vrot.slane %v4963, 2
    %v4984 = vsel %vm1698, %v4982, %v4983
    %v4985 = vrot.slane %v4964, 2
    %v4986 = vsel %vm1698, %v4983, %v4985
    %v4987 = vrot.slane %v4965, 2
    %v4988 = vsel %vm1698, %v4985, %v4987
    %v4989 = vrot.slane %v4966, 2
    %v4990 = vsel %vm1698, %v4987, %v4989
    %v4991 = vrot.slane %v4967, 2
    %v4992 = vrot.slane %v4968, 2
    %v4993 = vsel %vm1698, %v4991, %v4992
    %v4994 = vrot.slane %v4969, 2
    %v4995 = vsel %vm1698, %v4992, %v4994
    %v4996 = vrot.slane %v4970, 2
    %v4997 = vsel %vm1698, %v4994, %v4996
    %v4998 = vrot.slane %v4971, 2
    %v4999 = vsel %vm1698, %v4996, %v4998
    %5000 = vrot.lane.b32.xlu0 %v4984, 127
    %v5001 = vpop.permute.xlu0 %5000
    %5002 = vrot.lane.b32.xlu0 %v4986, 127
    %v5003 = vpop.permute.xlu0 %5002
    %5004 = vrot.lane.b32.xlu0 %v4988, 127
    %v5005 = vpop.permute.xlu0 %5004
    %5006 = vrot.lane.b32.xlu0 %v4990, 127
    %v5007 = vpop.permute.xlu0 %5006
    %5008 = vrot.lane.b32.xlu0 %v4993, 127
    %v5009 = vpop.permute.xlu0 %5008
    %5010 = vrot.lane.b32.xlu0 %v4995, 127
    %v5011 = vpop.permute.xlu0 %5010
    %5012 = vrot.lane.b32.xlu0 %v4997, 127
    %v5013 = vpop.permute.xlu0 %5012
    %5014 = vrot.lane.b32.xlu0 %v4999, 127
    %v5015 = vpop.permute.xlu0 %5014
    %v5024 = vadd.f32 %v4952, %v5001
    %v5025 = vadd.f32 %v4953, %v5003
    %v5026 = vadd.f32 %v4954, %v5005
    %v5027 = vadd.f32 %v4955, %v5007
    %v5028 = vadd.f32 %v4956, %v5009
    %v5029 = vadd.f32 %v4957, %v5011
    %v5030 = vadd.f32 %v4958, %v5013
    %v5031 = vadd.f32 %v4959, %v5015
    %s5032 = sld [smem:[#allocation8 + $0x3e]]
    %v5033 = vstv %s5032
    %v5034 = vmul.f32 %v5033, %v1327
    %v5035 = vmul.f32 %v5033, %v1328
    %v5036 = vmul.f32 %v5033, %v1329
    %v5037 = vmul.f32 %v5033, %v1330
    %v5038 = vmul.f32 %v5033, %v1331
    %v5039 = vmul.f32 %v5033, %v1347
    %v5040 = vmul.f32 %v5033, %v1348
    %v5041 = vmul.f32 %v5033, %v1349
    %v5042 = vmul.f32 %v5033, %v1350
    %v5043 = vmul.f32 %v5033, %v1351
    %v5054 = vrot.slane %v5034, 2
    %v5055 = vrot.slane %v5035, 2
    %v5056 = vsel %vm1698, %v5054, %v5055
    %v5057 = vrot.slane %v5036, 2
    %v5058 = vsel %vm1698, %v5055, %v5057
    %v5059 = vrot.slane %v5037, 2
    %v5060 = vsel %vm1698, %v5057, %v5059
    %v5061 = vrot.slane %v5038, 2
    %v5062 = vsel %vm1698, %v5059, %v5061
    %v5063 = vrot.slane %v5039, 2
    %v5064 = vrot.slane %v5040, 2
    %v5065 = vsel %vm1698, %v5063, %v5064
    %v5066 = vrot.slane %v5041, 2
    %v5067 = vsel %vm1698, %v5064, %v5066
    %v5068 = vrot.slane %v5042, 2
    %v5069 = vsel %vm1698, %v5066, %v5068
    %v5070 = vrot.slane %v5043, 2
    %v5071 = vsel %vm1698, %v5068, %v5070
    %5072 = vrot.lane.b32.xlu0 %v5056, 126
    %v5073 = vpop.permute.xlu0 %5072
    %5074 = vrot.lane.b32.xlu0 %v5058, 126
    %v5075 = vpop.permute.xlu0 %5074
    %5076 = vrot.lane.b32.xlu0 %v5060, 126
    %v5077 = vpop.permute.xlu0 %5076
    %5078 = vrot.lane.b32.xlu0 %v5062, 126
    %v5079 = vpop.permute.xlu0 %5078
    %5080 = vrot.lane.b32.xlu0 %v5065, 126
    %v5081 = vpop.permute.xlu0 %5080
    %5082 = vrot.lane.b32.xlu0 %v5067, 126
    %v5083 = vpop.permute.xlu0 %5082
    %5084 = vrot.lane.b32.xlu0 %v5069, 126
    %v5085 = vpop.permute.xlu0 %5084
    %5086 = vrot.lane.b32.xlu0 %v5071, 126
    %v5087 = vpop.permute.xlu0 %5086
    %v5096 = vadd.f32 %v5024, %v5073
    %v5097 = vadd.f32 %v5025, %v5075
    %v5098 = vadd.f32 %v5026, %v5077
    %v5099 = vadd.f32 %v5027, %v5079
    %v5100 = vadd.f32 %v5028, %v5081
    %v5101 = vadd.f32 %v5029, %v5083
    %v5102 = vadd.f32 %v5030, %v5085
    %v5103 = vadd.f32 %v5031, %v5087
    %s5104 = sld [smem:[#allocation8 + $0x3f]]
    %v5105 = vstv %s5104
    %v5106 = vmul.f32 %v5105, %v1332
    %v5107 = vmul.f32 %v5105, %v1333
    %v5108 = vmul.f32 %v5105, %v1334
    %v5109 = vmul.f32 %v5105, %v1335
    %v5110 = vmul.f32 %v5105, %v1352
    %v5111 = vmul.f32 %v5105, %v1353
    %v5112 = vmul.f32 %v5105, %v1354
    %v5113 = vmul.f32 %v5105, %v1355
    %v5114 = vadd.f32 %v5096, %v5106
    %v5115 = vadd.f32 %v5097, %v5107
    %v5116 = vadd.f32 %v5098, %v5108
    %v5117 = vadd.f32 %v5099, %v5109
    %v5118 = vadd.f32 %v5100, %v5110
    %v5119 = vadd.f32 %v5101, %v5111
    %v5120 = vadd.f32 %v5102, %v5112
    %v5121 = vadd.f32 %v5103, %v5113
    %s5122 = sld [smem:[#allocation8 + $0x40]]
    %v5123 = vstv %s5122
    %v5124 = vmul.f32 %v5123, %v1332
    %v5125 = vmul.f32 %v5123, %v1333
    %v5126 = vmul.f32 %v5123, %v1334
    %v5127 = vmul.f32 %v5123, %v1335
    %v5128 = vmul.f32 %v5123, %v1352
    %v5129 = vmul.f32 %v5123, %v1353
    %v5130 = vmul.f32 %v5123, %v1354
    %v5131 = vmul.f32 %v5123, %v1355
    %5140 = vrot.lane.b32.xlu0 %v5124, 127
    %v5141 = vpop.permute.xlu0 %5140
    %5142 = vrot.lane.b32.xlu0 %v5125, 127
    %v5143 = vpop.permute.xlu0 %5142
    %5144 = vrot.lane.b32.xlu0 %v5126, 127
    %v5145 = vpop.permute.xlu0 %5144
    %5146 = vrot.lane.b32.xlu0 %v5127, 127
    %v5147 = vpop.permute.xlu0 %5146
    %5148 = vrot.lane.b32.xlu0 %v5128, 127
    %v5149 = vpop.permute.xlu0 %5148
    %5150 = vrot.lane.b32.xlu0 %v5129, 127
    %v5151 = vpop.permute.xlu0 %5150
    %5152 = vrot.lane.b32.xlu0 %v5130, 127
    %v5153 = vpop.permute.xlu0 %5152
    %5154 = vrot.lane.b32.xlu0 %v5131, 127
    %v5155 = vpop.permute.xlu0 %5154
    %v5164 = vadd.f32 %v5114, %v5141
    %v5165 = vadd.f32 %v5115, %v5143
    %v5166 = vadd.f32 %v5116, %v5145
    %v5167 = vadd.f32 %v5117, %v5147
    %v5168 = vadd.f32 %v5118, %v5149
    %v5169 = vadd.f32 %v5119, %v5151
    %v5170 = vadd.f32 %v5120, %v5153
    %v5171 = vadd.f32 %v5121, %v5155
    %s5172 = sld [smem:[#allocation8 + $0x41]]
    %v5173 = vstv %s5172
    %v5174 = vmul.f32 %v5173, %v1332
    %v5175 = vmul.f32 %v5173, %v1333
    %v5176 = vmul.f32 %v5173, %v1334
    %v5177 = vmul.f32 %v5173, %v1335
    %v5178 = vmul.f32 %v5173, %v1352
    %v5179 = vmul.f32 %v5173, %v1353
    %v5180 = vmul.f32 %v5173, %v1354
    %v5181 = vmul.f32 %v5173, %v1355
    %5190 = vrot.lane.b32.xlu0 %v5174, 126
    %v5191 = vpop.permute.xlu0 %5190
    %5192 = vrot.lane.b32.xlu0 %v5175, 126
    %v5193 = vpop.permute.xlu0 %5192
    %5194 = vrot.lane.b32.xlu0 %v5176, 126
    %v5195 = vpop.permute.xlu0 %5194
    %5196 = vrot.lane.b32.xlu0 %v5177, 126
    %v5197 = vpop.permute.xlu0 %5196
    %5198 = vrot.lane.b32.xlu0 %v5178, 126
    %v5199 = vpop.permute.xlu0 %5198
    %5200 = vrot.lane.b32.xlu0 %v5179, 126
    %v5201 = vpop.permute.xlu0 %5200
    %5202 = vrot.lane.b32.xlu0 %v5180, 126
    %v5203 = vpop.permute.xlu0 %5202
    %5204 = vrot.lane.b32.xlu0 %v5181, 126
    %v5205 = vpop.permute.xlu0 %5204
    %v5214 = vadd.f32 %v5164, %v5191
    %v5215 = vadd.f32 %v5165, %v5193
    %v5216 = vadd.f32 %v5166, %v5195
    %v5217 = vadd.f32 %v5167, %v5197
    %v5218 = vadd.f32 %v5168, %v5199
    %v5219 = vadd.f32 %v5169, %v5201
    %v5220 = vadd.f32 %v5170, %v5203
    %v5221 = vadd.f32 %v5171, %v5205
    %s5222 = sld [smem:[#allocation8 + $0x42]]
    %v5223 = vstv %s5222
    %v5224 = vmul.f32 %v5223, %v1332
    %v5225 = vmul.f32 %v5223, %v1333
    %v5226 = vmul.f32 %v5223, %v1334
    %v5227 = vmul.f32 %v5223, %v1335
    %v5228 = vmul.f32 %v5223, %v1336
    %v5229 = vmul.f32 %v5223, %v1352
    %v5230 = vmul.f32 %v5223, %v1353
    %v5231 = vmul.f32 %v5223, %v1354
    %v5232 = vmul.f32 %v5223, %v1355
    %v5233 = vmul.f32 %v5223, %v1356
    %v5244 = vrot.slane %v5224, 1
    %v5245 = vrot.slane %v5225, 1
    %v5246 = vsel %vm1497, %v5244, %v5245
    %v5247 = vrot.slane %v5226, 1
    %v5248 = vsel %vm1497, %v5245, %v5247
    %v5249 = vrot.slane %v5227, 1
    %v5250 = vsel %vm1497, %v5247, %v5249
    %v5251 = vrot.slane %v5228, 1
    %v5252 = vsel %vm1497, %v5249, %v5251
    %v5253 = vrot.slane %v5229, 1
    %v5254 = vrot.slane %v5230, 1
    %v5255 = vsel %vm1497, %v5253, %v5254
    %v5256 = vrot.slane %v5231, 1
    %v5257 = vsel %vm1497, %v5254, %v5256
    %v5258 = vrot.slane %v5232, 1
    %v5259 = vsel %vm1497, %v5256, %v5258
    %v5260 = vrot.slane %v5233, 1
    %v5261 = vsel %vm1497, %v5258, %v5260
    %v5270 = vadd.f32 %v5214, %v5246
    %v5271 = vadd.f32 %v5215, %v5248
    %v5272 = vadd.f32 %v5216, %v5250
    %v5273 = vadd.f32 %v5217, %v5252
    %v5274 = vadd.f32 %v5218, %v5255
    %v5275 = vadd.f32 %v5219, %v5257
    %v5276 = vadd.f32 %v5220, %v5259
    %v5277 = vadd.f32 %v5221, %v5261
    %s5278 = sld [smem:[#allocation8 + $0x43]]
    %v5279 = vstv %s5278
    %v5280 = vmul.f32 %v5279, %v1332
    %v5281 = vmul.f32 %v5279, %v1333
    %v5282 = vmul.f32 %v5279, %v1334
    %v5283 = vmul.f32 %v5279, %v1335
    %v5284 = vmul.f32 %v5279, %v1336
    %v5285 = vmul.f32 %v5279, %v1352
    %v5286 = vmul.f32 %v5279, %v1353
    %v5287 = vmul.f32 %v5279, %v1354
    %v5288 = vmul.f32 %v5279, %v1355
    %v5289 = vmul.f32 %v5279, %v1356
    %v5300 = vrot.slane %v5280, 1
    %v5301 = vrot.slane %v5281, 1
    %v5302 = vsel %vm1497, %v5300, %v5301
    %v5303 = vrot.slane %v5282, 1
    %v5304 = vsel %vm1497, %v5301, %v5303
    %v5305 = vrot.slane %v5283, 1
    %v5306 = vsel %vm1497, %v5303, %v5305
    %v5307 = vrot.slane %v5284, 1
    %v5308 = vsel %vm1497, %v5305, %v5307
    %v5309 = vrot.slane %v5285, 1
    %v5310 = vrot.slane %v5286, 1
    %v5311 = vsel %vm1497, %v5309, %v5310
    %v5312 = vrot.slane %v5287, 1
    %v5313 = vsel %vm1497, %v5310, %v5312
    %v5314 = vrot.slane %v5288, 1
    %v5315 = vsel %vm1497, %v5312, %v5314
    %v5316 = vrot.slane %v5289, 1
    %v5317 = vsel %vm1497, %v5314, %v5316
    %5318 = vrot.lane.b32.xlu0 %v5302, 127
    %v5319 = vpop.permute.xlu0 %5318
    %5320 = vrot.lane.b32.xlu0 %v5304, 127
    %v5321 = vpop.permute.xlu0 %5320
    %5322 = vrot.lane.b32.xlu0 %v5306, 127
    %v5323 = vpop.permute.xlu0 %5322
    %5324 = vrot.lane.b32.xlu0 %v5308, 127
    %v5325 = vpop.permute.xlu0 %5324
    %5326 = vrot.lane.b32.xlu0 %v5311, 127
    %v5327 = vpop.permute.xlu0 %5326
    %5328 = vrot.lane.b32.xlu0 %v5313, 127
    %v5329 = vpop.permute.xlu0 %5328
    %5330 = vrot.lane.b32.xlu0 %v5315, 127
    %v5331 = vpop.permute.xlu0 %5330
    %5332 = vrot.lane.b32.xlu0 %v5317, 127
    %v5333 = vpop.permute.xlu0 %5332
    %v5342 = vadd.f32 %v5270, %v5319
    %v5343 = vadd.f32 %v5271, %v5321
    %v5344 = vadd.f32 %v5272, %v5323
    %v5345 = vadd.f32 %v5273, %v5325
    %v5346 = vadd.f32 %v5274, %v5327
    %v5347 = vadd.f32 %v5275, %v5329
    %v5348 = vadd.f32 %v5276, %v5331
    %v5349 = vadd.f32 %v5277, %v5333
    %s5350 = sld [smem:[#allocation8 + $0x44]]
    %v5351 = vstv %s5350
    %v5352 = vmul.f32 %v5351, %v1332
    %v5353 = vmul.f32 %v5351, %v1333
    %v5354 = vmul.f32 %v5351, %v1334
    %v5355 = vmul.f32 %v5351, %v1335
    %v5356 = vmul.f32 %v5351, %v1336
    %v5357 = vmul.f32 %v5351, %v1352
    %v5358 = vmul.f32 %v5351, %v1353
    %v5359 = vmul.f32 %v5351, %v1354
    %v5360 = vmul.f32 %v5351, %v1355
    %v5361 = vmul.f32 %v5351, %v1356
    %v5372 = vrot.slane %v5352, 1
    %v5373 = vrot.slane %v5353, 1
    %v5374 = vsel %vm1497, %v5372, %v5373
    %v5375 = vrot.slane %v5354, 1
    %v5376 = vsel %vm1497, %v5373, %v5375
    %v5377 = vrot.slane %v5355, 1
    %v5378 = vsel %vm1497, %v5375, %v5377
    %v5379 = vrot.slane %v5356, 1
    %v5380 = vsel %vm1497, %v5377, %v5379
    %v5381 = vrot.slane %v5357, 1
    %v5382 = vrot.slane %v5358, 1
    %v5383 = vsel %vm1497, %v5381, %v5382
    %v5384 = vrot.slane %v5359, 1
    %v5385 = vsel %vm1497, %v5382, %v5384
    %v5386 = vrot.slane %v5360, 1
    %v5387 = vsel %vm1497, %v5384, %v5386
    %v5388 = vrot.slane %v5361, 1
    %v5389 = vsel %vm1497, %v5386, %v5388
    %5390 = vrot.lane.b32.xlu0 %v5374, 126
    %v5391 = vpop.permute.xlu0 %5390
    %5392 = vrot.lane.b32.xlu0 %v5376, 126
    %v5393 = vpop.permute.xlu0 %5392
    %5394 = vrot.lane.b32.xlu0 %v5378, 126
    %v5395 = vpop.permute.xlu0 %5394
    %5396 = vrot.lane.b32.xlu0 %v5380, 126
    %v5397 = vpop.permute.xlu0 %5396
    %5398 = vrot.lane.b32.xlu0 %v5383, 126
    %v5399 = vpop.permute.xlu0 %5398
    %5400 = vrot.lane.b32.xlu0 %v5385, 126
    %v5401 = vpop.permute.xlu0 %5400
    %5402 = vrot.lane.b32.xlu0 %v5387, 126
    %v5403 = vpop.permute.xlu0 %5402
    %5404 = vrot.lane.b32.xlu0 %v5389, 126
    %v5405 = vpop.permute.xlu0 %5404
    %v5414 = vadd.f32 %v5342, %v5391
    %v5415 = vadd.f32 %v5343, %v5393
    %v5416 = vadd.f32 %v5344, %v5395
    %v5417 = vadd.f32 %v5345, %v5397
    %v5418 = vadd.f32 %v5346, %v5399
    %v5419 = vadd.f32 %v5347, %v5401
    %v5420 = vadd.f32 %v5348, %v5403
    %v5421 = vadd.f32 %v5349, %v5405
    %s5422 = sld [smem:[#allocation8 + $0x45]]
    %v5423 = vstv %s5422
    %v5424 = vmul.f32 %v5423, %v1332
    %v5425 = vmul.f32 %v5423, %v1333
    %v5426 = vmul.f32 %v5423, %v1334
    %v5427 = vmul.f32 %v5423, %v1335
    %v5428 = vmul.f32 %v5423, %v1336
    %v5429 = vmul.f32 %v5423, %v1352
    %v5430 = vmul.f32 %v5423, %v1353
    %v5431 = vmul.f32 %v5423, %v1354
    %v5432 = vmul.f32 %v5423, %v1355
    %v5433 = vmul.f32 %v5423, %v1356
    %v5444 = vrot.slane %v5424, 2
    %v5445 = vrot.slane %v5425, 2
    %v5446 = vsel %vm1698, %v5444, %v5445
    %v5447 = vrot.slane %v5426, 2
    %v5448 = vsel %vm1698, %v5445, %v5447
    %v5449 = vrot.slane %v5427, 2
    %v5450 = vsel %vm1698, %v5447, %v5449
    %v5451 = vrot.slane %v5428, 2
    %v5452 = vsel %vm1698, %v5449, %v5451
    %v5453 = vrot.slane %v5429, 2
    %v5454 = vrot.slane %v5430, 2
    %v5455 = vsel %vm1698, %v5453, %v5454
    %v5456 = vrot.slane %v5431, 2
    %v5457 = vsel %vm1698, %v5454, %v5456
    %v5458 = vrot.slane %v5432, 2
    %v5459 = vsel %vm1698, %v5456, %v5458
    %v5460 = vrot.slane %v5433, 2
    %v5461 = vsel %vm1698, %v5458, %v5460
    %v5470 = vadd.f32 %v5414, %v5446
    %v5471 = vadd.f32 %v5415, %v5448
    %v5472 = vadd.f32 %v5416, %v5450
    %v5473 = vadd.f32 %v5417, %v5452
    %v5474 = vadd.f32 %v5418, %v5455
    %v5475 = vadd.f32 %v5419, %v5457
    %v5476 = vadd.f32 %v5420, %v5459
    %v5477 = vadd.f32 %v5421, %v5461
    %s5478 = sld [smem:[#allocation8 + $0x46]]
    %v5479 = vstv %s5478
    %v5480 = vmul.f32 %v5479, %v1332
    %v5481 = vmul.f32 %v5479, %v1333
    %v5482 = vmul.f32 %v5479, %v1334
    %v5483 = vmul.f32 %v5479, %v1335
    %v5484 = vmul.f32 %v5479, %v1336
    %v5485 = vmul.f32 %v5479, %v1352
    %v5486 = vmul.f32 %v5479, %v1353
    %v5487 = vmul.f32 %v5479, %v1354
    %v5488 = vmul.f32 %v5479, %v1355
    %v5489 = vmul.f32 %v5479, %v1356
    %v5500 = vrot.slane %v5480, 2
    %v5501 = vrot.slane %v5481, 2
    %v5502 = vsel %vm1698, %v5500, %v5501
    %v5503 = vrot.slane %v5482, 2
    %v5504 = vsel %vm1698, %v5501, %v5503
    %v5505 = vrot.slane %v5483, 2
    %v5506 = vsel %vm1698, %v5503, %v5505
    %v5507 = vrot.slane %v5484, 2
    %v5508 = vsel %vm1698, %v5505, %v5507
    %v5509 = vrot.slane %v5485, 2
    %v5510 = vrot.slane %v5486, 2
    %v5511 = vsel %vm1698, %v5509, %v5510
    %v5512 = vrot.slane %v5487, 2
    %v5513 = vsel %vm1698, %v5510, %v5512
    %v5514 = vrot.slane %v5488, 2
    %v5515 = vsel %vm1698, %v5512, %v5514
    %v5516 = vrot.slane %v5489, 2
    %v5517 = vsel %vm1698, %v5514, %v5516
    %5518 = vrot.lane.b32.xlu0 %v5502, 127
    %v5519 = vpop.permute.xlu0 %5518
    %5520 = vrot.lane.b32.xlu0 %v5504, 127
    %v5521 = vpop.permute.xlu0 %5520
    %5522 = vrot.lane.b32.xlu0 %v5506, 127
    %v5523 = vpop.permute.xlu0 %5522
    %5524 = vrot.lane.b32.xlu0 %v5508, 127
    %v5525 = vpop.permute.xlu0 %5524
    %5526 = vrot.lane.b32.xlu0 %v5511, 127
    %v5527 = vpop.permute.xlu0 %5526
    %5528 = vrot.lane.b32.xlu0 %v5513, 127
    %v5529 = vpop.permute.xlu0 %5528
    %5530 = vrot.lane.b32.xlu0 %v5515, 127
    %v5531 = vpop.permute.xlu0 %5530
    %5532 = vrot.lane.b32.xlu0 %v5517, 127
    %v5533 = vpop.permute.xlu0 %5532
    %v5542 = vadd.f32 %v5470, %v5519
    %v5543 = vadd.f32 %v5471, %v5521
    %v5544 = vadd.f32 %v5472, %v5523
    %v5545 = vadd.f32 %v5473, %v5525
    %v5546 = vadd.f32 %v5474, %v5527
    %v5547 = vadd.f32 %v5475, %v5529
    %v5548 = vadd.f32 %v5476, %v5531
    %v5549 = vadd.f32 %v5477, %v5533
    %s5550 = sld [smem:[#allocation8 + $0x47]]
    %v5551 = vstv %s5550
    %v5552 = vmul.f32 %v5551, %v1332
    %v5553 = vmul.f32 %v5551, %v1333
    %v5554 = vmul.f32 %v5551, %v1334
    %v5555 = vmul.f32 %v5551, %v1335
    %v5556 = vmul.f32 %v5551, %v1336
    %v5557 = vmul.f32 %v5551, %v1352
    %v5558 = vmul.f32 %v5551, %v1353
    %v5559 = vmul.f32 %v5551, %v1354
    %v5560 = vmul.f32 %v5551, %v1355
    %v5561 = vmul.f32 %v5551, %v1356
    %v5572 = vrot.slane %v5552, 2
    %v5573 = vrot.slane %v5553, 2
    %v5574 = vsel %vm1698, %v5572, %v5573
    %v5575 = vrot.slane %v5554, 2
    %v5576 = vsel %vm1698, %v5573, %v5575
    %v5577 = vrot.slane %v5555, 2
    %v5578 = vsel %vm1698, %v5575, %v5577
    %v5579 = vrot.slane %v5556, 2
    %v5580 = vsel %vm1698, %v5577, %v5579
    %v5581 = vrot.slane %v5557, 2
    %v5582 = vrot.slane %v5558, 2
    %v5583 = vsel %vm1698, %v5581, %v5582
    %v5584 = vrot.slane %v5559, 2
    %v5585 = vsel %vm1698, %v5582, %v5584
    %v5586 = vrot.slane %v5560, 2
    %v5587 = vsel %vm1698, %v5584, %v5586
    %v5588 = vrot.slane %v5561, 2
    %v5589 = vsel %vm1698, %v5586, %v5588
    %5590 = vrot.lane.b32.xlu0 %v5574, 126
    %v5591 = vpop.permute.xlu0 %5590
    %5592 = vrot.lane.b32.xlu0 %v5576, 126
    %v5593 = vpop.permute.xlu0 %5592
    %5594 = vrot.lane.b32.xlu0 %v5578, 126
    %v5595 = vpop.permute.xlu0 %5594
    %5596 = vrot.lane.b32.xlu0 %v5580, 126
    %v5597 = vpop.permute.xlu0 %5596
    %5598 = vrot.lane.b32.xlu0 %v5583, 126
    %v5599 = vpop.permute.xlu0 %5598
    %5600 = vrot.lane.b32.xlu0 %v5585, 126
    %v5601 = vpop.permute.xlu0 %5600
    %5602 = vrot.lane.b32.xlu0 %v5587, 126
    %v5603 = vpop.permute.xlu0 %5602
    %5604 = vrot.lane.b32.xlu0 %v5589, 126
    %v5605 = vpop.permute.xlu0 %5604
    %v5614 = vadd.f32 %v5542, %v5591
    %v5615 = vadd.f32 %v5543, %v5593
    %v5616 = vadd.f32 %v5544, %v5595
    %v5617 = vadd.f32 %v5545, %v5597
    %v5618 = vadd.f32 %v5546, %v5599
    %v5619 = vadd.f32 %v5547, %v5601
    %v5620 = vadd.f32 %v5548, %v5603
    %v5621 = vadd.f32 %v5549, %v5605
    %s5622 = sld [smem:[#allocation9 + $0x1]]
    %v5623 = vstv %s5622
    %v5624 = vadd.f32 %v5614, %v5623
    %v5625 = vadd.f32 %v5615, %v5623
    %v5626 = vadd.f32 %v5616, %v5623
    %v5627 = vadd.f32 %v5617, %v5623
    %v5628 = vadd.f32 %v5618, %v5623
    %v5629 = vadd.f32 %v5619, %v5623
    %v5630 = vadd.f32 %v5620, %v5623
    %v5631 = vadd.f32 %v5621, %v5623
    %v5632 = vsel %vm3441, %v5624, 0.0
    %v5633 = vsel %vm3441, %v5625, 0.0
    %v5634 = vadd.f32 %v5632, %v5633
    %v5635 = vsel %vm3441, %v5626, 0.0
    %v5636 = vadd.f32 %v5634, %v5635
    %v5637 = vsel %vm3441, %v5627, 0.0
    %v5638 = vadd.f32 %v5636, %v5637
    %v5639 = vsel %vm3441, %v5628, 0.0
    %v5640 = vadd.f32 %v5638, %v5639
    %v5641 = vsel %vm3441, %v5629, 0.0
    %v5642 = vadd.f32 %v5640, %v5641
    %v5643 = vsel %vm3441, %v5630, 0.0
    %v5644 = vadd.f32 %v5642, %v5643
    %v5645 = vsel %vm3441, %v5631, 0.0
    %v5646 = vadd.f32 %v5644, %v5645
    %5647 = vadd.xlane.f32.xlu0 %v5646
    %v5648 = vpop.xlane.xlu0 %5647
    %v5649 = vrot.slane %v5648, 4
    %v5650 = vadd.f32 %v5648, %v5649
    %v5651 = vrot.slane %v5650, 2
    %v5652 = vadd.f32 %v5650, %v5651
    %v5653 = vrot.slane %v5652, 1
    %v5654 = vadd.f32 %v5652, %v5653
    %s5655 = vtos %v5654
    %v5656 = vstv %s5655
    %v5657 = vmul.f32 %v5624, %v5624
    %v5658 = vmul.f32 %v5625, %v5625
    %v5659 = vmul.f32 %v5626, %v5626
    %v5660 = vmul.f32 %v5627, %v5627
    %v5661 = vmul.f32 %v5628, %v5628
    %v5662 = vmul.f32 %v5629, %v5629
    %v5663 = vmul.f32 %v5630, %v5630
    %v5664 = vmul.f32 %v5631, %v5631
    %v5665 = vsel %vm3441, %v5657, 0.0
    %v5666 = vsel %vm3441, %v5658, 0.0
    %v5667 = vadd.f32 %v5665, %v5666
    %v5668 = vsel %vm3441, %v5659, 0.0
    %v5669 = vadd.f32 %v5667, %v5668
    %v5670 = vsel %vm3441, %v5660, 0.0
    %v5671 = vadd.f32 %v5669, %v5670
    %v5672 = vsel %vm3441, %v5661, 0.0
    %v5673 = vadd.f32 %v5671, %v5672
    %v5674 = vsel %vm3441, %v5662, 0.0
    %v5675 = vadd.f32 %v5673, %v5674
    %v5676 = vsel %vm3441, %v5663, 0.0
    %v5677 = vadd.f32 %v5675, %v5676
    %v5678 = vsel %vm3441, %v5664, 0.0
    %v5679 = vadd.f32 %v5677, %v5678
    %5680 = vadd.xlane.f32.xlu0 %v5679
    %v5681 = vpop.xlane.xlu0 %5680
    %v5682 = vrot.slane %v5681, 4
    %v5683 = vadd.f32 %v5681, %v5682
    %v5684 = vrot.slane %v5683, 2
    %v5685 = vadd.f32 %v5683, %v5684
    %v5686 = vrot.slane %v5685, 1
    %v5687 = vadd.f32 %v5685, %v5686
    %s5688 = vtos %v5687
    %v5689 = vstv %s5688
    %v5690 = vmul.f32 %v5656, 0.00048828125
    %v5691 = vmul.f32 %v5689, 0.00048828125
    %v5692 = vmul.f32 %v5690, %v5690
    %v5693 = vsub.f32 %v5691, %v5692
    %v5694 = vsub.f32 %v5624, %v5690
    %v5695 = vsub.f32 %v5625, %v5690
    %v5696 = vsub.f32 %v5626, %v5690
    %v5697 = vsub.f32 %v5627, %v5690
    %v5698 = vsub.f32 %v5628, %v5690
    %v5699 = vsub.f32 %v5629, %v5690
    %v5700 = vsub.f32 %v5630, %v5690
    %v5701 = vsub.f32 %v5631, %v5690
    %v5702 = vadd.f32 %v5693, 1e-05
    %v5703 = vrsqrt.pop %v5702
    %v5704 = vmul.f32 %v5694, %v5703
    %v5705 = vmul.f32 %v5695, %v5703
    %v5706 = vmul.f32 %v5696, %v5703
    %v5707 = vmul.f32 %v5697, %v5703
    %v5708 = vmul.f32 %v5698, %v5703
    %v5709 = vmul.f32 %v5699, %v5703
    %v5710 = vmul.f32 %v5700, %v5703
    %v5711 = vmul.f32 %v5701, %v5703
    %s5712 = sld [smem:[#allocation11 + $0x1]]
    %v5713 = vstv %s5712
    %v5714 = vmul.f32 %v5704, %v5713
    %v5715 = vmul.f32 %v5705, %v5713
    %v5716 = vmul.f32 %v5706, %v5713
    %v5717 = vmul.f32 %v5707, %v5713
    %v5718 = vmul.f32 %v5708, %v5713
    %v5719 = vmul.f32 %v5709, %v5713
    %v5720 = vmul.f32 %v5710, %v5713
    %v5721 = vmul.f32 %v5711, %v5713
    %s5722 = sld [smem:[#allocation12 + $0x1]]
    %v5723 = vstv %s5722
    %v5724 = vadd.f32 %v5714, %v5723
    %v5725 = vadd.f32 %v5715, %v5723
    %v5726 = vadd.f32 %v5716, %v5723
    %v5727 = vadd.f32 %v5717, %v5723
    %v5728 = vadd.f32 %v5718, %v5723
    %v5729 = vadd.f32 %v5719, %v5723
    %v5730 = vadd.f32 %v5720, %v5723
    %v5731 = vadd.f32 %v5721, %v5723
    %v5732 = vmax.f32 %v5724, 0.0
    %v5733 = vmax.f32 %v5725, 0.0
    %v5734 = vmax.f32 %v5726, 0.0
    %v5735 = vmax.f32 %v5727, 0.0
    %v5736 = vmax.f32 %v5728, 0.0
    %v5737 = vmax.f32 %v5729, 0.0
    %v5738 = vmax.f32 %v5730, 0.0
    %v5739 = vmax.f32 %v5731, 0.0
    %5740 = vst.msk [vmem:[#allocation3] sm:$0x1] %vm1055, 0.0
    %5741 = vst.msk [vmem:[#allocation3 + $0x28] sm:$0x1] %vm1055, 0.0
    %5742 = vst.msk [vmem:[#allocation3 + $0x50] sm:$0x1] %vm1055, 0.0
    %5743 = vst.msk [vmem:[#allocation3 + $0x78] sm:$0x1] %vm1055, 0.0
    %5744 = vst.msk [vmem:[#allocation3 + $0x21] sm:$0x1] %vm1055, 0.0
    %5745 = vst.msk [vmem:[#allocation3 + $0x49] sm:$0x1] %vm1055, 0.0
    %5746 = vst.msk [vmem:[#allocation3 + $0x71] sm:$0x1] %vm1055, 0.0
    %5747 = vst.msk [vmem:[#allocation3 + $0x99] sm:$0x1] %vm1055, 0.0
    %5748 = vst.msk [vmem:[#allocation3] sm:$0xff] %vm1072, 0.0
    %5749 = vst.msk [vmem:[#allocation3 + $0x8] sm:$0xff] %vm1072, 0.0
    %5750 = vst.msk [vmem:[#allocation3 + $0x10] sm:$0xff] %vm1072, 0.0
    %5751 = vst.msk [vmem:[#allocation3 + $0x18] sm:$0xff] %vm1072, 0.0
    %5752 = vst.msk [vmem:[#allocation3 + $0x20] sm:$0x3] %vm1077, 0.0
    %5753 = vst.msk [vmem:[#allocation3 + $0x28] sm:$0xff] %vm1072, 0.0
    %5754 = vst.msk [vmem:[#allocation3 + $0x30] sm:$0xff] %vm1072, 0.0
    %5755 = vst.msk [vmem:[#allocation3 + $0x38] sm:$0xff] %vm1072, 0.0
    %5756 = vst.msk [vmem:[#allocation3 + $0x40] sm:$0xff] %vm1072, 0.0
    %5757 = vst.msk [vmem:[#allocation3 + $0x48] sm:$0x3] %vm1077, 0.0
    %5758 = vst.msk [vmem:[#allocation3 + $0x50] sm:$0xff] %vm1072, 0.0
    %5759 = vst.msk [vmem:[#allocation3 + $0x58] sm:$0xff] %vm1072, 0.0
    %5760 = vst.msk [vmem:[#allocation3 + $0x60] sm:$0xff] %vm1072, 0.0
    %5761 = vst.msk [vmem:[#allocation3 + $0x68] sm:$0xff] %vm1072, 0.0
    %5762 = vst.msk [vmem:[#allocation3 + $0x70] sm:$0x3] %vm1077, 0.0
    %5763 = vst.msk [vmem:[#allocation3 + $0x78] sm:$0xff] %vm1072, 0.0
    %5764 = vst.msk [vmem:[#allocation3 + $0x80] sm:$0xff] %vm1072, 0.0
    %5765 = vst.msk [vmem:[#allocation3 + $0x88] sm:$0xff] %vm1072, 0.0
    %5766 = vst.msk [vmem:[#allocation3 + $0x90] sm:$0xff] %vm1072, 0.0
    %5767 = vst.msk [vmem:[#allocation3 + $0x98] sm:$0x3] %vm1077, 0.0
    %5768 = vst.msk [vmem:[#allocation3] sm:$0xff] %vm1114, 0.0
    %5769 = vst.msk [vmem:[#allocation3 + $0x8] sm:$0xff] %vm1114, 0.0
    %5770 = vst.msk [vmem:[#allocation3 + $0x10] sm:$0xff] %vm1114, 0.0
    %5771 = vst.msk [vmem:[#allocation3 + $0x18] sm:$0xff] %vm1114, 0.0
    %5772 = vst.msk [vmem:[#allocation3 + $0x20] sm:$0x3] %vm1119, 0.0
    %5773 = vst.msk [vmem:[#allocation3 + $0x28] sm:$0xff] %vm1114, 0.0
    %5774 = vst.msk [vmem:[#allocation3 + $0x30] sm:$0xff] %vm1114, 0.0
    %5775 = vst.msk [vmem:[#allocation3 + $0x38] sm:$0xff] %vm1114, 0.0
    %5776 = vst.msk [vmem:[#allocation3 + $0x40] sm:$0xff] %vm1114, 0.0
    %5777 = vst.msk [vmem:[#allocation3 + $0x48] sm:$0x3] %vm1119, 0.0
    %5778 = vst.msk [vmem:[#allocation3 + $0x50] sm:$0xff] %vm1114, 0.0
    %5779 = vst.msk [vmem:[#allocation3 + $0x58] sm:$0xff] %vm1114, 0.0
    %5780 = vst.msk [vmem:[#allocation3 + $0x60] sm:$0xff] %vm1114, 0.0
    %5781 = vst.msk [vmem:[#allocation3 + $0x68] sm:$0xff] %vm1114, 0.0
    %5782 = vst.msk [vmem:[#allocation3 + $0x70] sm:$0x3] %vm1119, 0.0
    %5783 = vst.msk [vmem:[#allocation3 + $0x78] sm:$0xff] %vm1114, 0.0
    %5784 = vst.msk [vmem:[#allocation3 + $0x80] sm:$0xff] %vm1114, 0.0
    %5785 = vst.msk [vmem:[#allocation3 + $0x88] sm:$0xff] %vm1114, 0.0
    %5786 = vst.msk [vmem:[#allocation3 + $0x90] sm:$0xff] %vm1114, 0.0
    %5787 = vst.msk [vmem:[#allocation3 + $0x98] sm:$0x3] %vm1119, 0.0
    %5804 = vrot.lane.b32.xlu0 %v3542, 1
    %v5805 = vpop.permute.xlu0 %5804
    %5806 = vrot.lane.b32.xlu0 %v3543, 1
    %v5807 = vpop.permute.xlu0 %5806
    %5808 = vrot.lane.b32.xlu0 %v3544, 1
    %v5809 = vpop.permute.xlu0 %5808
    %5810 = vrot.lane.b32.xlu0 %v3545, 1
    %v5811 = vpop.permute.xlu0 %5810
    %5812 = vrot.lane.b32.xlu0 %v5732, 1
    %v5813 = vpop.permute.xlu0 %5812
    %5814 = vrot.lane.b32.xlu0 %v5733, 1
    %v5815 = vpop.permute.xlu0 %5814
    %5816 = vrot.lane.b32.xlu0 %v5734, 1
    %v5817 = vpop.permute.xlu0 %5816
    %5818 = vrot.lane.b32.xlu0 %v5735, 1
    %v5819 = vpop.permute.xlu0 %5818
    %5820 = vrot.lane.b32.xlu0 %v3546, 1
    %v5821 = vpop.permute.xlu0 %5820
    %5822 = vrot.lane.b32.xlu0 %v3547, 1
    %v5823 = vpop.permute.xlu0 %5822
    %5824 = vrot.lane.b32.xlu0 %v3548, 1
    %v5825 = vpop.permute.xlu0 %5824
    %5826 = vrot.lane.b32.xlu0 %v3549, 1
    %v5827 = vpop.permute.xlu0 %5826
    %5828 = vrot.lane.b32.xlu0 %v5736, 1
    %v5829 = vpop.permute.xlu0 %5828
    %5830 = vrot.lane.b32.xlu0 %v5737, 1
    %v5831 = vpop.permute.xlu0 %5830
    %5832 = vrot.lane.b32.xlu0 %v5738, 1
    %v5833 = vpop.permute.xlu0 %5832
    %5834 = vrot.lane.b32.xlu0 %v5739, 1
    %v5835 = vpop.permute.xlu0 %5834
    %5852 = vst.msk [vmem:[#allocation3 + $0x1] sm:$0xff] %vm1284, %v5805
    %5853 = vst.msk [vmem:[#allocation3 + $0x9] sm:$0xff] %vm1284, %v5807
    %5854 = vst.msk [vmem:[#allocation3 + $0x11] sm:$0xff] %vm1284, %v5809
    %5855 = vst.msk [vmem:[#allocation3 + $0x19] sm:$0xff] %vm1284, %v5811
    %5856 = vst.msk [vmem:[#allocation3 + $0x29] sm:$0xff] %vm1284, %v5813
    %5857 = vst.msk [vmem:[#allocation3 + $0x31] sm:$0xff] %vm1284, %v5815
    %5858 = vst.msk [vmem:[#allocation3 + $0x39] sm:$0xff] %vm1284, %v5817
    %5859 = vst.msk [vmem:[#allocation3 + $0x41] sm:$0xff] %vm1284, %v5819
    %5860 = vst.msk [vmem:[#allocation3 + $0x51] sm:$0xff] %vm1284, %v5821
    %5861 = vst.msk [vmem:[#allocation3 + $0x59] sm:$0xff] %vm1284, %v5823
    %5862 = vst.msk [vmem:[#allocation3 + $0x61] sm:$0xff] %vm1284, %v5825
    %5863 = vst.msk [vmem:[#allocation3 + $0x69] sm:$0xff] %vm1284, %v5827
    %5864 = vst.msk [vmem:[#allocation3 + $0x79] sm:$0xff] %vm1284, %v5829
    %5865 = vst.msk [vmem:[#allocation3 + $0x81] sm:$0xff] %vm1284, %v5831
    %5866 = vst.msk [vmem:[#allocation3 + $0x89] sm:$0xff] %vm1284, %v5833
    %5867 = vst.msk [vmem:[#allocation3 + $0x91] sm:$0xff] %vm1284, %v5835
    %v5868 = vld [vmem:[#allocation3] sm:$0xff]
    %v5869 = vld [vmem:[#allocation3 + $0x8] sm:$0xff]
    %v5870 = vld [vmem:[#allocation3 + $0x10] sm:$0xff]
    %v5871 = vld [vmem:[#allocation3 + $0x18] sm:$0xff]
    %v5872 = vld [vmem:[#allocation3 + $0x20] sm:$0x3]
    %v5873 = vld [vmem:[#allocation3 + $0x28] sm:$0xff]
    %v5874 = vld [vmem:[#allocation3 + $0x30] sm:$0xff]
    %v5875 = vld [vmem:[#allocation3 + $0x38] sm:$0xff]
    %v5876 = vld [vmem:[#allocation3 + $0x40] sm:$0xff]
    %v5877 = vld [vmem:[#allocation3 + $0x48] sm:$0x3]
    %v5878 = vld [vmem:[#allocation3 + $0x50] sm:$0xff]
    %v5879 = vld [vmem:[#allocation3 + $0x58] sm:$0xff]
    %v5880 = vld [vmem:[#allocation3 + $0x60] sm:$0xff]
    %v5881 = vld [vmem:[#allocation3 + $0x68] sm:$0xff]
    %v5882 = vld [vmem:[#allocation3 + $0x70] sm:$0x3]
    %v5883 = vld [vmem:[#allocation3 + $0x78] sm:$0xff]
    %v5884 = vld [vmem:[#allocation3 + $0x80] sm:$0xff]
    %v5885 = vld [vmem:[#allocation3 + $0x88] sm:$0xff]
    %v5886 = vld [vmem:[#allocation3 + $0x90] sm:$0xff]
    %v5887 = vld [vmem:[#allocation3 + $0x98] sm:$0x3]
    %s5888 = sld [smem:[#allocation14]]
    %v5889 = vstv %s5888
    %v5890 = vmul.f32 %v5889, %v5868
    %v5891 = vmul.f32 %v5889, %v5869
    %v5892 = vmul.f32 %v5889, %v5870
    %v5893 = vmul.f32 %v5889, %v5871
    %v5894 = vmul.f32 %v5889, %v5878
    %v5895 = vmul.f32 %v5889, %v5879
    %v5896 = vmul.f32 %v5889, %v5880
    %v5897 = vmul.f32 %v5889, %v5881
    %v5898 = vadd.f32 %v5890, 0.0
    %v5899 = vadd.f32 %v5891, 0.0
    %v5900 = vadd.f32 %v5892, 0.0
    %v5901 = vadd.f32 %v5893, 0.0
    %v5902 = vadd.f32 %v5894, 0.0
    %v5903 = vadd.f32 %v5895, 0.0
    %v5904 = vadd.f32 %v5896, 0.0
    %v5905 = vadd.f32 %v5897, 0.0
    %s5906 = sld [smem:[#allocation14 + $0x1]]
    %v5907 = vstv %s5906
    %v5908 = vmul.f32 %v5907, %v5868
    %v5909 = vmul.f32 %v5907, %v5869
    %v5910 = vmul.f32 %v5907, %v5870
    %v5911 = vmul.f32 %v5907, %v5871
    %v5912 = vmul.f32 %v5907, %v5878
    %v5913 = vmul.f32 %v5907, %v5879
    %v5914 = vmul.f32 %v5907, %v5880
    %v5915 = vmul.f32 %v5907, %v5881
    %5924 = vrot.lane.b32.xlu0 %v5908, 127
    %v5925 = vpop.permute.xlu0 %5924
    %5926 = vrot.lane.b32.xlu0 %v5909, 127
    %v5927 = vpop.permute.xlu0 %5926
    %5928 = vrot.lane.b32.xlu0 %v5910, 127
    %v5929 = vpop.permute.xlu0 %5928
    %5930 = vrot.lane.b32.xlu0 %v5911, 127
    %v5931 = vpop.permute.xlu0 %5930
    %5932 = vrot.lane.b32.xlu0 %v5912, 127
    %v5933 = vpop.permute.xlu0 %5932
    %5934 = vrot.lane.b32.xlu0 %v5913, 127
    %v5935 = vpop.permute.xlu0 %5934
    %5936 = vrot.lane.b32.xlu0 %v5914, 127
    %v5937 = vpop.permute.xlu0 %5936
    %5938 = vrot.lane.b32.xlu0 %v5915, 127
    %v5939 = vpop.permute.xlu0 %5938
    %v5948 = vadd.f32 %v5898, %v5925
    %v5949 = vadd.f32 %v5899, %v5927
    %v5950 = vadd.f32 %v5900, %v5929
    %v5951 = vadd.f32 %v5901, %v5931
    %v5952 = vadd.f32 %v5902, %v5933
    %v5953 = vadd.f32 %v5903, %v5935
    %v5954 = vadd.f32 %v5904, %v5937
    %v5955 = vadd.f32 %v5905, %v5939
    %s5956 = sld [smem:[#allocation14 + $0x2]]
    %v5957 = vstv %s5956
    %v5958 = vmul.f32 %v5957, %v5868
    %v5959 = vmul.f32 %v5957, %v5869
    %v5960 = vmul.f32 %v5957, %v5870
    %v5961 = vmul.f32 %v5957, %v5871
    %v5962 = vmul.f32 %v5957, %v5878
    %v5963 = vmul.f32 %v5957, %v5879
    %v5964 = vmul.f32 %v5957, %v5880
    %v5965 = vmul.f32 %v5957, %v5881
    %5974 = vrot.lane.b32.xlu0 %v5958, 126
    %v5975 = vpop.permute.xlu0 %5974
    %5976 = vrot.lane.b32.xlu0 %v5959, 126
    %v5977 = vpop.permute.xlu0 %5976
    %5978 = vrot.lane.b32.xlu0 %v5960, 126
    %v5979 = vpop.permute.xlu0 %5978
    %5980 = vrot.lane.b32.xlu0 %v5961, 126
    %v5981 = vpop.permute.xlu0 %5980
    %5982 = vrot.lane.b32.xlu0 %v5962, 126
    %v5983 = vpop.permute.xlu0 %5982
    %5984 = vrot.lane.b32.xlu0 %v5963, 126
    %v5985 = vpop.permute.xlu0 %5984
    %5986 = vrot.lane.b32.xlu0 %v5964, 126
    %v5987 = vpop.permute.xlu0 %5986
    %5988 = vrot.lane.b32.xlu0 %v5965, 126
    %v5989 = vpop.permute.xlu0 %5988
    %v5998 = vadd.f32 %v5948, %v5975
    %v5999 = vadd.f32 %v5949, %v5977
    %v6000 = vadd.f32 %v5950, %v5979
    %v6001 = vadd.f32 %v5951, %v5981
    %v6002 = vadd.f32 %v5952, %v5983
    %v6003 = vadd.f32 %v5953, %v5985
    %v6004 = vadd.f32 %v5954, %v5987
    %v6005 = vadd.f32 %v5955, %v5989
    %s6006 = sld [smem:[#allocation14 + $0x3]]
    %v6007 = vstv %s6006
    %v6008 = vmul.f32 %v6007, %v5868
    %v6009 = vmul.f32 %v6007, %v5869
    %v6010 = vmul.f32 %v6007, %v5870
    %v6011 = vmul.f32 %v6007, %v5871
    %v6012 = vmul.f32 %v6007, %v5872
    %v6013 = vmul.f32 %v6007, %v5878
    %v6014 = vmul.f32 %v6007, %v5879
    %v6015 = vmul.f32 %v6007, %v5880
    %v6016 = vmul.f32 %v6007, %v5881
    %v6017 = vmul.f32 %v6007, %v5882
    %v6028 = vrot.slane %v6008, 1
    %v6029 = vrot.slane %v6009, 1
    %v6030 = vsel %vm1497, %v6028, %v6029
    %v6031 = vrot.slane %v6010, 1
    %v6032 = vsel %vm1497, %v6029, %v6031
    %v6033 = vrot.slane %v6011, 1
    %v6034 = vsel %vm1497, %v6031, %v6033
    %v6035 = vrot.slane %v6012, 1
    %v6036 = vsel %vm1497, %v6033, %v6035
    %v6037 = vrot.slane %v6013, 1
    %v6038 = vrot.slane %v6014, 1
    %v6039 = vsel %vm1497, %v6037, %v6038
    %v6040 = vrot.slane %v6015, 1
    %v6041 = vsel %vm1497, %v6038, %v6040
    %v6042 = vrot.slane %v6016, 1
    %v6043 = vsel %vm1497, %v6040, %v6042
    %v6044 = vrot.slane %v6017, 1
    %v6045 = vsel %vm1497, %v6042, %v6044
    %v6054 = vadd.f32 %v5998, %v6030
    %v6055 = vadd.f32 %v5999, %v6032
    %v6056 = vadd.f32 %v6000, %v6034
    %v6057 = vadd.f32 %v6001, %v6036
    %v6058 = vadd.f32 %v6002, %v6039
    %v6059 = vadd.f32 %v6003, %v6041
    %v6060 = vadd.f32 %v6004, %v6043
    %v6061 = vadd.f32 %v6005, %v6045
    %s6062 = sld [smem:[#allocation14 + $0x4]]
    %v6063 = vstv %s6062
    %v6064 = vmul.f32 %v6063, %v5868
    %v6065 = vmul.f32 %v6063, %v5869
    %v6066 = vmul.f32 %v6063, %v5870
    %v6067 = vmul.f32 %v6063, %v5871
    %v6068 = vmul.f32 %v6063, %v5872
    %v6069 = vmul.f32 %v6063, %v5878
    %v6070 = vmul.f32 %v6063, %v5879
    %v6071 = vmul.f32 %v6063, %v5880
    %v6072 = vmul.f32 %v6063, %v5881
    %v6073 = vmul.f32 %v6063, %v5882
    %v6084 = vrot.slane %v6064, 1
    %v6085 = vrot.slane %v6065, 1
    %v6086 = vsel %vm1497, %v6084, %v6085
    %v6087 = vrot.slane %v6066, 1
    %v6088 = vsel %vm1497, %v6085, %v6087
    %v6089 = vrot.slane %v6067, 1
    %v6090 = vsel %vm1497, %v6087, %v6089
    %v6091 = vrot.slane %v6068, 1
    %v6092 = vsel %vm1497, %v6089, %v6091
    %v6093 = vrot.slane %v6069, 1
    %v6094 = vrot.slane %v6070, 1
    %v6095 = vsel %vm1497, %v6093, %v6094
    %v6096 = vrot.slane %v6071, 1
    %v6097 = vsel %vm1497, %v6094, %v6096
    %v6098 = vrot.slane %v6072, 1
    %v6099 = vsel %vm1497, %v6096, %v6098
    %v6100 = vrot.slane %v6073, 1
    %v6101 = vsel %vm1497, %v6098, %v6100
    %6102 = vrot.lane.b32.xlu0 %v6086, 127
    %v6103 = vpop.permute.xlu0 %6102
    %6104 = vrot.lane.b32.xlu0 %v6088, 127
    %v6105 = vpop.permute.xlu0 %6104
    %6106 = vrot.lane.b32.xlu0 %v6090, 127
    %v6107 = vpop.permute.xlu0 %6106
    %6108 = vrot.lane.b32.xlu0 %v6092, 127
    %v6109 = vpop.permute.xlu0 %6108
    %6110 = vrot.lane.b32.xlu0 %v6095, 127
    %v6111 = vpop.permute.xlu0 %6110
    %6112 = vrot.lane.b32.xlu0 %v6097, 127
    %v6113 = vpop.permute.xlu0 %6112
    %6114 = vrot.lane.b32.xlu0 %v6099, 127
    %v6115 = vpop.permute.xlu0 %6114
    %6116 = vrot.lane.b32.xlu0 %v6101, 127
    %v6117 = vpop.permute.xlu0 %6116
    %v6126 = vadd.f32 %v6054, %v6103
    %v6127 = vadd.f32 %v6055, %v6105
    %v6128 = vadd.f32 %v6056, %v6107
    %v6129 = vadd.f32 %v6057, %v6109
    %v6130 = vadd.f32 %v6058, %v6111
    %v6131 = vadd.f32 %v6059, %v6113
    %v6132 = vadd.f32 %v6060, %v6115
    %v6133 = vadd.f32 %v6061, %v6117
    %s6134 = sld [smem:[#allocation14 + $0x5]]
    %v6135 = vstv %s6134
    %v6136 = vmul.f32 %v6135, %v5868
    %v6137 = vmul.f32 %v6135, %v5869
    %v6138 = vmul.f32 %v6135, %v5870
    %v6139 = vmul.f32 %v6135, %v5871
    %v6140 = vmul.f32 %v6135, %v5872
    %v6141 = vmul.f32 %v6135, %v5878
    %v6142 = vmul.f32 %v6135, %v5879
    %v6143 = vmul.f32 %v6135, %v5880
    %v6144 = vmul.f32 %v6135, %v5881
    %v6145 = vmul.f32 %v6135, %v5882
    %v6156 = vrot.slane %v6136, 1
    %v6157 = vrot.slane %v6137, 1
    %v6158 = vsel %vm1497, %v6156, %v6157
    %v6159 = vrot.slane %v6138, 1
    %v6160 = vsel %vm1497, %v6157, %v6159
    %v6161 = vrot.slane %v6139, 1
    %v6162 = vsel %vm1497, %v6159, %v6161
    %v6163 = vrot.slane %v6140, 1
    %v6164 = vsel %vm1497, %v6161, %v6163
    %v6165 = vrot.slane %v6141, 1
    %v6166 = vrot.slane %v6142, 1
    %v6167 = vsel %vm1497, %v6165, %v6166
    %v6168 = vrot.slane %v6143, 1
    %v6169 = vsel %vm1497, %v6166, %v6168
    %v6170 = vrot.slane %v6144, 1
    %v6171 = vsel %vm1497, %v6168, %v6170
    %v6172 = vrot.slane %v6145, 1
    %v6173 = vsel %vm1497, %v6170, %v6172
    %6174 = vrot.lane.b32.xlu0 %v6158, 126
    %v6175 = vpop.permute.xlu0 %6174
    %6176 = vrot.lane.b32.xlu0 %v6160, 126
    %v6177 = vpop.permute.xlu0 %6176
    %6178 = vrot.lane.b32.xlu0 %v6162, 126
    %v6179 = vpop.permute.xlu0 %6178
    %6180 = vrot.lane.b32.xlu0 %v6164, 126
    %v6181 = vpop.permute.xlu0 %6180
    %6182 = vrot.lane.b32.xlu0 %v6167, 126
    %v6183 = vpop.permute.xlu0 %6182
    %6184 = vrot.lane.b32.xlu0 %v6169, 126
    %v6185 = vpop.permute.xlu0 %6184
    %6186 = vrot.lane.b32.xlu0 %v6171, 126
    %v6187 = vpop.permute.xlu0 %6186
    %6188 = vrot.lane.b32.xlu0 %v6173, 126
    %v6189 = vpop.permute.xlu0 %6188
    %v6198 = vadd.f32 %v6126, %v6175
    %v6199 = vadd.f32 %v6127, %v6177
    %v6200 = vadd.f32 %v6128, %v6179
    %v6201 = vadd.f32 %v6129, %v6181
    %v6202 = vadd.f32 %v6130, %v6183
    %v6203 = vadd.f32 %v6131, %v6185
    %v6204 = vadd.f32 %v6132, %v6187
    %v6205 = vadd.f32 %v6133, %v6189
    %s6206 = sld [smem:[#allocation14 + $0x6]]
    %v6207 = vstv %s6206
    %v6208 = vmul.f32 %v6207, %v5868
    %v6209 = vmul.f32 %v6207, %v5869
    %v6210 = vmul.f32 %v6207, %v5870
    %v6211 = vmul.f32 %v6207, %v5871
    %v6212 = vmul.f32 %v6207, %v5872
    %v6213 = vmul.f32 %v6207, %v5878
    %v6214 = vmul.f32 %v6207, %v5879
    %v6215 = vmul.f32 %v6207, %v5880
    %v6216 = vmul.f32 %v6207, %v5881
    %v6217 = vmul.f32 %v6207, %v5882
    %v6228 = vrot.slane %v6208, 2
    %v6229 = vrot.slane %v6209, 2
    %v6230 = vsel %vm1698, %v6228, %v6229
    %v6231 = vrot.slane %v6210, 2
    %v6232 = vsel %vm1698, %v6229, %v6231
    %v6233 = vrot.slane %v6211, 2
    %v6234 = vsel %vm1698, %v6231, %v6233
    %v6235 = vrot.slane %v6212, 2
    %v6236 = vsel %vm1698, %v6233, %v6235
    %v6237 = vrot.slane %v6213, 2
    %v6238 = vrot.slane %v6214, 2
    %v6239 = vsel %vm1698, %v6237, %v6238
    %v6240 = vrot.slane %v6215, 2
    %v6241 = vsel %vm1698, %v6238, %v6240
    %v6242 = vrot.slane %v6216, 2
    %v6243 = vsel %vm1698, %v6240, %v6242
    %v6244 = vrot.slane %v6217, 2
    %v6245 = vsel %vm1698, %v6242, %v6244
    %v6254 = vadd.f32 %v6198, %v6230
    %v6255 = vadd.f32 %v6199, %v6232
    %v6256 = vadd.f32 %v6200, %v6234
    %v6257 = vadd.f32 %v6201, %v6236
    %v6258 = vadd.f32 %v6202, %v6239
    %v6259 = vadd.f32 %v6203, %v6241
    %v6260 = vadd.f32 %v6204, %v6243
    %v6261 = vadd.f32 %v6205, %v6245
    %s6262 = sld [smem:[#allocation14 + $0x7]]
    %v6263 = vstv %s6262
    %v6264 = vmul.f32 %v6263, %v5868
    %v6265 = vmul.f32 %v6263, %v5869
    %v6266 = vmul.f32 %v6263, %v5870
    %v6267 = vmul.f32 %v6263, %v5871
    %v6268 = vmul.f32 %v6263, %v5872
    %v6269 = vmul.f32 %v6263, %v5878
    %v6270 = vmul.f32 %v6263, %v5879
    %v6271 = vmul.f32 %v6263, %v5880
    %v6272 = vmul.f32 %v6263, %v5881
    %v6273 = vmul.f32 %v6263, %v5882
    %v6284 = vrot.slane %v6264, 2
    %v6285 = vrot.slane %v6265, 2
    %v6286 = vsel %vm1698, %v6284, %v6285
    %v6287 = vrot.slane %v6266, 2
    %v6288 = vsel %vm1698, %v6285, %v6287
    %v6289 = vrot.slane %v6267, 2
    %v6290 = vsel %vm1698, %v6287, %v6289
    %v6291 = vrot.slane %v6268, 2
    %v6292 = vsel %vm1698, %v6289, %v6291
    %v6293 = vrot.slane %v6269, 2
    %v6294 = vrot.slane %v6270, 2
    %v6295 = vsel %vm1698, %v6293, %v6294
    %v6296 = vrot.slane %v6271, 2
    %v6297 = vsel %vm1698, %v6294, %v6296
    %v6298 = vrot.slane %v6272, 2
    %v6299 = vsel %vm1698, %v6296, %v6298
    %v6300 = vrot.slane %v6273, 2
    %v6301 = vsel %vm1698, %v6298, %v6300
    %6302 = vrot.lane.b32.xlu0 %v6286, 127
    %v6303 = vpop.permute.xlu0 %6302
    %6304 = vrot.lane.b32.xlu0 %v6288, 127
    %v6305 = vpop.permute.xlu0 %6304
    %6306 = vrot.lane.b32.xlu0 %v6290, 127
    %v6307 = vpop.permute.xlu0 %6306
    %6308 = vrot.lane.b32.xlu0 %v6292, 127
    %v6309 = vpop.permute.xlu0 %6308
    %6310 = vrot.lane.b32.xlu0 %v6295, 127
    %v6311 = vpop.permute.xlu0 %6310
    %6312 = vrot.lane.b32.xlu0 %v6297, 127
    %v6313 = vpop.permute.xlu0 %6312
    %6314 = vrot.lane.b32.xlu0 %v6299, 127
    %v6315 = vpop.permute.xlu0 %6314
    %6316 = vrot.lane.b32.xlu0 %v6301, 127
    %v6317 = vpop.permute.xlu0 %6316
    %v6326 = vadd.f32 %v6254, %v6303
    %v6327 = vadd.f32 %v6255, %v6305
    %v6328 = vadd.f32 %v6256, %v6307
    %v6329 = vadd.f32 %v6257, %v6309
    %v6330 = vadd.f32 %v6258, %v6311
    %v6331 = vadd.f32 %v6259, %v6313
    %v6332 = vadd.f32 %v6260, %v6315
    %v6333 = vadd.f32 %v6261, %v6317
    %s6334 = sld [smem:[#allocation14 + $0x8]]
    %v6335 = vstv %s6334
    %v6336 = vmul.f32 %v6335, %v5868
    %v6337 = vmul.f32 %v6335, %v5869
    %v6338 = vmul.f32 %v6335, %v5870
    %v6339 = vmul.f32 %v6335, %v5871
    %v6340 = vmul.f32 %v6335, %v5872
    %v6341 = vmul.f32 %v6335, %v5878
    %v6342 = vmul.f32 %v6335, %v5879
    %v6343 = vmul.f32 %v6335, %v5880
    %v6344 = vmul.f32 %v6335, %v5881
    %v6345 = vmul.f32 %v6335, %v5882
    %v6356 = vrot.slane %v6336, 2
    %v6357 = vrot.slane %v6337, 2
    %v6358 = vsel %vm1698, %v6356, %v6357
    %v6359 = vrot.slane %v6338, 2
    %v6360 = vsel %vm1698, %v6357, %v6359
    %v6361 = vrot.slane %v6339, 2
    %v6362 = vsel %vm1698, %v6359, %v6361
    %v6363 = vrot.slane %v6340, 2
    %v6364 = vsel %vm1698, %v6361, %v6363
    %v6365 = vrot.slane %v6341, 2
    %v6366 = vrot.slane %v6342, 2
    %v6367 = vsel %vm1698, %v6365, %v6366
    %v6368 = vrot.slane %v6343, 2
    %v6369 = vsel %vm1698, %v6366, %v6368
    %v6370 = vrot.slane %v6344, 2
    %v6371 = vsel %vm1698, %v6368, %v6370
    %v6372 = vrot.slane %v6345, 2
    %v6373 = vsel %vm1698, %v6370, %v6372
    %6374 = vrot.lane.b32.xlu0 %v6358, 126
    %v6375 = vpop.permute.xlu0 %6374
    %6376 = vrot.lane.b32.xlu0 %v6360, 126
    %v6377 = vpop.permute.xlu0 %6376
    %6378 = vrot.lane.b32.xlu0 %v6362, 126
    %v6379 = vpop.permute.xlu0 %6378
    %6380 = vrot.lane.b32.xlu0 %v6364, 126
    %v6381 = vpop.permute.xlu0 %6380
    %6382 = vrot.lane.b32.xlu0 %v6367, 126
    %v6383 = vpop.permute.xlu0 %6382
    %6384 = vrot.lane.b32.xlu0 %v6369, 126
    %v6385 = vpop.permute.xlu0 %6384
    %6386 = vrot.lane.b32.xlu0 %v6371, 126
    %v6387 = vpop.permute.xlu0 %6386
    %6388 = vrot.lane.b32.xlu0 %v6373, 126
    %v6389 = vpop.permute.xlu0 %6388
    %v6398 = vadd.f32 %v6326, %v6375
    %v6399 = vadd.f32 %v6327, %v6377
    %v6400 = vadd.f32 %v6328, %v6379
    %v6401 = vadd.f32 %v6329, %v6381
    %v6402 = vadd.f32 %v6330, %v6383
    %v6403 = vadd.f32 %v6331, %v6385
    %v6404 = vadd.f32 %v6332, %v6387
    %v6405 = vadd.f32 %v6333, %v6389
    %s6406 = sld [smem:[#allocation14 + $0x9]]
    %v6407 = vstv %s6406
    %v6408 = vmul.f32 %v6407, %v5873
    %v6409 = vmul.f32 %v6407, %v5874
    %v6410 = vmul.f32 %v6407, %v5875
    %v6411 = vmul.f32 %v6407, %v5876
    %v6412 = vmul.f32 %v6407, %v5883
    %v6413 = vmul.f32 %v6407, %v5884
    %v6414 = vmul.f32 %v6407, %v5885
    %v6415 = vmul.f32 %v6407, %v5886
    %v6416 = vadd.f32 %v6398, %v6408
    %v6417 = vadd.f32 %v6399, %v6409
    %v6418 = vadd.f32 %v6400, %v6410
    %v6419 = vadd.f32 %v6401, %v6411
    %v6420 = vadd.f32 %v6402, %v6412
    %v6421 = vadd.f32 %v6403, %v6413
    %v6422 = vadd.f32 %v6404, %v6414
    %v6423 = vadd.f32 %v6405, %v6415
    %s6424 = sld [smem:[#allocation14 + $0xa]]
    %v6425 = vstv %s6424
    %v6426 = vmul.f32 %v6425, %v5873
    %v6427 = vmul.f32 %v6425, %v5874
    %v6428 = vmul.f32 %v6425, %v5875
    %v6429 = vmul.f32 %v6425, %v5876
    %v6430 = vmul.f32 %v6425, %v5883
    %v6431 = vmul.f32 %v6425, %v5884
    %v6432 = vmul.f32 %v6425, %v5885
    %v6433 = vmul.f32 %v6425, %v5886
    %6442 = vrot.lane.b32.xlu0 %v6426, 127
    %v6443 = vpop.permute.xlu0 %6442
    %6444 = vrot.lane.b32.xlu0 %v6427, 127
    %v6445 = vpop.permute.xlu0 %6444
    %6446 = vrot.lane.b32.xlu0 %v6428, 127
    %v6447 = vpop.permute.xlu0 %6446
    %6448 = vrot.lane.b32.xlu0 %v6429, 127
    %v6449 = vpop.permute.xlu0 %6448
    %6450 = vrot.lane.b32.xlu0 %v6430, 127
    %v6451 = vpop.permute.xlu0 %6450
    %6452 = vrot.lane.b32.xlu0 %v6431, 127
    %v6453 = vpop.permute.xlu0 %6452
    %6454 = vrot.lane.b32.xlu0 %v6432, 127
    %v6455 = vpop.permute.xlu0 %6454
    %6456 = vrot.lane.b32.xlu0 %v6433, 127
    %v6457 = vpop.permute.xlu0 %6456
    %v6466 = vadd.f32 %v6416, %v6443
    %v6467 = vadd.f32 %v6417, %v6445
    %v6468 = vadd.f32 %v6418, %v6447
    %v6469 = vadd.f32 %v6419, %v6449
    %v6470 = vadd.f32 %v6420, %v6451
    %v6471 = vadd.f32 %v6421, %v6453
    %v6472 = vadd.f32 %v6422, %v6455
    %v6473 = vadd.f32 %v6423, %v6457
    %s6474 = sld [smem:[#allocation14 + $0xb]]
    %v6475 = vstv %s6474
    %v6476 = vmul.f32 %v6475, %v5873
    %v6477 = vmul.f32 %v6475, %v5874
    %v6478 = vmul.f32 %v6475, %v5875
    %v6479 = vmul.f32 %v6475, %v5876
    %v6480 = vmul.f32 %v6475, %v5883
    %v6481 = vmul.f32 %v6475, %v5884
    %v6482 = vmul.f32 %v6475, %v5885
    %v6483 = vmul.f32 %v6475, %v5886
    %6492 = vrot.lane.b32.xlu0 %v6476, 126
    %v6493 = vpop.permute.xlu0 %6492
    %6494 = vrot.lane.b32.xlu0 %v6477, 126
    %v6495 = vpop.permute.xlu0 %6494
    %6496 = vrot.lane.b32.xlu0 %v6478, 126
    %v6497 = vpop.permute.xlu0 %6496
    %6498 = vrot.lane.b32.xlu0 %v6479, 126
    %v6499 = vpop.permute.xlu0 %6498
    %6500 = vrot.lane.b32.xlu0 %v6480, 126
    %v6501 = vpop.permute.xlu0 %6500
    %6502 = vrot.lane.b32.xlu0 %v6481, 126
    %v6503 = vpop.permute.xlu0 %6502
    %6504 = vrot.lane.b32.xlu0 %v6482, 126
    %v6505 = vpop.permute.xlu0 %6504
    %6506 = vrot.lane.b32.xlu0 %v6483, 126
    %v6507 = vpop.permute.xlu0 %6506
    %v6516 = vadd.f32 %v6466, %v6493
    %v6517 = vadd.f32 %v6467, %v6495
    %v6518 = vadd.f32 %v6468, %v6497
    %v6519 = vadd.f32 %v6469, %v6499
    %v6520 = vadd.f32 %v6470, %v6501
    %v6521 = vadd.f32 %v6471, %v6503
    %v6522 = vadd.f32 %v6472, %v6505
    %v6523 = vadd.f32 %v6473, %v6507
    %s6524 = sld [smem:[#allocation14 + $0xc]]
    %v6525 = vstv %s6524
    %v6526 = vmul.f32 %v6525, %v5873
    %v6527 = vmul.f32 %v6525, %v5874
    %v6528 = vmul.f32 %v6525, %v5875
    %v6529 = vmul.f32 %v6525, %v5876
    %v6530 = vmul.f32 %v6525, %v5877
    %v6531 = vmul.f32 %v6525, %v5883
    %v6532 = vmul.f32 %v6525, %v5884
    %v6533 = vmul.f32 %v6525, %v5885
    %v6534 = vmul.f32 %v6525, %v5886
    %v6535 = vmul.f32 %v6525, %v5887
    %v6546 = vrot.slane %v6526, 1
    %v6547 = vrot.slane %v6527, 1
    %v6548 = vsel %vm1497, %v6546, %v6547
    %v6549 = vrot.slane %v6528, 1
    %v6550 = vsel %vm1497, %v6547, %v6549
    %v6551 = vrot.slane %v6529, 1
    %v6552 = vsel %vm1497, %v6549, %v6551
    %v6553 = vrot.slane %v6530, 1
    %v6554 = vsel %vm1497, %v6551, %v6553
    %v6555 = vrot.slane %v6531, 1
    %v6556 = vrot.slane %v6532, 1
    %v6557 = vsel %vm1497, %v6555, %v6556
    %v6558 = vrot.slane %v6533, 1
    %v6559 = vsel %vm1497, %v6556, %v6558
    %v6560 = vrot.slane %v6534, 1
    %v6561 = vsel %vm1497, %v6558, %v6560
    %v6562 = vrot.slane %v6535, 1
    %v6563 = vsel %vm1497, %v6560, %v6562
    %v6572 = vadd.f32 %v6516, %v6548
    %v6573 = vadd.f32 %v6517, %v6550
    %v6574 = vadd.f32 %v6518, %v6552
    %v6575 = vadd.f32 %v6519, %v6554
    %v6576 = vadd.f32 %v6520, %v6557
    %v6577 = vadd.f32 %v6521, %v6559
    %v6578 = vadd.f32 %v6522, %v6561
    %v6579 = vadd.f32 %v6523, %v6563
    %s6580 = sld [smem:[#allocation14 + $0xd]]
    %v6581 = vstv %s6580
    %v6582 = vmul.f32 %v6581, %v5873
    %v6583 = vmul.f32 %v6581, %v5874
    %v6584 = vmul.f32 %v6581, %v5875
    %v6585 = vmul.f32 %v6581, %v5876
    %v6586 = vmul.f32 %v6581, %v5877
    %v6587 = vmul.f32 %v6581, %v5883
    %v6588 = vmul.f32 %v6581, %v5884
    %v6589 = vmul.f32 %v6581, %v5885
    %v6590 = vmul.f32 %v6581, %v5886
    %v6591 = vmul.f32 %v6581, %v5887
    %v6602 = vrot.slane %v6582, 1
    %v6603 = vrot.slane %v6583, 1
    %v6604 = vsel %vm1497, %v6602, %v6603
    %v6605 = vrot.slane %v6584, 1
    %v6606 = vsel %vm1497, %v6603, %v6605
    %v6607 = vrot.slane %v6585, 1
    %v6608 = vsel %vm1497, %v6605, %v6607
    %v6609 = vrot.slane %v6586, 1
    %v6610 = vsel %vm1497, %v6607, %v6609
    %v6611 = vrot.slane %v6587, 1
    %v6612 = vrot.slane %v6588, 1
    %v6613 = vsel %vm1497, %v6611, %v6612
    %v6614 = vrot.slane %v6589, 1
    %v6615 = vsel %vm1497, %v6612, %v6614
    %v6616 = vrot.slane %v6590, 1
    %v6617 = vsel %vm1497, %v6614, %v6616
    %v6618 = vrot.slane %v6591, 1
    %v6619 = vsel %vm1497, %v6616, %v6618
    %6620 = vrot.lane.b32.xlu0 %v6604, 127
    %v6621 = vpop.permute.xlu0 %6620
    %6622 = vrot.lane.b32.xlu0 %v6606, 127
    %v6623 = vpop.permute.xlu0 %6622
    %6624 = vrot.lane.b32.xlu0 %v6608, 127
    %v6625 = vpop.permute.xlu0 %6624
    %6626 = vrot.lane.b32.xlu0 %v6610, 127
    %v6627 = vpop.permute.xlu0 %6626
    %6628 = vrot.lane.b32.xlu0 %v6613, 127
    %v6629 = vpop.permute.xlu0 %6628
    %6630 = vrot.lane.b32.xlu0 %v6615, 127
    %v6631 = vpop.permute.xlu0 %6630
    %6632 = vrot.lane.b32.xlu0 %v6617, 127
    %v6633 = vpop.permute.xlu0 %6632
    %6634 = vrot.lane.b32.xlu0 %v6619, 127
    %v6635 = vpop.permute.xlu0 %6634
    %v6644 = vadd.f32 %v6572, %v6621
    %v6645 = vadd.f32 %v6573, %v6623
    %v6646 = vadd.f32 %v6574, %v6625
    %v6647 = vadd.f32 %v6575, %v6627
    %v6648 = vadd.f32 %v6576, %v6629
    %v6649 = vadd.f32 %v6577, %v6631
    %v6650 = vadd.f32 %v6578, %v6633
    %v6651 = vadd.f32 %v6579, %v6635
    %s6652 = sld [smem:[#allocation14 + $0xe]]
    %v6653 = vstv %s6652
    %v6654 = vmul.f32 %v6653, %v5873
    %v6655 = vmul.f32 %v6653, %v5874
    %v6656 = vmul.f32 %v6653, %v5875
    %v6657 = vmul.f32 %v6653, %v5876
    %v6658 = vmul.f32 %v6653, %v5877
    %v6659 = vmul.f32 %v6653, %v5883
    %v6660 = vmul.f32 %v6653, %v5884
    %v6661 = vmul.f32 %v6653, %v5885
    %v6662 = vmul.f32 %v6653, %v5886
    %v6663 = vmul.f32 %v6653, %v5887
    %v6674 = vrot.slane %v6654, 1
    %v6675 = vrot.slane %v6655, 1
    %v6676 = vsel %vm1497, %v6674, %v6675
    %v6677 = vrot.slane %v6656, 1
    %v6678 = vsel %vm1497, %v6675, %v6677
    %v6679 = vrot.slane %v6657, 1
    %v6680 = vsel %vm1497, %v6677, %v6679
    %v6681 = vrot.slane %v6658, 1
    %v6682 = vsel %vm1497, %v6679, %v6681
    %v6683 = vrot.slane %v6659, 1
    %v6684 = vrot.slane %v6660, 1
    %v6685 = vsel %vm1497, %v6683, %v6684
    %v6686 = vrot.slane %v6661, 1
    %v6687 = vsel %vm1497, %v6684, %v6686
    %v6688 = vrot.slane %v6662, 1
    %v6689 = vsel %vm1497, %v6686, %v6688
    %v6690 = vrot.slane %v6663, 1
    %v6691 = vsel %vm1497, %v6688, %v6690
    %6692 = vrot.lane.b32.xlu0 %v6676, 126
    %v6693 = vpop.permute.xlu0 %6692
    %6694 = vrot.lane.b32.xlu0 %v6678, 126
    %v6695 = vpop.permute.xlu0 %6694
    %6696 = vrot.lane.b32.xlu0 %v6680, 126
    %v6697 = vpop.permute.xlu0 %6696
    %6698 = vrot.lane.b32.xlu0 %v6682, 126
    %v6699 = vpop.permute.xlu0 %6698
    %6700 = vrot.lane.b32.xlu0 %v6685, 126
    %v6701 = vpop.permute.xlu0 %6700
    %6702 = vrot.lane.b32.xlu0 %v6687, 126
    %v6703 = vpop.permute.xlu0 %6702
    %6704 = vrot.lane.b32.xlu0 %v6689, 126
    %v6705 = vpop.permute.xlu0 %6704
    %6706 = vrot.lane.b32.xlu0 %v6691, 126
    %v6707 = vpop.permute.xlu0 %6706
    %v6716 = vadd.f32 %v6644, %v6693
    %v6717 = vadd.f32 %v6645, %v6695
    %v6718 = vadd.f32 %v6646, %v6697
    %v6719 = vadd.f32 %v6647, %v6699
    %v6720 = vadd.f32 %v6648, %v6701
    %v6721 = vadd.f32 %v6649, %v6703
    %v6722 = vadd.f32 %v6650, %v6705
    %v6723 = vadd.f32 %v6651, %v6707
    %s6724 = sld [smem:[#allocation14 + $0xf]]
    %v6725 = vstv %s6724
    %v6726 = vmul.f32 %v6725, %v5873
    %v6727 = vmul.f32 %v6725, %v5874
    %v6728 = vmul.f32 %v6725, %v5875
    %v6729 = vmul.f32 %v6725, %v5876
    %v6730 = vmul.f32 %v6725, %v5877
    %v6731 = vmul.f32 %v6725, %v5883
    %v6732 = vmul.f32 %v6725, %v5884
    %v6733 = vmul.f32 %v6725, %v5885
    %v6734 = vmul.f32 %v6725, %v5886
    %v6735 = vmul.f32 %v6725, %v5887
    %v6746 = vrot.slane %v6726, 2
    %v6747 = vrot.slane %v6727, 2
    %v6748 = vsel %vm1698, %v6746, %v6747
    %v6749 = vrot.slane %v6728, 2
    %v6750 = vsel %vm1698, %v6747, %v6749
    %v6751 = vrot.slane %v6729, 2
    %v6752 = vsel %vm1698, %v6749, %v6751
    %v6753 = vrot.slane %v6730, 2
    %v6754 = vsel %vm1698, %v6751, %v6753
    %v6755 = vrot.slane %v6731, 2
    %v6756 = vrot.slane %v6732, 2
    %v6757 = vsel %vm1698, %v6755, %v6756
    %v6758 = vrot.slane %v6733, 2
    %v6759 = vsel %vm1698, %v6756, %v6758
    %v6760 = vrot.slane %v6734, 2
    %v6761 = vsel %vm1698, %v6758, %v6760
    %v6762 = vrot.slane %v6735, 2
    %v6763 = vsel %vm1698, %v6760, %v6762
    %v6772 = vadd.f32 %v6716, %v6748
    %v6773 = vadd.f32 %v6717, %v6750
    %v6774 = vadd.f32 %v6718, %v6752
    %v6775 = vadd.f32 %v6719, %v6754
    %v6776 = vadd.f32 %v6720, %v6757
    %v6777 = vadd.f32 %v6721, %v6759
    %v6778 = vadd.f32 %v6722, %v6761
    %v6779 = vadd.f32 %v6723, %v6763
    %s6780 = sld [smem:[#allocation14 + $0x10]]
    %v6781 = vstv %s6780
    %v6782 = vmul.f32 %v6781, %v5873
    %v6783 = vmul.f32 %v6781, %v5874
    %v6784 = vmul.f32 %v6781, %v5875
    %v6785 = vmul.f32 %v6781, %v5876
    %v6786 = vmul.f32 %v6781, %v5877
    %v6787 = vmul.f32 %v6781, %v5883
    %v6788 = vmul.f32 %v6781, %v5884
    %v6789 = vmul.f32 %v6781, %v5885
    %v6790 = vmul.f32 %v6781, %v5886
    %v6791 = vmul.f32 %v6781, %v5887
    %v6802 = vrot.slane %v6782, 2
    %v6803 = vrot.slane %v6783, 2
    %v6804 = vsel %vm1698, %v6802, %v6803
    %v6805 = vrot.slane %v6784, 2
    %v6806 = vsel %vm1698, %v6803, %v6805
    %v6807 = vrot.slane %v6785, 2
    %v6808 = vsel %vm1698, %v6805, %v6807
    %v6809 = vrot.slane %v6786, 2
    %v6810 = vsel %vm1698, %v6807, %v6809
    %v6811 = vrot.slane %v6787, 2
    %v6812 = vrot.slane %v6788, 2
    %v6813 = vsel %vm1698, %v6811, %v6812
    %v6814 = vrot.slane %v6789, 2
    %v6815 = vsel %vm1698, %v6812, %v6814
    %v6816 = vrot.slane %v6790, 2
    %v6817 = vsel %vm1698, %v6814, %v6816
    %v6818 = vrot.slane %v6791, 2
    %v6819 = vsel %vm1698, %v6816, %v6818
    %6820 = vrot.lane.b32.xlu0 %v6804, 127
    %v6821 = vpop.permute.xlu0 %6820
    %6822 = vrot.lane.b32.xlu0 %v6806, 127
    %v6823 = vpop.permute.xlu0 %6822
    %6824 = vrot.lane.b32.xlu0 %v6808, 127
    %v6825 = vpop.permute.xlu0 %6824
    %6826 = vrot.lane.b32.xlu0 %v6810, 127
    %v6827 = vpop.permute.xlu0 %6826
    %6828 = vrot.lane.b32.xlu0 %v6813, 127
    %v6829 = vpop.permute.xlu0 %6828
    %6830 = vrot.lane.b32.xlu0 %v6815, 127
    %v6831 = vpop.permute.xlu0 %6830
    %6832 = vrot.lane.b32.xlu0 %v6817, 127
    %v6833 = vpop.permute.xlu0 %6832
    %6834 = vrot.lane.b32.xlu0 %v6819, 127
    %v6835 = vpop.permute.xlu0 %6834
    %v6844 = vadd.f32 %v6772, %v6821
    %v6845 = vadd.f32 %v6773, %v6823
    %v6846 = vadd.f32 %v6774, %v6825
    %v6847 = vadd.f32 %v6775, %v6827
    %v6848 = vadd.f32 %v6776, %v6829
    %v6849 = vadd.f32 %v6777, %v6831
    %v6850 = vadd.f32 %v6778, %v6833
    %v6851 = vadd.f32 %v6779, %v6835
    %s6852 = sld [smem:[#allocation14 + $0x11]]
    %v6853 = vstv %s6852
    %v6854 = vmul.f32 %v6853, %v5873
    %v6855 = vmul.f32 %v6853, %v5874
    %v6856 = vmul.f32 %v6853, %v5875
    %v6857 = vmul.f32 %v6853, %v5876
    %v6858 = vmul.f32 %v6853, %v5877
    %v6859 = vmul.f32 %v6853, %v5883
    %v6860 = vmul.f32 %v6853, %v5884
    %v6861 = vmul.f32 %v6853, %v5885
    %v6862 = vmul.f32 %v6853, %v5886
    %v6863 = vmul.f32 %v6853, %v5887
    %v6874 = vrot.slane %v6854, 2
    %v6875 = vrot.slane %v6855, 2
    %v6876 = vsel %vm1698, %v6874, %v6875
    %v6877 = vrot.slane %v6856, 2
    %v6878 = vsel %vm1698, %v6875, %v6877
    %v6879 = vrot.slane %v6857, 2
    %v6880 = vsel %vm1698, %v6877, %v6879
    %v6881 = vrot.slane %v6858, 2
    %v6882 = vsel %vm1698, %v6879, %v6881
    %v6883 = vrot.slane %v6859, 2
    %v6884 = vrot.slane %v6860, 2
    %v6885 = vsel %vm1698, %v6883, %v6884
    %v6886 = vrot.slane %v6861, 2
    %v6887 = vsel %vm1698, %v6884, %v6886
    %v6888 = vrot.slane %v6862, 2
    %v6889 = vsel %vm1698, %v6886, %v6888
    %v6890 = vrot.slane %v6863, 2
    %v6891 = vsel %vm1698, %v6888, %v6890
    %6892 = vrot.lane.b32.xlu0 %v6876, 126
    %v6893 = vpop.permute.xlu0 %6892
    %6894 = vrot.lane.b32.xlu0 %v6878, 126
    %v6895 = vpop.permute.xlu0 %6894
    %6896 = vrot.lane.b32.xlu0 %v6880, 126
    %v6897 = vpop.permute.xlu0 %6896
    %6898 = vrot.lane.b32.xlu0 %v6882, 126
    %v6899 = vpop.permute.xlu0 %6898
    %6900 = vrot.lane.b32.xlu0 %v6885, 126
    %v6901 = vpop.permute.xlu0 %6900
    %6902 = vrot.lane.b32.xlu0 %v6887, 126
    %v6903 = vpop.permute.xlu0 %6902
    %6904 = vrot.lane.b32.xlu0 %v6889, 126
    %v6905 = vpop.permute.xlu0 %6904
    %6906 = vrot.lane.b32.xlu0 %v6891, 126
    %v6907 = vpop.permute.xlu0 %6906
    %v6916 = vadd.f32 %v6844, %v6893
    %v6917 = vadd.f32 %v6845, %v6895
    %v6918 = vadd.f32 %v6846, %v6897
    %v6919 = vadd.f32 %v6847, %v6899
    %v6920 = vadd.f32 %v6848, %v6901
    %v6921 = vadd.f32 %v6849, %v6903
    %v6922 = vadd.f32 %v6850, %v6905
    %v6923 = vadd.f32 %v6851, %v6907
    %s6924 = sld [smem:[#allocation15]]
    %v6925 = vstv %s6924
    %v6926 = vadd.f32 %v6916, %v6925
    %v6927 = vadd.f32 %v6917, %v6925
    %v6928 = vadd.f32 %v6918, %v6925
    %v6929 = vadd.f32 %v6919, %v6925
    %v6930 = vadd.f32 %v6920, %v6925
    %v6931 = vadd.f32 %v6921, %v6925
    %v6932 = vadd.f32 %v6922, %v6925
    %v6933 = vadd.f32 %v6923, %v6925
    %v6934 = vsel %vm3441, %v6926, 0.0
    %v6935 = vsel %vm3441, %v6927, 0.0
    %v6936 = vadd.f32 %v6934, %v6935
    %v6937 = vsel %vm3441, %v6928, 0.0
    %v6938 = vadd.f32 %v6936, %v6937
    %v6939 = vsel %vm3441, %v6929, 0.0
    %v6940 = vadd.f32 %v6938, %v6939
    %v6941 = vsel %vm3441, %v6930, 0.0
    %v6942 = vadd.f32 %v6940, %v6941
    %v6943 = vsel %vm3441, %v6931, 0.0
    %v6944 = vadd.f32 %v6942, %v6943
    %v6945 = vsel %vm3441, %v6932, 0.0
    %v6946 = vadd.f32 %v6944, %v6945
    %v6947 = vsel %vm3441, %v6933, 0.0
    %v6948 = vadd.f32 %v6946, %v6947
    %6949 = vadd.xlane.f32.xlu0 %v6948
    %v6950 = vpop.xlane.xlu0 %6949
    %v6951 = vrot.slane %v6950, 4
    %v6952 = vadd.f32 %v6950, %v6951
    %v6953 = vrot.slane %v6952, 2
    %v6954 = vadd.f32 %v6952, %v6953
    %v6955 = vrot.slane %v6954, 1
    %v6956 = vadd.f32 %v6954, %v6955
    %s6957 = vtos %v6956
    %v6958 = vstv %s6957
    %v6959 = vmul.f32 %v6926, %v6926
    %v6960 = vmul.f32 %v6927, %v6927
    %v6961 = vmul.f32 %v6928, %v6928
    %v6962 = vmul.f32 %v6929, %v6929
    %v6963 = vmul.f32 %v6930, %v6930
    %v6964 = vmul.f32 %v6931, %v6931
    %v6965 = vmul.f32 %v6932, %v6932
    %v6966 = vmul.f32 %v6933, %v6933
    %v6967 = vsel %vm3441, %v6959, 0.0
    %v6968 = vsel %vm3441, %v6960, 0.0
    %v6969 = vadd.f32 %v6967, %v6968
    %v6970 = vsel %vm3441, %v6961, 0.0
    %v6971 = vadd.f32 %v6969, %v6970
    %v6972 = vsel %vm3441, %v6962, 0.0
    %v6973 = vadd.f32 %v6971, %v6972
    %v6974 = vsel %vm3441, %v6963, 0.0
    %v6975 = vadd.f32 %v6973, %v6974
    %v6976 = vsel %vm3441, %v6964, 0.0
    %v6977 = vadd.f32 %v6975, %v6976
    %v6978 = vsel %vm3441, %v6965, 0.0
    %v6979 = vadd.f32 %v6977, %v6978
    %v6980 = vsel %vm3441, %v6966, 0.0
    %v6981 = vadd.f32 %v6979, %v6980
    %6982 = vadd.xlane.f32.xlu0 %v6981
    %v6983 = vpop.xlane.xlu0 %6982
    %v6984 = vrot.slane %v6983, 4
    %v6985 = vadd.f32 %v6983, %v6984
    %v6986 = vrot.slane %v6985, 2
    %v6987 = vadd.f32 %v6985, %v6986
    %v6988 = vrot.slane %v6987, 1
    %v6989 = vadd.f32 %v6987, %v6988
    %s6990 = vtos %v6989
    %v6991 = vstv %s6990
    %v6992 = vmul.f32 %v6958, 0.00048828125
    %v6993 = vmul.f32 %v6991, 0.00048828125
    %v6994 = vmul.f32 %v6992, %v6992
    %v6995 = vsub.f32 %v6993, %v6994
    %v6996 = vsub.f32 %v6926, %v6992
    %v6997 = vsub.f32 %v6927, %v6992
    %v6998 = vsub.f32 %v6928, %v6992
    %v6999 = vsub.f32 %v6929, %v6992
    %v7000 = vsub.f32 %v6930, %v6992
    %v7001 = vsub.f32 %v6931, %v6992
    %v7002 = vsub.f32 %v6932, %v6992
    %v7003 = vsub.f32 %v6933, %v6992
    %v7004 = vadd.f32 %v6995, 1e-05
    %v7005 = vrsqrt.pop %v7004
    %v7006 = vmul.f32 %v6996, %v7005
    %v7007 = vmul.f32 %v6997, %v7005
    %v7008 = vmul.f32 %v6998, %v7005
    %v7009 = vmul.f32 %v6999, %v7005
    %v7010 = vmul.f32 %v7000, %v7005
    %v7011 = vmul.f32 %v7001, %v7005
    %v7012 = vmul.f32 %v7002, %v7005
    %v7013 = vmul.f32 %v7003, %v7005
    %s7014 = sld [smem:[#allocation17]]
    %v7015 = vstv %s7014
    %v7016 = vmul.f32 %v7006, %v7015
    %v7017 = vmul.f32 %v7007, %v7015
    %v7018 = vmul.f32 %v7008, %v7015
    %v7019 = vmul.f32 %v7009, %v7015
    %v7020 = vmul.f32 %v7010, %v7015
    %v7021 = vmul.f32 %v7011, %v7015
    %v7022 = vmul.f32 %v7012, %v7015
    %v7023 = vmul.f32 %v7013, %v7015
    %s7024 = sld [smem:[#allocation18]]
    %v7025 = vstv %s7024
    %v7026 = vadd.f32 %v7016, %v7025
    %v7027 = vadd.f32 %v7017, %v7025
    %v7028 = vadd.f32 %v7018, %v7025
    %v7029 = vadd.f32 %v7019, %v7025
    %v7030 = vadd.f32 %v7020, %v7025
    %v7031 = vadd.f32 %v7021, %v7025
    %v7032 = vadd.f32 %v7022, %v7025
    %v7033 = vadd.f32 %v7023, %v7025
    %v7034 = vmax.f32 %v7026, 0.0
    %v7035 = vmax.f32 %v7027, 0.0
    %v7036 = vmax.f32 %v7028, 0.0
    %v7037 = vmax.f32 %v7029, 0.0
    %v7038 = vmax.f32 %v7030, 0.0
    %v7039 = vmax.f32 %v7031, 0.0
    %v7040 = vmax.f32 %v7032, 0.0
    %v7041 = vmax.f32 %v7033, 0.0
    %s7042 = sld [smem:[#allocation14 + $0x12]]
    %v7043 = vstv %s7042
    %v7044 = vmul.f32 %v7043, %v5868
    %v7045 = vmul.f32 %v7043, %v5869
    %v7046 = vmul.f32 %v7043, %v5870
    %v7047 = vmul.f32 %v7043, %v5871
    %v7048 = vmul.f32 %v7043, %v5878
    %v7049 = vmul.f32 %v7043, %v5879
    %v7050 = vmul.f32 %v7043, %v5880
    %v7051 = vmul.f32 %v7043, %v5881
    %v7052 = vadd.f32 %v7044, 0.0
    %v7053 = vadd.f32 %v7045, 0.0
    %v7054 = vadd.f32 %v7046, 0.0
    %v7055 = vadd.f32 %v7047, 0.0
    %v7056 = vadd.f32 %v7048, 0.0
    %v7057 = vadd.f32 %v7049, 0.0
    %v7058 = vadd.f32 %v7050, 0.0
    %v7059 = vadd.f32 %v7051, 0.0
    %s7060 = sld [smem:[#allocation14 + $0x13]]
    %v7061 = vstv %s7060
    %v7062 = vmul.f32 %v7061, %v5868
    %v7063 = vmul.f32 %v7061, %v5869
    %v7064 = vmul.f32 %v7061, %v5870
    %v7065 = vmul.f32 %v7061, %v5871
    %v7066 = vmul.f32 %v7061, %v5878
    %v7067 = vmul.f32 %v7061, %v5879
    %v7068 = vmul.f32 %v7061, %v5880
    %v7069 = vmul.f32 %v7061, %v5881
    %7078 = vrot.lane.b32.xlu0 %v7062, 127
    %v7079 = vpop.permute.xlu0 %7078
    %7080 = vrot.lane.b32.xlu0 %v7063, 127
    %v7081 = vpop.permute.xlu0 %7080
    %7082 = vrot.lane.b32.xlu0 %v7064, 127
    %v7083 = vpop.permute.xlu0 %7082
    %7084 = vrot.lane.b32.xlu0 %v7065, 127
    %v7085 = vpop.permute.xlu0 %7084
    %7086 = vrot.lane.b32.xlu0 %v7066, 127
    %v7087 = vpop.permute.xlu0 %7086
    %7088 = vrot.lane.b32.xlu0 %v7067, 127
    %v7089 = vpop.permute.xlu0 %7088
    %7090 = vrot.lane.b32.xlu0 %v7068, 127
    %v7091 = vpop.permute.xlu0 %7090
    %7092 = vrot.lane.b32.xlu0 %v7069, 127
    %v7093 = vpop.permute.xlu0 %7092
    %v7102 = vadd.f32 %v7052, %v7079
    %v7103 = vadd.f32 %v7053, %v7081
    %v7104 = vadd.f32 %v7054, %v7083
    %v7105 = vadd.f32 %v7055, %v7085
    %v7106 = vadd.f32 %v7056, %v7087
    %v7107 = vadd.f32 %v7057, %v7089
    %v7108 = vadd.f32 %v7058, %v7091
    %v7109 = vadd.f32 %v7059, %v7093
    %s7110 = sld [smem:[#allocation14 + $0x14]]
    %v7111 = vstv %s7110
    %v7112 = vmul.f32 %v7111, %v5868
    %v7113 = vmul.f32 %v7111, %v5869
    %v7114 = vmul.f32 %v7111, %v5870
    %v7115 = vmul.f32 %v7111, %v5871
    %v7116 = vmul.f32 %v7111, %v5878
    %v7117 = vmul.f32 %v7111, %v5879
    %v7118 = vmul.f32 %v7111, %v5880
    %v7119 = vmul.f32 %v7111, %v5881
    %7128 = vrot.lane.b32.xlu0 %v7112, 126
    %v7129 = vpop.permute.xlu0 %7128
    %7130 = vrot.lane.b32.xlu0 %v7113, 126
    %v7131 = vpop.permute.xlu0 %7130
    %7132 = vrot.lane.b32.xlu0 %v7114, 126
    %v7133 = vpop.permute.xlu0 %7132
    %7134 = vrot.lane.b32.xlu0 %v7115, 126
    %v7135 = vpop.permute.xlu0 %7134
    %7136 = vrot.lane.b32.xlu0 %v7116, 126
    %v7137 = vpop.permute.xlu0 %7136
    %7138 = vrot.lane.b32.xlu0 %v7117, 126
    %v7139 = vpop.permute.xlu0 %7138
    %7140 = vrot.lane.b32.xlu0 %v7118, 126
    %v7141 = vpop.permute.xlu0 %7140
    %7142 = vrot.lane.b32.xlu0 %v7119, 126
    %v7143 = vpop.permute.xlu0 %7142
    %v7152 = vadd.f32 %v7102, %v7129
    %v7153 = vadd.f32 %v7103, %v7131
    %v7154 = vadd.f32 %v7104, %v7133
    %v7155 = vadd.f32 %v7105, %v7135
    %v7156 = vadd.f32 %v7106, %v7137
    %v7157 = vadd.f32 %v7107, %v7139
    %v7158 = vadd.f32 %v7108, %v7141
    %v7159 = vadd.f32 %v7109, %v7143
    %s7160 = sld [smem:[#allocation14 + $0x15]]
    %v7161 = vstv %s7160
    %v7162 = vmul.f32 %v7161, %v5868
    %v7163 = vmul.f32 %v7161, %v5869
    %v7164 = vmul.f32 %v7161, %v5870
    %v7165 = vmul.f32 %v7161, %v5871
    %v7166 = vmul.f32 %v7161, %v5872
    %v7167 = vmul.f32 %v7161, %v5878
    %v7168 = vmul.f32 %v7161, %v5879
    %v7169 = vmul.f32 %v7161, %v5880
    %v7170 = vmul.f32 %v7161, %v5881
    %v7171 = vmul.f32 %v7161, %v5882
    %v7182 = vrot.slane %v7162, 1
    %v7183 = vrot.slane %v7163, 1
    %v7184 = vsel %vm1497, %v7182, %v7183
    %v7185 = vrot.slane %v7164, 1
    %v7186 = vsel %vm1497, %v7183, %v7185
    %v7187 = vrot.slane %v7165, 1
    %v7188 = vsel %vm1497, %v7185, %v7187
    %v7189 = vrot.slane %v7166, 1
    %v7190 = vsel %vm1497, %v7187, %v7189
    %v7191 = vrot.slane %v7167, 1
    %v7192 = vrot.slane %v7168, 1
    %v7193 = vsel %vm1497, %v7191, %v7192
    %v7194 = vrot.slane %v7169, 1
    %v7195 = vsel %vm1497, %v7192, %v7194
    %v7196 = vrot.slane %v7170, 1
    %v7197 = vsel %vm1497, %v7194, %v7196
    %v7198 = vrot.slane %v7171, 1
    %v7199 = vsel %vm1497, %v7196, %v7198
    %v7208 = vadd.f32 %v7152, %v7184
    %v7209 = vadd.f32 %v7153, %v7186
    %v7210 = vadd.f32 %v7154, %v7188
    %v7211 = vadd.f32 %v7155, %v7190
    %v7212 = vadd.f32 %v7156, %v7193
    %v7213 = vadd.f32 %v7157, %v7195
    %v7214 = vadd.f32 %v7158, %v7197
    %v7215 = vadd.f32 %v7159, %v7199
    %s7216 = sld [smem:[#allocation14 + $0x16]]
    %v7217 = vstv %s7216
    %v7218 = vmul.f32 %v7217, %v5868
    %v7219 = vmul.f32 %v7217, %v5869
    %v7220 = vmul.f32 %v7217, %v5870
    %v7221 = vmul.f32 %v7217, %v5871
    %v7222 = vmul.f32 %v7217, %v5872
    %v7223 = vmul.f32 %v7217, %v5878
    %v7224 = vmul.f32 %v7217, %v5879
    %v7225 = vmul.f32 %v7217, %v5880
    %v7226 = vmul.f32 %v7217, %v5881
    %v7227 = vmul.f32 %v7217, %v5882
    %v7238 = vrot.slane %v7218, 1
    %v7239 = vrot.slane %v7219, 1
    %v7240 = vsel %vm1497, %v7238, %v7239
    %v7241 = vrot.slane %v7220, 1
    %v7242 = vsel %vm1497, %v7239, %v7241
    %v7243 = vrot.slane %v7221, 1
    %v7244 = vsel %vm1497, %v7241, %v7243
    %v7245 = vrot.slane %v7222, 1
    %v7246 = vsel %vm1497, %v7243, %v7245
    %v7247 = vrot.slane %v7223, 1
    %v7248 = vrot.slane %v7224, 1
    %v7249 = vsel %vm1497, %v7247, %v7248
    %v7250 = vrot.slane %v7225, 1
    %v7251 = vsel %vm1497, %v7248, %v7250
    %v7252 = vrot.slane %v7226, 1
    %v7253 = vsel %vm1497, %v7250, %v7252
    %v7254 = vrot.slane %v7227, 1
    %v7255 = vsel %vm1497, %v7252, %v7254
    %7256 = vrot.lane.b32.xlu0 %v7240, 127
    %v7257 = vpop.permute.xlu0 %7256
    %7258 = vrot.lane.b32.xlu0 %v7242, 127
    %v7259 = vpop.permute.xlu0 %7258
    %7260 = vrot.lane.b32.xlu0 %v7244, 127
    %v7261 = vpop.permute.xlu0 %7260
    %7262 = vrot.lane.b32.xlu0 %v7246, 127
    %v7263 = vpop.permute.xlu0 %7262
    %7264 = vrot.lane.b32.xlu0 %v7249, 127
    %v7265 = vpop.permute.xlu0 %7264
    %7266 = vrot.lane.b32.xlu0 %v7251, 127
    %v7267 = vpop.permute.xlu0 %7266
    %7268 = vrot.lane.b32.xlu0 %v7253, 127
    %v7269 = vpop.permute.xlu0 %7268
    %7270 = vrot.lane.b32.xlu0 %v7255, 127
    %v7271 = vpop.permute.xlu0 %7270
    %v7280 = vadd.f32 %v7208, %v7257
    %v7281 = vadd.f32 %v7209, %v7259
    %v7282 = vadd.f32 %v7210, %v7261
    %v7283 = vadd.f32 %v7211, %v7263
    %v7284 = vadd.f32 %v7212, %v7265
    %v7285 = vadd.f32 %v7213, %v7267
    %v7286 = vadd.f32 %v7214, %v7269
    %v7287 = vadd.f32 %v7215, %v7271
    %s7288 = sld [smem:[#allocation14 + $0x17]]
    %v7289 = vstv %s7288
    %v7290 = vmul.f32 %v7289, %v5868
    %v7291 = vmul.f32 %v7289, %v5869
    %v7292 = vmul.f32 %v7289, %v5870
    %v7293 = vmul.f32 %v7289, %v5871
    %v7294 = vmul.f32 %v7289, %v5872
    %v7295 = vmul.f32 %v7289, %v5878
    %v7296 = vmul.f32 %v7289, %v5879
    %v7297 = vmul.f32 %v7289, %v5880
    %v7298 = vmul.f32 %v7289, %v5881
    %v7299 = vmul.f32 %v7289, %v5882
    %v7310 = vrot.slane %v7290, 1
    %v7311 = vrot.slane %v7291, 1
    %v7312 = vsel %vm1497, %v7310, %v7311
    %v7313 = vrot.slane %v7292, 1
    %v7314 = vsel %vm1497, %v7311, %v7313
    %v7315 = vrot.slane %v7293, 1
    %v7316 = vsel %vm1497, %v7313, %v7315
    %v7317 = vrot.slane %v7294, 1
    %v7318 = vsel %vm1497, %v7315, %v7317
    %v7319 = vrot.slane %v7295, 1
    %v7320 = vrot.slane %v7296, 1
    %v7321 = vsel %vm1497, %v7319, %v7320
    %v7322 = vrot.slane %v7297, 1
    %v7323 = vsel %vm1497, %v7320, %v7322
    %v7324 = vrot.slane %v7298, 1
    %v7325 = vsel %vm1497, %v7322, %v7324
    %v7326 = vrot.slane %v7299, 1
    %v7327 = vsel %vm1497, %v7324, %v7326
    %7328 = vrot.lane.b32.xlu0 %v7312, 126
    %v7329 = vpop.permute.xlu0 %7328
    %7330 = vrot.lane.b32.xlu0 %v7314, 126
    %v7331 = vpop.permute.xlu0 %7330
    %7332 = vrot.lane.b32.xlu0 %v7316, 126
    %v7333 = vpop.permute.xlu0 %7332
    %7334 = vrot.lane.b32.xlu0 %v7318, 126
    %v7335 = vpop.permute.xlu0 %7334
    %7336 = vrot.lane.b32.xlu0 %v7321, 126
    %v7337 = vpop.permute.xlu0 %7336
    %7338 = vrot.lane.b32.xlu0 %v7323, 126
    %v7339 = vpop.permute.xlu0 %7338
    %7340 = vrot.lane.b32.xlu0 %v7325, 126
    %v7341 = vpop.permute.xlu0 %7340
    %7342 = vrot.lane.b32.xlu0 %v7327, 126
    %v7343 = vpop.permute.xlu0 %7342
    %v7352 = vadd.f32 %v7280, %v7329
    %v7353 = vadd.f32 %v7281, %v7331
    %v7354 = vadd.f32 %v7282, %v7333
    %v7355 = vadd.f32 %v7283, %v7335
    %v7356 = vadd.f32 %v7284, %v7337
    %v7357 = vadd.f32 %v7285, %v7339
    %v7358 = vadd.f32 %v7286, %v7341
    %v7359 = vadd.f32 %v7287, %v7343
    %s7360 = sld [smem:[#allocation14 + $0x18]]
    %v7361 = vstv %s7360
    %v7362 = vmul.f32 %v7361, %v5868
    %v7363 = vmul.f32 %v7361, %v5869
    %v7364 = vmul.f32 %v7361, %v5870
    %v7365 = vmul.f32 %v7361, %v5871
    %v7366 = vmul.f32 %v7361, %v5872
    %v7367 = vmul.f32 %v7361, %v5878
    %v7368 = vmul.f32 %v7361, %v5879
    %v7369 = vmul.f32 %v7361, %v5880
    %v7370 = vmul.f32 %v7361, %v5881
    %v7371 = vmul.f32 %v7361, %v5882
    %v7382 = vrot.slane %v7362, 2
    %v7383 = vrot.slane %v7363, 2
    %v7384 = vsel %vm1698, %v7382, %v7383
    %v7385 = vrot.slane %v7364, 2
    %v7386 = vsel %vm1698, %v7383, %v7385
    %v7387 = vrot.slane %v7365, 2
    %v7388 = vsel %vm1698, %v7385, %v7387
    %v7389 = vrot.slane %v7366, 2
    %v7390 = vsel %vm1698, %v7387, %v7389
    %v7391 = vrot.slane %v7367, 2
    %v7392 = vrot.slane %v7368, 2
    %v7393 = vsel %vm1698, %v7391, %v7392
    %v7394 = vrot.slane %v7369, 2
    %v7395 = vsel %vm1698, %v7392, %v7394
    %v7396 = vrot.slane %v7370, 2
    %v7397 = vsel %vm1698, %v7394, %v7396
    %v7398 = vrot.slane %v7371, 2
    %v7399 = vsel %vm1698, %v7396, %v7398
    %v7408 = vadd.f32 %v7352, %v7384
    %v7409 = vadd.f32 %v7353, %v7386
    %v7410 = vadd.f32 %v7354, %v7388
    %v7411 = vadd.f32 %v7355, %v7390
    %v7412 = vadd.f32 %v7356, %v7393
    %v7413 = vadd.f32 %v7357, %v7395
    %v7414 = vadd.f32 %v7358, %v7397
    %v7415 = vadd.f32 %v7359, %v7399
    %s7416 = sld [smem:[#allocation14 + $0x19]]
    %v7417 = vstv %s7416
    %v7418 = vmul.f32 %v7417, %v5868
    %v7419 = vmul.f32 %v7417, %v5869
    %v7420 = vmul.f32 %v7417, %v5870
    %v7421 = vmul.f32 %v7417, %v5871
    %v7422 = vmul.f32 %v7417, %v5872
    %v7423 = vmul.f32 %v7417, %v5878
    %v7424 = vmul.f32 %v7417, %v5879
    %v7425 = vmul.f32 %v7417, %v5880
    %v7426 = vmul.f32 %v7417, %v5881
    %v7427 = vmul.f32 %v7417, %v5882
    %v7438 = vrot.slane %v7418, 2
    %v7439 = vrot.slane %v7419, 2
    %v7440 = vsel %vm1698, %v7438, %v7439
    %v7441 = vrot.slane %v7420, 2
    %v7442 = vsel %vm1698, %v7439, %v7441
    %v7443 = vrot.slane %v7421, 2
    %v7444 = vsel %vm1698, %v7441, %v7443
    %v7445 = vrot.slane %v7422, 2
    %v7446 = vsel %vm1698, %v7443, %v7445
    %v7447 = vrot.slane %v7423, 2
    %v7448 = vrot.slane %v7424, 2
    %v7449 = vsel %vm1698, %v7447, %v7448
    %v7450 = vrot.slane %v7425, 2
    %v7451 = vsel %vm1698, %v7448, %v7450
    %v7452 = vrot.slane %v7426, 2
    %v7453 = vsel %vm1698, %v7450, %v7452
    %v7454 = vrot.slane %v7427, 2
    %v7455 = vsel %vm1698, %v7452, %v7454
    %7456 = vrot.lane.b32.xlu0 %v7440, 127
    %v7457 = vpop.permute.xlu0 %7456
    %7458 = vrot.lane.b32.xlu0 %v7442, 127
    %v7459 = vpop.permute.xlu0 %7458
    %7460 = vrot.lane.b32.xlu0 %v7444, 127
    %v7461 = vpop.permute.xlu0 %7460
    %7462 = vrot.lane.b32.xlu0 %v7446, 127
    %v7463 = vpop.permute.xlu0 %7462
    %7464 = vrot.lane.b32.xlu0 %v7449, 127
    %v7465 = vpop.permute.xlu0 %7464
    %7466 = vrot.lane.b32.xlu0 %v7451, 127
    %v7467 = vpop.permute.xlu0 %7466
    %7468 = vrot.lane.b32.xlu0 %v7453, 127
    %v7469 = vpop.permute.xlu0 %7468
    %7470 = vrot.lane.b32.xlu0 %v7455, 127
    %v7471 = vpop.permute.xlu0 %7470
    %v7480 = vadd.f32 %v7408, %v7457
    %v7481 = vadd.f32 %v7409, %v7459
    %v7482 = vadd.f32 %v7410, %v7461
    %v7483 = vadd.f32 %v7411, %v7463
    %v7484 = vadd.f32 %v7412, %v7465
    %v7485 = vadd.f32 %v7413, %v7467
    %v7486 = vadd.f32 %v7414, %v7469
    %v7487 = vadd.f32 %v7415, %v7471
    %s7488 = sld [smem:[#allocation14 + $0x1a]]
    %v7489 = vstv %s7488
    %v7490 = vmul.f32 %v7489, %v5868
    %v7491 = vmul.f32 %v7489, %v5869
    %v7492 = vmul.f32 %v7489, %v5870
    %v7493 = vmul.f32 %v7489, %v5871
    %v7494 = vmul.f32 %v7489, %v5872
    %v7495 = vmul.f32 %v7489, %v5878
    %v7496 = vmul.f32 %v7489, %v5879
    %v7497 = vmul.f32 %v7489, %v5880
    %v7498 = vmul.f32 %v7489, %v5881
    %v7499 = vmul.f32 %v7489, %v5882
    %v7510 = vrot.slane %v7490, 2
    %v7511 = vrot.slane %v7491, 2
    %v7512 = vsel %vm1698, %v7510, %v7511
    %v7513 = vrot.slane %v7492, 2
    %v7514 = vsel %vm1698, %v7511, %v7513
    %v7515 = vrot.slane %v7493, 2
    %v7516 = vsel %vm1698, %v7513, %v7515
    %v7517 = vrot.slane %v7494, 2
    %v7518 = vsel %vm1698, %v7515, %v7517
    %v7519 = vrot.slane %v7495, 2
    %v7520 = vrot.slane %v7496, 2
    %v7521 = vsel %vm1698, %v7519, %v7520
    %v7522 = vrot.slane %v7497, 2
    %v7523 = vsel %vm1698, %v7520, %v7522
    %v7524 = vrot.slane %v7498, 2
    %v7525 = vsel %vm1698, %v7522, %v7524
    %v7526 = vrot.slane %v7499, 2
    %v7527 = vsel %vm1698, %v7524, %v7526
    %7528 = vrot.lane.b32.xlu0 %v7512, 126
    %v7529 = vpop.permute.xlu0 %7528
    %7530 = vrot.lane.b32.xlu0 %v7514, 126
    %v7531 = vpop.permute.xlu0 %7530
    %7532 = vrot.lane.b32.xlu0 %v7516, 126
    %v7533 = vpop.permute.xlu0 %7532
    %7534 = vrot.lane.b32.xlu0 %v7518, 126
    %v7535 = vpop.permute.xlu0 %7534
    %7536 = vrot.lane.b32.xlu0 %v7521, 126
    %v7537 = vpop.permute.xlu0 %7536
    %7538 = vrot.lane.b32.xlu0 %v7523, 126
    %v7539 = vpop.permute.xlu0 %7538
    %7540 = vrot.lane.b32.xlu0 %v7525, 126
    %v7541 = vpop.permute.xlu0 %7540
    %7542 = vrot.lane.b32.xlu0 %v7527, 126
    %v7543 = vpop.permute.xlu0 %7542
    %v7552 = vadd.f32 %v7480, %v7529
    %v7553 = vadd.f32 %v7481, %v7531
    %v7554 = vadd.f32 %v7482, %v7533
    %v7555 = vadd.f32 %v7483, %v7535
    %v7556 = vadd.f32 %v7484, %v7537
    %v7557 = vadd.f32 %v7485, %v7539
    %v7558 = vadd.f32 %v7486, %v7541
    %v7559 = vadd.f32 %v7487, %v7543
    %s7560 = sld [smem:[#allocation14 + $0x1b]]
    %v7561 = vstv %s7560
    %v7562 = vmul.f32 %v7561, %v5873
    %v7563 = vmul.f32 %v7561, %v5874
    %v7564 = vmul.f32 %v7561, %v5875
    %v7565 = vmul.f32 %v7561, %v5876
    %v7566 = vmul.f32 %v7561, %v5883
    %v7567 = vmul.f32 %v7561, %v5884
    %v7568 = vmul.f32 %v7561, %v5885
    %v7569 = vmul.f32 %v7561, %v5886
    %v7570 = vadd.f32 %v7552, %v7562
    %v7571 = vadd.f32 %v7553, %v7563
    %v7572 = vadd.f32 %v7554, %v7564
    %v7573 = vadd.f32 %v7555, %v7565
    %v7574 = vadd.f32 %v7556, %v7566
    %v7575 = vadd.f32 %v7557, %v7567
    %v7576 = vadd.f32 %v7558, %v7568
    %v7577 = vadd.f32 %v7559, %v7569
    %s7578 = sld [smem:[#allocation14 + $0x1c]]
    %v7579 = vstv %s7578
    %v7580 = vmul.f32 %v7579, %v5873
    %v7581 = vmul.f32 %v7579, %v5874
    %v7582 = vmul.f32 %v7579, %v5875
    %v7583 = vmul.f32 %v7579, %v5876
    %v7584 = vmul.f32 %v7579, %v5883
    %v7585 = vmul.f32 %v7579, %v5884
    %v7586 = vmul.f32 %v7579, %v5885
    %v7587 = vmul.f32 %v7579, %v5886
    %7596 = vrot.lane.b32.xlu0 %v7580, 127
    %v7597 = vpop.permute.xlu0 %7596
    %7598 = vrot.lane.b32.xlu0 %v7581, 127
    %v7599 = vpop.permute.xlu0 %7598
    %7600 = vrot.lane.b32.xlu0 %v7582, 127
    %v7601 = vpop.permute.xlu0 %7600
    %7602 = vrot.lane.b32.xlu0 %v7583, 127
    %v7603 = vpop.permute.xlu0 %7602
    %7604 = vrot.lane.b32.xlu0 %v7584, 127
    %v7605 = vpop.permute.xlu0 %7604
    %7606 = vrot.lane.b32.xlu0 %v7585, 127
    %v7607 = vpop.permute.xlu0 %7606
    %7608 = vrot.lane.b32.xlu0 %v7586, 127
    %v7609 = vpop.permute.xlu0 %7608
    %7610 = vrot.lane.b32.xlu0 %v7587, 127
    %v7611 = vpop.permute.xlu0 %7610
    %v7620 = vadd.f32 %v7570, %v7597
    %v7621 = vadd.f32 %v7571, %v7599
    %v7622 = vadd.f32 %v7572, %v7601
    %v7623 = vadd.f32 %v7573, %v7603
    %v7624 = vadd.f32 %v7574, %v7605
    %v7625 = vadd.f32 %v7575, %v7607
    %v7626 = vadd.f32 %v7576, %v7609
    %v7627 = vadd.f32 %v7577, %v7611
    %s7628 = sld [smem:[#allocation14 + $0x1d]]
    %v7629 = vstv %s7628
    %v7630 = vmul.f32 %v7629, %v5873
    %v7631 = vmul.f32 %v7629, %v5874
    %v7632 = vmul.f32 %v7629, %v5875
    %v7633 = vmul.f32 %v7629, %v5876
    %v7634 = vmul.f32 %v7629, %v5883
    %v7635 = vmul.f32 %v7629, %v5884
    %v7636 = vmul.f32 %v7629, %v5885
    %v7637 = vmul.f32 %v7629, %v5886
    %7646 = vrot.lane.b32.xlu0 %v7630, 126
    %v7647 = vpop.permute.xlu0 %7646
    %7648 = vrot.lane.b32.xlu0 %v7631, 126
    %v7649 = vpop.permute.xlu0 %7648
    %7650 = vrot.lane.b32.xlu0 %v7632, 126
    %v7651 = vpop.permute.xlu0 %7650
    %7652 = vrot.lane.b32.xlu0 %v7633, 126
    %v7653 = vpop.permute.xlu0 %7652
    %7654 = vrot.lane.b32.xlu0 %v7634, 126
    %v7655 = vpop.permute.xlu0 %7654
    %7656 = vrot.lane.b32.xlu0 %v7635, 126
    %v7657 = vpop.permute.xlu0 %7656
    %7658 = vrot.lane.b32.xlu0 %v7636, 126
    %v7659 = vpop.permute.xlu0 %7658
    %7660 = vrot.lane.b32.xlu0 %v7637, 126
    %v7661 = vpop.permute.xlu0 %7660
    %v7670 = vadd.f32 %v7620, %v7647
    %v7671 = vadd.f32 %v7621, %v7649
    %v7672 = vadd.f32 %v7622, %v7651
    %v7673 = vadd.f32 %v7623, %v7653
    %v7674 = vadd.f32 %v7624, %v7655
    %v7675 = vadd.f32 %v7625, %v7657
    %v7676 = vadd.f32 %v7626, %v7659
    %v7677 = vadd.f32 %v7627, %v7661
    %s7678 = sld [smem:[#allocation14 + $0x1e]]
    %v7679 = vstv %s7678
    %v7680 = vmul.f32 %v7679, %v5873
    %v7681 = vmul.f32 %v7679, %v5874
    %v7682 = vmul.f32 %v7679, %v5875
    %v7683 = vmul.f32 %v7679, %v5876
    %v7684 = vmul.f32 %v7679, %v5877
    %v7685 = vmul.f32 %v7679, %v5883
    %v7686 = vmul.f32 %v7679, %v5884
    %v7687 = vmul.f32 %v7679, %v5885
    %v7688 = vmul.f32 %v7679, %v5886
    %v7689 = vmul.f32 %v7679, %v5887
    %v7700 = vrot.slane %v7680, 1
    %v7701 = vrot.slane %v7681, 1
    %v7702 = vsel %vm1497, %v7700, %v7701
    %v7703 = vrot.slane %v7682, 1
    %v7704 = vsel %vm1497, %v7701, %v7703
    %v7705 = vrot.slane %v7683, 1
    %v7706 = vsel %vm1497, %v7703, %v7705
    %v7707 = vrot.slane %v7684, 1
    %v7708 = vsel %vm1497, %v7705, %v7707
    %v7709 = vrot.slane %v7685, 1
    %v7710 = vrot.slane %v7686, 1
    %v7711 = vsel %vm1497, %v7709, %v7710
    %v7712 = vrot.slane %v7687, 1
    %v7713 = vsel %vm1497, %v7710, %v7712
    %v7714 = vrot.slane %v7688, 1
    %v7715 = vsel %vm1497, %v7712, %v7714
    %v7716 = vrot.slane %v7689, 1
    %v7717 = vsel %vm1497, %v7714, %v7716
    %v7726 = vadd.f32 %v7670, %v7702
    %v7727 = vadd.f32 %v7671, %v7704
    %v7728 = vadd.f32 %v7672, %v7706
    %v7729 = vadd.f32 %v7673, %v7708
    %v7730 = vadd.f32 %v7674, %v7711
    %v7731 = vadd.f32 %v7675, %v7713
    %v7732 = vadd.f32 %v7676, %v7715
    %v7733 = vadd.f32 %v7677, %v7717
    %s7734 = sld [smem:[#allocation14 + $0x1f]]
    %v7735 = vstv %s7734
    %v7736 = vmul.f32 %v7735, %v5873
    %v7737 = vmul.f32 %v7735, %v5874
    %v7738 = vmul.f32 %v7735, %v5875
    %v7739 = vmul.f32 %v7735, %v5876
    %v7740 = vmul.f32 %v7735, %v5877
    %v7741 = vmul.f32 %v7735, %v5883
    %v7742 = vmul.f32 %v7735, %v5884
    %v7743 = vmul.f32 %v7735, %v5885
    %v7744 = vmul.f32 %v7735, %v5886
    %v7745 = vmul.f32 %v7735, %v5887
    %v7756 = vrot.slane %v7736, 1
    %v7757 = vrot.slane %v7737, 1
    %v7758 = vsel %vm1497, %v7756, %v7757
    %v7759 = vrot.slane %v7738, 1
    %v7760 = vsel %vm1497, %v7757, %v7759
    %v7761 = vrot.slane %v7739, 1
    %v7762 = vsel %vm1497, %v7759, %v7761
    %v7763 = vrot.slane %v7740, 1
    %v7764 = vsel %vm1497, %v7761, %v7763
    %v7765 = vrot.slane %v7741, 1
    %v7766 = vrot.slane %v7742, 1
    %v7767 = vsel %vm1497, %v7765, %v7766
    %v7768 = vrot.slane %v7743, 1
    %v7769 = vsel %vm1497, %v7766, %v7768
    %v7770 = vrot.slane %v7744, 1
    %v7771 = vsel %vm1497, %v7768, %v7770
    %v7772 = vrot.slane %v7745, 1
    %v7773 = vsel %vm1497, %v7770, %v7772
    %7774 = vrot.lane.b32.xlu0 %v7758, 127
    %v7775 = vpop.permute.xlu0 %7774
    %7776 = vrot.lane.b32.xlu0 %v7760, 127
    %v7777 = vpop.permute.xlu0 %7776
    %7778 = vrot.lane.b32.xlu0 %v7762, 127
    %v7779 = vpop.permute.xlu0 %7778
    %7780 = vrot.lane.b32.xlu0 %v7764, 127
    %v7781 = vpop.permute.xlu0 %7780
    %7782 = vrot.lane.b32.xlu0 %v7767, 127
    %v7783 = vpop.permute.xlu0 %7782
    %7784 = vrot.lane.b32.xlu0 %v7769, 127
    %v7785 = vpop.permute.xlu0 %7784
    %7786 = vrot.lane.b32.xlu0 %v7771, 127
    %v7787 = vpop.permute.xlu0 %7786
    %7788 = vrot.lane.b32.xlu0 %v7773, 127
    %v7789 = vpop.permute.xlu0 %7788
    %v7798 = vadd.f32 %v7726, %v7775
    %v7799 = vadd.f32 %v7727, %v7777
    %v7800 = vadd.f32 %v7728, %v7779
    %v7801 = vadd.f32 %v7729, %v7781
    %v7802 = vadd.f32 %v7730, %v7783
    %v7803 = vadd.f32 %v7731, %v7785
    %v7804 = vadd.f32 %v7732, %v7787
    %v7805 = vadd.f32 %v7733, %v7789
    %s7806 = sld [smem:[#allocation14 + $0x20]]
    %v7807 = vstv %s7806
    %v7808 = vmul.f32 %v7807, %v5873
    %v7809 = vmul.f32 %v7807, %v5874
    %v7810 = vmul.f32 %v7807, %v5875
    %v7811 = vmul.f32 %v7807, %v5876
    %v7812 = vmul.f32 %v7807, %v5877
    %v7813 = vmul.f32 %v7807, %v5883
    %v7814 = vmul.f32 %v7807, %v5884
    %v7815 = vmul.f32 %v7807, %v5885
    %v7816 = vmul.f32 %v7807, %v5886
    %v7817 = vmul.f32 %v7807, %v5887
    %v7828 = vrot.slane %v7808, 1
    %v7829 = vrot.slane %v7809, 1
    %v7830 = vsel %vm1497, %v7828, %v7829
    %v7831 = vrot.slane %v7810, 1
    %v7832 = vsel %vm1497, %v7829, %v7831
    %v7833 = vrot.slane %v7811, 1
    %v7834 = vsel %vm1497, %v7831, %v7833
    %v7835 = vrot.slane %v7812, 1
    %v7836 = vsel %vm1497, %v7833, %v7835
    %v7837 = vrot.slane %v7813, 1
    %v7838 = vrot.slane %v7814, 1
    %v7839 = vsel %vm1497, %v7837, %v7838
    %v7840 = vrot.slane %v7815, 1
    %v7841 = vsel %vm1497, %v7838, %v7840
    %v7842 = vrot.slane %v7816, 1
    %v7843 = vsel %vm1497, %v7840, %v7842
    %v7844 = vrot.slane %v7817, 1
    %v7845 = vsel %vm1497, %v7842, %v7844
    %7846 = vrot.lane.b32.xlu0 %v7830, 126
    %v7847 = vpop.permute.xlu0 %7846
    %7848 = vrot.lane.b32.xlu0 %v7832, 126
    %v7849 = vpop.permute.xlu0 %7848
    %7850 = vrot.lane.b32.xlu0 %v7834, 126
    %v7851 = vpop.permute.xlu0 %7850
    %7852 = vrot.lane.b32.xlu0 %v7836, 126
    %v7853 = vpop.permute.xlu0 %7852
    %7854 = vrot.lane.b32.xlu0 %v7839, 126
    %v7855 = vpop.permute.xlu0 %7854
    %7856 = vrot.lane.b32.xlu0 %v7841, 126
    %v7857 = vpop.permute.xlu0 %7856
    %7858 = vrot.lane.b32.xlu0 %v7843, 126
    %v7859 = vpop.permute.xlu0 %7858
    %7860 = vrot.lane.b32.xlu0 %v7845, 126
    %v7861 = vpop.permute.xlu0 %7860
    %v7870 = vadd.f32 %v7798, %v7847
    %v7871 = vadd.f32 %v7799, %v7849
    %v7872 = vadd.f32 %v7800, %v7851
    %v7873 = vadd.f32 %v7801, %v7853
    %v7874 = vadd.f32 %v7802, %v7855
    %v7875 = vadd.f32 %v7803, %v7857
    %v7876 = vadd.f32 %v7804, %v7859
    %v7877 = vadd.f32 %v7805, %v7861
    %s7878 = sld [smem:[#allocation14 + $0x21]]
    %v7879 = vstv %s7878
    %v7880 = vmul.f32 %v7879, %v5873
    %v7881 = vmul.f32 %v7879, %v5874
    %v7882 = vmul.f32 %v7879, %v5875
    %v7883 = vmul.f32 %v7879, %v5876
    %v7884 = vmul.f32 %v7879, %v5877
    %v7885 = vmul.f32 %v7879, %v5883
    %v7886 = vmul.f32 %v7879, %v5884
    %v7887 = vmul.f32 %v7879, %v5885
    %v7888 = vmul.f32 %v7879, %v5886
    %v7889 = vmul.f32 %v7879, %v5887
    %v7900 = vrot.slane %v7880, 2
    %v7901 = vrot.slane %v7881, 2
    %v7902 = vsel %vm1698, %v7900, %v7901
    %v7903 = vrot.slane %v7882, 2
    %v7904 = vsel %vm1698, %v7901, %v7903
    %v7905 = vrot.slane %v7883, 2
    %v7906 = vsel %vm1698, %v7903, %v7905
    %v7907 = vrot.slane %v7884, 2
    %v7908 = vsel %vm1698, %v7905, %v7907
    %v7909 = vrot.slane %v7885, 2
    %v7910 = vrot.slane %v7886, 2
    %v7911 = vsel %vm1698, %v7909, %v7910
    %v7912 = vrot.slane %v7887, 2
    %v7913 = vsel %vm1698, %v7910, %v7912
    %v7914 = vrot.slane %v7888, 2
    %v7915 = vsel %vm1698, %v7912, %v7914
    %v7916 = vrot.slane %v7889, 2
    %v7917 = vsel %vm1698, %v7914, %v7916
    %v7926 = vadd.f32 %v7870, %v7902
    %v7927 = vadd.f32 %v7871, %v7904
    %v7928 = vadd.f32 %v7872, %v7906
    %v7929 = vadd.f32 %v7873, %v7908
    %v7930 = vadd.f32 %v7874, %v7911
    %v7931 = vadd.f32 %v7875, %v7913
    %v7932 = vadd.f32 %v7876, %v7915
    %v7933 = vadd.f32 %v7877, %v7917
    %s7934 = sld [smem:[#allocation14 + $0x22]]
    %v7935 = vstv %s7934
    %v7936 = vmul.f32 %v7935, %v5873
    %v7937 = vmul.f32 %v7935, %v5874
    %v7938 = vmul.f32 %v7935, %v5875
    %v7939 = vmul.f32 %v7935, %v5876
    %v7940 = vmul.f32 %v7935, %v5877
    %v7941 = vmul.f32 %v7935, %v5883
    %v7942 = vmul.f32 %v7935, %v5884
    %v7943 = vmul.f32 %v7935, %v5885
    %v7944 = vmul.f32 %v7935, %v5886
    %v7945 = vmul.f32 %v7935, %v5887
    %v7956 = vrot.slane %v7936, 2
    %v7957 = vrot.slane %v7937, 2
    %v7958 = vsel %vm1698, %v7956, %v7957
    %v7959 = vrot.slane %v7938, 2
    %v7960 = vsel %vm1698, %v7957, %v7959
    %v7961 = vrot.slane %v7939, 2
    %v7962 = vsel %vm1698, %v7959, %v7961
    %v7963 = vrot.slane %v7940, 2
    %v7964 = vsel %vm1698, %v7961, %v7963
    %v7965 = vrot.slane %v7941, 2
    %v7966 = vrot.slane %v7942, 2
    %v7967 = vsel %vm1698, %v7965, %v7966
    %v7968 = vrot.slane %v7943, 2
    %v7969 = vsel %vm1698, %v7966, %v7968
    %v7970 = vrot.slane %v7944, 2
    %v7971 = vsel %vm1698, %v7968, %v7970
    %v7972 = vrot.slane %v7945, 2
    %v7973 = vsel %vm1698, %v7970, %v7972
    %7974 = vrot.lane.b32.xlu0 %v7958, 127
    %v7975 = vpop.permute.xlu0 %7974
    %7976 = vrot.lane.b32.xlu0 %v7960, 127
    %v7977 = vpop.permute.xlu0 %7976
    %7978 = vrot.lane.b32.xlu0 %v7962, 127
    %v7979 = vpop.permute.xlu0 %7978
    %7980 = vrot.lane.b32.xlu0 %v7964, 127
    %v7981 = vpop.permute.xlu0 %7980
    %7982 = vrot.lane.b32.xlu0 %v7967, 127
    %v7983 = vpop.permute.xlu0 %7982
    %7984 = vrot.lane.b32.xlu0 %v7969, 127
    %v7985 = vpop.permute.xlu0 %7984
    %7986 = vrot.lane.b32.xlu0 %v7971, 127
    %v7987 = vpop.permute.xlu0 %7986
    %7988 = vrot.lane.b32.xlu0 %v7973, 127
    %v7989 = vpop.permute.xlu0 %7988
    %v7998 = vadd.f32 %v7926, %v7975
    %v7999 = vadd.f32 %v7927, %v7977
    %v8000 = vadd.f32 %v7928, %v7979
    %v8001 = vadd.f32 %v7929, %v7981
    %v8002 = vadd.f32 %v7930, %v7983
    %v8003 = vadd.f32 %v7931, %v7985
    %v8004 = vadd.f32 %v7932, %v7987
    %v8005 = vadd.f32 %v7933, %v7989
    %s8006 = sld [smem:[#allocation14 + $0x23]]
    %v8007 = vstv %s8006
    %v8008 = vmul.f32 %v8007, %v5873
    %v8009 = vmul.f32 %v8007, %v5874
    %v8010 = vmul.f32 %v8007, %v5875
    %v8011 = vmul.f32 %v8007, %v5876
    %v8012 = vmul.f32 %v8007, %v5877
    %v8013 = vmul.f32 %v8007, %v5883
    %v8014 = vmul.f32 %v8007, %v5884
    %v8015 = vmul.f32 %v8007, %v5885
    %v8016 = vmul.f32 %v8007, %v5886
    %v8017 = vmul.f32 %v8007, %v5887
    %v8028 = vrot.slane %v8008, 2
    %v8029 = vrot.slane %v8009, 2
    %v8030 = vsel %vm1698, %v8028, %v8029
    %v8031 = vrot.slane %v8010, 2
    %v8032 = vsel %vm1698, %v8029, %v8031
    %v8033 = vrot.slane %v8011, 2
    %v8034 = vsel %vm1698, %v8031, %v8033
    %v8035 = vrot.slane %v8012, 2
    %v8036 = vsel %vm1698, %v8033, %v8035
    %v8037 = vrot.slane %v8013, 2
    %v8038 = vrot.slane %v8014, 2
    %v8039 = vsel %vm1698, %v8037, %v8038
    %v8040 = vrot.slane %v8015, 2
    %v8041 = vsel %vm1698, %v8038, %v8040
    %v8042 = vrot.slane %v8016, 2
    %v8043 = vsel %vm1698, %v8040, %v8042
    %v8044 = vrot.slane %v8017, 2
    %v8045 = vsel %vm1698, %v8042, %v8044
    %8046 = vrot.lane.b32.xlu0 %v8030, 126
    %v8047 = vpop.permute.xlu0 %8046
    %8048 = vrot.lane.b32.xlu0 %v8032, 126
    %v8049 = vpop.permute.xlu0 %8048
    %8050 = vrot.lane.b32.xlu0 %v8034, 126
    %v8051 = vpop.permute.xlu0 %8050
    %8052 = vrot.lane.b32.xlu0 %v8036, 126
    %v8053 = vpop.permute.xlu0 %8052
    %8054 = vrot.lane.b32.xlu0 %v8039, 126
    %v8055 = vpop.permute.xlu0 %8054
    %8056 = vrot.lane.b32.xlu0 %v8041, 126
    %v8057 = vpop.permute.xlu0 %8056
    %8058 = vrot.lane.b32.xlu0 %v8043, 126
    %v8059 = vpop.permute.xlu0 %8058
    %8060 = vrot.lane.b32.xlu0 %v8045, 126
    %v8061 = vpop.permute.xlu0 %8060
    %v8070 = vadd.f32 %v7998, %v8047
    %v8071 = vadd.f32 %v7999, %v8049
    %v8072 = vadd.f32 %v8000, %v8051
    %v8073 = vadd.f32 %v8001, %v8053
    %v8074 = vadd.f32 %v8002, %v8055
    %v8075 = vadd.f32 %v8003, %v8057
    %v8076 = vadd.f32 %v8004, %v8059
    %v8077 = vadd.f32 %v8005, %v8061
    %s8078 = sld [smem:[#allocation15 + $0x1]]
    %v8079 = vstv %s8078
    %v8080 = vadd.f32 %v8070, %v8079
    %v8081 = vadd.f32 %v8071, %v8079
    %v8082 = vadd.f32 %v8072, %v8079
    %v8083 = vadd.f32 %v8073, %v8079
    %v8084 = vadd.f32 %v8074, %v8079
    %v8085 = vadd.f32 %v8075, %v8079
    %v8086 = vadd.f32 %v8076, %v8079
    %v8087 = vadd.f32 %v8077, %v8079
    %v8088 = vsel %vm3441, %v8080, 0.0
    %v8089 = vsel %vm3441, %v8081, 0.0
    %v8090 = vadd.f32 %v8088, %v8089
    %v8091 = vsel %vm3441, %v8082, 0.0
    %v8092 = vadd.f32 %v8090, %v8091
    %v8093 = vsel %vm3441, %v8083, 0.0
    %v8094 = vadd.f32 %v8092, %v8093
    %v8095 = vsel %vm3441, %v8084, 0.0
    %v8096 = vadd.f32 %v8094, %v8095
    %v8097 = vsel %vm3441, %v8085, 0.0
    %v8098 = vadd.f32 %v8096, %v8097
    %v8099 = vsel %vm3441, %v8086, 0.0
    %v8100 = vadd.f32 %v8098, %v8099
    %v8101 = vsel %vm3441, %v8087, 0.0
    %v8102 = vadd.f32 %v8100, %v8101
    %8103 = vadd.xlane.f32.xlu0 %v8102
    %v8104 = vpop.xlane.xlu0 %8103
    %v8105 = vrot.slane %v8104, 4
    %v8106 = vadd.f32 %v8104, %v8105
    %v8107 = vrot.slane %v8106, 2
    %v8108 = vadd.f32 %v8106, %v8107
    %v8109 = vrot.slane %v8108, 1
    %v8110 = vadd.f32 %v8108, %v8109
    %s8111 = vtos %v8110
    %v8112 = vstv %s8111
    %v8113 = vmul.f32 %v8080, %v8080
    %v8114 = vmul.f32 %v8081, %v8081
    %v8115 = vmul.f32 %v8082, %v8082
    %v8116 = vmul.f32 %v8083, %v8083
    %v8117 = vmul.f32 %v8084, %v8084
    %v8118 = vmul.f32 %v8085, %v8085
    %v8119 = vmul.f32 %v8086, %v8086
    %v8120 = vmul.f32 %v8087, %v8087
    %v8121 = vsel %vm3441, %v8113, 0.0
    %v8122 = vsel %vm3441, %v8114, 0.0
    %v8123 = vadd.f32 %v8121, %v8122
    %v8124 = vsel %vm3441, %v8115, 0.0
    %v8125 = vadd.f32 %v8123, %v8124
    %v8126 = vsel %vm3441, %v8116, 0.0
    %v8127 = vadd.f32 %v8125, %v8126
    %v8128 = vsel %vm3441, %v8117, 0.0
    %v8129 = vadd.f32 %v8127, %v8128
    %v8130 = vsel %vm3441, %v8118, 0.0
    %v8131 = vadd.f32 %v8129, %v8130
    %v8132 = vsel %vm3441, %v8119, 0.0
    %v8133 = vadd.f32 %v8131, %v8132
    %v8134 = vsel %vm3441, %v8120, 0.0
    %v8135 = vadd.f32 %v8133, %v8134
    %8136 = vadd.xlane.f32.xlu0 %v8135
    %v8137 = vpop.xlane.xlu0 %8136
    %v8138 = vrot.slane %v8137, 4
    %v8139 = vadd.f32 %v8137, %v8138
    %v8140 = vrot.slane %v8139, 2
    %v8141 = vadd.f32 %v8139, %v8140
    %v8142 = vrot.slane %v8141, 1
    %v8143 = vadd.f32 %v8141, %v8142
    %s8144 = vtos %v8143
    %v8145 = vstv %s8144
    %v8146 = vmul.f32 %v8112, 0.00048828125
    %v8147 = vmul.f32 %v8145, 0.00048828125
    %v8148 = vmul.f32 %v8146, %v8146
    %v8149 = vsub.f32 %v8147, %v8148
    %v8150 = vsub.f32 %v8080, %v8146
    %v8151 = vsub.f32 %v8081, %v8146
    %v8152 = vsub.f32 %v8082, %v8146
    %v8153 = vsub.f32 %v8083, %v8146
    %v8154 = vsub.f32 %v8084, %v8146
    %v8155 = vsub.f32 %v8085, %v8146
    %v8156 = vsub.f32 %v8086, %v8146
    %v8157 = vsub.f32 %v8087, %v8146
    %v8158 = vadd.f32 %v8149, 1e-05
    %v8159 = vrsqrt.pop %v8158
    %v8160 = vmul.f32 %v8150, %v8159
    %v8161 = vmul.f32 %v8151, %v8159
    %v8162 = vmul.f32 %v8152, %v8159
    %v8163 = vmul.f32 %v8153, %v8159
    %v8164 = vmul.f32 %v8154, %v8159
    %v8165 = vmul.f32 %v8155, %v8159
    %v8166 = vmul.f32 %v8156, %v8159
    %v8167 = vmul.f32 %v8157, %v8159
    %s8168 = sld [smem:[#allocation17 + $0x1]]
    %v8169 = vstv %s8168
    %v8170 = vmul.f32 %v8160, %v8169
    %v8171 = vmul.f32 %v8161, %v8169
    %v8172 = vmul.f32 %v8162, %v8169
    %v8173 = vmul.f32 %v8163, %v8169
    %v8174 = vmul.f32 %v8164, %v8169
    %v8175 = vmul.f32 %v8165, %v8169
    %v8176 = vmul.f32 %v8166, %v8169
    %v8177 = vmul.f32 %v8167, %v8169
    %s8178 = sld [smem:[#allocation18 + $0x1]]
    %v8179 = vstv %s8178
    %v8180 = vadd.f32 %v8170, %v8179
    %v8181 = vadd.f32 %v8171, %v8179
    %v8182 = vadd.f32 %v8172, %v8179
    %v8183 = vadd.f32 %v8173, %v8179
    %v8184 = vadd.f32 %v8174, %v8179
    %v8185 = vadd.f32 %v8175, %v8179
    %v8186 = vadd.f32 %v8176, %v8179
    %v8187 = vadd.f32 %v8177, %v8179
    %v8188 = vmax.f32 %v8180, 0.0
    %v8189 = vmax.f32 %v8181, 0.0
    %v8190 = vmax.f32 %v8182, 0.0
    %v8191 = vmax.f32 %v8183, 0.0
    %v8192 = vmax.f32 %v8184, 0.0
    %v8193 = vmax.f32 %v8185, 0.0
    %v8194 = vmax.f32 %v8186, 0.0
    %v8195 = vmax.f32 %v8187, 0.0
    %8196 = vst.msk [vmem:[#allocation20] sm:$0xff] %vm3441, %v7034
    %8197 = vst.msk [vmem:[#allocation20 + $0x8] sm:$0xff] %vm3441, %v7035
    %8198 = vst.msk [vmem:[#allocation20 + $0x10] sm:$0xff] %vm3441, %v7036
    %8199 = vst.msk [vmem:[#allocation20 + $0x18] sm:$0xff] %vm3441, %v7037
    %8200 = vst.msk [vmem:[#allocation20 + $0x20] sm:$0xff] %vm3441, %v8188
    %8201 = vst.msk [vmem:[#allocation20 + $0x28] sm:$0xff] %vm3441, %v8189
    %8202 = vst.msk [vmem:[#allocation20 + $0x30] sm:$0xff] %vm3441, %v8190
    %8203 = vst.msk [vmem:[#allocation20 + $0x38] sm:$0xff] %vm3441, %v8191
    %8204 = vst.msk [vmem:[#allocation20 + $0x40] sm:$0xff] %vm3441, %v7038
    %8205 = vst.msk [vmem:[#allocation20 + $0x48] sm:$0xff] %vm3441, %v7039
    %8206 = vst.msk [vmem:[#allocation20 + $0x50] sm:$0xff] %vm3441, %v7040
    %8207 = vst.msk [vmem:[#allocation20 + $0x58] sm:$0xff] %vm3441, %v7041
    %8208 = vst.msk [vmem:[#allocation20 + $0x60] sm:$0xff] %vm3441, %v8192
    %8209 = vst.msk [vmem:[#allocation20 + $0x68] sm:$0xff] %vm3441, %v8193
    %8210 = vst.msk [vmem:[#allocation20 + $0x70] sm:$0xff] %vm3441, %v8194
    %8211 = vst.msk [vmem:[#allocation20 + $0x78] sm:$0xff] %vm3441, %v8195
    // Predicated region
    $region82: #{tpu_custom_call.1} parent=1 // pred_check
      _
    $region83: #{tpu_custom_call.1} parent=1 // pred_check_branch
      %8213 = sbr.rel (0) target = $region85
    $region84: #{tpu_custom_call.1} parent=1 // pred_region
      %s8215 = ssub.s32 2048, 2048
      %8216 = vsyncadd [#allocation6], %s8215
      %s8217 = sshll.u32 [#allocation20], 4
      %s8218 = int_to_ptr.vmem [resolvable:$true] %s8217
      %8223 = dma.vmem_to_hbm [thread:$0]  %s8218, 2048, %s11, [#allocation6], 128, 128, 8
    $region85: #{tpu_custom_call.1} parent=1 // pred_fallthru
      _
    // Predicated region
    $region86: #{tpu_custom_call.1} parent=1 // pred_check
      _
    $region87: #{tpu_custom_call.1} parent=1 // pred_check_branch
      %8225 = sbr.rel (0) target = $region89
    $region88: #{tpu_custom_call.1} parent=1 // pred_region
      %8226 = dma.done [#allocation6], 2048
    $region89: #{tpu_custom_call.1} parent=1 // pred_fallthru
      _
    %8227 = vsyncpa [#allocation5], 1
    %8228 = vsyncpa [#allocation6], 1
    %8229 = vsyncpa [#allocation7], 1
    %8230 = vsyncpa [#allocation10], 1
    %8231 = vsyncpa [#allocation13], 1
    %8232 = vsyncpa [#allocation16], 1
    %8233 = vsyncpa [#allocation19], 1

</llo_original>
